<compile_context>
chip_gen: v7x
topology: tpu7x:2x2x1
jax: 0.10.0
libtpu: 0.0.40
codegen_flags: <defaults>
</compile_context>

<pallas_src>
import functools

import jax
import jax.numpy as jnp
from jax import lax
from jax.experimental import pallas as pl
from jax.experimental.pallas import tpu as pltpu


# -----------------------------------------------------------------------------
# Static module configuration
# -----------------------------------------------------------------------------
VOXEL_SIZE = (0.2, 0.2, 4.0)
PC_RANGE = (0.0, -40.0, -3.0, 70.4, 40.0, 1.0)
VX, VY, VZ = VOXEL_SIZE
X_OFF = VX / 2 + PC_RANGE[0]
Y_OFF = VY / 2 + PC_RANGE[1]
Z_OFF = VZ / 2 + PC_RANGE[2]
REL_DIST_SCALER = 1.0
MODE = "max"          # baked into the fused kernels (max-combine into the voxel table)
C_OUT = 32            # feat_channels = [32, 32]


def _round_up(x, m):
    return ((x + m - 1) // m) * m


def _vmem_limit(nbytes):
    # Explicit scoped-VMEM limit (review item 12): never below the 32 MiB default
    # (so it can only help), capped at v7x's 64 MiB physical budget.
    return int(min(64 * 2**20, max(32 * 2**20, 2 * nbytes)))


# -----------------------------------------------------------------------------
# Kernel 1: fused per-voxel SUM scatter (cluster_scatter, mode='avg' numerator)
#   Point tiles accumulate into a VMEM-resident voxel table via a one-hot MXU
#   matmul over a block-aligned 2*TN-row window of the table.
# -----------------------------------------------------------------------------
def _scatter_sum_kernel(tb_ref, x_ref, inv_ref, o_ref, *, tn, w):
    i = pl.program_id(0)
    tb = tb_ref[i]
    start = pl.multiple_of(tb * tn, tn)        # block-aligned window into the table

    @pl.when(i == 0)
    def _init():
        o_ref[...] = jnp.zeros_like(o_ref)

    local = inv_ref[...] - tb * tn                                     # (tn, 1) int32
    onehot = (local == lax.broadcasted_iota(jnp.int32, (tn, w), 1)).astype(jnp.float32)
    # partial[v, c] = sum over points p of this tile with local voxel v of x[p, c]
    partial = lax.dot_general(onehot, x_ref[...], (((0,), (0,)), ((), ())),
                              preferred_element_type=jnp.float32)      # (w, c)
    o_ref[pl.ds(start, w), :] = o_ref[pl.ds(start, w), :] + partial


def scatter_sum(x, inv_col, tile_block, *, tn, table_rows):
    """Per-voxel sums of x (points sorted by voxel id) into a (table_rows, C) table."""
    n_pad, c = x.shape
    w = 2 * tn
    est = 2 * table_rows * c * 4 + 4 * tn * (c + 1) * 4 + tn * w * 4 + (1 << 20)
    return pl.pallas_call(
        functools.partial(_scatter_sum_kernel, tn=tn, w=w),
        out_shape=jax.ShapeDtypeStruct((table_rows, c), jnp.float32),
        grid_spec=pltpu.PrefetchScalarGridSpec(
            num_scalar_prefetch=1,
            grid=(n_pad // tn,),
            in_specs=[
                pl.BlockSpec((tn, c), lambda i, tb: (i, 0)),    # point features tile
                pl.BlockSpec((tn, 1), lambda i, tb: (i, 0)),    # voxel id per point
            ],
            out_specs=pl.BlockSpec((table_rows, c), lambda i, tb: (0, 0)),
        ),
        compiler_params=pltpu.CompilerParams(
            dimension_semantics=("arbitrary",),   # resident accumulator output
            vmem_limit_bytes=_vmem_limit(est)),
    )(tile_block, x, inv_col)


# -----------------------------------------------------------------------------
# Kernel 2: fused (voxel-table gather) + Linear + BN(eval) + ReLU + MAX scatter
#   One point-tile pass per VFE layer.  The per-voxel max is computed in-tile
#   with a segmented max-scan over the sorted points and combined into the
#   VMEM-resident voxel table, so point features never round-trip HBM for the
#   scatter (review item 4).
# -----------------------------------------------------------------------------
def _make_fused_kernel(*, tn, w, gather_dtype, with_point_out):
    def kernel(tb_ref, x_ref, inv_ref, tbl_ref, wx_ref, wt_ref, sc_ref, sh_ref,
               *out_refs):
        if with_point_out:
            pf_ref, vox_ref = out_refs
        else:
            (vox_ref,) = out_refs

        i = pl.program_id(0)
        tb = tb_ref[i]
        start = pl.multiple_of(tb * tn, tn)     # aligned window (review item 8)

        @pl.when(i == 0)
        def _init():
            vox_ref[...] = jnp.zeros_like(vox_ref)

        # Sorted points: voxel ids of this tile lie in [tb*tn, tb*tn + 2*tn).
        local = inv_ref[...] - tb * tn                                   # (tn, 1), non-decreasing
        onehot_b = local == lax.broadcasted_iota(jnp.int32, (tn, w), 1)  # (tn, w) bool

        # ---- Gather each point's voxel-table row with a one-hot MXU matmul.
        #      bf16 inputs for the wide layer-2 table (review item 5), f32 accum.
        window = tbl_ref[pl.ds(start, w), :].astype(gather_dtype)        # (w, ct)
        g = jnp.dot(onehot_b.astype(gather_dtype), window,
                    preferred_element_type=jnp.float32)                  # (tn, ct)

        # ---- Linear (bias-free) + folded BatchNorm (eval) + ReLU.
        y = (jnp.dot(x_ref[...], wx_ref[...], preferred_element_type=jnp.float32)
             + jnp.dot(g, wt_ref[...], preferred_element_type=jnp.float32))
        y = jnp.maximum(y * sc_ref[...] + sh_ref[...], 0.0)              # (tn, c_out), >= 0

        if with_point_out:
            pf_ref[...] = y

        # ---- Fused per-voxel max scatter.
        # Segmented inclusive max-scan along the (sorted) point axis.  The shift
        # v[p] <- v[p-k] is expressed as a sub-diagonal matmul (layout-trivial on
        # the MXU); at scale it can move to the XLU via pltpu.roll.
        row_i = lax.broadcasted_iota(jnp.int32, (tn, tn), 0)
        col_i = lax.broadcasted_iota(jnp.int32, (tn, tn), 1)
        diff = row_i - col_i
        loc_f = local.astype(jnp.float32)        # exact small integers in f32
        acc = y
        k = 1
        while k < tn:
            shift_k = (diff == k).astype(jnp.float32)       # shift_k @ v == v[p-k]
            prev_acc = jnp.dot(shift_k, acc, preferred_element_type=jnp.float32)
            prev_loc = jnp.dot(shift_k, loc_f, preferred_element_type=jnp.float32)
            same = prev_loc == loc_f                         # same voxel as point p-k
            # y >= 0 (post-ReLU), so the all-zero fill rows (p < k) are inert.
            acc = jnp.where(same, jnp.maximum(acc, prev_acc), acc)
            k *= 2
        # The last point of each within-tile segment now holds that segment's max;
        # select it with a one-hot matmul and max-combine into the resident table.
        nxt_loc = jnp.dot((diff == -1).astype(jnp.float32), loc_f,
                          preferred_element_type=jnp.float32)
        pt_idx = lax.broadcasted_iota(jnp.int32, (tn, 1), 0)
        is_last = (nxt_loc != loc_f) | (pt_idx == tn - 1)                # (tn, 1) bool
        sel = (onehot_b & is_last).astype(jnp.float32)                   # (tn, w)
        partial = lax.dot_general(sel, acc, (((0,), (0,)), ((), ())),
                                  preferred_element_type=jnp.float32)   # (w, c_out)
        cur = vox_ref[pl.ds(start, w), :]
        vox_ref[pl.ds(start, w), :] = jnp.maximum(cur, partial)

    return kernel


def fused_layer_scatter(x, inv_col, tile_block, table, wx, wt, scale, shift,
                        *, tn, with_point_out, gather_dtype=jnp.bfloat16):
    n_pad, cx = x.shape
    vt, ct = table.shape
    c_out = wx.shape[1]
    w = 2 * tn

    in_specs = [
        pl.BlockSpec((tn, cx), lambda i, tb: (i, 0)),      # point-feature tile
        pl.BlockSpec((tn, 1), lambda i, tb: (i, 0)),       # voxel id per point
        pl.BlockSpec((vt, ct), lambda i, tb: (0, 0)),      # voxel table (VMEM-resident)
        pl.BlockSpec((cx, c_out), lambda i, tb: (0, 0)),
        pl.BlockSpec((ct, c_out), lambda i, tb: (0, 0)),
        pl.BlockSpec((1, c_out), lambda i, tb: (0, 0)),
        pl.BlockSpec((1, c_out), lambda i, tb: (0, 0)),
    ]
    vox_sds = jax.ShapeDtypeStruct((vt, c_out), jnp.float32)
    vox_spec = pl.BlockSpec((vt, c_out), lambda i, tb: (0, 0))
    if with_point_out:
        out_shape = (jax.ShapeDtypeStruct((n_pad, c_out), jnp.float32), vox_sds)
        out_specs = (pl.BlockSpec((tn, c_out), lambda i, tb: (i, 0)), vox_spec)
    else:
        out_shape = vox_sds
        out_specs = vox_spec

    est = (vt * ct * 4 + vt * c_out * 4            # resident tables (in + out)
           + 4 * tn * (cx + 1 + c_out) * 4         # double-buffered point tiles
           + 3 * tn * w * 4 + 2 * tn * tn * 4      # one-hots / shift matrices
           + (1 << 20))
    return pl.pallas_call(
        _make_fused_kernel(tn=tn, w=w, gather_dtype=gather_dtype,
                           with_point_out=with_point_out),
        out_shape=out_shape,
        grid_spec=pltpu.PrefetchScalarGridSpec(
            num_scalar_prefetch=1,
            grid=(n_pad // tn,),
            in_specs=in_specs,
            out_specs=out_specs,
        ),
        compiler_params=pltpu.CompilerParams(
            # The voxel table is a resident accumulator -> sequential grid.
            # TODO(synk): on v7x split the point range over the two TensorCores
            # explicitly, since this axis cannot be marked "parallel".
            dimension_semantics=("arbitrary",),
            vmem_limit_bytes=_vmem_limit(est)),
    )(tile_block, x, inv_col, table, wx, wt, scale, shift)


# -----------------------------------------------------------------------------
# Parameters (deterministic init; BN folded to scale/shift, eval mode)
# -----------------------------------------------------------------------------
def init_params(key):
    eps = 1e-3
    k1, k2 = jax.random.split(key)
    w1 = jax.random.normal(k1, (9, C_OUT), jnp.float32) / jnp.sqrt(9.0)
    w2 = jax.random.normal(k2, (2 * C_OUT, C_OUT), jnp.float32) / jnp.sqrt(64.0)

    def bn_fold(cout, phase):
        gamma = 1.0 + 0.05 * jnp.sin(jnp.arange(cout, dtype=jnp.float32) + phase)
        beta = 0.01 * jnp.cos(jnp.arange(cout, dtype=jnp.float32) + phase)
        running_mean = jnp.zeros((cout,), jnp.float32)
        running_var = jnp.ones((cout,), jnp.float32)
        scale = gamma / jnp.sqrt(running_var + eps)
        shift = beta - running_mean * scale
        return scale.reshape(1, cout), shift.reshape(1, cout)

    # Layer 1 consumes feats9 = [xyz | (xyz - mean)/rel | (xyz - voxel_center)].
    # Folded into two matmuls:  y = packed8 @ wx1 + gathered_table @ wt1
    # with packed8 = [xyz | vcen | 0 0] and table = (mean - vcen)  (small values,
    # low-precision friendly):
    #   y = xyz@(wa+wb'+wc) + vcen@(-(wb'+wc)) + (mean - vcen)@(-wb')
    wa, wb, wc = w1[0:3], w1[3:6], w1[6:9]
    wb = wb / REL_DIST_SCALER
    wx1 = (jnp.zeros((8, C_OUT), jnp.float32)
           .at[0:3].set(wa + wb + wc)
           .at[3:6].set(-(wb + wc)))
    wt1 = jnp.zeros((8, C_OUT), jnp.float32).at[0:3].set(-wb)
    s1, b1 = bn_fold(C_OUT, 0.0)

    # Layer 2 consumes [point_feats | voxel_feats[inv]] -> split W2 row-wise.
    wx2 = w2[:C_OUT]
    wt2 = w2[C_OUT:]
    s2, b2 = bn_fold(C_OUT, 1.0)

    return dict(wx1=wx1, wt1=wt1, scale1=s1, shift1=b1,
                wx2=wx2, wt2=wt2, scale2=s2, shift2=b2,
                w1_raw=w1, w2_raw=w2)   # raw weights only for the reference check


# -----------------------------------------------------------------------------
# DynamicScatterVFE forward (jittable; static voxel capacity)
# -----------------------------------------------------------------------------
def _forward(params, features, coors, *, max_voxels, tn):
    """features: (N, 3) float32 xyz; coors: (N, 4) int32 [batch, z, y, x]."""
    n = features.shape[0]
    features = features.astype(jnp.float32)

    # torch.unique(coors, dim=0, return_inverse=True) with a static capacity so
    # the forward jits once.
    # TODO(synk): row-dedup + argsort-by-voxel are data-dependent permutations
    # kept in XLA glue; a scene with more than max_voxels unique voxels would be
    # silently truncated (same caveat as the reference torch code's dynamic size).
    new_coors, unq_inv = jnp.unique(coors, axis=0, return_inverse=True,
                                    size=max_voxels, fill_value=0)
    unq_inv = unq_inv.reshape(-1).astype(jnp.int32)
    num_valid = jnp.max(unq_inv) + 1

    # Sort points by voxel id: a TN-point tile then spans at most TN voxels, so
    # every kernel works on a block-aligned 2*TN-row window of the voxel tables.
    order = jnp.argsort(unq_inv)
    inv_s = unq_inv[order]
    feat_s = features[order]
    coor_s = coors[order].astype(jnp.float32)
    counts = jnp.bincount(unq_inv, length=max_voxels).astype(jnp.float32)

    # packed8 = [xyz | voxel_center | 0 0]  (voxel-center decoration folded into wx1)
    vcen = jnp.stack([coor_s[:, 3] * VX + X_OFF,
                      coor_s[:, 2] * VY + Y_OFF,
                      coor_s[:, 1] * VZ + Z_OFF], axis=1)
    packed8 = jnp.concatenate([feat_s, vcen, jnp.zeros((n, 2), jnp.float32)], axis=1)

    # Pad points to a whole number of tiles.  Padding rows carry the out-of-range
    # voxel id `max_voxels`, so they only ever touch the padding rows of the
    # voxel tables (or fall outside the one-hot window) -- never a real voxel.
    n_pad = _round_up(n, tn)
    pad = n_pad - n
    packed8 = jnp.pad(packed8, ((0, pad), (0, 0)))
    inv_pad = jnp.concatenate([inv_s, jnp.full((pad,), max_voxels, jnp.int32)])
    inv_col = inv_pad.reshape(n_pad, 1)
    # Per-tile aligned window index (first point's voxel id // TN); pad < TN, so
    # the first point of every tile is a real point.
    tile_block = (inv_pad.reshape(n_pad // tn, tn)[:, 0] // tn).astype(jnp.int32)

    table_rows = _round_up(max_voxels, tn) + tn   # keeps every 2*TN window in bounds

    # Cluster scatter ('avg'): per-voxel sums of [xyz | vcen] in one fused pass;
    # the cheap (V, 8) mean / centering stays in XLA glue.  The gathered table is
    # stored as (mean - voxel_center) so its magnitudes stay small.
    sum_tbl = scatter_sum(packed8, inv_col, tile_block, tn=tn, table_rows=table_rows)
    cnt = jnp.maximum(counts, 1.0).reshape(max_voxels, 1)
    mean_minus_vcen = (sum_tbl[:max_voxels, 0:3] - sum_tbl[:max_voxels, 3:6]) / cnt
    table1 = jnp.zeros((table_rows, 8), jnp.float32).at[:max_voxels, 0:3].set(
        mean_minus_vcen)

    # Layer 1: decoration (cluster + voxel-center offsets) folded into the matmul,
    # fused with BN(eval) + ReLU and the per-voxel max scatter.
    pf1, vfeat1 = fused_layer_scatter(
        packed8, inv_col, tile_block, table1,
        params["wx1"], params["wt1"], params["scale1"], params["shift1"],
        tn=tn, with_point_out=True, gather_dtype=jnp.float32)

    # Layer 2: bf16 one-hot gather of layer-1 voxel features + Linear + BN + ReLU
    # + max scatter; only the voxel table is materialised (no pf2 HBM round-trip).
    vfeat2 = fused_layer_scatter(
        pf1, inv_col, tile_block, vfeat1,
        params["wx2"], params["wt2"], params["scale2"], params["shift2"],
        tn=tn, with_point_out=False, gather_dtype=jnp.bfloat16)

    # voxel_feats[unq_inv[dummy_mask]] = 0.0 is a no-op here (3-channel input).
    return vfeat2[:max_voxels], new_coors, num_valid


# -----------------------------------------------------------------------------
# Pure-JAX reference (for a correctness check at demo scale)
# -----------------------------------------------------------------------------
def _reference_forward(params, features, coors, max_voxels):
    hi = lax.Precision.HIGHEST
    new_coors, unq_inv = jnp.unique(coors, axis=0, return_inverse=True,
                                    size=max_voxels, fill_value=0)
    unq_inv = unq_inv.reshape(-1)
    cnt = jnp.bincount(unq_inv, length=max_voxels).astype(jnp.float32)
    sums = jnp.zeros((max_voxels, 3), jnp.float32).at[unq_inv].add(features)
    mean = sums / jnp.maximum(cnt, 1.0)[:, None]
    f_cluster = (features - mean[unq_inv]) / REL_DIST_SCALER
    cf = coors.astype(jnp.float32)
    f_center = jnp.stack([features[:, 0] - (cf[:, 3] * VX + X_OFF),
                          features[:, 1] - (cf[:, 2] * VY + Y_OFF),
                          features[:, 2] - (cf[:, 1] * VZ + Z_OFF)], axis=1)
    feats = jnp.concatenate([features, f_cluster, f_center], axis=1)

    def layer(x, w, scale, shift):
        return jnp.maximum(jnp.dot(x, w, precision=hi) * scale + shift, 0.0)

    def scatter_max(pf):
        vf = jnp.full((max_voxels, C_OUT), -jnp.inf, jnp.float32).at[unq_inv].max(pf)
        return jnp.where(cnt[:, None] > 0, vf, 0.0)

    pf1 = layer(feats, params["w1_raw"], params["scale1"], params["shift1"])
    vf1 = scatter_max(pf1)
    pf2 = layer(jnp.concatenate([pf1, vf1[unq_inv]], axis=1),
                params["w2_raw"], params["scale2"], params["shift2"])
    return scatter_max(pf2), new_coors


# -----------------------------------------------------------------------------
# Demo
# -----------------------------------------------------------------------------
if __name__ == "__main__":
    key = jax.random.PRNGKey(0)
    k_pts, k_params = jax.random.split(key)

    N = 64
    # Points confined to a small region so several points share a voxel.
    kx, ky, kz = jax.random.split(k_pts, 3)
    px = jax.random.uniform(kx, (N,), minval=0.0, maxval=2.0)
    py = jax.random.uniform(ky, (N,), minval=-40.0, maxval=-38.0)
    pz = jax.random.uniform(kz, (N,), minval=-3.0, maxval=1.0)
    features = jnp.stack([px, py, pz], axis=1).astype(jnp.float32)   # (64, 3)

    # Voxel coords [batch, z, y, x] consistent with voxel_size / point_cloud_range.
    vz = jnp.floor((pz - PC_RANGE[2]) / VZ).astype(jnp.int32)
    vy = jnp.floor((py - PC_RANGE[1]) / VY).astype(jnp.int32)
    vx = jnp.floor((px - PC_RANGE[0]) / VX).astype(jnp.int32)
    vb = jnp.zeros((N,), jnp.int32)
    coors = jnp.stack([vb, vz, vy, vx], axis=1)                      # (64, 4)

    params = init_params(k_params)

    MAX_VOXELS = 128   # static voxel capacity (>= #unique voxels in the scene)
    TN = 128           # point-tile size; 256 suits v6e/v7x MXUs at production scale

    fwd = jax.jit(functools.partial(_forward, max_voxels=MAX_VOXELS, tn=TN))
    voxel_feats, voxel_coors, num_valid = fwd(params, features, coors)
    jax.block_until_ready(voxel_feats)

    nv = int(num_valid)
    assert voxel_feats.shape == (MAX_VOXELS, C_OUT)
    assert voxel_coors.shape == (MAX_VOXELS, 4)
    assert 0 < nv <= N
    assert bool(jnp.all(jnp.isfinite(voxel_feats)))
    assert bool(jnp.all(voxel_feats[nv:] == 0.0))   # untouched voxels stay zero

    ref_feats, _ = _reference_forward(params, features, coors, MAX_VOXELS)
    assert bool(jnp.allclose(ref_feats, voxel_feats, rtol=2e-2, atol=2e-2))

    print("KERNEL_OK")
</pallas_src>

<mosaic_0001>
module attributes {stable_mosaic.version = 11 : i64} {
  func.func private @main(%arg0: i32) attributes {dimension_semantics = [#tpu.dimension_semantics<core_parallel>], iteration_bounds = array<i64: 2>, tpu.core_type = #tpu.core_type<sc_scalar_subcore>, window_params = []} {
    return
  }
}

module attributes {stable_mosaic.version = 11 : i64} {
  func.func private @main(%arg0: i32) attributes {dimension_semantics = [#tpu.dimension_semantics<core_parallel>], iteration_bounds = array<i64: 2>, tpu.core_type = #tpu.core_type<sc_scalar_subcore>, window_params = []} {
    return
  }
}

module attributes {stable_mosaic.version = 11 : i64} {
  func.func @_scatter_sum_kernel(%arg0: i32, %arg1: memref<1xi32, #tpu.memory_space<smem>>, %arg2: memref<128x8xf32, #tpu.memory_space<vmem>>, %arg3: memref<128x1xi32, #tpu.memory_space<vmem>>, %arg4: memref<256x8xf32, #tpu.memory_space<vmem>>) attributes {dimension_semantics = [#tpu.dimension_semantics<arbitrary>], iteration_bounds = array<i64: 1>, scalar_prefetch = 1 : i64, scratch_operands = 0 : i64, tpu.core_type = #tpu.core_type<tc>, window_params = [{transform_indices = @transform_0, window_bounds = array<i64: 128, 8>}, {transform_indices = @transform_1, window_bounds = array<i64: 128, 1>}, {pipeline_mode = #tpu.pipeline_mode<synchronous>, transform_indices = @transform_2, window_bounds = array<i64: 256, 8>}]} {
    %0 = arith.index_cast %arg0 : i32 to index
    %1 = memref.load %arg1[%0] : memref<1xi32, #tpu.memory_space<smem>>
    %c128_i32 = arith.constant 128 : i32
    %2 = arith.muli %1, %c128_i32 : i32
    %3 = tpu.assume_multiple %2, 128 : i32
    %c0_i32 = arith.constant 0 : i32
    %4 = arith.cmpi eq, %arg0, %c0_i32 : i32
    %5 = arith.extui %4 : i1 to i32
    %c0_i32_0 = arith.constant 0 : i32
    %6 = arith.cmpi ne, %5, %c0_i32_0 : i32
    scf.if %6 {
      %cst_7 = arith.constant 0.000000e+00 : f32
      %23 = vector.broadcast %cst_7 : f32 to vector<256x8xf32>
      %c0_8 = arith.constant 0 : index
      %c0_9 = arith.constant 0 : index
      %24 = vector.load %arg4[%c0_8, %c0_9] : memref<256x8xf32, #tpu.memory_space<vmem>>, vector<256x8xf32>
      tpu.vector_store %arg4[%c0_8, %c0_9], %23 {strides = array<i32>} : memref<256x8xf32, #tpu.memory_space<vmem>>, vector<256x8xf32>,
    } else {
    }
    %c0 = arith.constant 0 : index
    %c0_1 = arith.constant 0 : index
    %7 = vector.load %arg3[%c0, %c0_1] : memref<128x1xi32, #tpu.memory_space<vmem>>, vector<128x1xi32>
    %c128_i32_2 = arith.constant 128 : i32
    %8 = arith.muli %1, %c128_i32_2 : i32
    %9 = vector.broadcast %8 : i32 to vector<128x1xi32>
    %10 = arith.subi %7, %9 : vector<128x1xi32>
    %11 = tpu.iota {dimensions = array<i32: 1>} : vector<128x256xi32>
    %12 = vector.broadcast %10 : vector<128x1xi32> to vector<128x256xi32>
    %13 = arith.cmpi eq, %12, %11 : vector<128x256xi32>
    %14 = arith.extui %13 : vector<128x256xi1> to vector<128x256xi32>
    %15 = arith.sitofp %14 : vector<128x256xi32> to vector<128x256xf32>
    %c0_3 = arith.constant 0 : index
    %c0_4 = arith.constant 0 : index
    %16 = vector.load %arg2[%c0_3, %c0_4] : memref<128x8xf32, #tpu.memory_space<vmem>>, vector<128x8xf32>
    %cst = arith.constant dense<0.000000e+00> : vector<256x8xf32>
    %17 = tpu.matmul %15, %16, %cst {dimension_numbers = #tpu.dot_dimension_numbers<[0], [0], [1], [1], [0, 1, 1, 1], [], []>} : vector<128x256xf32>, vector<128x8xf32>, vector<256x8xf32> -> vector<256x8xf32>
    %18 = arith.index_cast %3 : i32 to index
    %c0_5 = arith.constant 0 : index
    %19 = vector.load %arg4[%18, %c0_5] : memref<256x8xf32, #tpu.memory_space<vmem>>, vector<256x8xf32>
    %20 = arith.addf %19, %17 : vector<256x8xf32>
    %21 = arith.index_cast %3 : i32 to index
    %c0_6 = arith.constant 0 : index
    %22 = vector.load %arg4[%21, %c0_6] : memref<256x8xf32, #tpu.memory_space<vmem>>, vector<256x8xf32>
    tpu.vector_store %arg4[%21, %c0_6], %20 {strides = array<i32>} : memref<256x8xf32, #tpu.memory_space<vmem>>, vector<256x8xf32>,
    return
  }
  func.func @transform_0(%arg0: i32, %arg1: memref<1xi32, #tpu.memory_space<smem>>) -> (i32, i32) {
    %c0_i32 = arith.constant 0 : i32
    %c0_i32_0 = arith.constant 0 : i32
    return %arg0, %c0_i32 : i32, i32
  }
  func.func @transform_1(%arg0: i32, %arg1: memref<1xi32, #tpu.memory_space<smem>>) -> (i32, i32) {
    %c0_i32 = arith.constant 0 : i32
    %c0_i32_0 = arith.constant 0 : i32
    return %arg0, %c0_i32 : i32, i32
  }
  func.func @transform_2(%arg0: i32, %arg1: memref<1xi32, #tpu.memory_space<smem>>) -> (i32, i32) {
    %c0_i32 = arith.constant 0 : i32
    %c0_i32_0 = arith.constant 0 : i32
    %c0_i32_1 = arith.constant 0 : i32
    return %c0_i32, %c0_i32_0 : i32, i32
  }
}

module attributes {stable_mosaic.version = 11 : i64} {
  func.func @kernel(%arg0: i32, %arg1: memref<1xi32, #tpu.memory_space<smem>>, %arg2: memref<128x32xf32, #tpu.memory_space<vmem>>, %arg3: memref<128x1xi32, #tpu.memory_space<vmem>>, %arg4: memref<256x32xf32, #tpu.memory_space<vmem>>, %arg5: memref<32x32xf32, #tpu.memory_space<vmem>>, %arg6: memref<32x32xf32, #tpu.memory_space<vmem>>, %arg7: memref<1x32xf32, #tpu.memory_space<vmem>>, %arg8: memref<1x32xf32, #tpu.memory_space<vmem>>, %arg9: memref<256x32xf32, #tpu.memory_space<vmem>>) attributes {dimension_semantics = [#tpu.dimension_semantics<arbitrary>], iteration_bounds = array<i64: 1>, scalar_prefetch = 1 : i64, scratch_operands = 0 : i64, tpu.core_type = #tpu.core_type<tc>, window_params = [{transform_indices = @transform_0, window_bounds = array<i64: 128, 32>}, {transform_indices = @transform_1, window_bounds = array<i64: 128, 1>}, {pipeline_mode = #tpu.pipeline_mode<synchronous>, transform_indices = @transform_2, window_bounds = array<i64: 256, 32>}, {pipeline_mode = #tpu.pipeline_mode<synchronous>, transform_indices = @transform_3, window_bounds = array<i64: 32, 32>}, {pipeline_mode = #tpu.pipeline_mode<synchronous>, transform_indices = @transform_4, window_bounds = array<i64: 32, 32>}, {pipeline_mode = #tpu.pipeline_mode<synchronous>, transform_indices = @transform_5, window_bounds = array<i64: 1, 32>}, {pipeline_mode = #tpu.pipeline_mode<synchronous>, transform_indices = @transform_6, window_bounds = array<i64: 1, 32>}, {pipeline_mode = #tpu.pipeline_mode<synchronous>, transform_indices = @transform_7, window_bounds = array<i64: 256, 32>}]} {
    %0 = arith.index_cast %arg0 : i32 to index
    %1 = memref.load %arg1[%0] : memref<1xi32, #tpu.memory_space<smem>>
    %c128_i32 = arith.constant 128 : i32
    %2 = arith.muli %1, %c128_i32 : i32
    %3 = tpu.assume_multiple %2, 128 : i32
    %c0_i32 = arith.constant 0 : i32
    %4 = arith.cmpi eq, %arg0, %c0_i32 : i32
    %5 = arith.extui %4 : i1 to i32
    %c0_i32_0 = arith.constant 0 : i32
    %6 = arith.cmpi ne, %5, %c0_i32_0 : i32
    scf.if %6 {
      %cst_35 = arith.constant 0.000000e+00 : f32
      %136 = vector.broadcast %cst_35 : f32 to vector<256x32xf32>
      %c0_36 = arith.constant 0 : index
      %c0_37 = arith.constant 0 : index
      %137 = vector.load %arg9[%c0_36, %c0_37] : memref<256x32xf32, #tpu.memory_space<vmem>>, vector<256x32xf32>
      tpu.vector_store %arg9[%c0_36, %c0_37], %136 {strides = array<i32>} : memref<256x32xf32, #tpu.memory_space<vmem>>, vector<256x32xf32>,
    } else {
    }
    %c0 = arith.constant 0 : index
    %c0_1 = arith.constant 0 : index
    %7 = vector.load %arg3[%c0, %c0_1] : memref<128x1xi32, #tpu.memory_space<vmem>>, vector<128x1xi32>
    %c128_i32_2 = arith.constant 128 : i32
    %8 = arith.muli %1, %c128_i32_2 : i32
    %9 = vector.broadcast %8 : i32 to vector<128x1xi32>
    %10 = arith.subi %7, %9 : vector<128x1xi32>
    %11 = tpu.iota {dimensions = array<i32: 1>} : vector<128x256xi32>
    %12 = vector.broadcast %10 : vector<128x1xi32> to vector<128x256xi32>
    %13 = arith.cmpi eq, %12, %11 : vector<128x256xi32>
    %14 = arith.index_cast %3 : i32 to index
    %c0_3 = arith.constant 0 : index
    %15 = vector.load %arg4[%14, %c0_3] : memref<256x32xf32, #tpu.memory_space<vmem>>, vector<256x32xf32>
    %16 = arith.truncf %15 : vector<256x32xf32> to vector<256x32xbf16>
    %17 = arith.extui %13 : vector<128x256xi1> to vector<128x256xi32>
    %18 = arith.sitofp %17 : vector<128x256xi32> to vector<128x256xf32>
    %19 = arith.truncf %18 : vector<128x256xf32> to vector<128x256xbf16>
    %cst = arith.constant dense<0.000000e+00> : vector<128x32xf32>
    %20 = tpu.matmul %19, %16, %cst {dimension_numbers = #tpu.dot_dimension_numbers<[1], [0], [0], [1], [0, 0, 1, 1], [], []>} : vector<128x256xbf16>, vector<256x32xbf16>, vector<128x32xf32> -> vector<128x32xf32>
    %c0_4 = arith.constant 0 : index
    %c0_5 = arith.constant 0 : index
    %21 = vector.load %arg2[%c0_4, %c0_5] : memref<128x32xf32, #tpu.memory_space<vmem>>, vector<128x32xf32>
    %c0_6 = arith.constant 0 : index
    %c0_7 = arith.constant 0 : index
    %22 = vector.load %arg5[%c0_6, %c0_7] : memref<32x32xf32, #tpu.memory_space<vmem>>, vector<32x32xf32>
    %cst_8 = arith.constant dense<0.000000e+00> : vector<128x32xf32>
    %23 = tpu.matmul %21, %22, %cst_8 {dimension_numbers = #tpu.dot_dimension_numbers<[1], [0], [0], [1], [0, 0, 1, 1], [], []>} : vector<128x32xf32>, vector<32x32xf32>, vector<128x32xf32> -> vector<128x32xf32>
    %c0_9 = arith.constant 0 : index
    %c0_10 = arith.constant 0 : index
    %24 = vector.load %arg6[%c0_9, %c0_10] : memref<32x32xf32, #tpu.memory_space<vmem>>, vector<32x32xf32>
    %cst_11 = arith.constant dense<0.000000e+00> : vector<128x32xf32>
    %25 = tpu.matmul %20, %24, %cst_11 {dimension_numbers = #tpu.dot_dimension_numbers<[1], [0], [0], [1], [0, 0, 1, 1], [], []>} : vector<128x32xf32>, vector<32x32xf32>, vector<128x32xf32> -> vector<128x32xf32>
    %26 = arith.addf %23, %25 : vector<128x32xf32>
    %c0_12 = arith.constant 0 : index
    %c0_13 = arith.constant 0 : index
    %27 = vector.load %arg7[%c0_12, %c0_13] : memref<1x32xf32, #tpu.memory_space<vmem>>, vector<1x32xf32>
    %28 = vector.broadcast %27 : vector<1x32xf32> to vector<128x32xf32>
    %29 = arith.mulf %26, %28 : vector<128x32xf32>
    %c0_14 = arith.constant 0 : index
    %c0_15 = arith.constant 0 : index
    %30 = vector.load %arg8[%c0_14, %c0_15] : memref<1x32xf32, #tpu.memory_space<vmem>>, vector<1x32xf32>
    %31 = vector.broadcast %30 : vector<1x32xf32> to vector<128x32xf32>
    %32 = arith.addf %29, %31 : vector<128x32xf32>
    %cst_16 = arith.constant 0.000000e+00 : f32
    %33 = vector.broadcast %cst_16 : f32 to vector<128x32xf32>
    %34 = arith.maximumf %32, %33 : vector<128x32xf32>
    %35 = tpu.iota {dimensions = array<i32: 0>} : vector<128x128xi32>
    %36 = tpu.iota {dimensions = array<i32: 1>} : vector<128x128xi32>
    %37 = arith.subi %35, %36 : vector<128x128xi32>
    %38 = arith.sitofp %10 : vector<128x1xi32> to vector<128x1xf32>
    %c1_i32 = arith.constant 1 : i32
    %39 = vector.broadcast %c1_i32 : i32 to vector<128x128xi32>
    %40 = arith.cmpi eq, %37, %39 : vector<128x128xi32>
    %41 = arith.extui %40 : vector<128x128xi1> to vector<128x128xi32>
    %42 = arith.sitofp %41 : vector<128x128xi32> to vector<128x128xf32>
    %cst_17 = arith.constant dense<0.000000e+00> : vector<128x32xf32>
    %43 = tpu.matmul %42, %34, %cst_17 {dimension_numbers = #tpu.dot_dimension_numbers<[1], [0], [0], [1], [0, 0, 1, 1], [], []>} : vector<128x128xf32>, vector<128x32xf32>, vector<128x32xf32> -> vector<128x32xf32>
    %cst_18 = arith.constant dense<0.000000e+00> : vector<128x1xf32>
    %44 = tpu.matmul %42, %38, %cst_18 {dimension_numbers = #tpu.dot_dimension_numbers<[1], [0], [0], [1], [0, 0, 1, 1], [], []>} : vector<128x128xf32>, vector<128x1xf32>, vector<128x1xf32> -> vector<128x1xf32>
    %45 = arith.cmpf oeq, %44, %38 : vector<128x1xf32>
    %46 = arith.maximumf %34, %43 : vector<128x32xf32>
    %47 = vector.shape_cast %45 : vector<128x1xi1> to vector<128x1xi1>
    %48 = vector.broadcast %47 : vector<128x1xi1> to vector<128x32xi1>
    %49 = arith.select %48, %46, %34 : vector<128x32xi1>, vector<128x32xf32>
    %c2_i32 = arith.constant 2 : i32
    %50 = vector.broadcast %c2_i32 : i32 to vector<128x128xi32>
    %51 = arith.cmpi eq, %37, %50 : vector<128x128xi32>
    %52 = arith.extui %51 : vector<128x128xi1> to vector<128x128xi32>
    %53 = arith.sitofp %52 : vector<128x128xi32> to vector<128x128xf32>
    %cst_19 = arith.constant dense<0.000000e+00> : vector<128x32xf32>
    %54 = tpu.matmul %53, %49, %cst_19 {dimension_numbers = #tpu.dot_dimension_numbers<[1], [0], [0], [1], [0, 0, 1, 1], [], []>} : vector<128x128xf32>, vector<128x32xf32>, vector<128x32xf32> -> vector<128x32xf32>
    %cst_20 = arith.constant dense<0.000000e+00> : vector<128x1xf32>
    %55 = tpu.matmul %53, %38, %cst_20 {dimension_numbers = #tpu.dot_dimension_numbers<[1], [0], [0], [1], [0, 0, 1, 1], [], []>} : vector<128x128xf32>, vector<128x1xf32>, vector<128x1xf32> -> vector<128x1xf32>
    %56 = arith.cmpf oeq, %55, %38 : vector<128x1xf32>
    %57 = arith.maximumf %49, %54 : vector<128x32xf32>
    %58 = vector.shape_cast %56 : vector<128x1xi1> to vector<128x1xi1>
    %59 = vector.broadcast %58 : vector<128x1xi1> to vector<128x32xi1>
    %60 = arith.select %59, %57, %49 : vector<128x32xi1>, vector<128x32xf32>
    %c4_i32 = arith.constant 4 : i32
    %61 = vector.broadcast %c4_i32 : i32 to vector<128x128xi32>
    %62 = arith.cmpi eq, %37, %61 : vector<128x128xi32>
    %63 = arith.extui %62 : vector<128x128xi1> to vector<128x128xi32>
    %64 = arith.sitofp %63 : vector<128x128xi32> to vector<128x128xf32>
    %cst_21 = arith.constant dense<0.000000e+00> : vector<128x32xf32>
    %65 = tpu.matmul %64, %60, %cst_21 {dimension_numbers = #tpu.dot_dimension_numbers<[1], [0], [0], [1], [0, 0, 1, 1], [], []>} : vector<128x128xf32>, vector<128x32xf32>, vector<128x32xf32> -> vector<128x32xf32>
    %cst_22 = arith.constant dense<0.000000e+00> : vector<128x1xf32>
    %66 = tpu.matmul %64, %38, %cst_22 {dimension_numbers = #tpu.dot_dimension_numbers<[1], [0], [0], [1], [0, 0, 1, 1], [], []>} : vector<128x128xf32>, vector<128x1xf32>, vector<128x1xf32> -> vector<128x1xf32>
    %67 = arith.cmpf oeq, %66, %38 : vector<128x1xf32>
    %68 = arith.maximumf %60, %65 : vector<128x32xf32>
    %69 = vector.shape_cast %67 : vector<128x1xi1> to vector<128x1xi1>
    %70 = vector.broadcast %69 : vector<128x1xi1> to vector<128x32xi1>
    %71 = arith.select %70, %68, %60 : vector<128x32xi1>, vector<128x32xf32>
    %c8_i32 = arith.constant 8 : i32
    %72 = vector.broadcast %c8_i32 : i32 to vector<128x128xi32>
    %73 = arith.cmpi eq, %37, %72 : vector<128x128xi32>
    %74 = arith.extui %73 : vector<128x128xi1> to vector<128x128xi32>
    %75 = arith.sitofp %74 : vector<128x128xi32> to vector<128x128xf32>
    %cst_23 = arith.constant dense<0.000000e+00> : vector<128x32xf32>
    %76 = tpu.matmul %75, %71, %cst_23 {dimension_numbers = #tpu.dot_dimension_numbers<[1], [0], [0], [1], [0, 0, 1, 1], [], []>} : vector<128x128xf32>, vector<128x32xf32>, vector<128x32xf32> -> vector<128x32xf32>
    %cst_24 = arith.constant dense<0.000000e+00> : vector<128x1xf32>
    %77 = tpu.matmul %75, %38, %cst_24 {dimension_numbers = #tpu.dot_dimension_numbers<[1], [0], [0], [1], [0, 0, 1, 1], [], []>} : vector<128x128xf32>, vector<128x1xf32>, vector<128x1xf32> -> vector<128x1xf32>
    %78 = arith.cmpf oeq, %77, %38 : vector<128x1xf32>
    %79 = arith.maximumf %71, %76 : vector<128x32xf32>
    %80 = vector.shape_cast %78 : vector<128x1xi1> to vector<128x1xi1>
    %81 = vector.broadcast %80 : vector<128x1xi1> to vector<128x32xi1>
    %82 = arith.select %81, %79, %71 : vector<128x32xi1>, vector<128x32xf32>
    %c16_i32 = arith.constant 16 : i32
    %83 = vector.broadcast %c16_i32 : i32 to vector<128x128xi32>
    %84 = arith.cmpi eq, %37, %83 : vector<128x128xi32>
    %85 = arith.extui %84 : vector<128x128xi1> to vector<128x128xi32>
    %86 = arith.sitofp %85 : vector<128x128xi32> to vector<128x128xf32>
    %cst_25 = arith.constant dense<0.000000e+00> : vector<128x32xf32>
    %87 = tpu.matmul %86, %82, %cst_25 {dimension_numbers = #tpu.dot_dimension_numbers<[1], [0], [0], [1], [0, 0, 1, 1], [], []>} : vector<128x128xf32>, vector<128x32xf32>, vector<128x32xf32> -> vector<128x32xf32>
    %cst_26 = arith.constant dense<0.000000e+00> : vector<128x1xf32>
    %88 = tpu.matmul %86, %38, %cst_26 {dimension_numbers = #tpu.dot_dimension_numbers<[1], [0], [0], [1], [0, 0, 1, 1], [], []>} : vector<128x128xf32>, vector<128x1xf32>, vector<128x1xf32> -> vector<128x1xf32>
    %89 = arith.cmpf oeq, %88, %38 : vector<128x1xf32>
    %90 = arith.maximumf %82, %87 : vector<128x32xf32>
    %91 = vector.shape_cast %89 : vector<128x1xi1> to vector<128x1xi1>
    %92 = vector.broadcast %91 : vector<128x1xi1> to vector<128x32xi1>
    %93 = arith.select %92, %90, %82 : vector<128x32xi1>, vector<128x32xf32>
    %c32_i32 = arith.constant 32 : i32
    %94 = vector.broadcast %c32_i32 : i32 to vector<128x128xi32>
    %95 = arith.cmpi eq, %37, %94 : vector<128x128xi32>
    %96 = arith.extui %95 : vector<128x128xi1> to vector<128x128xi32>
    %97 = arith.sitofp %96 : vector<128x128xi32> to vector<128x128xf32>
    %cst_27 = arith.constant dense<0.000000e+00> : vector<128x32xf32>
    %98 = tpu.matmul %97, %93, %cst_27 {dimension_numbers = #tpu.dot_dimension_numbers<[1], [0], [0], [1], [0, 0, 1, 1], [], []>} : vector<128x128xf32>, vector<128x32xf32>, vector<128x32xf32> -> vector<128x32xf32>
    %cst_28 = arith.constant dense<0.000000e+00> : vector<128x1xf32>
    %99 = tpu.matmul %97, %38, %cst_28 {dimension_numbers = #tpu.dot_dimension_numbers<[1], [0], [0], [1], [0, 0, 1, 1], [], []>} : vector<128x128xf32>, vector<128x1xf32>, vector<128x1xf32> -> vector<128x1xf32>
    %100 = arith.cmpf oeq, %99, %38 : vector<128x1xf32>
    %101 = arith.maximumf %93, %98 : vector<128x32xf32>
    %102 = vector.shape_cast %100 : vector<128x1xi1> to vector<128x1xi1>
    %103 = vector.broadcast %102 : vector<128x1xi1> to vector<128x32xi1>
    %104 = arith.select %103, %101, %93 : vector<128x32xi1>, vector<128x32xf32>
    %c64_i32 = arith.constant 64 : i32
    %105 = vector.broadcast %c64_i32 : i32 to vector<128x128xi32>
    %106 = arith.cmpi eq, %37, %105 : vector<128x128xi32>
    %107 = arith.extui %106 : vector<128x128xi1> to vector<128x128xi32>
    %108 = arith.sitofp %107 : vector<128x128xi32> to vector<128x128xf32>
    %cst_29 = arith.constant dense<0.000000e+00> : vector<128x32xf32>
    %109 = tpu.matmul %108, %104, %cst_29 {dimension_numbers = #tpu.dot_dimension_numbers<[1], [0], [0], [1], [0, 0, 1, 1], [], []>} : vector<128x128xf32>, vector<128x32xf32>, vector<128x32xf32> -> vector<128x32xf32>
    %cst_30 = arith.constant dense<0.000000e+00> : vector<128x1xf32>
    %110 = tpu.matmul %108, %38, %cst_30 {dimension_numbers = #tpu.dot_dimension_numbers<[1], [0], [0], [1], [0, 0, 1, 1], [], []>} : vector<128x128xf32>, vector<128x1xf32>, vector<128x1xf32> -> vector<128x1xf32>
    %111 = arith.cmpf oeq, %110, %38 : vector<128x1xf32>
    %112 = arith.maximumf %104, %109 : vector<128x32xf32>
    %113 = vector.shape_cast %111 : vector<128x1xi1> to vector<128x1xi1>
    %114 = vector.broadcast %113 : vector<128x1xi1> to vector<128x32xi1>
    %115 = arith.select %114, %112, %104 : vector<128x32xi1>, vector<128x32xf32>
    %c-1_i32 = arith.constant -1 : i32
    %116 = vector.broadcast %c-1_i32 : i32 to vector<128x128xi32>
    %117 = arith.cmpi eq, %37, %116 : vector<128x128xi32>
    %118 = arith.extui %117 : vector<128x128xi1> to vector<128x128xi32>
    %119 = arith.sitofp %118 : vector<128x128xi32> to vector<128x128xf32>
    %cst_31 = arith.constant dense<0.000000e+00> : vector<128x1xf32>
    %120 = tpu.matmul %119, %38, %cst_31 {dimension_numbers = #tpu.dot_dimension_numbers<[1], [0], [0], [1], [0, 0, 1, 1], [], []>} : vector<128x128xf32>, vector<128x1xf32>, vector<128x1xf32> -> vector<128x1xf32>
    %121 = tpu.iota {dimensions = array<i32: 0>} : vector<128x1xi32>
    %122 = arith.cmpf one, %120, %38 : vector<128x1xf32>
    %c127_i32 = arith.constant 127 : i32
    %123 = vector.broadcast %c127_i32 : i32 to vector<128x1xi32>
    %124 = arith.cmpi eq, %121, %123 : vector<128x1xi32>
    %125 = arith.ori %122, %124 : vector<128x1xi1>
    %126 = vector.broadcast %125 : vector<128x1xi1> to vector<128x256xi1>
    %127 = arith.andi %13, %126 : vector<128x256xi1>
    %128 = arith.extui %127 : vector<128x256xi1> to vector<128x256xi32>
    %129 = arith.sitofp %128 : vector<128x256xi32> to vector<128x256xf32>
    %cst_32 = arith.constant dense<0.000000e+00> : vector<256x32xf32>
    %130 = tpu.matmul %129, %115, %cst_32 {dimension_numbers = #tpu.dot_dimension_numbers<[0], [0], [1], [1], [0, 1, 1, 1], [], []>} : vector<128x256xf32>, vector<128x32xf32>, vector<256x32xf32> -> vector<256x32xf32>
    %131 = arith.index_cast %3 : i32 to index
    %c0_33 = arith.constant 0 : index
    %132 = vector.load %arg9[%131, %c0_33] : memref<256x32xf32, #tpu.memory_space<vmem>>, vector<256x32xf32>
    %133 = arith.maximumf %132, %130 : vector<256x32xf32>
    %134 = arith.index_cast %3 : i32 to index
    %c0_34 = arith.constant 0 : index
    %135 = vector.load %arg9[%134, %c0_34] : memref<256x32xf32, #tpu.memory_space<vmem>>, vector<256x32xf32>
    tpu.vector_store %arg9[%134, %c0_34], %133 {strides = array<i32>} : memref<256x32xf32, #tpu.memory_space<vmem>>, vector<256x32xf32>,
    return
  }
  func.func @transform_0(%arg0: i32, %arg1: memref<1xi32, #tpu.memory_space<smem>>) -> (i32, i32) {
    %c0_i32 = arith.constant 0 : i32
    %c0_i32_0 = arith.constant 0 : i32
    return %arg0, %c0_i32 : i32, i32
  }
  func.func @transform_1(%arg0: i32, %arg1: memref<1xi32, #tpu.memory_space<smem>>) -> (i32, i32) {
    %c0_i32 = arith.constant 0 : i32
    %c0_i32_0 = arith.constant 0 : i32
    return %arg0, %c0_i32 : i32, i32
  }
  func.func @transform_2(%arg0: i32, %arg1: memref<1xi32, #tpu.memory_space<smem>>) -> (i32, i32) {
    %c0_i32 = arith.constant 0 : i32
    %c0_i32_0 = arith.constant 0 : i32
    %c0_i32_1 = arith.constant 0 : i32
    return %c0_i32, %c0_i32_0 : i32, i32
  }
  func.func @transform_3(%arg0: i32, %arg1: memref<1xi32, #tpu.memory_space<smem>>) -> (i32, i32) {
    %c0_i32 = arith.constant 0 : i32
    %c0_i32_0 = arith.constant 0 : i32
    %c0_i32_1 = arith.constant 0 : i32
    return %c0_i32, %c0_i32_0 : i32, i32
  }
  func.func @transform_4(%arg0: i32, %arg1: memref<1xi32, #tpu.memory_space<smem>>) -> (i32, i32) {
    %c0_i32 = arith.constant 0 : i32
    %c0_i32_0 = arith.constant 0 : i32
    %c0_i32_1 = arith.constant 0 : i32
    return %c0_i32, %c0_i32_0 : i32, i32
  }
  func.func @transform_5(%arg0: i32, %arg1: memref<1xi32, #tpu.memory_space<smem>>) -> (i32, i32) {
    %c0_i32 = arith.constant 0 : i32
    %c0_i32_0 = arith.constant 0 : i32
    %c0_i32_1 = arith.constant 0 : i32
    return %c0_i32, %c0_i32_0 : i32, i32
  }
  func.func @transform_6(%arg0: i32, %arg1: memref<1xi32, #tpu.memory_space<smem>>) -> (i32, i32) {
    %c0_i32 = arith.constant 0 : i32
    %c0_i32_0 = arith.constant 0 : i32
    %c0_i32_1 = arith.constant 0 : i32
    return %c0_i32, %c0_i32_0 : i32, i32
  }
  func.func @transform_7(%arg0: i32, %arg1: memref<1xi32, #tpu.memory_space<smem>>) -> (i32, i32) {
    %c0_i32 = arith.constant 0 : i32
    %c0_i32_0 = arith.constant 0 : i32
    %c0_i32_1 = arith.constant 0 : i32
    return %c0_i32, %c0_i32_0 : i32, i32
  }
}

module attributes {stable_mosaic.version = 11 : i64} {
  func.func @kernel(%arg0: i32, %arg1: memref<1xi32, #tpu.memory_space<smem>>, %arg2: memref<128x8xf32, #tpu.memory_space<vmem>>, %arg3: memref<128x1xi32, #tpu.memory_space<vmem>>, %arg4: memref<256x8xf32, #tpu.memory_space<vmem>>, %arg5: memref<8x32xf32, #tpu.memory_space<vmem>>, %arg6: memref<8x32xf32, #tpu.memory_space<vmem>>, %arg7: memref<1x32xf32, #tpu.memory_space<vmem>>, %arg8: memref<1x32xf32, #tpu.memory_space<vmem>>, %arg9: memref<128x32xf32, #tpu.memory_space<vmem>>, %arg10: memref<256x32xf32, #tpu.memory_space<vmem>>) attributes {dimension_semantics = [#tpu.dimension_semantics<arbitrary>], iteration_bounds = array<i64: 1>, scalar_prefetch = 1 : i64, scratch_operands = 0 : i64, tpu.core_type = #tpu.core_type<tc>, window_params = [{transform_indices = @transform_0, window_bounds = array<i64: 128, 8>}, {transform_indices = @transform_1, window_bounds = array<i64: 128, 1>}, {pipeline_mode = #tpu.pipeline_mode<synchronous>, transform_indices = @transform_2, window_bounds = array<i64: 256, 8>}, {pipeline_mode = #tpu.pipeline_mode<synchronous>, transform_indices = @transform_3, window_bounds = array<i64: 8, 32>}, {pipeline_mode = #tpu.pipeline_mode<synchronous>, transform_indices = @transform_4, window_bounds = array<i64: 8, 32>}, {pipeline_mode = #tpu.pipeline_mode<synchronous>, transform_indices = @transform_5, window_bounds = array<i64: 1, 32>}, {pipeline_mode = #tpu.pipeline_mode<synchronous>, transform_indices = @transform_6, window_bounds = array<i64: 1, 32>}, {transform_indices = @transform_7, window_bounds = array<i64: 128, 32>}, {pipeline_mode = #tpu.pipeline_mode<synchronous>, transform_indices = @transform_8, window_bounds = array<i64: 256, 32>}]} {
    %0 = arith.index_cast %arg0 : i32 to index
    %1 = memref.load %arg1[%0] : memref<1xi32, #tpu.memory_space<smem>>
    %c128_i32 = arith.constant 128 : i32
    %2 = arith.muli %1, %c128_i32 : i32
    %3 = tpu.assume_multiple %2, 128 : i32
    %c0_i32 = arith.constant 0 : i32
    %4 = arith.cmpi eq, %arg0, %c0_i32 : i32
    %5 = arith.extui %4 : i1 to i32
    %c0_i32_0 = arith.constant 0 : i32
    %6 = arith.cmpi ne, %5, %c0_i32_0 : i32
    scf.if %6 {
      %cst_37 = arith.constant 0.000000e+00 : f32
      %135 = vector.broadcast %cst_37 : f32 to vector<256x32xf32>
      %c0_38 = arith.constant 0 : index
      %c0_39 = arith.constant 0 : index
      %136 = vector.load %arg10[%c0_38, %c0_39] : memref<256x32xf32, #tpu.memory_space<vmem>>, vector<256x32xf32>
      tpu.vector_store %arg10[%c0_38, %c0_39], %135 {strides = array<i32>} : memref<256x32xf32, #tpu.memory_space<vmem>>, vector<256x32xf32>,
    } else {
    }
    %c0 = arith.constant 0 : index
    %c0_1 = arith.constant 0 : index
    %7 = vector.load %arg3[%c0, %c0_1] : memref<128x1xi32, #tpu.memory_space<vmem>>, vector<128x1xi32>
    %c128_i32_2 = arith.constant 128 : i32
    %8 = arith.muli %1, %c128_i32_2 : i32
    %9 = vector.broadcast %8 : i32 to vector<128x1xi32>
    %10 = arith.subi %7, %9 : vector<128x1xi32>
    %11 = tpu.iota {dimensions = array<i32: 1>} : vector<128x256xi32>
    %12 = vector.broadcast %10 : vector<128x1xi32> to vector<128x256xi32>
    %13 = arith.cmpi eq, %12, %11 : vector<128x256xi32>
    %14 = arith.index_cast %3 : i32 to index
    %c0_3 = arith.constant 0 : index
    %15 = vector.load %arg4[%14, %c0_3] : memref<256x8xf32, #tpu.memory_space<vmem>>, vector<256x8xf32>
    %16 = arith.extui %13 : vector<128x256xi1> to vector<128x256xi32>
    %17 = arith.sitofp %16 : vector<128x256xi32> to vector<128x256xf32>
    %cst = arith.constant dense<0.000000e+00> : vector<128x8xf32>
    %18 = tpu.matmul %17, %15, %cst {dimension_numbers = #tpu.dot_dimension_numbers<[1], [0], [0], [1], [0, 0, 1, 1], [], []>} : vector<128x256xf32>, vector<256x8xf32>, vector<128x8xf32> -> vector<128x8xf32>
    %c0_4 = arith.constant 0 : index
    %c0_5 = arith.constant 0 : index
    %19 = vector.load %arg2[%c0_4, %c0_5] : memref<128x8xf32, #tpu.memory_space<vmem>>, vector<128x8xf32>
    %c0_6 = arith.constant 0 : index
    %c0_7 = arith.constant 0 : index
    %20 = vector.load %arg5[%c0_6, %c0_7] : memref<8x32xf32, #tpu.memory_space<vmem>>, vector<8x32xf32>
    %cst_8 = arith.constant dense<0.000000e+00> : vector<128x32xf32>
    %21 = tpu.matmul %19, %20, %cst_8 {dimension_numbers = #tpu.dot_dimension_numbers<[1], [0], [0], [1], [0, 0, 1, 1], [], []>} : vector<128x8xf32>, vector<8x32xf32>, vector<128x32xf32> -> vector<128x32xf32>
    %c0_9 = arith.constant 0 : index
    %c0_10 = arith.constant 0 : index
    %22 = vector.load %arg6[%c0_9, %c0_10] : memref<8x32xf32, #tpu.memory_space<vmem>>, vector<8x32xf32>
    %cst_11 = arith.constant dense<0.000000e+00> : vector<128x32xf32>
    %23 = tpu.matmul %18, %22, %cst_11 {dimension_numbers = #tpu.dot_dimension_numbers<[1], [0], [0], [1], [0, 0, 1, 1], [], []>} : vector<128x8xf32>, vector<8x32xf32>, vector<128x32xf32> -> vector<128x32xf32>
    %24 = arith.addf %21, %23 : vector<128x32xf32>
    %c0_12 = arith.constant 0 : index
    %c0_13 = arith.constant 0 : index
    %25 = vector.load %arg7[%c0_12, %c0_13] : memref<1x32xf32, #tpu.memory_space<vmem>>, vector<1x32xf32>
    %26 = vector.broadcast %25 : vector<1x32xf32> to vector<128x32xf32>
    %27 = arith.mulf %24, %26 : vector<128x32xf32>
    %c0_14 = arith.constant 0 : index
    %c0_15 = arith.constant 0 : index
    %28 = vector.load %arg8[%c0_14, %c0_15] : memref<1x32xf32, #tpu.memory_space<vmem>>, vector<1x32xf32>
    %29 = vector.broadcast %28 : vector<1x32xf32> to vector<128x32xf32>
    %30 = arith.addf %27, %29 : vector<128x32xf32>
    %cst_16 = arith.constant 0.000000e+00 : f32
    %31 = vector.broadcast %cst_16 : f32 to vector<128x32xf32>
    %32 = arith.maximumf %30, %31 : vector<128x32xf32>
    %c0_17 = arith.constant 0 : index
    %c0_18 = arith.constant 0 : index
    %33 = vector.load %arg9[%c0_17, %c0_18] : memref<128x32xf32, #tpu.memory_space<vmem>>, vector<128x32xf32>
    tpu.vector_store %arg9[%c0_17, %c0_18], %32 {strides = array<i32>} : memref<128x32xf32, #tpu.memory_space<vmem>>, vector<128x32xf32>,
    %34 = tpu.iota {dimensions = array<i32: 0>} : vector<128x128xi32>
    %35 = tpu.iota {dimensions = array<i32: 1>} : vector<128x128xi32>
    %36 = arith.subi %34, %35 : vector<128x128xi32>
    %37 = arith.sitofp %10 : vector<128x1xi32> to vector<128x1xf32>
    %c1_i32 = arith.constant 1 : i32
    %38 = vector.broadcast %c1_i32 : i32 to vector<128x128xi32>
    %39 = arith.cmpi eq, %36, %38 : vector<128x128xi32>
    %40 = arith.extui %39 : vector<128x128xi1> to vector<128x128xi32>
    %41 = arith.sitofp %40 : vector<128x128xi32> to vector<128x128xf32>
    %cst_19 = arith.constant dense<0.000000e+00> : vector<128x32xf32>
    %42 = tpu.matmul %41, %32, %cst_19 {dimension_numbers = #tpu.dot_dimension_numbers<[1], [0], [0], [1], [0, 0, 1, 1], [], []>} : vector<128x128xf32>, vector<128x32xf32>, vector<128x32xf32> -> vector<128x32xf32>
    %cst_20 = arith.constant dense<0.000000e+00> : vector<128x1xf32>
    %43 = tpu.matmul %41, %37, %cst_20 {dimension_numbers = #tpu.dot_dimension_numbers<[1], [0], [0], [1], [0, 0, 1, 1], [], []>} : vector<128x128xf32>, vector<128x1xf32>, vector<128x1xf32> -> vector<128x1xf32>
    %44 = arith.cmpf oeq, %43, %37 : vector<128x1xf32>
    %45 = arith.maximumf %32, %42 : vector<128x32xf32>
    %46 = vector.shape_cast %44 : vector<128x1xi1> to vector<128x1xi1>
    %47 = vector.broadcast %46 : vector<128x1xi1> to vector<128x32xi1>
    %48 = arith.select %47, %45, %32 : vector<128x32xi1>, vector<128x32xf32>
    %c2_i32 = arith.constant 2 : i32
    %49 = vector.broadcast %c2_i32 : i32 to vector<128x128xi32>
    %50 = arith.cmpi eq, %36, %49 : vector<128x128xi32>
    %51 = arith.extui %50 : vector<128x128xi1> to vector<128x128xi32>
    %52 = arith.sitofp %51 : vector<128x128xi32> to vector<128x128xf32>
    %cst_21 = arith.constant dense<0.000000e+00> : vector<128x32xf32>
    %53 = tpu.matmul %52, %48, %cst_21 {dimension_numbers = #tpu.dot_dimension_numbers<[1], [0], [0], [1], [0, 0, 1, 1], [], []>} : vector<128x128xf32>, vector<128x32xf32>, vector<128x32xf32> -> vector<128x32xf32>
    %cst_22 = arith.constant dense<0.000000e+00> : vector<128x1xf32>
    %54 = tpu.matmul %52, %37, %cst_22 {dimension_numbers = #tpu.dot_dimension_numbers<[1], [0], [0], [1], [0, 0, 1, 1], [], []>} : vector<128x128xf32>, vector<128x1xf32>, vector<128x1xf32> -> vector<128x1xf32>
    %55 = arith.cmpf oeq, %54, %37 : vector<128x1xf32>
    %56 = arith.maximumf %48, %53 : vector<128x32xf32>
    %57 = vector.shape_cast %55 : vector<128x1xi1> to vector<128x1xi1>
    %58 = vector.broadcast %57 : vector<128x1xi1> to vector<128x32xi1>
    %59 = arith.select %58, %56, %48 : vector<128x32xi1>, vector<128x32xf32>
    %c4_i32 = arith.constant 4 : i32
    %60 = vector.broadcast %c4_i32 : i32 to vector<128x128xi32>
    %61 = arith.cmpi eq, %36, %60 : vector<128x128xi32>
    %62 = arith.extui %61 : vector<128x128xi1> to vector<128x128xi32>
    %63 = arith.sitofp %62 : vector<128x128xi32> to vector<128x128xf32>
    %cst_23 = arith.constant dense<0.000000e+00> : vector<128x32xf32>
    %64 = tpu.matmul %63, %59, %cst_23 {dimension_numbers = #tpu.dot_dimension_numbers<[1], [0], [0], [1], [0, 0, 1, 1], [], []>} : vector<128x128xf32>, vector<128x32xf32>, vector<128x32xf32> -> vector<128x32xf32>
    %cst_24 = arith.constant dense<0.000000e+00> : vector<128x1xf32>
    %65 = tpu.matmul %63, %37, %cst_24 {dimension_numbers = #tpu.dot_dimension_numbers<[1], [0], [0], [1], [0, 0, 1, 1], [], []>} : vector<128x128xf32>, vector<128x1xf32>, vector<128x1xf32> -> vector<128x1xf32>
    %66 = arith.cmpf oeq, %65, %37 : vector<128x1xf32>
    %67 = arith.maximumf %59, %64 : vector<128x32xf32>
    %68 = vector.shape_cast %66 : vector<128x1xi1> to vector<128x1xi1>
    %69 = vector.broadcast %68 : vector<128x1xi1> to vector<128x32xi1>
    %70 = arith.select %69, %67, %59 : vector<128x32xi1>, vector<128x32xf32>
    %c8_i32 = arith.constant 8 : i32
    %71 = vector.broadcast %c8_i32 : i32 to vector<128x128xi32>
    %72 = arith.cmpi eq, %36, %71 : vector<128x128xi32>
    %73 = arith.extui %72 : vector<128x128xi1> to vector<128x128xi32>
    %74 = arith.sitofp %73 : vector<128x128xi32> to vector<128x128xf32>
    %cst_25 = arith.constant dense<0.000000e+00> : vector<128x32xf32>
    %75 = tpu.matmul %74, %70, %cst_25 {dimension_numbers = #tpu.dot_dimension_numbers<[1], [0], [0], [1], [0, 0, 1, 1], [], []>} : vector<128x128xf32>, vector<128x32xf32>, vector<128x32xf32> -> vector<128x32xf32>
    %cst_26 = arith.constant dense<0.000000e+00> : vector<128x1xf32>
    %76 = tpu.matmul %74, %37, %cst_26 {dimension_numbers = #tpu.dot_dimension_numbers<[1], [0], [0], [1], [0, 0, 1, 1], [], []>} : vector<128x128xf32>, vector<128x1xf32>, vector<128x1xf32> -> vector<128x1xf32>
    %77 = arith.cmpf oeq, %76, %37 : vector<128x1xf32>
    %78 = arith.maximumf %70, %75 : vector<128x32xf32>
    %79 = vector.shape_cast %77 : vector<128x1xi1> to vector<128x1xi1>
    %80 = vector.broadcast %79 : vector<128x1xi1> to vector<128x32xi1>
    %81 = arith.select %80, %78, %70 : vector<128x32xi1>, vector<128x32xf32>
    %c16_i32 = arith.constant 16 : i32
    %82 = vector.broadcast %c16_i32 : i32 to vector<128x128xi32>
    %83 = arith.cmpi eq, %36, %82 : vector<128x128xi32>
    %84 = arith.extui %83 : vector<128x128xi1> to vector<128x128xi32>
    %85 = arith.sitofp %84 : vector<128x128xi32> to vector<128x128xf32>
    %cst_27 = arith.constant dense<0.000000e+00> : vector<128x32xf32>
    %86 = tpu.matmul %85, %81, %cst_27 {dimension_numbers = #tpu.dot_dimension_numbers<[1], [0], [0], [1], [0, 0, 1, 1], [], []>} : vector<128x128xf32>, vector<128x32xf32>, vector<128x32xf32> -> vector<128x32xf32>
    %cst_28 = arith.constant dense<0.000000e+00> : vector<128x1xf32>
    %87 = tpu.matmul %85, %37, %cst_28 {dimension_numbers = #tpu.dot_dimension_numbers<[1], [0], [0], [1], [0, 0, 1, 1], [], []>} : vector<128x128xf32>, vector<128x1xf32>, vector<128x1xf32> -> vector<128x1xf32>
    %88 = arith.cmpf oeq, %87, %37 : vector<128x1xf32>
    %89 = arith.maximumf %81, %86 : vector<128x32xf32>
    %90 = vector.shape_cast %88 : vector<128x1xi1> to vector<128x1xi1>
    %91 = vector.broadcast %90 : vector<128x1xi1> to vector<128x32xi1>
    %92 = arith.select %91, %89, %81 : vector<128x32xi1>, vector<128x32xf32>
    %c32_i32 = arith.constant 32 : i32
    %93 = vector.broadcast %c32_i32 : i32 to vector<128x128xi32>
    %94 = arith.cmpi eq, %36, %93 : vector<128x128xi32>
    %95 = arith.extui %94 : vector<128x128xi1> to vector<128x128xi32>
    %96 = arith.sitofp %95 : vector<128x128xi32> to vector<128x128xf32>
    %cst_29 = arith.constant dense<0.000000e+00> : vector<128x32xf32>
    %97 = tpu.matmul %96, %92, %cst_29 {dimension_numbers = #tpu.dot_dimension_numbers<[1], [0], [0], [1], [0, 0, 1, 1], [], []>} : vector<128x128xf32>, vector<128x32xf32>, vector<128x32xf32> -> vector<128x32xf32>
    %cst_30 = arith.constant dense<0.000000e+00> : vector<128x1xf32>
    %98 = tpu.matmul %96, %37, %cst_30 {dimension_numbers = #tpu.dot_dimension_numbers<[1], [0], [0], [1], [0, 0, 1, 1], [], []>} : vector<128x128xf32>, vector<128x1xf32>, vector<128x1xf32> -> vector<128x1xf32>
    %99 = arith.cmpf oeq, %98, %37 : vector<128x1xf32>
    %100 = arith.maximumf %92, %97 : vector<128x32xf32>
    %101 = vector.shape_cast %99 : vector<128x1xi1> to vector<128x1xi1>
    %102 = vector.broadcast %101 : vector<128x1xi1> to vector<128x32xi1>
    %103 = arith.select %102, %100, %92 : vector<128x32xi1>, vector<128x32xf32>
    %c64_i32 = arith.constant 64 : i32
    %104 = vector.broadcast %c64_i32 : i32 to vector<128x128xi32>
    %105 = arith.cmpi eq, %36, %104 : vector<128x128xi32>
    %106 = arith.extui %105 : vector<128x128xi1> to vector<128x128xi32>
    %107 = arith.sitofp %106 : vector<128x128xi32> to vector<128x128xf32>
    %cst_31 = arith.constant dense<0.000000e+00> : vector<128x32xf32>
    %108 = tpu.matmul %107, %103, %cst_31 {dimension_numbers = #tpu.dot_dimension_numbers<[1], [0], [0], [1], [0, 0, 1, 1], [], []>} : vector<128x128xf32>, vector<128x32xf32>, vector<128x32xf32> -> vector<128x32xf32>
    %cst_32 = arith.constant dense<0.000000e+00> : vector<128x1xf32>
    %109 = tpu.matmul %107, %37, %cst_32 {dimension_numbers = #tpu.dot_dimension_numbers<[1], [0], [0], [1], [0, 0, 1, 1], [], []>} : vector<128x128xf32>, vector<128x1xf32>, vector<128x1xf32> -> vector<128x1xf32>
    %110 = arith.cmpf oeq, %109, %37 : vector<128x1xf32>
    %111 = arith.maximumf %103, %108 : vector<128x32xf32>
    %112 = vector.shape_cast %110 : vector<128x1xi1> to vector<128x1xi1>
    %113 = vector.broadcast %112 : vector<128x1xi1> to vector<128x32xi1>
    %114 = arith.select %113, %111, %103 : vector<128x32xi1>, vector<128x32xf32>
    %c-1_i32 = arith.constant -1 : i32
    %115 = vector.broadcast %c-1_i32 : i32 to vector<128x128xi32>
    %116 = arith.cmpi eq, %36, %115 : vector<128x128xi32>
    %117 = arith.extui %116 : vector<128x128xi1> to vector<128x128xi32>
    %118 = arith.sitofp %117 : vector<128x128xi32> to vector<128x128xf32>
    %cst_33 = arith.constant dense<0.000000e+00> : vector<128x1xf32>
    %119 = tpu.matmul %118, %37, %cst_33 {dimension_numbers = #tpu.dot_dimension_numbers<[1], [0], [0], [1], [0, 0, 1, 1], [], []>} : vector<128x128xf32>, vector<128x1xf32>, vector<128x1xf32> -> vector<128x1xf32>
    %120 = tpu.iota {dimensions = array<i32: 0>} : vector<128x1xi32>
    %121 = arith.cmpf one, %119, %37 : vector<128x1xf32>
    %c127_i32 = arith.constant 127 : i32
    %122 = vector.broadcast %c127_i32 : i32 to vector<128x1xi32>
    %123 = arith.cmpi eq, %120, %122 : vector<128x1xi32>
    %124 = arith.ori %121, %123 : vector<128x1xi1>
    %125 = vector.broadcast %124 : vector<128x1xi1> to vector<128x256xi1>
    %126 = arith.andi %13, %125 : vector<128x256xi1>
    %127 = arith.extui %126 : vector<128x256xi1> to vector<128x256xi32>
    %128 = arith.sitofp %127 : vector<128x256xi32> to vector<128x256xf32>
    %cst_34 = arith.constant dense<0.000000e+00> : vector<256x32xf32>
    %129 = tpu.matmul %128, %114, %cst_34 {dimension_numbers = #tpu.dot_dimension_numbers<[0], [0], [1], [1], [0, 1, 1, 1], [], []>} : vector<128x256xf32>, vector<128x32xf32>, vector<256x32xf32> -> vector<256x32xf32>
    %130 = arith.index_cast %3 : i32 to index
    %c0_35 = arith.constant 0 : index
    %131 = vector.load %arg10[%130, %c0_35] : memref<256x32xf32, #tpu.memory_space<vmem>>, vector<256x32xf32>
    %132 = arith.maximumf %131, %129 : vector<256x32xf32>
    %133 = arith.index_cast %3 : i32 to index
    %c0_36 = arith.constant 0 : index
    %134 = vector.load %arg10[%133, %c0_36] : memref<256x32xf32, #tpu.memory_space<vmem>>, vector<256x32xf32>
    tpu.vector_store %arg10[%133, %c0_36], %132 {strides = array<i32>} : memref<256x32xf32, #tpu.memory_space<vmem>>, vector<256x32xf32>,
    return
  }
  func.func @transform_0(%arg0: i32, %arg1: memref<1xi32, #tpu.memory_space<smem>>) -> (i32, i32) {
    %c0_i32 = arith.constant 0 : i32
    %c0_i32_0 = arith.constant 0 : i32
    return %arg0, %c0_i32 : i32, i32
  }
  func.func @transform_1(%arg0: i32, %arg1: memref<1xi32, #tpu.memory_space<smem>>) -> (i32, i32) {
    %c0_i32 = arith.constant 0 : i32
    %c0_i32_0 = arith.constant 0 : i32
    return %arg0, %c0_i32 : i32, i32
  }
  func.func @transform_2(%arg0: i32, %arg1: memref<1xi32, #tpu.memory_space<smem>>) -> (i32, i32) {
    %c0_i32 = arith.constant 0 : i32
    %c0_i32_0 = arith.constant 0 : i32
    %c0_i32_1 = arith.constant 0 : i32
    return %c0_i32, %c0_i32_0 : i32, i32
  }
  func.func @transform_3(%arg0: i32, %arg1: memref<1xi32, #tpu.memory_space<smem>>) -> (i32, i32) {
    %c0_i32 = arith.constant 0 : i32
    %c0_i32_0 = arith.constant 0 : i32
    %c0_i32_1 = arith.constant 0 : i32
    return %c0_i32, %c0_i32_0 : i32, i32
  }
  func.func @transform_4(%arg0: i32, %arg1: memref<1xi32, #tpu.memory_space<smem>>) -> (i32, i32) {
    %c0_i32 = arith.constant 0 : i32
    %c0_i32_0 = arith.constant 0 : i32
    %c0_i32_1 = arith.constant 0 : i32
    return %c0_i32, %c0_i32_0 : i32, i32
  }
  func.func @transform_5(%arg0: i32, %arg1: memref<1xi32, #tpu.memory_space<smem>>) -> (i32, i32) {
    %c0_i32 = arith.constant 0 : i32
    %c0_i32_0 = arith.constant 0 : i32
    %c0_i32_1 = arith.constant 0 : i32
    return %c0_i32, %c0_i32_0 : i32, i32
  }
  func.func @transform_6(%arg0: i32, %arg1: memref<1xi32, #tpu.memory_space<smem>>) -> (i32, i32) {
    %c0_i32 = arith.constant 0 : i32
    %c0_i32_0 = arith.constant 0 : i32
    %c0_i32_1 = arith.constant 0 : i32
    return %c0_i32, %c0_i32_0 : i32, i32
  }
  func.func @transform_7(%arg0: i32, %arg1: memref<1xi32, #tpu.memory_space<smem>>) -> (i32, i32) {
    %c0_i32 = arith.constant 0 : i32
    %c0_i32_0 = arith.constant 0 : i32
    return %arg0, %c0_i32 : i32, i32
  }
  func.func @transform_8(%arg0: i32, %arg1: memref<1xi32, #tpu.memory_space<smem>>) -> (i32, i32) {
    %c0_i32 = arith.constant 0 : i32
    %c0_i32_0 = arith.constant 0 : i32
    %c0_i32_1 = arith.constant 0 : i32
    return %c0_i32, %c0_i32_0 : i32, i32
  }
}

</mosaic_0001>

<llo_original>
// kernel: _forward.3
$region0: #{_forward.3}
  #allocation0 [shape = 'u32[]', space=smem, size = 0x4, offset = 0x4, fixed_abs, tag = 'smem constant byte address 0x4 - core index']
  #allocation1 [shape = 'u32[144,128]{1,0:T(1,128)}', space=vmem, size = 0x12000, scoped, tag = 'internal scratch']
  #allocation2 [shape = 's32[1]{0}', space=sflag, size = 0x4, scoped, tag = 'scoped memory for _forward.3']
  #allocation3 [shape = 's32[1]{0:T(128)S(6)}', space=smem, size = 0x200, scoped, tag = 'prefetched SMEM operand 0']
  %s0 = inlined_call_operand.<no memory space> [shape: s32[1], index: 0, kind: input, shape index: {}]
  %s1 = inlined_call_operand.vmem [shape: f32[128,8], index: 1, kind: input, shape index: {}]
  %s2 = inlined_call_operand.vmem [shape: s32[128,1], index: 2, kind: input, shape index: {}]
  %s3 = inlined_call_operand.vmem [shape: f32[256,8], index: 3, kind: output, shape index: {}]
  %s4 = sld [smem:[#allocation0]]
  $region22: #{_forward.3} parent=0
    _
  %s6 = ssub.s32 1, %s4
  %s7 = scalar_select 0, %s6, %s4
  %8 = sst [smem:[#allocation3]] %s0
  // Predicated region
  $region2: #{_forward.3} parent=0 // pred_check
    _
  $region3: #{_forward.3} parent=0 // pred_check_branch
    %10 = sbr.rel (0) target = $region5
  $region4: #{_forward.3} parent=0 // pred_region
    _
  $region5: #{_forward.3} parent=0 // pred_fallthru
    _
  // Predicated region
  $region6: #{_forward.3} parent=0 // pred_check
    _
  $region7: #{_forward.3} parent=0 // pred_check_branch
    %12 = sbr.rel (0) target = $region9
  $region8: #{_forward.3} parent=0 // pred_region
    _
  $region9: #{_forward.3} parent=0 // pred_fallthru
    _
  %s13 = sld [smem:[#allocation3]]
  %s14 = smul.u32 %s13, 128
  %p15 = scmp.eq.s32.totalorder 0, 0
  // Predicated region
  $region10: #{_forward.3} parent=0 // pred_check
    %p16 = pneg %p15
  $region11: #{_forward.3} parent=0 // pred_check_branch
    %18 = sbr.rel (%p16) target = $region13
  $region12: #{_forward.3} parent=0 // pred_region
    %vm19 = vcmask 64512
    %20 = vst.msk [vmem:[%s3] sm:$0xff] %vm19, 0.0
    %21 = vst.msk [vmem:[%s3 + $0x8] sm:$0xff] %vm19, 0.0
    %22 = vst.msk [vmem:[%s3 + $0x10] sm:$0xff] %vm19, 0.0
    %23 = vst.msk [vmem:[%s3 + $0x18] sm:$0xff] %vm19, 0.0
    %24 = vst.msk [vmem:[%s3 + $0x20] sm:$0xff] %vm19, 0.0
    %25 = vst.msk [vmem:[%s3 + $0x28] sm:$0xff] %vm19, 0.0
    %26 = vst.msk [vmem:[%s3 + $0x30] sm:$0xff] %vm19, 0.0
    %27 = vst.msk [vmem:[%s3 + $0x38] sm:$0xff] %vm19, 0.0
    %28 = vst.msk [vmem:[%s3 + $0x40] sm:$0xff] %vm19, 0.0
    %29 = vst.msk [vmem:[%s3 + $0x48] sm:$0xff] %vm19, 0.0
    %30 = vst.msk [vmem:[%s3 + $0x50] sm:$0xff] %vm19, 0.0
    %31 = vst.msk [vmem:[%s3 + $0x58] sm:$0xff] %vm19, 0.0
    %32 = vst.msk [vmem:[%s3 + $0x60] sm:$0xff] %vm19, 0.0
    %33 = vst.msk [vmem:[%s3 + $0x68] sm:$0xff] %vm19, 0.0
    %34 = vst.msk [vmem:[%s3 + $0x70] sm:$0xff] %vm19, 0.0
    %35 = vst.msk [vmem:[%s3 + $0x78] sm:$0xff] %vm19, 0.0
    %36 = vst.msk [vmem:[%s3 + $0x80] sm:$0xff] %vm19, 0.0
    %37 = vst.msk [vmem:[%s3 + $0x88] sm:$0xff] %vm19, 0.0
    %38 = vst.msk [vmem:[%s3 + $0x90] sm:$0xff] %vm19, 0.0
    %39 = vst.msk [vmem:[%s3 + $0x98] sm:$0xff] %vm19, 0.0
    %40 = vst.msk [vmem:[%s3 + $0xa0] sm:$0xff] %vm19, 0.0
    %41 = vst.msk [vmem:[%s3 + $0xa8] sm:$0xff] %vm19, 0.0
    %42 = vst.msk [vmem:[%s3 + $0xb0] sm:$0xff] %vm19, 0.0
    %43 = vst.msk [vmem:[%s3 + $0xb8] sm:$0xff] %vm19, 0.0
    %44 = vst.msk [vmem:[%s3 + $0xc0] sm:$0xff] %vm19, 0.0
    %45 = vst.msk [vmem:[%s3 + $0xc8] sm:$0xff] %vm19, 0.0
    %46 = vst.msk [vmem:[%s3 + $0xd0] sm:$0xff] %vm19, 0.0
    %47 = vst.msk [vmem:[%s3 + $0xd8] sm:$0xff] %vm19, 0.0
    %48 = vst.msk [vmem:[%s3 + $0xe0] sm:$0xff] %vm19, 0.0
    %49 = vst.msk [vmem:[%s3 + $0xe8] sm:$0xff] %vm19, 0.0
    %50 = vst.msk [vmem:[%s3 + $0xf0] sm:$0xff] %vm19, 0.0
    %51 = vst.msk [vmem:[%s3 + $0xf8] sm:$0xff] %vm19, 0.0
  $region13: #{_forward.3} parent=0 // pred_fallthru
    _
  %v52 = vld [vmem:[%s2] sm:$0xff]
  %v53 = vld [vmem:[%s2 + $0x8] sm:$0xff]
  %v54 = vld [vmem:[%s2 + $0x10] sm:$0xff]
  %v55 = vld [vmem:[%s2 + $0x18] sm:$0xff]
  %v56 = vld [vmem:[%s2 + $0x20] sm:$0xff]
  %v57 = vld [vmem:[%s2 + $0x28] sm:$0xff]
  %v58 = vld [vmem:[%s2 + $0x30] sm:$0xff]
  %v59 = vld [vmem:[%s2 + $0x38] sm:$0xff]
  %v60 = vld [vmem:[%s2 + $0x40] sm:$0xff]
  %v61 = vld [vmem:[%s2 + $0x48] sm:$0xff]
  %v62 = vld [vmem:[%s2 + $0x50] sm:$0xff]
  %v63 = vld [vmem:[%s2 + $0x58] sm:$0xff]
  %v64 = vld [vmem:[%s2 + $0x60] sm:$0xff]
  %v65 = vld [vmem:[%s2 + $0x68] sm:$0xff]
  %v66 = vld [vmem:[%s2 + $0x70] sm:$0xff]
  %v67 = vld [vmem:[%s2 + $0x78] sm:$0xff]
  %v68 = vstv %s14
  %v69 = vsub.s32 %v52, %v68
  %v70 = vsub.s32 %v53, %v68
  %v71 = vsub.s32 %v54, %v68
  %v72 = vsub.s32 %v55, %v68
  %v73 = vsub.s32 %v56, %v68
  %v74 = vsub.s32 %v57, %v68
  %v75 = vsub.s32 %v58, %v68
  %v76 = vsub.s32 %v59, %v68
  %v77 = vsub.s32 %v60, %v68
  %v78 = vsub.s32 %v61, %v68
  %v79 = vsub.s32 %v62, %v68
  %v80 = vsub.s32 %v63, %v68
  %v81 = vsub.s32 %v64, %v68
  %v82 = vsub.s32 %v65, %v68
  %v83 = vsub.s32 %v66, %v68
  %v84 = vsub.s32 %v67, %v68
  %v85 = vlaneseq
  %v86 = vand.u32 %v85, 127
  %v87 = vadd.s32 %v86, 128
  %88 = vset.pattern.permute.xlu0 0
  %89 = vperm.xlu0 %88, %v69
  %v90 = vpop.permute.xlu0 %89
  %91 = vset.pattern.permute.xlu0 0
  %92 = vperm.xlu0 %91, %v70
  %v93 = vpop.permute.xlu0 %92
  %94 = vset.pattern.permute.xlu0 0
  %95 = vperm.xlu0 %94, %v71
  %v96 = vpop.permute.xlu0 %95
  %97 = vset.pattern.permute.xlu0 0
  %98 = vperm.xlu0 %97, %v72
  %v99 = vpop.permute.xlu0 %98
  %100 = vset.pattern.permute.xlu0 0
  %101 = vperm.xlu0 %100, %v73
  %v102 = vpop.permute.xlu0 %101
  %103 = vset.pattern.permute.xlu0 0
  %104 = vperm.xlu0 %103, %v74
  %v105 = vpop.permute.xlu0 %104
  %106 = vset.pattern.permute.xlu0 0
  %107 = vperm.xlu0 %106, %v75
  %v108 = vpop.permute.xlu0 %107
  %109 = vset.pattern.permute.xlu0 0
  %110 = vperm.xlu0 %109, %v76
  %v111 = vpop.permute.xlu0 %110
  %112 = vset.pattern.permute.xlu0 0
  %113 = vperm.xlu0 %112, %v77
  %v114 = vpop.permute.xlu0 %113
  %115 = vset.pattern.permute.xlu0 0
  %116 = vperm.xlu0 %115, %v78
  %v117 = vpop.permute.xlu0 %116
  %118 = vset.pattern.permute.xlu0 0
  %119 = vperm.xlu0 %118, %v79
  %v120 = vpop.permute.xlu0 %119
  %121 = vset.pattern.permute.xlu0 0
  %122 = vperm.xlu0 %121, %v80
  %v123 = vpop.permute.xlu0 %122
  %124 = vset.pattern.permute.xlu0 0
  %125 = vperm.xlu0 %124, %v81
  %v126 = vpop.permute.xlu0 %125
  %127 = vset.pattern.permute.xlu0 0
  %128 = vperm.xlu0 %127, %v82
  %v129 = vpop.permute.xlu0 %128
  %130 = vset.pattern.permute.xlu0 0
  %131 = vperm.xlu0 %130, %v83
  %v132 = vpop.permute.xlu0 %131
  %133 = vset.pattern.permute.xlu0 0
  %134 = vperm.xlu0 %133, %v84
  %v135 = vpop.permute.xlu0 %134
  %vm136 = vcmp.eq.s32.totalorder %v90, %v86
  %vm137 = vcmp.eq.s32.totalorder %v90, %v87
  %vm138 = vcmp.eq.s32.totalorder %v93, %v86
  %vm139 = vcmp.eq.s32.totalorder %v93, %v87
  %vm140 = vcmp.eq.s32.totalorder %v96, %v86
  %vm141 = vcmp.eq.s32.totalorder %v96, %v87
  %vm142 = vcmp.eq.s32.totalorder %v99, %v86
  %vm143 = vcmp.eq.s32.totalorder %v99, %v87
  %vm144 = vcmp.eq.s32.totalorder %v102, %v86
  %vm145 = vcmp.eq.s32.totalorder %v102, %v87
  %vm146 = vcmp.eq.s32.totalorder %v105, %v86
  %vm147 = vcmp.eq.s32.totalorder %v105, %v87
  %vm148 = vcmp.eq.s32.totalorder %v108, %v86
  %vm149 = vcmp.eq.s32.totalorder %v108, %v87
  %vm150 = vcmp.eq.s32.totalorder %v111, %v86
  %vm151 = vcmp.eq.s32.totalorder %v111, %v87
  %vm152 = vcmp.eq.s32.totalorder %v114, %v86
  %vm153 = vcmp.eq.s32.totalorder %v114, %v87
  %vm154 = vcmp.eq.s32.totalorder %v117, %v86
  %vm155 = vcmp.eq.s32.totalorder %v117, %v87
  %vm156 = vcmp.eq.s32.totalorder %v120, %v86
  %vm157 = vcmp.eq.s32.totalorder %v120, %v87
  %vm158 = vcmp.eq.s32.totalorder %v123, %v86
  %vm159 = vcmp.eq.s32.totalorder %v123, %v87
  %vm160 = vcmp.eq.s32.totalorder %v126, %v86
  %vm161 = vcmp.eq.s32.totalorder %v126, %v87
  %vm162 = vcmp.eq.s32.totalorder %v129, %v86
  %vm163 = vcmp.eq.s32.totalorder %v129, %v87
  %vm164 = vcmp.eq.s32.totalorder %v132, %v86
  %vm165 = vcmp.eq.s32.totalorder %v132, %v87
  %vm166 = vcmp.eq.s32.totalorder %v135, %v86
  %vm167 = vcmp.eq.s32.totalorder %v135, %v87
  %v168 = vsel %vm136, 1, 0
  %v169 = vsel %vm137, 1, 0
  %v170 = vsel %vm138, 1, 0
  %v171 = vsel %vm139, 1, 0
  %v172 = vsel %vm140, 1, 0
  %v173 = vsel %vm141, 1, 0
  %v174 = vsel %vm142, 1, 0
  %v175 = vsel %vm143, 1, 0
  %v176 = vsel %vm144, 1, 0
  %v177 = vsel %vm145, 1, 0
  %v178 = vsel %vm146, 1, 0
  %v179 = vsel %vm147, 1, 0
  %v180 = vsel %vm148, 1, 0
  %v181 = vsel %vm149, 1, 0
  %v182 = vsel %vm150, 1, 0
  %v183 = vsel %vm151, 1, 0
  %v184 = vsel %vm152, 1, 0
  %v185 = vsel %vm153, 1, 0
  %v186 = vsel %vm154, 1, 0
  %v187 = vsel %vm155, 1, 0
  %v188 = vsel %vm156, 1, 0
  %v189 = vsel %vm157, 1, 0
  %v190 = vsel %vm158, 1, 0
  %v191 = vsel %vm159, 1, 0
  %v192 = vsel %vm160, 1, 0
  %v193 = vsel %vm161, 1, 0
  %v194 = vsel %vm162, 1, 0
  %v195 = vsel %vm163, 1, 0
  %v196 = vsel %vm164, 1, 0
  %v197 = vsel %vm165, 1, 0
  %v198 = vsel %vm166, 1, 0
  %v199 = vsel %vm167, 1, 0
  %v200 = vcvt.s32.f32 %v168
  %v201 = vcvt.s32.f32 %v169
  %v202 = vcvt.s32.f32 %v170
  %v203 = vcvt.s32.f32 %v171
  %v204 = vcvt.s32.f32 %v172
  %v205 = vcvt.s32.f32 %v173
  %v206 = vcvt.s32.f32 %v174
  %v207 = vcvt.s32.f32 %v175
  %v208 = vcvt.s32.f32 %v176
  %v209 = vcvt.s32.f32 %v177
  %v210 = vcvt.s32.f32 %v178
  %v211 = vcvt.s32.f32 %v179
  %v212 = vcvt.s32.f32 %v180
  %v213 = vcvt.s32.f32 %v181
  %v214 = vcvt.s32.f32 %v182
  %v215 = vcvt.s32.f32 %v183
  %v216 = vcvt.s32.f32 %v184
  %v217 = vcvt.s32.f32 %v185
  %v218 = vcvt.s32.f32 %v186
  %v219 = vcvt.s32.f32 %v187
  %v220 = vcvt.s32.f32 %v188
  %v221 = vcvt.s32.f32 %v189
  %v222 = vcvt.s32.f32 %v190
  %v223 = vcvt.s32.f32 %v191
  %v224 = vcvt.s32.f32 %v192
  %v225 = vcvt.s32.f32 %v193
  %v226 = vcvt.s32.f32 %v194
  %v227 = vcvt.s32.f32 %v195
  %v228 = vcvt.s32.f32 %v196
  %v229 = vcvt.s32.f32 %v197
  %v230 = vcvt.s32.f32 %v198
  %v231 = vcvt.s32.f32 %v199
  %v232 = vld [vmem:[%s1] sm:$0xff]
  %v233 = vld [vmem:[%s1 + $0x8] sm:$0xff]
  %v234 = vld [vmem:[%s1 + $0x10] sm:$0xff]
  %v235 = vld [vmem:[%s1 + $0x18] sm:$0xff]
  %v236 = vld [vmem:[%s1 + $0x20] sm:$0xff]
  %v237 = vld [vmem:[%s1 + $0x28] sm:$0xff]
  %v238 = vld [vmem:[%s1 + $0x30] sm:$0xff]
  %v239 = vld [vmem:[%s1 + $0x38] sm:$0xff]
  %v240 = vld [vmem:[%s1 + $0x40] sm:$0xff]
  %v241 = vld [vmem:[%s1 + $0x48] sm:$0xff]
  %v242 = vld [vmem:[%s1 + $0x50] sm:$0xff]
  %v243 = vld [vmem:[%s1 + $0x58] sm:$0xff]
  %v244 = vld [vmem:[%s1 + $0x60] sm:$0xff]
  %v245 = vld [vmem:[%s1 + $0x68] sm:$0xff]
  %v246 = vld [vmem:[%s1 + $0x70] sm:$0xff]
  %v247 = vld [vmem:[%s1 + $0x78] sm:$0xff]
  %248 = vxpose.xlu0.b32.start [1/16] %v200, 128
  %249 = vxpose.xlu0.b32.cont [2/16] %v202, 128
  %250 = vxpose.xlu0.b32.cont [3/16] %v204, 128
  %251 = vxpose.xlu0.b32.cont [4/16] %v206, 128
  %252 = vxpose.xlu0.b32.cont [5/16] %v208, 128
  %253 = vxpose.xlu0.b32.cont [6/16] %v210, 128
  %254 = vxpose.xlu0.b32.cont [7/16] %v212, 128
  %255 = vxpose.xlu0.b32.cont [8/16] %v214, 128
  %256 = vxpose.xlu0.b32.cont [9/16] %v216, 128
  %257 = vxpose.xlu0.b32.cont [10/16] %v218, 128
  %258 = vxpose.xlu0.b32.cont [11/16] %v220, 128
  %259 = vxpose.xlu0.b32.cont [12/16] %v222, 128
  %260 = vxpose.xlu0.b32.cont [13/16] %v224, 128
  %261 = vxpose.xlu0.b32.cont [14/16] %v226, 128
  %262 = vxpose.xlu0.b32.cont [15/16] %v228, 128
  %263 = vxpose.xlu0.b32.end [16/16] %v230, 128
  %v264 = vpop.trf.xlu0
  %v265 = vpop.trf.xlu0
  %v266 = vpop.trf.xlu0
  %v267 = vpop.trf.xlu0
  %v268 = vpop.trf.xlu0
  %v269 = vpop.trf.xlu0
  %v270 = vpop.trf.xlu0
  %v271 = vpop.trf.xlu0
  %v272 = vpop.trf.xlu0
  %v273 = vpop.trf.xlu0
  %v274 = vpop.trf.xlu0
  %v275 = vpop.trf.xlu0
  %v276 = vpop.trf.xlu0
  %v277 = vpop.trf.xlu0
  %v278 = vpop.trf.xlu0
  %v279 = vpop.trf.xlu0
  %280 = vxpose.xlu0.b32.start [1/16] %v201, 128
  %281 = vxpose.xlu0.b32.cont [2/16] %v203, 128
  %282 = vxpose.xlu0.b32.cont [3/16] %v205, 128
  %283 = vxpose.xlu0.b32.cont [4/16] %v207, 128
  %284 = vxpose.xlu0.b32.cont [5/16] %v209, 128
  %285 = vxpose.xlu0.b32.cont [6/16] %v211, 128
  %286 = vxpose.xlu0.b32.cont [7/16] %v213, 128
  %287 = vxpose.xlu0.b32.cont [8/16] %v215, 128
  %288 = vxpose.xlu0.b32.cont [9/16] %v217, 128
  %289 = vxpose.xlu0.b32.cont [10/16] %v219, 128
  %290 = vxpose.xlu0.b32.cont [11/16] %v221, 128
  %291 = vxpose.xlu0.b32.cont [12/16] %v223, 128
  %292 = vxpose.xlu0.b32.cont [13/16] %v225, 128
  %293 = vxpose.xlu0.b32.cont [14/16] %v227, 128
  %294 = vxpose.xlu0.b32.cont [15/16] %v229, 128
  %295 = vxpose.xlu0.b32.end [16/16] %v231, 128
  %v296 = vpop.trf.xlu0
  %v297 = vpop.trf.xlu0
  %v298 = vpop.trf.xlu0
  %v299 = vpop.trf.xlu0
  %v300 = vpop.trf.xlu0
  %v301 = vpop.trf.xlu0
  %v302 = vpop.trf.xlu0
  %v303 = vpop.trf.xlu0
  %v304 = vpop.trf.xlu0
  %v305 = vpop.trf.xlu0
  %v306 = vpop.trf.xlu0
  %v307 = vpop.trf.xlu0
  %v308 = vpop.trf.xlu0
  %v309 = vpop.trf.xlu0
  %v310 = vpop.trf.xlu0
  %v311 = vpop.trf.xlu0
  %312 = vmatprep.subr.mxu0 0.0
  %313 = vmatpush1.msra.mxu0 %v232
  %314 = vmatprep.subr.mxu0 0.0
  %315 = vmatpush1.msra.mxu0 %v233
  %316 = vmatprep.subr.mxu0 0.0
  %317 = vmatpush1.msra.mxu0 %v234
  %318 = vmatprep.subr.mxu0 0.0
  %319 = vmatpush1.msra.mxu0 %v235
  %320 = vmatprep.subr.mxu0 0.0
  %321 = vmatpush1.msra.mxu0 %v236
  %322 = vmatprep.subr.mxu0 0.0
  %323 = vmatpush1.msra.mxu0 %v237
  %324 = vmatprep.subr.mxu0 0.0
  %325 = vmatpush1.msra.mxu0 %v238
  %326 = vmatprep.subr.mxu0 0.0
  %327 = vmatpush1.msra.mxu0 %v239
  %328 = vmatprep.subr.mxu0 0.0
  %329 = vmatpush1.msra.mxu0 %v240
  %330 = vmatprep.subr.mxu0 0.0
  %331 = vmatpush1.msra.mxu0 %v241
  %332 = vmatprep.subr.mxu0 0.0
  %333 = vmatpush1.msra.mxu0 %v242
  %334 = vmatprep.subr.mxu0 0.0
  %335 = vmatpush1.msra.mxu0 %v243
  %336 = vmatprep.subr.mxu0 0.0
  %337 = vmatpush1.msra.mxu0 %v244
  %338 = vmatprep.subr.mxu0 0.0
  %339 = vmatpush1.msra.mxu0 %v245
  %340 = vmatprep.subr.mxu0 0.0
  %341 = vmatpush1.msra.mxu0 %v246
  %342 = vmatprep.subr.mxu0 0.0
  %343 = vmatpush1.msra.mxu0 %v247
  %344 = vmatprep.subr.mxu0 0.0
  %345 = vmatpush1.msra.mxu0 0.0
  %346 = vmatprep.subr.mxu0 0.0
  %347 = vmatpush1.msra.mxu0 0.0
  %348 = vmatprep.subr.mxu0 0.0
  %349 = vmatpush1.msra.mxu0 0.0
  %350 = vmatprep.subr.mxu0 0.0
  %351 = vmatpush1.msra.mxu0 0.0
  %352 = vmatprep.subr.mxu0 0.0
  %353 = vmatpush1.msra.mxu0 0.0
  %354 = vmatprep.subr.mxu0 0.0
  %355 = vmatpush1.msra.mxu0 0.0
  %356 = vmatprep.subr.mxu0 0.0
  %357 = vmatpush1.msra.mxu0 0.0
  %358 = vmatprep.subr.mxu0 0.0
  %359 = vmatpush1.msra.mxu0 0.0
  %360 = vmatprep.subr.mxu0 0.0
  %361 = vmatpush1.msra.mxu0 0.0
  %362 = vmatprep.subr.mxu0 0.0
  %363 = vmatpush1.msra.mxu0 0.0
  %364 = vmatprep.subr.mxu0 0.0
  %365 = vmatpush1.msra.mxu0 0.0
  %366 = vmatprep.subr.mxu0 0.0
  %367 = vmatpush1.msra.mxu0 0.0
  %368 = vmatprep.subr.mxu0 0.0
  %369 = vmatpush1.msra.mxu0 0.0
  %370 = vmatprep.subr.mxu0 0.0
  %371 = vmatpush1.msra.mxu0 0.0
  %372 = vmatprep.subr.mxu0 0.0
  %373 = vmatpush1.msra.mxu0 0.0
  %374 = vmatprep.subr.mxu0 0.0
  %375 = vmatpush1.msra.mxu0 0.0
  %376 = vmatprep.mubr.f32.mxu0 0.0
  %377 = vmatmul.mubr.f32.gmra.mrb[0].mxu0 %v264
  %v378 = vpop.f32.mrb[0].mxu0
  %v379 = vadd.f32 0.0, %v378
  %v380 = vpop.f32.mrb[0].mxu0
  %381 = vmatprep.mubr.f32.mxu0 0.0
  %382 = vmatmul.mubr.f32.gmra.mrb[0].mxu0 %v265
  %v383 = vpop.f32.mrb[0].mxu0
  %v384 = vadd.f32 0.0, %v383
  %v385 = vpop.f32.mrb[0].mxu0
  %386 = vmatprep.mubr.f32.mxu0 0.0
  %387 = vmatmul.mubr.f32.gmra.mrb[0].mxu0 %v266
  %v388 = vpop.f32.mrb[0].mxu0
  %v389 = vadd.f32 0.0, %v388
  %v390 = vpop.f32.mrb[0].mxu0
  %391 = vmatprep.mubr.f32.mxu0 0.0
  %392 = vmatmul.mubr.f32.gmra.mrb[0].mxu0 %v267
  %v393 = vpop.f32.mrb[0].mxu0
  %v394 = vadd.f32 0.0, %v393
  %v395 = vpop.f32.mrb[0].mxu0
  %396 = vmatprep.mubr.f32.mxu0 0.0
  %397 = vmatmul.mubr.f32.gmra.mrb[0].mxu0 %v268
  %v398 = vpop.f32.mrb[0].mxu0
  %v399 = vadd.f32 0.0, %v398
  %v400 = vpop.f32.mrb[0].mxu0
  %401 = vmatprep.mubr.f32.mxu0 0.0
  %402 = vmatmul.mubr.f32.gmra.mrb[0].mxu0 %v269
  %v403 = vpop.f32.mrb[0].mxu0
  %v404 = vadd.f32 0.0, %v403
  %v405 = vpop.f32.mrb[0].mxu0
  %406 = vmatprep.mubr.f32.mxu0 0.0
  %407 = vmatmul.mubr.f32.gmra.mrb[0].mxu0 %v270
  %v408 = vpop.f32.mrb[0].mxu0
  %v409 = vadd.f32 0.0, %v408
  %v410 = vpop.f32.mrb[0].mxu0
  %411 = vmatprep.mubr.f32.mxu0 0.0
  %412 = vmatmul.mubr.f32.gmra.mrb[0].mxu0 %v271
  %v413 = vpop.f32.mrb[0].mxu0
  %v414 = vadd.f32 0.0, %v413
  %v415 = vpop.f32.mrb[0].mxu0
  %416 = vmatprep.mubr.f32.mxu0 0.0
  %417 = vmatmul.mubr.f32.gmra.mrb[0].mxu0 %v272
  %v418 = vpop.f32.mrb[0].mxu0
  %v419 = vadd.f32 0.0, %v418
  %v420 = vpop.f32.mrb[0].mxu0
  %421 = vmatprep.mubr.f32.mxu0 0.0
  %422 = vmatmul.mubr.f32.gmra.mrb[0].mxu0 %v273
  %v423 = vpop.f32.mrb[0].mxu0
  %v424 = vadd.f32 0.0, %v423
  %v425 = vpop.f32.mrb[0].mxu0
  %426 = vmatprep.mubr.f32.mxu0 0.0
  %427 = vmatmul.mubr.f32.gmra.mrb[0].mxu0 %v274
  %v428 = vpop.f32.mrb[0].mxu0
  %v429 = vadd.f32 0.0, %v428
  %v430 = vpop.f32.mrb[0].mxu0
  %431 = vmatprep.mubr.f32.mxu0 0.0
  %432 = vmatmul.mubr.f32.gmra.mrb[0].mxu0 %v275
  %v433 = vpop.f32.mrb[0].mxu0
  %v434 = vadd.f32 0.0, %v433
  %v435 = vpop.f32.mrb[0].mxu0
  %436 = vmatprep.mubr.f32.mxu0 0.0
  %437 = vmatmul.mubr.f32.gmra.mrb[0].mxu0 %v276
  %v438 = vpop.f32.mrb[0].mxu0
  %v439 = vadd.f32 0.0, %v438
  %v440 = vpop.f32.mrb[0].mxu0
  %441 = vmatprep.mubr.f32.mxu0 0.0
  %442 = vmatmul.mubr.f32.gmra.mrb[0].mxu0 %v277
  %v443 = vpop.f32.mrb[0].mxu0
  %v444 = vadd.f32 0.0, %v443
  %v445 = vpop.f32.mrb[0].mxu0
  %446 = vmatprep.mubr.f32.mxu0 0.0
  %447 = vmatmul.mubr.f32.gmra.mrb[0].mxu0 %v278
  %v448 = vpop.f32.mrb[0].mxu0
  %v449 = vadd.f32 0.0, %v448
  %v450 = vpop.f32.mrb[0].mxu0
  %451 = vmatprep.mubr.f32.mxu0 0.0
  %452 = vmatmul.mubr.f32.gmra.mrb[0].mxu0 %v279
  %v453 = vpop.f32.mrb[0].mxu0
  %v454 = vadd.f32 0.0, %v453
  %v455 = vpop.f32.mrb[0].mxu0
  %456 = vmatprep.mubr.f32.mxu0 0.0
  %457 = vmatmul.mubr.f32.gmra.mrb[0].mxu0 %v296
  %v458 = vpop.f32.mrb[0].mxu0
  %v459 = vadd.f32 0.0, %v458
  %v460 = vpop.f32.mrb[0].mxu0
  %461 = vmatprep.mubr.f32.mxu0 0.0
  %462 = vmatmul.mubr.f32.gmra.mrb[0].mxu0 %v297
  %v463 = vpop.f32.mrb[0].mxu0
  %v464 = vadd.f32 0.0, %v463
  %v465 = vpop.f32.mrb[0].mxu0
  %466 = vmatprep.mubr.f32.mxu0 0.0
  %467 = vmatmul.mubr.f32.gmra.mrb[0].mxu0 %v298
  %v468 = vpop.f32.mrb[0].mxu0
  %v469 = vadd.f32 0.0, %v468
  %v470 = vpop.f32.mrb[0].mxu0
  %471 = vmatprep.mubr.f32.mxu0 0.0
  %472 = vmatmul.mubr.f32.gmra.mrb[0].mxu0 %v299
  %v473 = vpop.f32.mrb[0].mxu0
  %v474 = vadd.f32 0.0, %v473
  %v475 = vpop.f32.mrb[0].mxu0
  %476 = vmatprep.mubr.f32.mxu0 0.0
  %477 = vmatmul.mubr.f32.gmra.mrb[0].mxu0 %v300
  %v478 = vpop.f32.mrb[0].mxu0
  %v479 = vadd.f32 0.0, %v478
  %v480 = vpop.f32.mrb[0].mxu0
  %481 = vmatprep.mubr.f32.mxu0 0.0
  %482 = vmatmul.mubr.f32.gmra.mrb[0].mxu0 %v301
  %v483 = vpop.f32.mrb[0].mxu0
  %v484 = vadd.f32 0.0, %v483
  %v485 = vpop.f32.mrb[0].mxu0
  %486 = vmatprep.mubr.f32.mxu0 0.0
  %487 = vmatmul.mubr.f32.gmra.mrb[0].mxu0 %v302
  %v488 = vpop.f32.mrb[0].mxu0
  %v489 = vadd.f32 0.0, %v488
  %v490 = vpop.f32.mrb[0].mxu0
  %491 = vmatprep.mubr.f32.mxu0 0.0
  %492 = vmatmul.mubr.f32.gmra.mrb[0].mxu0 %v303
  %v493 = vpop.f32.mrb[0].mxu0
  %v494 = vadd.f32 0.0, %v493
  %v495 = vpop.f32.mrb[0].mxu0
  %496 = vmatprep.mubr.f32.mxu0 0.0
  %497 = vmatmul.mubr.f32.gmra.mrb[0].mxu0 %v304
  %v498 = vpop.f32.mrb[0].mxu0
  %v499 = vadd.f32 0.0, %v498
  %v500 = vpop.f32.mrb[0].mxu0
  %501 = vmatprep.mubr.f32.mxu0 0.0
  %502 = vmatmul.mubr.f32.gmra.mrb[0].mxu0 %v305
  %v503 = vpop.f32.mrb[0].mxu0
  %v504 = vadd.f32 0.0, %v503
  %v505 = vpop.f32.mrb[0].mxu0
  %506 = vmatprep.mubr.f32.mxu0 0.0
  %507 = vmatmul.mubr.f32.gmra.mrb[0].mxu0 %v306
  %v508 = vpop.f32.mrb[0].mxu0
  %v509 = vadd.f32 0.0, %v508
  %v510 = vpop.f32.mrb[0].mxu0
  %511 = vmatprep.mubr.f32.mxu0 0.0
  %512 = vmatmul.mubr.f32.gmra.mrb[0].mxu0 %v307
  %v513 = vpop.f32.mrb[0].mxu0
  %v514 = vadd.f32 0.0, %v513
  %v515 = vpop.f32.mrb[0].mxu0
  %516 = vmatprep.mubr.f32.mxu0 0.0
  %517 = vmatmul.mubr.f32.gmra.mrb[0].mxu0 %v308
  %v518 = vpop.f32.mrb[0].mxu0
  %v519 = vadd.f32 0.0, %v518
  %v520 = vpop.f32.mrb[0].mxu0
  %521 = vmatprep.mubr.f32.mxu0 0.0
  %522 = vmatmul.mubr.f32.gmra.mrb[0].mxu0 %v309
  %v523 = vpop.f32.mrb[0].mxu0
  %v524 = vadd.f32 0.0, %v523
  %v525 = vpop.f32.mrb[0].mxu0
  %526 = vmatprep.mubr.f32.mxu0 0.0
  %527 = vmatmul.mubr.f32.gmra.mrb[0].mxu0 %v310
  %v528 = vpop.f32.mrb[0].mxu0
  %v529 = vadd.f32 0.0, %v528
  %v530 = vpop.f32.mrb[0].mxu0
  %531 = vmatprep.mubr.f32.mxu0 0.0
  %532 = vmatmul.mubr.f32.gmra.mrb[0].mxu0 %v311
  %v533 = vpop.f32.mrb[0].mxu0
  %v534 = vadd.f32 0.0, %v533
  %v535 = vpop.f32.mrb[0].mxu0
  %536 = vdwg.mxu0
  %s537 = scalar_lea.vmem %s3, %s14
  %v538 = vld [vmem:[%s537] sm:$0xff]
  %v539 = vld [vmem:[%s537 + $0x8] sm:$0xff]
  %v540 = vld [vmem:[%s537 + $0x10] sm:$0xff]
  %v541 = vld [vmem:[%s537 + $0x18] sm:$0xff]
  %v542 = vld [vmem:[%s537 + $0x20] sm:$0xff]
  %v543 = vld [vmem:[%s537 + $0x28] sm:$0xff]
  %v544 = vld [vmem:[%s537 + $0x30] sm:$0xff]
  %v545 = vld [vmem:[%s537 + $0x38] sm:$0xff]
  %v546 = vld [vmem:[%s537 + $0x40] sm:$0xff]
  %v547 = vld [vmem:[%s537 + $0x48] sm:$0xff]
  %v548 = vld [vmem:[%s537 + $0x50] sm:$0xff]
  %v549 = vld [vmem:[%s537 + $0x58] sm:$0xff]
  %v550 = vld [vmem:[%s537 + $0x60] sm:$0xff]
  %v551 = vld [vmem:[%s537 + $0x68] sm:$0xff]
  %v552 = vld [vmem:[%s537 + $0x70] sm:$0xff]
  %v553 = vld [vmem:[%s537 + $0x78] sm:$0xff]
  %v554 = vld [vmem:[%s537 + $0x80] sm:$0xff]
  %v555 = vld [vmem:[%s537 + $0x88] sm:$0xff]
  %v556 = vld [vmem:[%s537 + $0x90] sm:$0xff]
  %v557 = vld [vmem:[%s537 + $0x98] sm:$0xff]
  %v558 = vld [vmem:[%s537 + $0xa0] sm:$0xff]
  %v559 = vld [vmem:[%s537 + $0xa8] sm:$0xff]
  %v560 = vld [vmem:[%s537 + $0xb0] sm:$0xff]
  %v561 = vld [vmem:[%s537 + $0xb8] sm:$0xff]
  %v562 = vld [vmem:[%s537 + $0xc0] sm:$0xff]
  %v563 = vld [vmem:[%s537 + $0xc8] sm:$0xff]
  %v564 = vld [vmem:[%s537 + $0xd0] sm:$0xff]
  %v565 = vld [vmem:[%s537 + $0xd8] sm:$0xff]
  %v566 = vld [vmem:[%s537 + $0xe0] sm:$0xff]
  %v567 = vld [vmem:[%s537 + $0xe8] sm:$0xff]
  %v568 = vld [vmem:[%s537 + $0xf0] sm:$0xff]
  %v569 = vld [vmem:[%s537 + $0xf8] sm:$0xff]
  %v570 = vadd.f32 %v538, %v379
  %v571 = vadd.f32 %v539, %v384
  %v572 = vadd.f32 %v540, %v389
  %v573 = vadd.f32 %v541, %v394
  %v574 = vadd.f32 %v542, %v399
  %v575 = vadd.f32 %v543, %v404
  %v576 = vadd.f32 %v544, %v409
  %v577 = vadd.f32 %v545, %v414
  %v578 = vadd.f32 %v546, %v419
  %v579 = vadd.f32 %v547, %v424
  %v580 = vadd.f32 %v548, %v429
  %v581 = vadd.f32 %v549, %v434
  %v582 = vadd.f32 %v550, %v439
  %v583 = vadd.f32 %v551, %v444
  %v584 = vadd.f32 %v552, %v449
  %v585 = vadd.f32 %v553, %v454
  %v586 = vadd.f32 %v554, %v459
  %v587 = vadd.f32 %v555, %v464
  %v588 = vadd.f32 %v556, %v469
  %v589 = vadd.f32 %v557, %v474
  %v590 = vadd.f32 %v558, %v479
  %v591 = vadd.f32 %v559, %v484
  %v592 = vadd.f32 %v560, %v489
  %v593 = vadd.f32 %v561, %v494
  %v594 = vadd.f32 %v562, %v499
  %v595 = vadd.f32 %v563, %v504
  %v596 = vadd.f32 %v564, %v509
  %v597 = vadd.f32 %v565, %v514
  %v598 = vadd.f32 %v566, %v519
  %v599 = vadd.f32 %v567, %v524
  %v600 = vadd.f32 %v568, %v529
  %v601 = vadd.f32 %v569, %v534
  %vm602 = vcmask 64512
  %603 = vst.msk [vmem:[%s537] sm:$0xff] %vm602, %v570
  %604 = vst.msk [vmem:[%s537 + $0x8] sm:$0xff] %vm602, %v571
  %605 = vst.msk [vmem:[%s537 + $0x10] sm:$0xff] %vm602, %v572
  %606 = vst.msk [vmem:[%s537 + $0x18] sm:$0xff] %vm602, %v573
  %607 = vst.msk [vmem:[%s537 + $0x20] sm:$0xff] %vm602, %v574
  %608 = vst.msk [vmem:[%s537 + $0x28] sm:$0xff] %vm602, %v575
  %609 = vst.msk [vmem:[%s537 + $0x30] sm:$0xff] %vm602, %v576
  %610 = vst.msk [vmem:[%s537 + $0x38] sm:$0xff] %vm602, %v577
  %611 = vst.msk [vmem:[%s537 + $0x40] sm:$0xff] %vm602, %v578
  %612 = vst.msk [vmem:[%s537 + $0x48] sm:$0xff] %vm602, %v579
  %613 = vst.msk [vmem:[%s537 + $0x50] sm:$0xff] %vm602, %v580
  %614 = vst.msk [vmem:[%s537 + $0x58] sm:$0xff] %vm602, %v581
  %615 = vst.msk [vmem:[%s537 + $0x60] sm:$0xff] %vm602, %v582
  %616 = vst.msk [vmem:[%s537 + $0x68] sm:$0xff] %vm602, %v583
  %617 = vst.msk [vmem:[%s537 + $0x70] sm:$0xff] %vm602, %v584
  %618 = vst.msk [vmem:[%s537 + $0x78] sm:$0xff] %vm602, %v585
  %619 = vst.msk [vmem:[%s537 + $0x80] sm:$0xff] %vm602, %v586
  %620 = vst.msk [vmem:[%s537 + $0x88] sm:$0xff] %vm602, %v587
  %621 = vst.msk [vmem:[%s537 + $0x90] sm:$0xff] %vm602, %v588
  %622 = vst.msk [vmem:[%s537 + $0x98] sm:$0xff] %vm602, %v589
  %623 = vst.msk [vmem:[%s537 + $0xa0] sm:$0xff] %vm602, %v590
  %624 = vst.msk [vmem:[%s537 + $0xa8] sm:$0xff] %vm602, %v591
  %625 = vst.msk [vmem:[%s537 + $0xb0] sm:$0xff] %vm602, %v592
  %626 = vst.msk [vmem:[%s537 + $0xb8] sm:$0xff] %vm602, %v593
  %627 = vst.msk [vmem:[%s537 + $0xc0] sm:$0xff] %vm602, %v594
  %628 = vst.msk [vmem:[%s537 + $0xc8] sm:$0xff] %vm602, %v595
  %629 = vst.msk [vmem:[%s537 + $0xd0] sm:$0xff] %vm602, %v596
  %630 = vst.msk [vmem:[%s537 + $0xd8] sm:$0xff] %vm602, %v597
  %631 = vst.msk [vmem:[%s537 + $0xe0] sm:$0xff] %vm602, %v598
  %632 = vst.msk [vmem:[%s537 + $0xe8] sm:$0xff] %vm602, %v599
  %633 = vst.msk [vmem:[%s537 + $0xf0] sm:$0xff] %vm602, %v600
  %634 = vst.msk [vmem:[%s537 + $0xf8] sm:$0xff] %vm602, %v601
  // Predicated region
  $region14: #{_forward.3} parent=0 // pred_check
    _
  $region15: #{_forward.3} parent=0 // pred_check_branch
    %636 = sbr.rel (0) target = $region17
  $region16: #{_forward.3} parent=0 // pred_region
    _
  $region17: #{_forward.3} parent=0 // pred_fallthru
    _
  // Predicated region
  $region18: #{_forward.3} parent=0 // pred_check
    _
  $region19: #{_forward.3} parent=0 // pred_check_branch
    %638 = sbr.rel (0) target = $region21
  $region20: #{_forward.3} parent=0 // pred_region
    _
  $region21: #{_forward.3} parent=0 // pred_fallthru
    _

// kernel: _forward.5
$region0: #{_forward.5}
  #allocation0 [shape = 'u32[]', space=smem, size = 0x4, offset = 0x4, fixed_abs, tag = 'smem constant byte address 0x4 - core index']
  #allocation1 [shape = 'u32[144,128]{1,0:T(1,128)}', space=vmem, size = 0x12000, scoped, tag = 'internal scratch']
  #allocation2 [shape = 's32[1]{0}', space=sflag, size = 0x4, scoped, tag = 'scoped memory for _forward.5']
  #allocation3 [shape = 's32[1]{0:T(128)S(6)}', space=smem, size = 0x200, scoped, tag = 'prefetched SMEM operand 0']
  %s0 = inlined_call_operand.<no memory space> [shape: s32[1], index: 0, kind: input, shape index: {}]
  %s1 = inlined_call_operand.vmem [shape: f32[128,32], index: 1, kind: input, shape index: {}]
  %s2 = inlined_call_operand.vmem [shape: s32[128,1], index: 2, kind: input, shape index: {}]
  %s3 = inlined_call_operand.vmem [shape: f32[256,32], index: 3, kind: input, shape index: {}]
  %s4 = inlined_call_operand.vmem [shape: f32[32,32], index: 4, kind: input, shape index: {}]
  %s5 = inlined_call_operand.vmem [shape: f32[32,32], index: 5, kind: input, shape index: {}]
  %s6 = inlined_call_operand.vmem [shape: f32[1,32], index: 6, kind: input, shape index: {}]
  %s7 = inlined_call_operand.vmem [shape: f32[1,32], index: 7, kind: input, shape index: {}]
  %s8 = inlined_call_operand.vmem [shape: f32[256,32], index: 8, kind: output, shape index: {}]
  %s9 = sld [smem:[#allocation0]]
  $region42: #{_forward.5} parent=0
    _
  %s11 = ssub.s32 1, %s9
  %s12 = scalar_select 0, %s11, %s9
  %13 = sst [smem:[#allocation3]] %s0
  // Predicated region
  $region2: #{_forward.5} parent=0 // pred_check
    _
  $region3: #{_forward.5} parent=0 // pred_check_branch
    %15 = sbr.rel (0) target = $region5
  $region4: #{_forward.5} parent=0 // pred_region
    _
  $region5: #{_forward.5} parent=0 // pred_fallthru
    _
  // Predicated region
  $region6: #{_forward.5} parent=0 // pred_check
    _
  $region7: #{_forward.5} parent=0 // pred_check_branch
    %17 = sbr.rel (0) target = $region9
  $region8: #{_forward.5} parent=0 // pred_region
    _
  $region9: #{_forward.5} parent=0 // pred_fallthru
    _
  // Predicated region
  $region10: #{_forward.5} parent=0 // pred_check
    _
  $region11: #{_forward.5} parent=0 // pred_check_branch
    %19 = sbr.rel (0) target = $region13
  $region12: #{_forward.5} parent=0 // pred_region
    _
  $region13: #{_forward.5} parent=0 // pred_fallthru
    _
  // Predicated region
  $region14: #{_forward.5} parent=0 // pred_check
    _
  $region15: #{_forward.5} parent=0 // pred_check_branch
    %21 = sbr.rel (0) target = $region17
  $region16: #{_forward.5} parent=0 // pred_region
    _
  $region17: #{_forward.5} parent=0 // pred_fallthru
    _
  // Predicated region
  $region18: #{_forward.5} parent=0 // pred_check
    _
  $region19: #{_forward.5} parent=0 // pred_check_branch
    %23 = sbr.rel (0) target = $region21
  $region20: #{_forward.5} parent=0 // pred_region
    _
  $region21: #{_forward.5} parent=0 // pred_fallthru
    _
  // Predicated region
  $region22: #{_forward.5} parent=0 // pred_check
    _
  $region23: #{_forward.5} parent=0 // pred_check_branch
    %25 = sbr.rel (0) target = $region25
  $region24: #{_forward.5} parent=0 // pred_region
    _
  $region25: #{_forward.5} parent=0 // pred_fallthru
    _
  // Predicated region
  $region26: #{_forward.5} parent=0 // pred_check
    _
  $region27: #{_forward.5} parent=0 // pred_check_branch
    %27 = sbr.rel (0) target = $region29
  $region28: #{_forward.5} parent=0 // pred_region
    _
  $region29: #{_forward.5} parent=0 // pred_fallthru
    _
  %s29 = sld [smem:[#allocation3]]
  %s30 = smul.u32 %s29, 128
  %p31 = scmp.eq.s32.totalorder 0, 0
  // Predicated region
  $region30: #{_forward.5} parent=0 // pred_check
    %p32 = pneg %p31
  $region31: #{_forward.5} parent=0 // pred_check_branch
    %34 = sbr.rel (%p32) target = $region33
  $region32: #{_forward.5} parent=0 // pred_region
    %vm35 = vcmask 261120
    %36 = vst.msk [vmem:[%s8] sm:$0xff] %vm35, 0.0
    %37 = vst.msk [vmem:[%s8 + $0x8] sm:$0xff] %vm35, 0.0
    %38 = vst.msk [vmem:[%s8 + $0x10] sm:$0xff] %vm35, 0.0
    %39 = vst.msk [vmem:[%s8 + $0x18] sm:$0xff] %vm35, 0.0
    %40 = vst.msk [vmem:[%s8 + $0x20] sm:$0xff] %vm35, 0.0
    %41 = vst.msk [vmem:[%s8 + $0x28] sm:$0xff] %vm35, 0.0
    %42 = vst.msk [vmem:[%s8 + $0x30] sm:$0xff] %vm35, 0.0
    %43 = vst.msk [vmem:[%s8 + $0x38] sm:$0xff] %vm35, 0.0
    %44 = vst.msk [vmem:[%s8 + $0x40] sm:$0xff] %vm35, 0.0
    %45 = vst.msk [vmem:[%s8 + $0x48] sm:$0xff] %vm35, 0.0
    %46 = vst.msk [vmem:[%s8 + $0x50] sm:$0xff] %vm35, 0.0
    %47 = vst.msk [vmem:[%s8 + $0x58] sm:$0xff] %vm35, 0.0
    %48 = vst.msk [vmem:[%s8 + $0x60] sm:$0xff] %vm35, 0.0
    %49 = vst.msk [vmem:[%s8 + $0x68] sm:$0xff] %vm35, 0.0
    %50 = vst.msk [vmem:[%s8 + $0x70] sm:$0xff] %vm35, 0.0
    %51 = vst.msk [vmem:[%s8 + $0x78] sm:$0xff] %vm35, 0.0
    %52 = vst.msk [vmem:[%s8 + $0x80] sm:$0xff] %vm35, 0.0
    %53 = vst.msk [vmem:[%s8 + $0x88] sm:$0xff] %vm35, 0.0
    %54 = vst.msk [vmem:[%s8 + $0x90] sm:$0xff] %vm35, 0.0
    %55 = vst.msk [vmem:[%s8 + $0x98] sm:$0xff] %vm35, 0.0
    %56 = vst.msk [vmem:[%s8 + $0xa0] sm:$0xff] %vm35, 0.0
    %57 = vst.msk [vmem:[%s8 + $0xa8] sm:$0xff] %vm35, 0.0
    %58 = vst.msk [vmem:[%s8 + $0xb0] sm:$0xff] %vm35, 0.0
    %59 = vst.msk [vmem:[%s8 + $0xb8] sm:$0xff] %vm35, 0.0
    %60 = vst.msk [vmem:[%s8 + $0xc0] sm:$0xff] %vm35, 0.0
    %61 = vst.msk [vmem:[%s8 + $0xc8] sm:$0xff] %vm35, 0.0
    %62 = vst.msk [vmem:[%s8 + $0xd0] sm:$0xff] %vm35, 0.0
    %63 = vst.msk [vmem:[%s8 + $0xd8] sm:$0xff] %vm35, 0.0
    %64 = vst.msk [vmem:[%s8 + $0xe0] sm:$0xff] %vm35, 0.0
    %65 = vst.msk [vmem:[%s8 + $0xe8] sm:$0xff] %vm35, 0.0
    %66 = vst.msk [vmem:[%s8 + $0xf0] sm:$0xff] %vm35, 0.0
    %67 = vst.msk [vmem:[%s8 + $0xf8] sm:$0xff] %vm35, 0.0
  $region33: #{_forward.5} parent=0 // pred_fallthru
    _
  %v68 = vld [vmem:[%s2] sm:$0xff]
  %v69 = vld [vmem:[%s2 + $0x8] sm:$0xff]
  %v70 = vld [vmem:[%s2 + $0x10] sm:$0xff]
  %v71 = vld [vmem:[%s2 + $0x18] sm:$0xff]
  %v72 = vld [vmem:[%s2 + $0x20] sm:$0xff]
  %v73 = vld [vmem:[%s2 + $0x28] sm:$0xff]
  %v74 = vld [vmem:[%s2 + $0x30] sm:$0xff]
  %v75 = vld [vmem:[%s2 + $0x38] sm:$0xff]
  %v76 = vld [vmem:[%s2 + $0x40] sm:$0xff]
  %v77 = vld [vmem:[%s2 + $0x48] sm:$0xff]
  %v78 = vld [vmem:[%s2 + $0x50] sm:$0xff]
  %v79 = vld [vmem:[%s2 + $0x58] sm:$0xff]
  %v80 = vld [vmem:[%s2 + $0x60] sm:$0xff]
  %v81 = vld [vmem:[%s2 + $0x68] sm:$0xff]
  %v82 = vld [vmem:[%s2 + $0x70] sm:$0xff]
  %v83 = vld [vmem:[%s2 + $0x78] sm:$0xff]
  %v84 = vstv %s30
  %v85 = vsub.s32 %v68, %v84
  %v86 = vsub.s32 %v69, %v84
  %v87 = vsub.s32 %v70, %v84
  %v88 = vsub.s32 %v71, %v84
  %v89 = vsub.s32 %v72, %v84
  %v90 = vsub.s32 %v73, %v84
  %v91 = vsub.s32 %v74, %v84
  %v92 = vsub.s32 %v75, %v84
  %v93 = vsub.s32 %v76, %v84
  %v94 = vsub.s32 %v77, %v84
  %v95 = vsub.s32 %v78, %v84
  %v96 = vsub.s32 %v79, %v84
  %v97 = vsub.s32 %v80, %v84
  %v98 = vsub.s32 %v81, %v84
  %v99 = vsub.s32 %v82, %v84
  %v100 = vsub.s32 %v83, %v84
  %v101 = vlaneseq
  %v102 = vand.u32 %v101, 127
  %v103 = vadd.s32 %v102, 128
  %104 = vset.pattern.permute.xlu0 0
  %105 = vperm.xlu0 %104, %v85
  %v106 = vpop.permute.xlu0 %105
  %107 = vset.pattern.permute.xlu0 0
  %108 = vperm.xlu0 %107, %v86
  %v109 = vpop.permute.xlu0 %108
  %110 = vset.pattern.permute.xlu0 0
  %111 = vperm.xlu0 %110, %v87
  %v112 = vpop.permute.xlu0 %111
  %113 = vset.pattern.permute.xlu0 0
  %114 = vperm.xlu0 %113, %v88
  %v115 = vpop.permute.xlu0 %114
  %116 = vset.pattern.permute.xlu0 0
  %117 = vperm.xlu0 %116, %v89
  %v118 = vpop.permute.xlu0 %117
  %119 = vset.pattern.permute.xlu0 0
  %120 = vperm.xlu0 %119, %v90
  %v121 = vpop.permute.xlu0 %120
  %122 = vset.pattern.permute.xlu0 0
  %123 = vperm.xlu0 %122, %v91
  %v124 = vpop.permute.xlu0 %123
  %125 = vset.pattern.permute.xlu0 0
  %126 = vperm.xlu0 %125, %v92
  %v127 = vpop.permute.xlu0 %126
  %128 = vset.pattern.permute.xlu0 0
  %129 = vperm.xlu0 %128, %v93
  %v130 = vpop.permute.xlu0 %129
  %131 = vset.pattern.permute.xlu0 0
  %132 = vperm.xlu0 %131, %v94
  %v133 = vpop.permute.xlu0 %132
  %134 = vset.pattern.permute.xlu0 0
  %135 = vperm.xlu0 %134, %v95
  %v136 = vpop.permute.xlu0 %135
  %137 = vset.pattern.permute.xlu0 0
  %138 = vperm.xlu0 %137, %v96
  %v139 = vpop.permute.xlu0 %138
  %140 = vset.pattern.permute.xlu0 0
  %141 = vperm.xlu0 %140, %v97
  %v142 = vpop.permute.xlu0 %141
  %143 = vset.pattern.permute.xlu0 0
  %144 = vperm.xlu0 %143, %v98
  %v145 = vpop.permute.xlu0 %144
  %146 = vset.pattern.permute.xlu0 0
  %147 = vperm.xlu0 %146, %v99
  %v148 = vpop.permute.xlu0 %147
  %149 = vset.pattern.permute.xlu0 0
  %150 = vperm.xlu0 %149, %v100
  %v151 = vpop.permute.xlu0 %150
  %vm152 = vcmp.eq.s32.totalorder %v106, %v102
  %vm153 = vcmp.eq.s32.totalorder %v106, %v103
  %vm154 = vcmp.eq.s32.totalorder %v109, %v102
  %vm155 = vcmp.eq.s32.totalorder %v109, %v103
  %vm156 = vcmp.eq.s32.totalorder %v112, %v102
  %vm157 = vcmp.eq.s32.totalorder %v112, %v103
  %vm158 = vcmp.eq.s32.totalorder %v115, %v102
  %vm159 = vcmp.eq.s32.totalorder %v115, %v103
  %vm160 = vcmp.eq.s32.totalorder %v118, %v102
  %vm161 = vcmp.eq.s32.totalorder %v118, %v103
  %vm162 = vcmp.eq.s32.totalorder %v121, %v102
  %vm163 = vcmp.eq.s32.totalorder %v121, %v103
  %vm164 = vcmp.eq.s32.totalorder %v124, %v102
  %vm165 = vcmp.eq.s32.totalorder %v124, %v103
  %vm166 = vcmp.eq.s32.totalorder %v127, %v102
  %vm167 = vcmp.eq.s32.totalorder %v127, %v103
  %vm168 = vcmp.eq.s32.totalorder %v130, %v102
  %vm169 = vcmp.eq.s32.totalorder %v130, %v103
  %vm170 = vcmp.eq.s32.totalorder %v133, %v102
  %vm171 = vcmp.eq.s32.totalorder %v133, %v103
  %vm172 = vcmp.eq.s32.totalorder %v136, %v102
  %vm173 = vcmp.eq.s32.totalorder %v136, %v103
  %vm174 = vcmp.eq.s32.totalorder %v139, %v102
  %vm175 = vcmp.eq.s32.totalorder %v139, %v103
  %vm176 = vcmp.eq.s32.totalorder %v142, %v102
  %vm177 = vcmp.eq.s32.totalorder %v142, %v103
  %vm178 = vcmp.eq.s32.totalorder %v145, %v102
  %vm179 = vcmp.eq.s32.totalorder %v145, %v103
  %vm180 = vcmp.eq.s32.totalorder %v148, %v102
  %vm181 = vcmp.eq.s32.totalorder %v148, %v103
  %vm182 = vcmp.eq.s32.totalorder %v151, %v102
  %vm183 = vcmp.eq.s32.totalorder %v151, %v103
  %s184 = scalar_lea.vmem %s3, %s30
  %v185 = vld [vmem:[%s184] sm:$0xff]
  %v186 = vld [vmem:[%s184 + $0x8] sm:$0xff]
  %v187 = vld [vmem:[%s184 + $0x10] sm:$0xff]
  %v188 = vld [vmem:[%s184 + $0x18] sm:$0xff]
  %v189 = vld [vmem:[%s184 + $0x20] sm:$0xff]
  %v190 = vld [vmem:[%s184 + $0x28] sm:$0xff]
  %v191 = vld [vmem:[%s184 + $0x30] sm:$0xff]
  %v192 = vld [vmem:[%s184 + $0x38] sm:$0xff]
  %v193 = vld [vmem:[%s184 + $0x40] sm:$0xff]
  %v194 = vld [vmem:[%s184 + $0x48] sm:$0xff]
  %v195 = vld [vmem:[%s184 + $0x50] sm:$0xff]
  %v196 = vld [vmem:[%s184 + $0x58] sm:$0xff]
  %v197 = vld [vmem:[%s184 + $0x60] sm:$0xff]
  %v198 = vld [vmem:[%s184 + $0x68] sm:$0xff]
  %v199 = vld [vmem:[%s184 + $0x70] sm:$0xff]
  %v200 = vld [vmem:[%s184 + $0x78] sm:$0xff]
  %v201 = vld [vmem:[%s184 + $0x80] sm:$0xff]
  %v202 = vld [vmem:[%s184 + $0x88] sm:$0xff]
  %v203 = vld [vmem:[%s184 + $0x90] sm:$0xff]
  %v204 = vld [vmem:[%s184 + $0x98] sm:$0xff]
  %v205 = vld [vmem:[%s184 + $0xa0] sm:$0xff]
  %v206 = vld [vmem:[%s184 + $0xa8] sm:$0xff]
  %v207 = vld [vmem:[%s184 + $0xb0] sm:$0xff]
  %v208 = vld [vmem:[%s184 + $0xb8] sm:$0xff]
  %v209 = vld [vmem:[%s184 + $0xc0] sm:$0xff]
  %v210 = vld [vmem:[%s184 + $0xc8] sm:$0xff]
  %v211 = vld [vmem:[%s184 + $0xd0] sm:$0xff]
  %v212 = vld [vmem:[%s184 + $0xd8] sm:$0xff]
  %v213 = vld [vmem:[%s184 + $0xe0] sm:$0xff]
  %v214 = vld [vmem:[%s184 + $0xe8] sm:$0xff]
  %v215 = vld [vmem:[%s184 + $0xf0] sm:$0xff]
  %v216 = vld [vmem:[%s184 + $0xf8] sm:$0xff]
  %v217 = vpack.c.bf16 %v186, %v185
  %v218 = vpack.c.bf16 %v188, %v187
  %v219 = vpack.c.bf16 %v190, %v189
  %v220 = vpack.c.bf16 %v192, %v191
  %v221 = vpack.c.bf16 %v194, %v193
  %v222 = vpack.c.bf16 %v196, %v195
  %v223 = vpack.c.bf16 %v198, %v197
  %v224 = vpack.c.bf16 %v200, %v199
  %v225 = vpack.c.bf16 %v202, %v201
  %v226 = vpack.c.bf16 %v204, %v203
  %v227 = vpack.c.bf16 %v206, %v205
  %v228 = vpack.c.bf16 %v208, %v207
  %v229 = vpack.c.bf16 %v210, %v209
  %v230 = vpack.c.bf16 %v212, %v211
  %v231 = vpack.c.bf16 %v214, %v213
  %v232 = vpack.c.bf16 %v216, %v215
  %v233 = vsel %vm152, 1, 0
  %v234 = vsel %vm153, 1, 0
  %v235 = vsel %vm154, 1, 0
  %v236 = vsel %vm155, 1, 0
  %v237 = vsel %vm156, 1, 0
  %v238 = vsel %vm157, 1, 0
  %v239 = vsel %vm158, 1, 0
  %v240 = vsel %vm159, 1, 0
  %v241 = vsel %vm160, 1, 0
  %v242 = vsel %vm161, 1, 0
  %v243 = vsel %vm162, 1, 0
  %v244 = vsel %vm163, 1, 0
  %v245 = vsel %vm164, 1, 0
  %v246 = vsel %vm165, 1, 0
  %v247 = vsel %vm166, 1, 0
  %v248 = vsel %vm167, 1, 0
  %v249 = vsel %vm168, 1, 0
  %v250 = vsel %vm169, 1, 0
  %v251 = vsel %vm170, 1, 0
  %v252 = vsel %vm171, 1, 0
  %v253 = vsel %vm172, 1, 0
  %v254 = vsel %vm173, 1, 0
  %v255 = vsel %vm174, 1, 0
  %v256 = vsel %vm175, 1, 0
  %v257 = vsel %vm176, 1, 0
  %v258 = vsel %vm177, 1, 0
  %v259 = vsel %vm178, 1, 0
  %v260 = vsel %vm179, 1, 0
  %v261 = vsel %vm180, 1, 0
  %v262 = vsel %vm181, 1, 0
  %v263 = vsel %vm182, 1, 0
  %v264 = vsel %vm183, 1, 0
  %v265 = vcvt.s32.f32 %v233
  %v266 = vcvt.s32.f32 %v234
  %v267 = vcvt.s32.f32 %v235
  %v268 = vcvt.s32.f32 %v236
  %v269 = vcvt.s32.f32 %v237
  %v270 = vcvt.s32.f32 %v238
  %v271 = vcvt.s32.f32 %v239
  %v272 = vcvt.s32.f32 %v240
  %v273 = vcvt.s32.f32 %v241
  %v274 = vcvt.s32.f32 %v242
  %v275 = vcvt.s32.f32 %v243
  %v276 = vcvt.s32.f32 %v244
  %v277 = vcvt.s32.f32 %v245
  %v278 = vcvt.s32.f32 %v246
  %v279 = vcvt.s32.f32 %v247
  %v280 = vcvt.s32.f32 %v248
  %v281 = vcvt.s32.f32 %v249
  %v282 = vcvt.s32.f32 %v250
  %v283 = vcvt.s32.f32 %v251
  %v284 = vcvt.s32.f32 %v252
  %v285 = vcvt.s32.f32 %v253
  %v286 = vcvt.s32.f32 %v254
  %v287 = vcvt.s32.f32 %v255
  %v288 = vcvt.s32.f32 %v256
  %v289 = vcvt.s32.f32 %v257
  %v290 = vcvt.s32.f32 %v258
  %v291 = vcvt.s32.f32 %v259
  %v292 = vcvt.s32.f32 %v260
  %v293 = vcvt.s32.f32 %v261
  %v294 = vcvt.s32.f32 %v262
  %v295 = vcvt.s32.f32 %v263
  %v296 = vcvt.s32.f32 %v264
  %v297 = vpack.c.bf16 %v267, %v265
  %v298 = vpack.c.bf16 %v268, %v266
  %v299 = vpack.c.bf16 %v271, %v269
  %v300 = vpack.c.bf16 %v272, %v270
  %v301 = vpack.c.bf16 %v275, %v273
  %v302 = vpack.c.bf16 %v276, %v274
  %v303 = vpack.c.bf16 %v279, %v277
  %v304 = vpack.c.bf16 %v280, %v278
  %v305 = vpack.c.bf16 %v283, %v281
  %v306 = vpack.c.bf16 %v284, %v282
  %v307 = vpack.c.bf16 %v287, %v285
  %v308 = vpack.c.bf16 %v288, %v286
  %v309 = vpack.c.bf16 %v291, %v289
  %v310 = vpack.c.bf16 %v292, %v290
  %v311 = vpack.c.bf16 %v295, %v293
  %v312 = vpack.c.bf16 %v296, %v294
  %313 = vmatprep.subr.bf16.mxu0 0
  %314 = vmatpush1.bf16.msra.mxu0 %v217
  %315 = vmatprep.subr.bf16.mxu0 0
  %316 = vmatpush1.bf16.msra.mxu0 %v218
  %317 = vmatprep.subr.bf16.mxu0 0
  %318 = vmatpush1.bf16.msra.mxu0 %v219
  %319 = vmatprep.subr.bf16.mxu0 0
  %320 = vmatpush1.bf16.msra.mxu0 %v220
  %321 = vmatprep.subr.bf16.mxu0 0
  %322 = vmatpush1.bf16.msra.mxu0 %v221
  %323 = vmatprep.subr.bf16.mxu0 0
  %324 = vmatpush1.bf16.msra.mxu0 %v222
  %325 = vmatprep.subr.bf16.mxu0 0
  %326 = vmatpush1.bf16.msra.mxu0 %v223
  %327 = vmatprep.subr.bf16.mxu0 0
  %328 = vmatpush1.bf16.msra.mxu0 %v224
  %329 = vmatprep.subr.bf16.mxu0 0
  %330 = vmatpush1.bf16.msra.mxu0 %v225
  %331 = vmatprep.subr.bf16.mxu0 0
  %332 = vmatpush1.bf16.msra.mxu0 %v226
  %333 = vmatprep.subr.bf16.mxu0 0
  %334 = vmatpush1.bf16.msra.mxu0 %v227
  %335 = vmatprep.subr.bf16.mxu0 0
  %336 = vmatpush1.bf16.msra.mxu0 %v228
  %337 = vmatprep.subr.bf16.mxu0 0
  %338 = vmatpush1.bf16.msra.mxu0 %v229
  %339 = vmatprep.subr.bf16.mxu0 0
  %340 = vmatpush1.bf16.msra.mxu0 %v230
  %341 = vmatprep.subr.bf16.mxu0 0
  %342 = vmatpush1.bf16.msra.mxu0 %v231
  %343 = vmatprep.subr.bf16.mxu0 0
  %344 = vmatpush1.bf16.msra.mxu0 %v232
  %345 = vmatprep.mubr.bf16.mxu0 %v298
  %346 = vmatmul.mubr.bf16.gmra.mrb[0].mxu0 %v297
  %v347 = vpop.f32.mrb[0].mxu0
  %v348 = vadd.f32 0.0, %v347
  %v349 = vpop.f32.mrb[0].mxu0
  %v350 = vpop.f32.mrb[0].mxu0
  %v351 = vadd.f32 0.0, %v350
  %v352 = vpop.f32.mrb[0].mxu0
  %353 = vmatprep.mubr.bf16.mxu0 %v300
  %354 = vmatmul.mubr.bf16.gmra.mrb[0].mxu0 %v299
  %v355 = vpop.f32.mrb[0].mxu0
  %v356 = vadd.f32 0.0, %v355
  %v357 = vpop.f32.mrb[0].mxu0
  %v358 = vpop.f32.mrb[0].mxu0
  %v359 = vadd.f32 0.0, %v358
  %v360 = vpop.f32.mrb[0].mxu0
  %361 = vmatprep.mubr.bf16.mxu0 %v302
  %362 = vmatmul.mubr.bf16.gmra.mrb[0].mxu0 %v301
  %v363 = vpop.f32.mrb[0].mxu0
  %v364 = vadd.f32 0.0, %v363
  %v365 = vpop.f32.mrb[0].mxu0
  %v366 = vpop.f32.mrb[0].mxu0
  %v367 = vadd.f32 0.0, %v366
  %v368 = vpop.f32.mrb[0].mxu0
  %369 = vmatprep.mubr.bf16.mxu0 %v304
  %370 = vmatmul.mubr.bf16.gmra.mrb[0].mxu0 %v303
  %v371 = vpop.f32.mrb[0].mxu0
  %v372 = vadd.f32 0.0, %v371
  %v373 = vpop.f32.mrb[0].mxu0
  %v374 = vpop.f32.mrb[0].mxu0
  %v375 = vadd.f32 0.0, %v374
  %v376 = vpop.f32.mrb[0].mxu0
  %377 = vmatprep.mubr.bf16.mxu0 %v306
  %378 = vmatmul.mubr.bf16.gmra.mrb[0].mxu0 %v305
  %v379 = vpop.f32.mrb[0].mxu0
  %v380 = vadd.f32 0.0, %v379
  %v381 = vpop.f32.mrb[0].mxu0
  %v382 = vpop.f32.mrb[0].mxu0
  %v383 = vadd.f32 0.0, %v382
  %v384 = vpop.f32.mrb[0].mxu0
  %385 = vmatprep.mubr.bf16.mxu0 %v308
  %386 = vmatmul.mubr.bf16.gmra.mrb[0].mxu0 %v307
  %v387 = vpop.f32.mrb[0].mxu0
  %v388 = vadd.f32 0.0, %v387
  %v389 = vpop.f32.mrb[0].mxu0
  %v390 = vpop.f32.mrb[0].mxu0
  %v391 = vadd.f32 0.0, %v390
  %v392 = vpop.f32.mrb[0].mxu0
  %393 = vmatprep.mubr.bf16.mxu0 %v310
  %394 = vmatmul.mubr.bf16.gmra.mrb[0].mxu0 %v309
  %v395 = vpop.f32.mrb[0].mxu0
  %v396 = vadd.f32 0.0, %v395
  %v397 = vpop.f32.mrb[0].mxu0
  %v398 = vpop.f32.mrb[0].mxu0
  %v399 = vadd.f32 0.0, %v398
  %v400 = vpop.f32.mrb[0].mxu0
  %401 = vmatprep.mubr.bf16.mxu0 %v312
  %402 = vmatmul.mubr.bf16.gmra.mrb[0].mxu0 %v311
  %v403 = vpop.f32.mrb[0].mxu0
  %v404 = vadd.f32 0.0, %v403
  %v405 = vpop.f32.mrb[0].mxu0
  %v406 = vpop.f32.mrb[0].mxu0
  %v407 = vadd.f32 0.0, %v406
  %v408 = vpop.f32.mrb[0].mxu0
  %409 = vdwg.mxu0
  %v410 = vld [vmem:[%s1] sm:$0xff]
  %v411 = vld [vmem:[%s1 + $0x8] sm:$0xff]
  %v412 = vld [vmem:[%s1 + $0x10] sm:$0xff]
  %v413 = vld [vmem:[%s1 + $0x18] sm:$0xff]
  %v414 = vld [vmem:[%s1 + $0x20] sm:$0xff]
  %v415 = vld [vmem:[%s1 + $0x28] sm:$0xff]
  %v416 = vld [vmem:[%s1 + $0x30] sm:$0xff]
  %v417 = vld [vmem:[%s1 + $0x38] sm:$0xff]
  %v418 = vld [vmem:[%s1 + $0x40] sm:$0xff]
  %v419 = vld [vmem:[%s1 + $0x48] sm:$0xff]
  %v420 = vld [vmem:[%s1 + $0x50] sm:$0xff]
  %v421 = vld [vmem:[%s1 + $0x58] sm:$0xff]
  %v422 = vld [vmem:[%s1 + $0x60] sm:$0xff]
  %v423 = vld [vmem:[%s1 + $0x68] sm:$0xff]
  %v424 = vld [vmem:[%s1 + $0x70] sm:$0xff]
  %v425 = vld [vmem:[%s1 + $0x78] sm:$0xff]
  %v426 = vld [vmem:[%s4] sm:$0xff]
  %v427 = vld [vmem:[%s4 + $0x8] sm:$0xff]
  %v428 = vld [vmem:[%s4 + $0x10] sm:$0xff]
  %v429 = vld [vmem:[%s4 + $0x18] sm:$0xff]
  %v430 = vld [vmem:[%s5] sm:$0xff]
  %v431 = vld [vmem:[%s5 + $0x8] sm:$0xff]
  %v432 = vld [vmem:[%s5 + $0x10] sm:$0xff]
  %v433 = vld [vmem:[%s5 + $0x18] sm:$0xff]
  %vm434 = vcmask 261120
  %v436 = vsel %vm434, %v348, 0
  %v439 = vsel %vm434, %v351, 0
  %v442 = vsel %vm434, %v356, 0
  %v445 = vsel %vm434, %v359, 0
  %v448 = vsel %vm434, %v364, 0
  %v451 = vsel %vm434, %v367, 0
  %v454 = vsel %vm434, %v372, 0
  %v457 = vsel %vm434, %v375, 0
  %v460 = vsel %vm434, %v380, 0
  %v463 = vsel %vm434, %v383, 0
  %v466 = vsel %vm434, %v388, 0
  %v469 = vsel %vm434, %v391, 0
  %v472 = vsel %vm434, %v396, 0
  %v475 = vsel %vm434, %v399, 0
  %v478 = vsel %vm434, %v404, 0
  %v481 = vsel %vm434, %v407, 0
  %483 = vmatprep.subr.mxu0 0.0
  %484 = vmatpush1.msra.mxu0 %v430
  %485 = vmatprep.subr.mxu0 0.0
  %486 = vmatpush1.msra.mxu0 %v431
  %487 = vmatprep.subr.mxu0 0.0
  %488 = vmatpush1.msra.mxu0 %v432
  %489 = vmatprep.subr.mxu0 0.0
  %490 = vmatpush1.msra.mxu0 %v433
  %491 = vmatprep.subr.mxu0 0.0
  %492 = vmatpush1.msra.mxu0 0.0
  %493 = vmatprep.subr.mxu0 0.0
  %494 = vmatpush1.msra.mxu0 0.0
  %495 = vmatprep.subr.mxu0 0.0
  %496 = vmatpush1.msra.mxu0 0.0
  %497 = vmatprep.subr.mxu0 0.0
  %498 = vmatpush1.msra.mxu0 0.0
  %499 = vmatprep.subr.mxu0 0.0
  %500 = vmatpush1.msra.mxu0 0.0
  %501 = vmatprep.subr.mxu0 0.0
  %502 = vmatpush1.msra.mxu0 0.0
  %503 = vmatprep.subr.mxu0 0.0
  %504 = vmatpush1.msra.mxu0 0.0
  %505 = vmatprep.subr.mxu0 0.0
  %506 = vmatpush1.msra.mxu0 0.0
  %507 = vmatprep.subr.mxu0 0.0
  %508 = vmatpush1.msra.mxu0 0.0
  %509 = vmatprep.subr.mxu0 0.0
  %510 = vmatpush1.msra.mxu0 0.0
  %511 = vmatprep.subr.mxu0 0.0
  %512 = vmatpush1.msra.mxu0 0.0
  %513 = vmatprep.subr.mxu0 0.0
  %514 = vmatpush1.msra.mxu0 0.0
  %515 = vmatprep.subr.mxu0 0.0
  %516 = vmatpush1.msra.mxu0 0.0
  %517 = vmatprep.subr.mxu0 0.0
  %518 = vmatpush1.msra.mxu0 0.0
  %519 = vmatprep.subr.mxu0 0.0
  %520 = vmatpush1.msra.mxu0 0.0
  %521 = vmatprep.subr.mxu0 0.0
  %522 = vmatpush1.msra.mxu0 0.0
  %523 = vmatprep.subr.mxu0 0.0
  %524 = vmatpush1.msra.mxu0 0.0
  %525 = vmatprep.subr.mxu0 0.0
  %526 = vmatpush1.msra.mxu0 0.0
  %527 = vmatprep.subr.mxu0 0.0
  %528 = vmatpush1.msra.mxu0 0.0
  %529 = vmatprep.subr.mxu0 0.0
  %530 = vmatpush1.msra.mxu0 0.0
  %531 = vmatprep.subr.mxu0 0.0
  %532 = vmatpush1.msra.mxu0 0.0
  %533 = vmatprep.subr.mxu0 0.0
  %534 = vmatpush1.msra.mxu0 0.0
  %535 = vmatprep.subr.mxu0 0.0
  %536 = vmatpush1.msra.mxu0 0.0
  %537 = vmatprep.subr.mxu0 0.0
  %538 = vmatpush1.msra.mxu0 0.0
  %539 = vmatprep.subr.mxu0 0.0
  %540 = vmatpush1.msra.mxu0 0.0
  %541 = vmatprep.subr.mxu0 0.0
  %542 = vmatpush1.msra.mxu0 0.0
  %543 = vmatprep.subr.mxu0 0.0
  %544 = vmatpush1.msra.mxu0 0.0
  %545 = vmatprep.subr.mxu0 0.0
  %546 = vmatpush1.msra.mxu0 0.0
  %547 = vmatprep.mubr.f32.mxu0 0.0
  %548 = vmatmul.mubr.f32.gmra.mrb[0].mxu0 %v436
  %v549 = vpop.f32.mrb[0].mxu0
  %v550 = vadd.f32 0.0, %v549
  %v551 = vpop.f32.mrb[0].mxu0
  %552 = vmatprep.mubr.f32.mxu0 0.0
  %553 = vmatmul.mubr.f32.gmra.mrb[0].mxu0 %v439
  %v554 = vpop.f32.mrb[0].mxu0
  %v555 = vadd.f32 0.0, %v554
  %v556 = vpop.f32.mrb[0].mxu0
  %557 = vmatprep.mubr.f32.mxu0 0.0
  %558 = vmatmul.mubr.f32.gmra.mrb[0].mxu0 %v442
  %v559 = vpop.f32.mrb[0].mxu0
  %v560 = vadd.f32 0.0, %v559
  %v561 = vpop.f32.mrb[0].mxu0
  %562 = vmatprep.mubr.f32.mxu0 0.0
  %563 = vmatmul.mubr.f32.gmra.mrb[0].mxu0 %v445
  %v564 = vpop.f32.mrb[0].mxu0
  %v565 = vadd.f32 0.0, %v564
  %v566 = vpop.f32.mrb[0].mxu0
  %567 = vmatprep.mubr.f32.mxu0 0.0
  %568 = vmatmul.mubr.f32.gmra.mrb[0].mxu0 %v448
  %v569 = vpop.f32.mrb[0].mxu0
  %v570 = vadd.f32 0.0, %v569
  %v571 = vpop.f32.mrb[0].mxu0
  %572 = vmatprep.mubr.f32.mxu0 0.0
  %573 = vmatmul.mubr.f32.gmra.mrb[0].mxu0 %v451
  %v574 = vpop.f32.mrb[0].mxu0
  %v575 = vadd.f32 0.0, %v574
  %v576 = vpop.f32.mrb[0].mxu0
  %577 = vmatprep.mubr.f32.mxu0 0.0
  %578 = vmatmul.mubr.f32.gmra.mrb[0].mxu0 %v454
  %v579 = vpop.f32.mrb[0].mxu0
  %v580 = vadd.f32 0.0, %v579
  %v581 = vpop.f32.mrb[0].mxu0
  %582 = vmatprep.mubr.f32.mxu0 0.0
  %583 = vmatmul.mubr.f32.gmra.mrb[0].mxu0 %v457
  %v584 = vpop.f32.mrb[0].mxu0
  %v585 = vadd.f32 0.0, %v584
  %v586 = vpop.f32.mrb[0].mxu0
  %587 = vmatprep.mubr.f32.mxu0 0.0
  %588 = vmatmul.mubr.f32.gmra.mrb[0].mxu0 %v460
  %v589 = vpop.f32.mrb[0].mxu0
  %v590 = vadd.f32 0.0, %v589
  %v591 = vpop.f32.mrb[0].mxu0
  %592 = vmatprep.mubr.f32.mxu0 0.0
  %593 = vmatmul.mubr.f32.gmra.mrb[0].mxu0 %v463
  %v594 = vpop.f32.mrb[0].mxu0
  %v595 = vadd.f32 0.0, %v594
  %v596 = vpop.f32.mrb[0].mxu0
  %597 = vmatprep.mubr.f32.mxu0 0.0
  %598 = vmatmul.mubr.f32.gmra.mrb[0].mxu0 %v466
  %v599 = vpop.f32.mrb[0].mxu0
  %v600 = vadd.f32 0.0, %v599
  %v601 = vpop.f32.mrb[0].mxu0
  %602 = vmatprep.mubr.f32.mxu0 0.0
  %603 = vmatmul.mubr.f32.gmra.mrb[0].mxu0 %v469
  %v604 = vpop.f32.mrb[0].mxu0
  %v605 = vadd.f32 0.0, %v604
  %v606 = vpop.f32.mrb[0].mxu0
  %607 = vmatprep.mubr.f32.mxu0 0.0
  %608 = vmatmul.mubr.f32.gmra.mrb[0].mxu0 %v472
  %v609 = vpop.f32.mrb[0].mxu0
  %v610 = vadd.f32 0.0, %v609
  %v611 = vpop.f32.mrb[0].mxu0
  %612 = vmatprep.mubr.f32.mxu0 0.0
  %613 = vmatmul.mubr.f32.gmra.mrb[0].mxu0 %v475
  %v614 = vpop.f32.mrb[0].mxu0
  %v615 = vadd.f32 0.0, %v614
  %v616 = vpop.f32.mrb[0].mxu0
  %617 = vmatprep.mubr.f32.mxu0 0.0
  %618 = vmatmul.mubr.f32.gmra.mrb[0].mxu0 %v478
  %v619 = vpop.f32.mrb[0].mxu0
  %v620 = vadd.f32 0.0, %v619
  %v621 = vpop.f32.mrb[0].mxu0
  %622 = vmatprep.mubr.f32.mxu0 0.0
  %623 = vmatmul.mubr.f32.gmra.mrb[0].mxu0 %v481
  %v624 = vpop.f32.mrb[0].mxu0
  %v625 = vadd.f32 0.0, %v624
  %v626 = vpop.f32.mrb[0].mxu0
  %627 = vdwg.mxu0
  %v629 = vsel %vm434, %v410, 0
  %v632 = vsel %vm434, %v411, 0
  %v635 = vsel %vm434, %v412, 0
  %v638 = vsel %vm434, %v413, 0
  %v641 = vsel %vm434, %v414, 0
  %v644 = vsel %vm434, %v415, 0
  %v647 = vsel %vm434, %v416, 0
  %v650 = vsel %vm434, %v417, 0
  %v653 = vsel %vm434, %v418, 0
  %v656 = vsel %vm434, %v419, 0
  %v659 = vsel %vm434, %v420, 0
  %v662 = vsel %vm434, %v421, 0
  %v665 = vsel %vm434, %v422, 0
  %v668 = vsel %vm434, %v423, 0
  %v671 = vsel %vm434, %v424, 0
  %v674 = vsel %vm434, %v425, 0
  %676 = vmatprep.subr.mxu0 0.0
  %677 = vmatpush1.msra.mxu0 %v426
  %678 = vmatprep.subr.mxu0 0.0
  %679 = vmatpush1.msra.mxu0 %v427
  %680 = vmatprep.subr.mxu0 0.0
  %681 = vmatpush1.msra.mxu0 %v428
  %682 = vmatprep.subr.mxu0 0.0
  %683 = vmatpush1.msra.mxu0 %v429
  %684 = vmatprep.subr.mxu0 0.0
  %685 = vmatpush1.msra.mxu0 0.0
  %686 = vmatprep.subr.mxu0 0.0
  %687 = vmatpush1.msra.mxu0 0.0
  %688 = vmatprep.subr.mxu0 0.0
  %689 = vmatpush1.msra.mxu0 0.0
  %690 = vmatprep.subr.mxu0 0.0
  %691 = vmatpush1.msra.mxu0 0.0
  %692 = vmatprep.subr.mxu0 0.0
  %693 = vmatpush1.msra.mxu0 0.0
  %694 = vmatprep.subr.mxu0 0.0
  %695 = vmatpush1.msra.mxu0 0.0
  %696 = vmatprep.subr.mxu0 0.0
  %697 = vmatpush1.msra.mxu0 0.0
  %698 = vmatprep.subr.mxu0 0.0
  %699 = vmatpush1.msra.mxu0 0.0
  %700 = vmatprep.subr.mxu0 0.0
  %701 = vmatpush1.msra.mxu0 0.0
  %702 = vmatprep.subr.mxu0 0.0
  %703 = vmatpush1.msra.mxu0 0.0
  %704 = vmatprep.subr.mxu0 0.0
  %705 = vmatpush1.msra.mxu0 0.0
  %706 = vmatprep.subr.mxu0 0.0
  %707 = vmatpush1.msra.mxu0 0.0
  %708 = vmatprep.subr.mxu0 0.0
  %709 = vmatpush1.msra.mxu0 0.0
  %710 = vmatprep.subr.mxu0 0.0
  %711 = vmatpush1.msra.mxu0 0.0
  %712 = vmatprep.subr.mxu0 0.0
  %713 = vmatpush1.msra.mxu0 0.0
  %714 = vmatprep.subr.mxu0 0.0
  %715 = vmatpush1.msra.mxu0 0.0
  %716 = vmatprep.subr.mxu0 0.0
  %717 = vmatpush1.msra.mxu0 0.0
  %718 = vmatprep.subr.mxu0 0.0
  %719 = vmatpush1.msra.mxu0 0.0
  %720 = vmatprep.subr.mxu0 0.0
  %721 = vmatpush1.msra.mxu0 0.0
  %722 = vmatprep.subr.mxu0 0.0
  %723 = vmatpush1.msra.mxu0 0.0
  %724 = vmatprep.subr.mxu0 0.0
  %725 = vmatpush1.msra.mxu0 0.0
  %726 = vmatprep.subr.mxu0 0.0
  %727 = vmatpush1.msra.mxu0 0.0
  %728 = vmatprep.subr.mxu0 0.0
  %729 = vmatpush1.msra.mxu0 0.0
  %730 = vmatprep.subr.mxu0 0.0
  %731 = vmatpush1.msra.mxu0 0.0
  %732 = vmatprep.subr.mxu0 0.0
  %733 = vmatpush1.msra.mxu0 0.0
  %734 = vmatprep.subr.mxu0 0.0
  %735 = vmatpush1.msra.mxu0 0.0
  %736 = vmatprep.subr.mxu0 0.0
  %737 = vmatpush1.msra.mxu0 0.0
  %738 = vmatprep.subr.mxu0 0.0
  %739 = vmatpush1.msra.mxu0 0.0
  %740 = vmatprep.mubr.f32.mxu0 0.0
  %741 = vmatmul.mubr.f32.gmra.mrb[0].mxu0 %v629
  %v742 = vpop.f32.mrb[0].mxu0
  %v743 = vadd.f32 %v550, %v742
  %v744 = vpop.f32.mrb[0].mxu0
  %745 = vmatprep.mubr.f32.mxu0 0.0
  %746 = vmatmul.mubr.f32.gmra.mrb[0].mxu0 %v632
  %v747 = vpop.f32.mrb[0].mxu0
  %v748 = vadd.f32 %v555, %v747
  %v749 = vpop.f32.mrb[0].mxu0
  %750 = vmatprep.mubr.f32.mxu0 0.0
  %751 = vmatmul.mubr.f32.gmra.mrb[0].mxu0 %v635
  %v752 = vpop.f32.mrb[0].mxu0
  %v753 = vadd.f32 %v560, %v752
  %v754 = vpop.f32.mrb[0].mxu0
  %755 = vmatprep.mubr.f32.mxu0 0.0
  %756 = vmatmul.mubr.f32.gmra.mrb[0].mxu0 %v638
  %v757 = vpop.f32.mrb[0].mxu0
  %v758 = vadd.f32 %v565, %v757
  %v759 = vpop.f32.mrb[0].mxu0
  %760 = vmatprep.mubr.f32.mxu0 0.0
  %761 = vmatmul.mubr.f32.gmra.mrb[0].mxu0 %v641
  %v762 = vpop.f32.mrb[0].mxu0
  %v763 = vadd.f32 %v570, %v762
  %v764 = vpop.f32.mrb[0].mxu0
  %765 = vmatprep.mubr.f32.mxu0 0.0
  %766 = vmatmul.mubr.f32.gmra.mrb[0].mxu0 %v644
  %v767 = vpop.f32.mrb[0].mxu0
  %v768 = vadd.f32 %v575, %v767
  %v769 = vpop.f32.mrb[0].mxu0
  %770 = vmatprep.mubr.f32.mxu0 0.0
  %771 = vmatmul.mubr.f32.gmra.mrb[0].mxu0 %v647
  %v772 = vpop.f32.mrb[0].mxu0
  %v773 = vadd.f32 %v580, %v772
  %v774 = vpop.f32.mrb[0].mxu0
  %775 = vmatprep.mubr.f32.mxu0 0.0
  %776 = vmatmul.mubr.f32.gmra.mrb[0].mxu0 %v650
  %v777 = vpop.f32.mrb[0].mxu0
  %v778 = vadd.f32 %v585, %v777
  %v779 = vpop.f32.mrb[0].mxu0
  %780 = vmatprep.mubr.f32.mxu0 0.0
  %781 = vmatmul.mubr.f32.gmra.mrb[0].mxu0 %v653
  %v782 = vpop.f32.mrb[0].mxu0
  %v783 = vadd.f32 %v590, %v782
  %v784 = vpop.f32.mrb[0].mxu0
  %785 = vmatprep.mubr.f32.mxu0 0.0
  %786 = vmatmul.mubr.f32.gmra.mrb[0].mxu0 %v656
  %v787 = vpop.f32.mrb[0].mxu0
  %v788 = vadd.f32 %v595, %v787
  %v789 = vpop.f32.mrb[0].mxu0
  %790 = vmatprep.mubr.f32.mxu0 0.0
  %791 = vmatmul.mubr.f32.gmra.mrb[0].mxu0 %v659
  %v792 = vpop.f32.mrb[0].mxu0
  %v793 = vadd.f32 %v600, %v792
  %v794 = vpop.f32.mrb[0].mxu0
  %795 = vmatprep.mubr.f32.mxu0 0.0
  %796 = vmatmul.mubr.f32.gmra.mrb[0].mxu0 %v662
  %v797 = vpop.f32.mrb[0].mxu0
  %v798 = vadd.f32 %v605, %v797
  %v799 = vpop.f32.mrb[0].mxu0
  %800 = vmatprep.mubr.f32.mxu0 0.0
  %801 = vmatmul.mubr.f32.gmra.mrb[0].mxu0 %v665
  %v802 = vpop.f32.mrb[0].mxu0
  %v803 = vadd.f32 %v610, %v802
  %v804 = vpop.f32.mrb[0].mxu0
  %805 = vmatprep.mubr.f32.mxu0 0.0
  %806 = vmatmul.mubr.f32.gmra.mrb[0].mxu0 %v668
  %v807 = vpop.f32.mrb[0].mxu0
  %v808 = vadd.f32 %v615, %v807
  %v809 = vpop.f32.mrb[0].mxu0
  %810 = vmatprep.mubr.f32.mxu0 0.0
  %811 = vmatmul.mubr.f32.gmra.mrb[0].mxu0 %v671
  %v812 = vpop.f32.mrb[0].mxu0
  %v813 = vadd.f32 %v620, %v812
  %v814 = vpop.f32.mrb[0].mxu0
  %815 = vmatprep.mubr.f32.mxu0 0.0
  %816 = vmatmul.mubr.f32.gmra.mrb[0].mxu0 %v674
  %v817 = vpop.f32.mrb[0].mxu0
  %v818 = vadd.f32 %v625, %v817
  %v819 = vpop.f32.mrb[0].mxu0
  %820 = vdwg.mxu0
  %v821 = vld [vmem:[%s6] sm:$0x1]
  %v823 = vlaneseq
  %v824 = vshrl.u32 %v823, 7
  %v825 = vsub.s32 0, %v824
  %v826 = vrot.slane %v821, %v825
  %v828 = vmul.f32 %v743, %v826
  %v829 = vmul.f32 %v748, %v826
  %v830 = vmul.f32 %v753, %v826
  %v831 = vmul.f32 %v758, %v826
  %v832 = vmul.f32 %v763, %v826
  %v833 = vmul.f32 %v768, %v826
  %v834 = vmul.f32 %v773, %v826
  %v835 = vmul.f32 %v778, %v826
  %v836 = vmul.f32 %v783, %v826
  %v837 = vmul.f32 %v788, %v826
  %v838 = vmul.f32 %v793, %v826
  %v839 = vmul.f32 %v798, %v826
  %v840 = vmul.f32 %v803, %v826
  %v841 = vmul.f32 %v808, %v826
  %v842 = vmul.f32 %v813, %v826
  %v843 = vmul.f32 %v818, %v826
  %v844 = vld [vmem:[%s7] sm:$0x1]
  %v846 = vlaneseq
  %v847 = vshrl.u32 %v846, 7
  %v848 = vsub.s32 0, %v847
  %v849 = vrot.slane %v844, %v848
  %v851 = vadd.f32 %v828, %v849
  %v852 = vadd.f32 %v829, %v849
  %v853 = vadd.f32 %v830, %v849
  %v854 = vadd.f32 %v831, %v849
  %v855 = vadd.f32 %v832, %v849
  %v856 = vadd.f32 %v833, %v849
  %v857 = vadd.f32 %v834, %v849
  %v858 = vadd.f32 %v835, %v849
  %v859 = vadd.f32 %v836, %v849
  %v860 = vadd.f32 %v837, %v849
  %v861 = vadd.f32 %v838, %v849
  %v862 = vadd.f32 %v839, %v849
  %v863 = vadd.f32 %v840, %v849
  %v864 = vadd.f32 %v841, %v849
  %v865 = vadd.f32 %v842, %v849
  %v866 = vadd.f32 %v843, %v849
  %v867 = vmax.f32 %v851, 0.0
  %v868 = vmax.f32 %v852, 0.0
  %v869 = vmax.f32 %v853, 0.0
  %v870 = vmax.f32 %v854, 0.0
  %v871 = vmax.f32 %v855, 0.0
  %v872 = vmax.f32 %v856, 0.0
  %v873 = vmax.f32 %v857, 0.0
  %v874 = vmax.f32 %v858, 0.0
  %v875 = vmax.f32 %v859, 0.0
  %v876 = vmax.f32 %v860, 0.0
  %v877 = vmax.f32 %v861, 0.0
  %v878 = vmax.f32 %v862, 0.0
  %v879 = vmax.f32 %v863, 0.0
  %v880 = vmax.f32 %v864, 0.0
  %v881 = vmax.f32 %v865, 0.0
  %v882 = vmax.f32 %v866, 0.0
  %v883 = vlaneseq
  %v884 = vshrl.u32 %v883, 7
  %v885 = vadd.s32 %v884, 8
  %v886 = vadd.s32 %v884, 16
  %v887 = vadd.s32 %v884, 24
  %v888 = vadd.s32 %v884, 32
  %v889 = vadd.s32 %v884, 40
  %v890 = vadd.s32 %v884, 48
  %v891 = vadd.s32 %v884, 56
  %v892 = vadd.s32 %v884, 64
  %v893 = vadd.s32 %v884, 72
  %v894 = vadd.s32 %v884, 80
  %v895 = vadd.s32 %v884, 88
  %v896 = vadd.s32 %v884, 96
  %v897 = vadd.s32 %v884, 104
  %v898 = vadd.s32 %v884, 112
  %v899 = vadd.s32 %v884, 120
  %v900 = vsub.s32 %v884, %v102
  %v901 = vsub.s32 %v885, %v102
  %v902 = vsub.s32 %v886, %v102
  %v903 = vsub.s32 %v887, %v102
  %v904 = vsub.s32 %v888, %v102
  %v905 = vsub.s32 %v889, %v102
  %v906 = vsub.s32 %v890, %v102
  %v907 = vsub.s32 %v891, %v102
  %v908 = vsub.s32 %v892, %v102
  %v909 = vsub.s32 %v893, %v102
  %v910 = vsub.s32 %v894, %v102
  %v911 = vsub.s32 %v895, %v102
  %v912 = vsub.s32 %v896, %v102
  %v913 = vsub.s32 %v897, %v102
  %v914 = vsub.s32 %v898, %v102
  %v915 = vsub.s32 %v899, %v102
  %v916 = vcvt.s32.f32 %v85
  %v917 = vcvt.s32.f32 %v86
  %v918 = vcvt.s32.f32 %v87
  %v919 = vcvt.s32.f32 %v88
  %v920 = vcvt.s32.f32 %v89
  %v921 = vcvt.s32.f32 %v90
  %v922 = vcvt.s32.f32 %v91
  %v923 = vcvt.s32.f32 %v92
  %v924 = vcvt.s32.f32 %v93
  %v925 = vcvt.s32.f32 %v94
  %v926 = vcvt.s32.f32 %v95
  %v927 = vcvt.s32.f32 %v96
  %v928 = vcvt.s32.f32 %v97
  %v929 = vcvt.s32.f32 %v98
  %v930 = vcvt.s32.f32 %v99
  %v931 = vcvt.s32.f32 %v100
  %vm932 = vcmp.eq.s32.totalorder %v900, 1
  %vm933 = vcmp.eq.s32.totalorder %v901, 1
  %vm934 = vcmp.eq.s32.totalorder %v902, 1
  %vm935 = vcmp.eq.s32.totalorder %v903, 1
  %vm936 = vcmp.eq.s32.totalorder %v904, 1
  %vm937 = vcmp.eq.s32.totalorder %v905, 1
  %vm938 = vcmp.eq.s32.totalorder %v906, 1
  %vm939 = vcmp.eq.s32.totalorder %v907, 1
  %vm940 = vcmp.eq.s32.totalorder %v908, 1
  %vm941 = vcmp.eq.s32.totalorder %v909, 1
  %vm942 = vcmp.eq.s32.totalorder %v910, 1
  %vm943 = vcmp.eq.s32.totalorder %v911, 1
  %vm944 = vcmp.eq.s32.totalorder %v912, 1
  %vm945 = vcmp.eq.s32.totalorder %v913, 1
  %vm946 = vcmp.eq.s32.totalorder %v914, 1
  %vm947 = vcmp.eq.s32.totalorder %v915, 1
  %v948 = vsel %vm932, 1, 0
  %v949 = vsel %vm933, 1, 0
  %v950 = vsel %vm934, 1, 0
  %v951 = vsel %vm935, 1, 0
  %v952 = vsel %vm936, 1, 0
  %v953 = vsel %vm937, 1, 0
  %v954 = vsel %vm938, 1, 0
  %v955 = vsel %vm939, 1, 0
  %v956 = vsel %vm940, 1, 0
  %v957 = vsel %vm941, 1, 0
  %v958 = vsel %vm942, 1, 0
  %v959 = vsel %vm943, 1, 0
  %v960 = vsel %vm944, 1, 0
  %v961 = vsel %vm945, 1, 0
  %v962 = vsel %vm946, 1, 0
  %v963 = vsel %vm947, 1, 0
  %v964 = vcvt.s32.f32 %v948
  %v965 = vcvt.s32.f32 %v949
  %v966 = vcvt.s32.f32 %v950
  %v967 = vcvt.s32.f32 %v951
  %v968 = vcvt.s32.f32 %v952
  %v969 = vcvt.s32.f32 %v953
  %v970 = vcvt.s32.f32 %v954
  %v971 = vcvt.s32.f32 %v955
  %v972 = vcvt.s32.f32 %v956
  %v973 = vcvt.s32.f32 %v957
  %v974 = vcvt.s32.f32 %v958
  %v975 = vcvt.s32.f32 %v959
  %v976 = vcvt.s32.f32 %v960
  %v977 = vcvt.s32.f32 %v961
  %v978 = vcvt.s32.f32 %v962
  %v979 = vcvt.s32.f32 %v963
  %980 = vmatprep.subr.mxu0 0.0
  %981 = vmatpush1.msra.mxu0 %v867
  %982 = vmatprep.subr.mxu0 0.0
  %983 = vmatpush1.msra.mxu0 %v868
  %984 = vmatprep.subr.mxu0 0.0
  %985 = vmatpush1.msra.mxu0 %v869
  %986 = vmatprep.subr.mxu0 0.0
  %987 = vmatpush1.msra.mxu0 %v870
  %988 = vmatprep.subr.mxu0 0.0
  %989 = vmatpush1.msra.mxu0 %v871
  %990 = vmatprep.subr.mxu0 0.0
  %991 = vmatpush1.msra.mxu0 %v872
  %992 = vmatprep.subr.mxu0 0.0
  %993 = vmatpush1.msra.mxu0 %v873
  %994 = vmatprep.subr.mxu0 0.0
  %995 = vmatpush1.msra.mxu0 %v874
  %996 = vmatprep.subr.mxu0 0.0
  %997 = vmatpush1.msra.mxu0 %v875
  %998 = vmatprep.subr.mxu0 0.0
  %999 = vmatpush1.msra.mxu0 %v876
  %1000 = vmatprep.subr.mxu0 0.0
  %1001 = vmatpush1.msra.mxu0 %v877
  %1002 = vmatprep.subr.mxu0 0.0
  %1003 = vmatpush1.msra.mxu0 %v878
  %1004 = vmatprep.subr.mxu0 0.0
  %1005 = vmatpush1.msra.mxu0 %v879
  %1006 = vmatprep.subr.mxu0 0.0
  %1007 = vmatpush1.msra.mxu0 %v880
  %1008 = vmatprep.subr.mxu0 0.0
  %1009 = vmatpush1.msra.mxu0 %v881
  %1010 = vmatprep.subr.mxu0 0.0
  %1011 = vmatpush1.msra.mxu0 %v882
  %1012 = vmatprep.subr.mxu0 0.0
  %1013 = vmatpush1.msra.mxu0 0.0
  %1014 = vmatprep.subr.mxu0 0.0
  %1015 = vmatpush1.msra.mxu0 0.0
  %1016 = vmatprep.subr.mxu0 0.0
  %1017 = vmatpush1.msra.mxu0 0.0
  %1018 = vmatprep.subr.mxu0 0.0
  %1019 = vmatpush1.msra.mxu0 0.0
  %1020 = vmatprep.subr.mxu0 0.0
  %1021 = vmatpush1.msra.mxu0 0.0
  %1022 = vmatprep.subr.mxu0 0.0
  %1023 = vmatpush1.msra.mxu0 0.0
  %1024 = vmatprep.subr.mxu0 0.0
  %1025 = vmatpush1.msra.mxu0 0.0
  %1026 = vmatprep.subr.mxu0 0.0
  %1027 = vmatpush1.msra.mxu0 0.0
  %1028 = vmatprep.subr.mxu0 0.0
  %1029 = vmatpush1.msra.mxu0 0.0
  %1030 = vmatprep.subr.mxu0 0.0
  %1031 = vmatpush1.msra.mxu0 0.0
  %1032 = vmatprep.subr.mxu0 0.0
  %1033 = vmatpush1.msra.mxu0 0.0
  %1034 = vmatprep.subr.mxu0 0.0
  %1035 = vmatpush1.msra.mxu0 0.0
  %1036 = vmatprep.subr.mxu0 0.0
  %1037 = vmatpush1.msra.mxu0 0.0
  %1038 = vmatprep.subr.mxu0 0.0
  %1039 = vmatpush1.msra.mxu0 0.0
  %1040 = vmatprep.subr.mxu0 0.0
  %1041 = vmatpush1.msra.mxu0 0.0
  %1042 = vmatprep.subr.mxu0 0.0
  %1043 = vmatpush1.msra.mxu0 0.0
  %1044 = vmatprep.mubr.f32.mxu0 0.0
  %1045 = vmatmul.mubr.f32.gmra.mrb[0].mxu0 %v964
  %v1046 = vpop.f32.mrb[0].mxu0
  %v1047 = vadd.f32 0.0, %v1046
  %v1048 = vpop.f32.mrb[0].mxu0
  %1049 = vmatprep.mubr.f32.mxu0 0.0
  %1050 = vmatmul.mubr.f32.gmra.mrb[0].mxu0 %v965
  %v1051 = vpop.f32.mrb[0].mxu0
  %v1052 = vadd.f32 0.0, %v1051
  %v1053 = vpop.f32.mrb[0].mxu0
  %1054 = vmatprep.mubr.f32.mxu0 0.0
  %1055 = vmatmul.mubr.f32.gmra.mrb[0].mxu0 %v966
  %v1056 = vpop.f32.mrb[0].mxu0
  %v1057 = vadd.f32 0.0, %v1056
  %v1058 = vpop.f32.mrb[0].mxu0
  %1059 = vmatprep.mubr.f32.mxu0 0.0
  %1060 = vmatmul.mubr.f32.gmra.mrb[0].mxu0 %v967
  %v1061 = vpop.f32.mrb[0].mxu0
  %v1062 = vadd.f32 0.0, %v1061
  %v1063 = vpop.f32.mrb[0].mxu0
  %1064 = vmatprep.mubr.f32.mxu0 0.0
  %1065 = vmatmul.mubr.f32.gmra.mrb[0].mxu0 %v968
  %v1066 = vpop.f32.mrb[0].mxu0
  %v1067 = vadd.f32 0.0, %v1066
  %v1068 = vpop.f32.mrb[0].mxu0
  %1069 = vmatprep.mubr.f32.mxu0 0.0
  %1070 = vmatmul.mubr.f32.gmra.mrb[0].mxu0 %v969
  %v1071 = vpop.f32.mrb[0].mxu0
  %v1072 = vadd.f32 0.0, %v1071
  %v1073 = vpop.f32.mrb[0].mxu0
  %1074 = vmatprep.mubr.f32.mxu0 0.0
  %1075 = vmatmul.mubr.f32.gmra.mrb[0].mxu0 %v970
  %v1076 = vpop.f32.mrb[0].mxu0
  %v1077 = vadd.f32 0.0, %v1076
  %v1078 = vpop.f32.mrb[0].mxu0
  %1079 = vmatprep.mubr.f32.mxu0 0.0
  %1080 = vmatmul.mubr.f32.gmra.mrb[0].mxu0 %v971
  %v1081 = vpop.f32.mrb[0].mxu0
  %v1082 = vadd.f32 0.0, %v1081
  %v1083 = vpop.f32.mrb[0].mxu0
  %1084 = vmatprep.mubr.f32.mxu0 0.0
  %1085 = vmatmul.mubr.f32.gmra.mrb[0].mxu0 %v972
  %v1086 = vpop.f32.mrb[0].mxu0
  %v1087 = vadd.f32 0.0, %v1086
  %v1088 = vpop.f32.mrb[0].mxu0
  %1089 = vmatprep.mubr.f32.mxu0 0.0
  %1090 = vmatmul.mubr.f32.gmra.mrb[0].mxu0 %v973
  %v1091 = vpop.f32.mrb[0].mxu0
  %v1092 = vadd.f32 0.0, %v1091
  %v1093 = vpop.f32.mrb[0].mxu0
  %1094 = vmatprep.mubr.f32.mxu0 0.0
  %1095 = vmatmul.mubr.f32.gmra.mrb[0].mxu0 %v974
  %v1096 = vpop.f32.mrb[0].mxu0
  %v1097 = vadd.f32 0.0, %v1096
  %v1098 = vpop.f32.mrb[0].mxu0
  %1099 = vmatprep.mubr.f32.mxu0 0.0
  %1100 = vmatmul.mubr.f32.gmra.mrb[0].mxu0 %v975
  %v1101 = vpop.f32.mrb[0].mxu0
  %v1102 = vadd.f32 0.0, %v1101
  %v1103 = vpop.f32.mrb[0].mxu0
  %1104 = vmatprep.mubr.f32.mxu0 0.0
  %1105 = vmatmul.mubr.f32.gmra.mrb[0].mxu0 %v976
  %v1106 = vpop.f32.mrb[0].mxu0
  %v1107 = vadd.f32 0.0, %v1106
  %v1108 = vpop.f32.mrb[0].mxu0
  %1109 = vmatprep.mubr.f32.mxu0 0.0
  %1110 = vmatmul.mubr.f32.gmra.mrb[0].mxu0 %v977
  %v1111 = vpop.f32.mrb[0].mxu0
  %v1112 = vadd.f32 0.0, %v1111
  %v1113 = vpop.f32.mrb[0].mxu0
  %1114 = vmatprep.mubr.f32.mxu0 0.0
  %1115 = vmatmul.mubr.f32.gmra.mrb[0].mxu0 %v978
  %v1116 = vpop.f32.mrb[0].mxu0
  %v1117 = vadd.f32 0.0, %v1116
  %v1118 = vpop.f32.mrb[0].mxu0
  %1119 = vmatprep.mubr.f32.mxu0 0.0
  %1120 = vmatmul.mubr.f32.gmra.mrb[0].mxu0 %v979
  %v1121 = vpop.f32.mrb[0].mxu0
  %v1122 = vadd.f32 0.0, %v1121
  %v1123 = vpop.f32.mrb[0].mxu0
  %1124 = vdwg.mxu0
  %1125 = vmatprep.subr.mxu0 0.0
  %1126 = vmatpush1.msra.mxu0 %v916
  %1127 = vmatprep.subr.mxu0 0.0
  %1128 = vmatpush1.msra.mxu0 %v917
  %1129 = vmatprep.subr.mxu0 0.0
  %1130 = vmatpush1.msra.mxu0 %v918
  %1131 = vmatprep.subr.mxu0 0.0
  %1132 = vmatpush1.msra.mxu0 %v919
  %1133 = vmatprep.subr.mxu0 0.0
  %1134 = vmatpush1.msra.mxu0 %v920
  %1135 = vmatprep.subr.mxu0 0.0
  %1136 = vmatpush1.msra.mxu0 %v921
  %1137 = vmatprep.subr.mxu0 0.0
  %1138 = vmatpush1.msra.mxu0 %v922
  %1139 = vmatprep.subr.mxu0 0.0
  %1140 = vmatpush1.msra.mxu0 %v923
  %1141 = vmatprep.subr.mxu0 0.0
  %1142 = vmatpush1.msra.mxu0 %v924
  %1143 = vmatprep.subr.mxu0 0.0
  %1144 = vmatpush1.msra.mxu0 %v925
  %1145 = vmatprep.subr.mxu0 0.0
  %1146 = vmatpush1.msra.mxu0 %v926
  %1147 = vmatprep.subr.mxu0 0.0
  %1148 = vmatpush1.msra.mxu0 %v927
  %1149 = vmatprep.subr.mxu0 0.0
  %1150 = vmatpush1.msra.mxu0 %v928
  %1151 = vmatprep.subr.mxu0 0.0
  %1152 = vmatpush1.msra.mxu0 %v929
  %1153 = vmatprep.subr.mxu0 0.0
  %1154 = vmatpush1.msra.mxu0 %v930
  %1155 = vmatprep.subr.mxu0 0.0
  %1156 = vmatpush1.msra.mxu0 %v931
  %1157 = vmatprep.subr.mxu0 0.0
  %1158 = vmatpush1.msra.mxu0 0.0
  %1159 = vmatprep.subr.mxu0 0.0
  %1160 = vmatpush1.msra.mxu0 0.0
  %1161 = vmatprep.subr.mxu0 0.0
  %1162 = vmatpush1.msra.mxu0 0.0
  %1163 = vmatprep.subr.mxu0 0.0
  %1164 = vmatpush1.msra.mxu0 0.0
  %1165 = vmatprep.subr.mxu0 0.0
  %1166 = vmatpush1.msra.mxu0 0.0
  %1167 = vmatprep.subr.mxu0 0.0
  %1168 = vmatpush1.msra.mxu0 0.0
  %1169 = vmatprep.subr.mxu0 0.0
  %1170 = vmatpush1.msra.mxu0 0.0
  %1171 = vmatprep.subr.mxu0 0.0
  %1172 = vmatpush1.msra.mxu0 0.0
  %1173 = vmatprep.subr.mxu0 0.0
  %1174 = vmatpush1.msra.mxu0 0.0
  %1175 = vmatprep.subr.mxu0 0.0
  %1176 = vmatpush1.msra.mxu0 0.0
  %1177 = vmatprep.subr.mxu0 0.0
  %1178 = vmatpush1.msra.mxu0 0.0
  %1179 = vmatprep.subr.mxu0 0.0
  %1180 = vmatpush1.msra.mxu0 0.0
  %1181 = vmatprep.subr.mxu0 0.0
  %1182 = vmatpush1.msra.mxu0 0.0
  %1183 = vmatprep.subr.mxu0 0.0
  %1184 = vmatpush1.msra.mxu0 0.0
  %1185 = vmatprep.subr.mxu0 0.0
  %1186 = vmatpush1.msra.mxu0 0.0
  %1187 = vmatprep.subr.mxu0 0.0
  %1188 = vmatpush1.msra.mxu0 0.0
  %1189 = vmatprep.mubr.f32.mxu0 0.0
  %1190 = vmatmul.mubr.f32.gmra.mrb[0].mxu0 %v964
  %v1191 = vpop.f32.mrb[0].mxu0
  %v1192 = vadd.f32 0.0, %v1191
  %v1193 = vpop.f32.mrb[0].mxu0
  %1194 = vmatprep.mubr.f32.mxu0 0.0
  %1195 = vmatmul.mubr.f32.gmra.mrb[0].mxu0 %v965
  %v1196 = vpop.f32.mrb[0].mxu0
  %v1197 = vadd.f32 0.0, %v1196
  %v1198 = vpop.f32.mrb[0].mxu0
  %1199 = vmatprep.mubr.f32.mxu0 0.0
  %1200 = vmatmul.mubr.f32.gmra.mrb[0].mxu0 %v966
  %v1201 = vpop.f32.mrb[0].mxu0
  %v1202 = vadd.f32 0.0, %v1201
  %v1203 = vpop.f32.mrb[0].mxu0
  %1204 = vmatprep.mubr.f32.mxu0 0.0
  %1205 = vmatmul.mubr.f32.gmra.mrb[0].mxu0 %v967
  %v1206 = vpop.f32.mrb[0].mxu0
  %v1207 = vadd.f32 0.0, %v1206
  %v1208 = vpop.f32.mrb[0].mxu0
  %1209 = vmatprep.mubr.f32.mxu0 0.0
  %1210 = vmatmul.mubr.f32.gmra.mrb[0].mxu0 %v968
  %v1211 = vpop.f32.mrb[0].mxu0
  %v1212 = vadd.f32 0.0, %v1211
  %v1213 = vpop.f32.mrb[0].mxu0
  %1214 = vmatprep.mubr.f32.mxu0 0.0
  %1215 = vmatmul.mubr.f32.gmra.mrb[0].mxu0 %v969
  %v1216 = vpop.f32.mrb[0].mxu0
  %v1217 = vadd.f32 0.0, %v1216
  %v1218 = vpop.f32.mrb[0].mxu0
  %1219 = vmatprep.mubr.f32.mxu0 0.0
  %1220 = vmatmul.mubr.f32.gmra.mrb[0].mxu0 %v970
  %v1221 = vpop.f32.mrb[0].mxu0
  %v1222 = vadd.f32 0.0, %v1221
  %v1223 = vpop.f32.mrb[0].mxu0
  %1224 = vmatprep.mubr.f32.mxu0 0.0
  %1225 = vmatmul.mubr.f32.gmra.mrb[0].mxu0 %v971
  %v1226 = vpop.f32.mrb[0].mxu0
  %v1227 = vadd.f32 0.0, %v1226
  %v1228 = vpop.f32.mrb[0].mxu0
  %1229 = vmatprep.mubr.f32.mxu0 0.0
  %1230 = vmatmul.mubr.f32.gmra.mrb[0].mxu0 %v972
  %v1231 = vpop.f32.mrb[0].mxu0
  %v1232 = vadd.f32 0.0, %v1231
  %v1233 = vpop.f32.mrb[0].mxu0
  %1234 = vmatprep.mubr.f32.mxu0 0.0
  %1235 = vmatmul.mubr.f32.gmra.mrb[0].mxu0 %v973
  %v1236 = vpop.f32.mrb[0].mxu0
  %v1237 = vadd.f32 0.0, %v1236
  %v1238 = vpop.f32.mrb[0].mxu0
  %1239 = vmatprep.mubr.f32.mxu0 0.0
  %1240 = vmatmul.mubr.f32.gmra.mrb[0].mxu0 %v974
  %v1241 = vpop.f32.mrb[0].mxu0
  %v1242 = vadd.f32 0.0, %v1241
  %v1243 = vpop.f32.mrb[0].mxu0
  %1244 = vmatprep.mubr.f32.mxu0 0.0
  %1245 = vmatmul.mubr.f32.gmra.mrb[0].mxu0 %v975
  %v1246 = vpop.f32.mrb[0].mxu0
  %v1247 = vadd.f32 0.0, %v1246
  %v1248 = vpop.f32.mrb[0].mxu0
  %1249 = vmatprep.mubr.f32.mxu0 0.0
  %1250 = vmatmul.mubr.f32.gmra.mrb[0].mxu0 %v976
  %v1251 = vpop.f32.mrb[0].mxu0
  %v1252 = vadd.f32 0.0, %v1251
  %v1253 = vpop.f32.mrb[0].mxu0
  %1254 = vmatprep.mubr.f32.mxu0 0.0
  %1255 = vmatmul.mubr.f32.gmra.mrb[0].mxu0 %v977
  %v1256 = vpop.f32.mrb[0].mxu0
  %v1257 = vadd.f32 0.0, %v1256
  %v1258 = vpop.f32.mrb[0].mxu0
  %1259 = vmatprep.mubr.f32.mxu0 0.0
  %1260 = vmatmul.mubr.f32.gmra.mrb[0].mxu0 %v978
  %v1261 = vpop.f32.mrb[0].mxu0
  %v1262 = vadd.f32 0.0, %v1261
  %v1263 = vpop.f32.mrb[0].mxu0
  %1264 = vmatprep.mubr.f32.mxu0 0.0
  %1265 = vmatmul.mubr.f32.gmra.mrb[0].mxu0 %v979
  %v1266 = vpop.f32.mrb[0].mxu0
  %v1267 = vadd.f32 0.0, %v1266
  %v1268 = vpop.f32.mrb[0].mxu0
  %1269 = vdwg.mxu0
  %vm1270 = vcmp.eq.f32.partialorder %v1192, %v916
  %vm1271 = vcmp.eq.f32.partialorder %v1197, %v917
  %vm1272 = vcmp.eq.f32.partialorder %v1202, %v918
  %vm1273 = vcmp.eq.f32.partialorder %v1207, %v919
  %vm1274 = vcmp.eq.f32.partialorder %v1212, %v920
  %vm1275 = vcmp.eq.f32.partialorder %v1217, %v921
  %vm1276 = vcmp.eq.f32.partialorder %v1222, %v922
  %vm1277 = vcmp.eq.f32.partialorder %v1227, %v923
  %vm1278 = vcmp.eq.f32.partialorder %v1232, %v924
  %vm1279 = vcmp.eq.f32.partialorder %v1237, %v925
  %vm1280 = vcmp.eq.f32.partialorder %v1242, %v926
  %vm1281 = vcmp.eq.f32.partialorder %v1247, %v927
  %vm1282 = vcmp.eq.f32.partialorder %v1252, %v928
  %vm1283 = vcmp.eq.f32.partialorder %v1257, %v929
  %vm1284 = vcmp.eq.f32.partialorder %v1262, %v930
  %vm1285 = vcmp.eq.f32.partialorder %v1267, %v931
  %v1286 = vmax.f32 %v867, %v1047
  %v1287 = vmax.f32 %v868, %v1052
  %v1288 = vmax.f32 %v869, %v1057
  %v1289 = vmax.f32 %v870, %v1062
  %v1290 = vmax.f32 %v871, %v1067
  %v1291 = vmax.f32 %v872, %v1072
  %v1292 = vmax.f32 %v873, %v1077
  %v1293 = vmax.f32 %v874, %v1082
  %v1294 = vmax.f32 %v875, %v1087
  %v1295 = vmax.f32 %v876, %v1092
  %v1296 = vmax.f32 %v877, %v1097
  %v1297 = vmax.f32 %v878, %v1102
  %v1298 = vmax.f32 %v879, %v1107
  %v1299 = vmax.f32 %v880, %v1112
  %v1300 = vmax.f32 %v881, %v1117
  %v1301 = vmax.f32 %v882, %v1122
  %v1302 = vsel %vm1270, 1, 0
  %v1303 = vsel %vm1271, 1, 0
  %v1304 = vsel %vm1272, 1, 0
  %v1305 = vsel %vm1273, 1, 0
  %v1306 = vsel %vm1274, 1, 0
  %v1307 = vsel %vm1275, 1, 0
  %v1308 = vsel %vm1276, 1, 0
  %v1309 = vsel %vm1277, 1, 0
  %v1310 = vsel %vm1278, 1, 0
  %v1311 = vsel %vm1279, 1, 0
  %v1312 = vsel %vm1280, 1, 0
  %v1313 = vsel %vm1281, 1, 0
  %v1314 = vsel %vm1282, 1, 0
  %v1315 = vsel %vm1283, 1, 0
  %v1316 = vsel %vm1284, 1, 0
  %v1317 = vsel %vm1285, 1, 0
  %1318 = vset.pattern.permute.xlu0 0
  %1319 = vperm.xlu0 %1318, %v1302
  %v1320 = vpop.permute.xlu0 %1319
  %1321 = vset.pattern.permute.xlu0 0
  %1322 = vperm.xlu0 %1321, %v1303
  %v1323 = vpop.permute.xlu0 %1322
  %1324 = vset.pattern.permute.xlu0 0
  %1325 = vperm.xlu0 %1324, %v1304
  %v1326 = vpop.permute.xlu0 %1325
  %1327 = vset.pattern.permute.xlu0 0
  %1328 = vperm.xlu0 %1327, %v1305
  %v1329 = vpop.permute.xlu0 %1328
  %1330 = vset.pattern.permute.xlu0 0
  %1331 = vperm.xlu0 %1330, %v1306
  %v1332 = vpop.permute.xlu0 %1331
  %1333 = vset.pattern.permute.xlu0 0
  %1334 = vperm.xlu0 %1333, %v1307
  %v1335 = vpop.permute.xlu0 %1334
  %1336 = vset.pattern.permute.xlu0 0
  %1337 = vperm.xlu0 %1336, %v1308
  %v1338 = vpop.permute.xlu0 %1337
  %1339 = vset.pattern.permute.xlu0 0
  %1340 = vperm.xlu0 %1339, %v1309
  %v1341 = vpop.permute.xlu0 %1340
  %1342 = vset.pattern.permute.xlu0 0
  %1343 = vperm.xlu0 %1342, %v1310
  %v1344 = vpop.permute.xlu0 %1343
  %1345 = vset.pattern.permute.xlu0 0
  %1346 = vperm.xlu0 %1345, %v1311
  %v1347 = vpop.permute.xlu0 %1346
  %1348 = vset.pattern.permute.xlu0 0
  %1349 = vperm.xlu0 %1348, %v1312
  %v1350 = vpop.permute.xlu0 %1349
  %1351 = vset.pattern.permute.xlu0 0
  %1352 = vperm.xlu0 %1351, %v1313
  %v1353 = vpop.permute.xlu0 %1352
  %1354 = vset.pattern.permute.xlu0 0
  %1355 = vperm.xlu0 %1354, %v1314
  %v1356 = vpop.permute.xlu0 %1355
  %1357 = vset.pattern.permute.xlu0 0
  %1358 = vperm.xlu0 %1357, %v1315
  %v1359 = vpop.permute.xlu0 %1358
  %1360 = vset.pattern.permute.xlu0 0
  %1361 = vperm.xlu0 %1360, %v1316
  %v1362 = vpop.permute.xlu0 %1361
  %1363 = vset.pattern.permute.xlu0 0
  %1364 = vperm.xlu0 %1363, %v1317
  %v1365 = vpop.permute.xlu0 %1364
  %vm1366 = vcmp.eq.s32.totalorder %v1320, 1
  %vm1367 = vcmp.eq.s32.totalorder %v1323, 1
  %vm1368 = vcmp.eq.s32.totalorder %v1326, 1
  %vm1369 = vcmp.eq.s32.totalorder %v1329, 1
  %vm1370 = vcmp.eq.s32.totalorder %v1332, 1
  %vm1371 = vcmp.eq.s32.totalorder %v1335, 1
  %vm1372 = vcmp.eq.s32.totalorder %v1338, 1
  %vm1373 = vcmp.eq.s32.totalorder %v1341, 1
  %vm1374 = vcmp.eq.s32.totalorder %v1344, 1
  %vm1375 = vcmp.eq.s32.totalorder %v1347, 1
  %vm1376 = vcmp.eq.s32.totalorder %v1350, 1
  %vm1377 = vcmp.eq.s32.totalorder %v1353, 1
  %vm1378 = vcmp.eq.s32.totalorder %v1356, 1
  %vm1379 = vcmp.eq.s32.totalorder %v1359, 1
  %vm1380 = vcmp.eq.s32.totalorder %v1362, 1
  %vm1381 = vcmp.eq.s32.totalorder %v1365, 1
  %v1382 = vsel %vm1366, %v1286, %v867
  %v1383 = vsel %vm1367, %v1287, %v868
  %v1384 = vsel %vm1368, %v1288, %v869
  %v1385 = vsel %vm1369, %v1289, %v870
  %v1386 = vsel %vm1370, %v1290, %v871
  %v1387 = vsel %vm1371, %v1291, %v872
  %v1388 = vsel %vm1372, %v1292, %v873
  %v1389 = vsel %vm1373, %v1293, %v874
  %v1390 = vsel %vm1374, %v1294, %v875
  %v1391 = vsel %vm1375, %v1295, %v876
  %v1392 = vsel %vm1376, %v1296, %v877
  %v1393 = vsel %vm1377, %v1297, %v878
  %v1394 = vsel %vm1378, %v1298, %v879
  %v1395 = vsel %vm1379, %v1299, %v880
  %v1396 = vsel %vm1380, %v1300, %v881
  %v1397 = vsel %vm1381, %v1301, %v882
  %vm1398 = vcmp.eq.s32.totalorder %v900, 2
  %vm1399 = vcmp.eq.s32.totalorder %v901, 2
  %vm1400 = vcmp.eq.s32.totalorder %v902, 2
  %vm1401 = vcmp.eq.s32.totalorder %v903, 2
  %vm1402 = vcmp.eq.s32.totalorder %v904, 2
  %vm1403 = vcmp.eq.s32.totalorder %v905, 2
  %vm1404 = vcmp.eq.s32.totalorder %v906, 2
  %vm1405 = vcmp.eq.s32.totalorder %v907, 2
  %vm1406 = vcmp.eq.s32.totalorder %v908, 2
  %vm1407 = vcmp.eq.s32.totalorder %v909, 2
  %vm1408 = vcmp.eq.s32.totalorder %v910, 2
  %vm1409 = vcmp.eq.s32.totalorder %v911, 2
  %vm1410 = vcmp.eq.s32.totalorder %v912, 2
  %vm1411 = vcmp.eq.s32.totalorder %v913, 2
  %vm1412 = vcmp.eq.s32.totalorder %v914, 2
  %vm1413 = vcmp.eq.s32.totalorder %v915, 2
  %v1414 = vsel %vm1398, 1, 0
  %v1415 = vsel %vm1399, 1, 0
  %v1416 = vsel %vm1400, 1, 0
  %v1417 = vsel %vm1401, 1, 0
  %v1418 = vsel %vm1402, 1, 0
  %v1419 = vsel %vm1403, 1, 0
  %v1420 = vsel %vm1404, 1, 0
  %v1421 = vsel %vm1405, 1, 0
  %v1422 = vsel %vm1406, 1, 0
  %v1423 = vsel %vm1407, 1, 0
  %v1424 = vsel %vm1408, 1, 0
  %v1425 = vsel %vm1409, 1, 0
  %v1426 = vsel %vm1410, 1, 0
  %v1427 = vsel %vm1411, 1, 0
  %v1428 = vsel %vm1412, 1, 0
  %v1429 = vsel %vm1413, 1, 0
  %v1430 = vcvt.s32.f32 %v1414
  %v1431 = vcvt.s32.f32 %v1415
  %v1432 = vcvt.s32.f32 %v1416
  %v1433 = vcvt.s32.f32 %v1417
  %v1434 = vcvt.s32.f32 %v1418
  %v1435 = vcvt.s32.f32 %v1419
  %v1436 = vcvt.s32.f32 %v1420
  %v1437 = vcvt.s32.f32 %v1421
  %v1438 = vcvt.s32.f32 %v1422
  %v1439 = vcvt.s32.f32 %v1423
  %v1440 = vcvt.s32.f32 %v1424
  %v1441 = vcvt.s32.f32 %v1425
  %v1442 = vcvt.s32.f32 %v1426
  %v1443 = vcvt.s32.f32 %v1427
  %v1444 = vcvt.s32.f32 %v1428
  %v1445 = vcvt.s32.f32 %v1429
  %1446 = vmatprep.subr.mxu0 0.0
  %1447 = vmatpush1.msra.mxu0 %v1382
  %1448 = vmatprep.subr.mxu0 0.0
  %1449 = vmatpush1.msra.mxu0 %v1383
  %1450 = vmatprep.subr.mxu0 0.0
  %1451 = vmatpush1.msra.mxu0 %v1384
  %1452 = vmatprep.subr.mxu0 0.0
  %1453 = vmatpush1.msra.mxu0 %v1385
  %1454 = vmatprep.subr.mxu0 0.0
  %1455 = vmatpush1.msra.mxu0 %v1386
  %1456 = vmatprep.subr.mxu0 0.0
  %1457 = vmatpush1.msra.mxu0 %v1387
  %1458 = vmatprep.subr.mxu0 0.0
  %1459 = vmatpush1.msra.mxu0 %v1388
  %1460 = vmatprep.subr.mxu0 0.0
  %1461 = vmatpush1.msra.mxu0 %v1389
  %1462 = vmatprep.subr.mxu0 0.0
  %1463 = vmatpush1.msra.mxu0 %v1390
  %1464 = vmatprep.subr.mxu0 0.0
  %1465 = vmatpush1.msra.mxu0 %v1391
  %1466 = vmatprep.subr.mxu0 0.0
  %1467 = vmatpush1.msra.mxu0 %v1392
  %1468 = vmatprep.subr.mxu0 0.0
  %1469 = vmatpush1.msra.mxu0 %v1393
  %1470 = vmatprep.subr.mxu0 0.0
  %1471 = vmatpush1.msra.mxu0 %v1394
  %1472 = vmatprep.subr.mxu0 0.0
  %1473 = vmatpush1.msra.mxu0 %v1395
  %1474 = vmatprep.subr.mxu0 0.0
  %1475 = vmatpush1.msra.mxu0 %v1396
  %1476 = vmatprep.subr.mxu0 0.0
  %1477 = vmatpush1.msra.mxu0 %v1397
  %1478 = vmatprep.subr.mxu0 0.0
  %1479 = vmatpush1.msra.mxu0 0.0
  %1480 = vmatprep.subr.mxu0 0.0
  %1481 = vmatpush1.msra.mxu0 0.0
  %1482 = vmatprep.subr.mxu0 0.0
  %1483 = vmatpush1.msra.mxu0 0.0
  %1484 = vmatprep.subr.mxu0 0.0
  %1485 = vmatpush1.msra.mxu0 0.0
  %1486 = vmatprep.subr.mxu0 0.0
  %1487 = vmatpush1.msra.mxu0 0.0
  %1488 = vmatprep.subr.mxu0 0.0
  %1489 = vmatpush1.msra.mxu0 0.0
  %1490 = vmatprep.subr.mxu0 0.0
  %1491 = vmatpush1.msra.mxu0 0.0
  %1492 = vmatprep.subr.mxu0 0.0
  %1493 = vmatpush1.msra.mxu0 0.0
  %1494 = vmatprep.subr.mxu0 0.0
  %1495 = vmatpush1.msra.mxu0 0.0
  %1496 = vmatprep.subr.mxu0 0.0
  %1497 = vmatpush1.msra.mxu0 0.0
  %1498 = vmatprep.subr.mxu0 0.0
  %1499 = vmatpush1.msra.mxu0 0.0
  %1500 = vmatprep.subr.mxu0 0.0
  %1501 = vmatpush1.msra.mxu0 0.0
  %1502 = vmatprep.subr.mxu0 0.0
  %1503 = vmatpush1.msra.mxu0 0.0
  %1504 = vmatprep.subr.mxu0 0.0
  %1505 = vmatpush1.msra.mxu0 0.0
  %1506 = vmatprep.subr.mxu0 0.0
  %1507 = vmatpush1.msra.mxu0 0.0
  %1508 = vmatprep.subr.mxu0 0.0
  %1509 = vmatpush1.msra.mxu0 0.0
  %1510 = vmatprep.mubr.f32.mxu0 0.0
  %1511 = vmatmul.mubr.f32.gmra.mrb[0].mxu0 %v1430
  %v1512 = vpop.f32.mrb[0].mxu0
  %v1513 = vadd.f32 0.0, %v1512
  %v1514 = vpop.f32.mrb[0].mxu0
  %1515 = vmatprep.mubr.f32.mxu0 0.0
  %1516 = vmatmul.mubr.f32.gmra.mrb[0].mxu0 %v1431
  %v1517 = vpop.f32.mrb[0].mxu0
  %v1518 = vadd.f32 0.0, %v1517
  %v1519 = vpop.f32.mrb[0].mxu0
  %1520 = vmatprep.mubr.f32.mxu0 0.0
  %1521 = vmatmul.mubr.f32.gmra.mrb[0].mxu0 %v1432
  %v1522 = vpop.f32.mrb[0].mxu0
  %v1523 = vadd.f32 0.0, %v1522
  %v1524 = vpop.f32.mrb[0].mxu0
  %1525 = vmatprep.mubr.f32.mxu0 0.0
  %1526 = vmatmul.mubr.f32.gmra.mrb[0].mxu0 %v1433
  %v1527 = vpop.f32.mrb[0].mxu0
  %v1528 = vadd.f32 0.0, %v1527
  %v1529 = vpop.f32.mrb[0].mxu0
  %1530 = vmatprep.mubr.f32.mxu0 0.0
  %1531 = vmatmul.mubr.f32.gmra.mrb[0].mxu0 %v1434
  %v1532 = vpop.f32.mrb[0].mxu0
  %v1533 = vadd.f32 0.0, %v1532
  %v1534 = vpop.f32.mrb[0].mxu0
  %1535 = vmatprep.mubr.f32.mxu0 0.0
  %1536 = vmatmul.mubr.f32.gmra.mrb[0].mxu0 %v1435
  %v1537 = vpop.f32.mrb[0].mxu0
  %v1538 = vadd.f32 0.0, %v1537
  %v1539 = vpop.f32.mrb[0].mxu0
  %1540 = vmatprep.mubr.f32.mxu0 0.0
  %1541 = vmatmul.mubr.f32.gmra.mrb[0].mxu0 %v1436
  %v1542 = vpop.f32.mrb[0].mxu0
  %v1543 = vadd.f32 0.0, %v1542
  %v1544 = vpop.f32.mrb[0].mxu0
  %1545 = vmatprep.mubr.f32.mxu0 0.0
  %1546 = vmatmul.mubr.f32.gmra.mrb[0].mxu0 %v1437
  %v1547 = vpop.f32.mrb[0].mxu0
  %v1548 = vadd.f32 0.0, %v1547
  %v1549 = vpop.f32.mrb[0].mxu0
  %1550 = vmatprep.mubr.f32.mxu0 0.0
  %1551 = vmatmul.mubr.f32.gmra.mrb[0].mxu0 %v1438
  %v1552 = vpop.f32.mrb[0].mxu0
  %v1553 = vadd.f32 0.0, %v1552
  %v1554 = vpop.f32.mrb[0].mxu0
  %1555 = vmatprep.mubr.f32.mxu0 0.0
  %1556 = vmatmul.mubr.f32.gmra.mrb[0].mxu0 %v1439
  %v1557 = vpop.f32.mrb[0].mxu0
  %v1558 = vadd.f32 0.0, %v1557
  %v1559 = vpop.f32.mrb[0].mxu0
  %1560 = vmatprep.mubr.f32.mxu0 0.0
  %1561 = vmatmul.mubr.f32.gmra.mrb[0].mxu0 %v1440
  %v1562 = vpop.f32.mrb[0].mxu0
  %v1563 = vadd.f32 0.0, %v1562
  %v1564 = vpop.f32.mrb[0].mxu0
  %1565 = vmatprep.mubr.f32.mxu0 0.0
  %1566 = vmatmul.mubr.f32.gmra.mrb[0].mxu0 %v1441
  %v1567 = vpop.f32.mrb[0].mxu0
  %v1568 = vadd.f32 0.0, %v1567
  %v1569 = vpop.f32.mrb[0].mxu0
  %1570 = vmatprep.mubr.f32.mxu0 0.0
  %1571 = vmatmul.mubr.f32.gmra.mrb[0].mxu0 %v1442
  %v1572 = vpop.f32.mrb[0].mxu0
  %v1573 = vadd.f32 0.0, %v1572
  %v1574 = vpop.f32.mrb[0].mxu0
  %1575 = vmatprep.mubr.f32.mxu0 0.0
  %1576 = vmatmul.mubr.f32.gmra.mrb[0].mxu0 %v1443
  %v1577 = vpop.f32.mrb[0].mxu0
  %v1578 = vadd.f32 0.0, %v1577
  %v1579 = vpop.f32.mrb[0].mxu0
  %1580 = vmatprep.mubr.f32.mxu0 0.0
  %1581 = vmatmul.mubr.f32.gmra.mrb[0].mxu0 %v1444
  %v1582 = vpop.f32.mrb[0].mxu0
  %v1583 = vadd.f32 0.0, %v1582
  %v1584 = vpop.f32.mrb[0].mxu0
  %1585 = vmatprep.mubr.f32.mxu0 0.0
  %1586 = vmatmul.mubr.f32.gmra.mrb[0].mxu0 %v1445
  %v1587 = vpop.f32.mrb[0].mxu0
  %v1588 = vadd.f32 0.0, %v1587
  %v1589 = vpop.f32.mrb[0].mxu0
  %1590 = vdwg.mxu0
  %1591 = vmatprep.subr.mxu0 0.0
  %1592 = vmatpush1.msra.mxu0 %v916
  %1593 = vmatprep.subr.mxu0 0.0
  %1594 = vmatpush1.msra.mxu0 %v917
  %1595 = vmatprep.subr.mxu0 0.0
  %1596 = vmatpush1.msra.mxu0 %v918
  %1597 = vmatprep.subr.mxu0 0.0
  %1598 = vmatpush1.msra.mxu0 %v919
  %1599 = vmatprep.subr.mxu0 0.0
  %1600 = vmatpush1.msra.mxu0 %v920
  %1601 = vmatprep.subr.mxu0 0.0
  %1602 = vmatpush1.msra.mxu0 %v921
  %1603 = vmatprep.subr.mxu0 0.0
  %1604 = vmatpush1.msra.mxu0 %v922
  %1605 = vmatprep.subr.mxu0 0.0
  %1606 = vmatpush1.msra.mxu0 %v923
  %1607 = vmatprep.subr.mxu0 0.0
  %1608 = vmatpush1.msra.mxu0 %v924
  %1609 = vmatprep.subr.mxu0 0.0
  %1610 = vmatpush1.msra.mxu0 %v925
  %1611 = vmatprep.subr.mxu0 0.0
  %1612 = vmatpush1.msra.mxu0 %v926
  %1613 = vmatprep.subr.mxu0 0.0
  %1614 = vmatpush1.msra.mxu0 %v927
  %1615 = vmatprep.subr.mxu0 0.0
  %1616 = vmatpush1.msra.mxu0 %v928
  %1617 = vmatprep.subr.mxu0 0.0
  %1618 = vmatpush1.msra.mxu0 %v929
  %1619 = vmatprep.subr.mxu0 0.0
  %1620 = vmatpush1.msra.mxu0 %v930
  %1621 = vmatprep.subr.mxu0 0.0
  %1622 = vmatpush1.msra.mxu0 %v931
  %1623 = vmatprep.subr.mxu0 0.0
  %1624 = vmatpush1.msra.mxu0 0.0
  %1625 = vmatprep.subr.mxu0 0.0
  %1626 = vmatpush1.msra.mxu0 0.0
  %1627 = vmatprep.subr.mxu0 0.0
  %1628 = vmatpush1.msra.mxu0 0.0
  %1629 = vmatprep.subr.mxu0 0.0
  %1630 = vmatpush1.msra.mxu0 0.0
  %1631 = vmatprep.subr.mxu0 0.0
  %1632 = vmatpush1.msra.mxu0 0.0
  %1633 = vmatprep.subr.mxu0 0.0
  %1634 = vmatpush1.msra.mxu0 0.0
  %1635 = vmatprep.subr.mxu0 0.0
  %1636 = vmatpush1.msra.mxu0 0.0
  %1637 = vmatprep.subr.mxu0 0.0
  %1638 = vmatpush1.msra.mxu0 0.0
  %1639 = vmatprep.subr.mxu0 0.0
  %1640 = vmatpush1.msra.mxu0 0.0
  %1641 = vmatprep.subr.mxu0 0.0
  %1642 = vmatpush1.msra.mxu0 0.0
  %1643 = vmatprep.subr.mxu0 0.0
  %1644 = vmatpush1.msra.mxu0 0.0
  %1645 = vmatprep.subr.mxu0 0.0
  %1646 = vmatpush1.msra.mxu0 0.0
  %1647 = vmatprep.subr.mxu0 0.0
  %1648 = vmatpush1.msra.mxu0 0.0
  %1649 = vmatprep.subr.mxu0 0.0
  %1650 = vmatpush1.msra.mxu0 0.0
  %1651 = vmatprep.subr.mxu0 0.0
  %1652 = vmatpush1.msra.mxu0 0.0
  %1653 = vmatprep.subr.mxu0 0.0
  %1654 = vmatpush1.msra.mxu0 0.0
  %1655 = vmatprep.mubr.f32.mxu0 0.0
  %1656 = vmatmul.mubr.f32.gmra.mrb[0].mxu0 %v1430
  %v1657 = vpop.f32.mrb[0].mxu0
  %v1658 = vadd.f32 0.0, %v1657
  %v1659 = vpop.f32.mrb[0].mxu0
  %1660 = vmatprep.mubr.f32.mxu0 0.0
  %1661 = vmatmul.mubr.f32.gmra.mrb[0].mxu0 %v1431
  %v1662 = vpop.f32.mrb[0].mxu0
  %v1663 = vadd.f32 0.0, %v1662
  %v1664 = vpop.f32.mrb[0].mxu0
  %1665 = vmatprep.mubr.f32.mxu0 0.0
  %1666 = vmatmul.mubr.f32.gmra.mrb[0].mxu0 %v1432
  %v1667 = vpop.f32.mrb[0].mxu0
  %v1668 = vadd.f32 0.0, %v1667
  %v1669 = vpop.f32.mrb[0].mxu0
  %1670 = vmatprep.mubr.f32.mxu0 0.0
  %1671 = vmatmul.mubr.f32.gmra.mrb[0].mxu0 %v1433
  %v1672 = vpop.f32.mrb[0].mxu0
  %v1673 = vadd.f32 0.0, %v1672
  %v1674 = vpop.f32.mrb[0].mxu0
  %1675 = vmatprep.mubr.f32.mxu0 0.0
  %1676 = vmatmul.mubr.f32.gmra.mrb[0].mxu0 %v1434
  %v1677 = vpop.f32.mrb[0].mxu0
  %v1678 = vadd.f32 0.0, %v1677
  %v1679 = vpop.f32.mrb[0].mxu0
  %1680 = vmatprep.mubr.f32.mxu0 0.0
  %1681 = vmatmul.mubr.f32.gmra.mrb[0].mxu0 %v1435
  %v1682 = vpop.f32.mrb[0].mxu0
  %v1683 = vadd.f32 0.0, %v1682
  %v1684 = vpop.f32.mrb[0].mxu0
  %1685 = vmatprep.mubr.f32.mxu0 0.0
  %1686 = vmatmul.mubr.f32.gmra.mrb[0].mxu0 %v1436
  %v1687 = vpop.f32.mrb[0].mxu0
  %v1688 = vadd.f32 0.0, %v1687
  %v1689 = vpop.f32.mrb[0].mxu0
  %1690 = vmatprep.mubr.f32.mxu0 0.0
  %1691 = vmatmul.mubr.f32.gmra.mrb[0].mxu0 %v1437
  %v1692 = vpop.f32.mrb[0].mxu0
  %v1693 = vadd.f32 0.0, %v1692
  %v1694 = vpop.f32.mrb[0].mxu0
  %1695 = vmatprep.mubr.f32.mxu0 0.0
  %1696 = vmatmul.mubr.f32.gmra.mrb[0].mxu0 %v1438
  %v1697 = vpop.f32.mrb[0].mxu0
  %v1698 = vadd.f32 0.0, %v1697
  %v1699 = vpop.f32.mrb[0].mxu0
  %1700 = vmatprep.mubr.f32.mxu0 0.0
  %1701 = vmatmul.mubr.f32.gmra.mrb[0].mxu0 %v1439
  %v1702 = vpop.f32.mrb[0].mxu0
  %v1703 = vadd.f32 0.0, %v1702
  %v1704 = vpop.f32.mrb[0].mxu0
  %1705 = vmatprep.mubr.f32.mxu0 0.0
  %1706 = vmatmul.mubr.f32.gmra.mrb[0].mxu0 %v1440
  %v1707 = vpop.f32.mrb[0].mxu0
  %v1708 = vadd.f32 0.0, %v1707
  %v1709 = vpop.f32.mrb[0].mxu0
  %1710 = vmatprep.mubr.f32.mxu0 0.0
  %1711 = vmatmul.mubr.f32.gmra.mrb[0].mxu0 %v1441
  %v1712 = vpop.f32.mrb[0].mxu0
  %v1713 = vadd.f32 0.0, %v1712
  %v1714 = vpop.f32.mrb[0].mxu0
  %1715 = vmatprep.mubr.f32.mxu0 0.0
  %1716 = vmatmul.mubr.f32.gmra.mrb[0].mxu0 %v1442
  %v1717 = vpop.f32.mrb[0].mxu0
  %v1718 = vadd.f32 0.0, %v1717
  %v1719 = vpop.f32.mrb[0].mxu0
  %1720 = vmatprep.mubr.f32.mxu0 0.0
  %1721 = vmatmul.mubr.f32.gmra.mrb[0].mxu0 %v1443
  %v1722 = vpop.f32.mrb[0].mxu0
  %v1723 = vadd.f32 0.0, %v1722
  %v1724 = vpop.f32.mrb[0].mxu0
  %1725 = vmatprep.mubr.f32.mxu0 0.0
  %1726 = vmatmul.mubr.f32.gmra.mrb[0].mxu0 %v1444
  %v1727 = vpop.f32.mrb[0].mxu0
  %v1728 = vadd.f32 0.0, %v1727
  %v1729 = vpop.f32.mrb[0].mxu0
  %1730 = vmatprep.mubr.f32.mxu0 0.0
  %1731 = vmatmul.mubr.f32.gmra.mrb[0].mxu0 %v1445
  %v1732 = vpop.f32.mrb[0].mxu0
  %v1733 = vadd.f32 0.0, %v1732
  %v1734 = vpop.f32.mrb[0].mxu0
  %1735 = vdwg.mxu0
  %vm1736 = vcmp.eq.f32.partialorder %v1658, %v916
  %vm1737 = vcmp.eq.f32.partialorder %v1663, %v917
  %vm1738 = vcmp.eq.f32.partialorder %v1668, %v918
  %vm1739 = vcmp.eq.f32.partialorder %v1673, %v919
  %vm1740 = vcmp.eq.f32.partialorder %v1678, %v920
  %vm1741 = vcmp.eq.f32.partialorder %v1683, %v921
  %vm1742 = vcmp.eq.f32.partialorder %v1688, %v922
  %vm1743 = vcmp.eq.f32.partialorder %v1693, %v923
  %vm1744 = vcmp.eq.f32.partialorder %v1698, %v924
  %vm1745 = vcmp.eq.f32.partialorder %v1703, %v925
  %vm1746 = vcmp.eq.f32.partialorder %v1708, %v926
  %vm1747 = vcmp.eq.f32.partialorder %v1713, %v927
  %vm1748 = vcmp.eq.f32.partialorder %v1718, %v928
  %vm1749 = vcmp.eq.f32.partialorder %v1723, %v929
  %vm1750 = vcmp.eq.f32.partialorder %v1728, %v930
  %vm1751 = vcmp.eq.f32.partialorder %v1733, %v931
  %v1752 = vmax.f32 %v1382, %v1513
  %v1753 = vmax.f32 %v1383, %v1518
  %v1754 = vmax.f32 %v1384, %v1523
  %v1755 = vmax.f32 %v1385, %v1528
  %v1756 = vmax.f32 %v1386, %v1533
  %v1757 = vmax.f32 %v1387, %v1538
  %v1758 = vmax.f32 %v1388, %v1543
  %v1759 = vmax.f32 %v1389, %v1548
  %v1760 = vmax.f32 %v1390, %v1553
  %v1761 = vmax.f32 %v1391, %v1558
  %v1762 = vmax.f32 %v1392, %v1563
  %v1763 = vmax.f32 %v1393, %v1568
  %v1764 = vmax.f32 %v1394, %v1573
  %v1765 = vmax.f32 %v1395, %v1578
  %v1766 = vmax.f32 %v1396, %v1583
  %v1767 = vmax.f32 %v1397, %v1588
  %v1768 = vsel %vm1736, 1, 0
  %v1769 = vsel %vm1737, 1, 0
  %v1770 = vsel %vm1738, 1, 0
  %v1771 = vsel %vm1739, 1, 0
  %v1772 = vsel %vm1740, 1, 0
  %v1773 = vsel %vm1741, 1, 0
  %v1774 = vsel %vm1742, 1, 0
  %v1775 = vsel %vm1743, 1, 0
  %v1776 = vsel %vm1744, 1, 0
  %v1777 = vsel %vm1745, 1, 0
  %v1778 = vsel %vm1746, 1, 0
  %v1779 = vsel %vm1747, 1, 0
  %v1780 = vsel %vm1748, 1, 0
  %v1781 = vsel %vm1749, 1, 0
  %v1782 = vsel %vm1750, 1, 0
  %v1783 = vsel %vm1751, 1, 0
  %1784 = vset.pattern.permute.xlu0 0
  %1785 = vperm.xlu0 %1784, %v1768
  %v1786 = vpop.permute.xlu0 %1785
  %1787 = vset.pattern.permute.xlu0 0
  %1788 = vperm.xlu0 %1787, %v1769
  %v1789 = vpop.permute.xlu0 %1788
  %1790 = vset.pattern.permute.xlu0 0
  %1791 = vperm.xlu0 %1790, %v1770
  %v1792 = vpop.permute.xlu0 %1791
  %1793 = vset.pattern.permute.xlu0 0
  %1794 = vperm.xlu0 %1793, %v1771
  %v1795 = vpop.permute.xlu0 %1794
  %1796 = vset.pattern.permute.xlu0 0
  %1797 = vperm.xlu0 %1796, %v1772
  %v1798 = vpop.permute.xlu0 %1797
  %1799 = vset.pattern.permute.xlu0 0
  %1800 = vperm.xlu0 %1799, %v1773
  %v1801 = vpop.permute.xlu0 %1800
  %1802 = vset.pattern.permute.xlu0 0
  %1803 = vperm.xlu0 %1802, %v1774
  %v1804 = vpop.permute.xlu0 %1803
  %1805 = vset.pattern.permute.xlu0 0
  %1806 = vperm.xlu0 %1805, %v1775
  %v1807 = vpop.permute.xlu0 %1806
  %1808 = vset.pattern.permute.xlu0 0
  %1809 = vperm.xlu0 %1808, %v1776
  %v1810 = vpop.permute.xlu0 %1809
  %1811 = vset.pattern.permute.xlu0 0
  %1812 = vperm.xlu0 %1811, %v1777
  %v1813 = vpop.permute.xlu0 %1812
  %1814 = vset.pattern.permute.xlu0 0
  %1815 = vperm.xlu0 %1814, %v1778
  %v1816 = vpop.permute.xlu0 %1815
  %1817 = vset.pattern.permute.xlu0 0
  %1818 = vperm.xlu0 %1817, %v1779
  %v1819 = vpop.permute.xlu0 %1818
  %1820 = vset.pattern.permute.xlu0 0
  %1821 = vperm.xlu0 %1820, %v1780
  %v1822 = vpop.permute.xlu0 %1821
  %1823 = vset.pattern.permute.xlu0 0
  %1824 = vperm.xlu0 %1823, %v1781
  %v1825 = vpop.permute.xlu0 %1824
  %1826 = vset.pattern.permute.xlu0 0
  %1827 = vperm.xlu0 %1826, %v1782
  %v1828 = vpop.permute.xlu0 %1827
  %1829 = vset.pattern.permute.xlu0 0
  %1830 = vperm.xlu0 %1829, %v1783
  %v1831 = vpop.permute.xlu0 %1830
  %vm1832 = vcmp.eq.s32.totalorder %v1786, 1
  %vm1833 = vcmp.eq.s32.totalorder %v1789, 1
  %vm1834 = vcmp.eq.s32.totalorder %v1792, 1
  %vm1835 = vcmp.eq.s32.totalorder %v1795, 1
  %vm1836 = vcmp.eq.s32.totalorder %v1798, 1
  %vm1837 = vcmp.eq.s32.totalorder %v1801, 1
  %vm1838 = vcmp.eq.s32.totalorder %v1804, 1
  %vm1839 = vcmp.eq.s32.totalorder %v1807, 1
  %vm1840 = vcmp.eq.s32.totalorder %v1810, 1
  %vm1841 = vcmp.eq.s32.totalorder %v1813, 1
  %vm1842 = vcmp.eq.s32.totalorder %v1816, 1
  %vm1843 = vcmp.eq.s32.totalorder %v1819, 1
  %vm1844 = vcmp.eq.s32.totalorder %v1822, 1
  %vm1845 = vcmp.eq.s32.totalorder %v1825, 1
  %vm1846 = vcmp.eq.s32.totalorder %v1828, 1
  %vm1847 = vcmp.eq.s32.totalorder %v1831, 1
  %v1848 = vsel %vm1832, %v1752, %v1382
  %v1849 = vsel %vm1833, %v1753, %v1383
  %v1850 = vsel %vm1834, %v1754, %v1384
  %v1851 = vsel %vm1835, %v1755, %v1385
  %v1852 = vsel %vm1836, %v1756, %v1386
  %v1853 = vsel %vm1837, %v1757, %v1387
  %v1854 = vsel %vm1838, %v1758, %v1388
  %v1855 = vsel %vm1839, %v1759, %v1389
  %v1856 = vsel %vm1840, %v1760, %v1390
  %v1857 = vsel %vm1841, %v1761, %v1391
  %v1858 = vsel %vm1842, %v1762, %v1392
  %v1859 = vsel %vm1843, %v1763, %v1393
  %v1860 = vsel %vm1844, %v1764, %v1394
  %v1861 = vsel %vm1845, %v1765, %v1395
  %v1862 = vsel %vm1846, %v1766, %v1396
  %v1863 = vsel %vm1847, %v1767, %v1397
  %vm1864 = vcmp.eq.s32.totalorder %v900, 4
  %vm1865 = vcmp.eq.s32.totalorder %v901, 4
  %vm1866 = vcmp.eq.s32.totalorder %v902, 4
  %vm1867 = vcmp.eq.s32.totalorder %v903, 4
  %vm1868 = vcmp.eq.s32.totalorder %v904, 4
  %vm1869 = vcmp.eq.s32.totalorder %v905, 4
  %vm1870 = vcmp.eq.s32.totalorder %v906, 4
  %vm1871 = vcmp.eq.s32.totalorder %v907, 4
  %vm1872 = vcmp.eq.s32.totalorder %v908, 4
  %vm1873 = vcmp.eq.s32.totalorder %v909, 4
  %vm1874 = vcmp.eq.s32.totalorder %v910, 4
  %vm1875 = vcmp.eq.s32.totalorder %v911, 4
  %vm1876 = vcmp.eq.s32.totalorder %v912, 4
  %vm1877 = vcmp.eq.s32.totalorder %v913, 4
  %vm1878 = vcmp.eq.s32.totalorder %v914, 4
  %vm1879 = vcmp.eq.s32.totalorder %v915, 4
  %v1880 = vsel %vm1864, 1, 0
  %v1881 = vsel %vm1865, 1, 0
  %v1882 = vsel %vm1866, 1, 0
  %v1883 = vsel %vm1867, 1, 0
  %v1884 = vsel %vm1868, 1, 0
  %v1885 = vsel %vm1869, 1, 0
  %v1886 = vsel %vm1870, 1, 0
  %v1887 = vsel %vm1871, 1, 0
  %v1888 = vsel %vm1872, 1, 0
  %v1889 = vsel %vm1873, 1, 0
  %v1890 = vsel %vm1874, 1, 0
  %v1891 = vsel %vm1875, 1, 0
  %v1892 = vsel %vm1876, 1, 0
  %v1893 = vsel %vm1877, 1, 0
  %v1894 = vsel %vm1878, 1, 0
  %v1895 = vsel %vm1879, 1, 0
  %v1896 = vcvt.s32.f32 %v1880
  %v1897 = vcvt.s32.f32 %v1881
  %v1898 = vcvt.s32.f32 %v1882
  %v1899 = vcvt.s32.f32 %v1883
  %v1900 = vcvt.s32.f32 %v1884
  %v1901 = vcvt.s32.f32 %v1885
  %v1902 = vcvt.s32.f32 %v1886
  %v1903 = vcvt.s32.f32 %v1887
  %v1904 = vcvt.s32.f32 %v1888
  %v1905 = vcvt.s32.f32 %v1889
  %v1906 = vcvt.s32.f32 %v1890
  %v1907 = vcvt.s32.f32 %v1891
  %v1908 = vcvt.s32.f32 %v1892
  %v1909 = vcvt.s32.f32 %v1893
  %v1910 = vcvt.s32.f32 %v1894
  %v1911 = vcvt.s32.f32 %v1895
  %1912 = vmatprep.subr.mxu0 0.0
  %1913 = vmatpush1.msra.mxu0 %v1848
  %1914 = vmatprep.subr.mxu0 0.0
  %1915 = vmatpush1.msra.mxu0 %v1849
  %1916 = vmatprep.subr.mxu0 0.0
  %1917 = vmatpush1.msra.mxu0 %v1850
  %1918 = vmatprep.subr.mxu0 0.0
  %1919 = vmatpush1.msra.mxu0 %v1851
  %1920 = vmatprep.subr.mxu0 0.0
  %1921 = vmatpush1.msra.mxu0 %v1852
  %1922 = vmatprep.subr.mxu0 0.0
  %1923 = vmatpush1.msra.mxu0 %v1853
  %1924 = vmatprep.subr.mxu0 0.0
  %1925 = vmatpush1.msra.mxu0 %v1854
  %1926 = vmatprep.subr.mxu0 0.0
  %1927 = vmatpush1.msra.mxu0 %v1855
  %1928 = vmatprep.subr.mxu0 0.0
  %1929 = vmatpush1.msra.mxu0 %v1856
  %1930 = vmatprep.subr.mxu0 0.0
  %1931 = vmatpush1.msra.mxu0 %v1857
  %1932 = vmatprep.subr.mxu0 0.0
  %1933 = vmatpush1.msra.mxu0 %v1858
  %1934 = vmatprep.subr.mxu0 0.0
  %1935 = vmatpush1.msra.mxu0 %v1859
  %1936 = vmatprep.subr.mxu0 0.0
  %1937 = vmatpush1.msra.mxu0 %v1860
  %1938 = vmatprep.subr.mxu0 0.0
  %1939 = vmatpush1.msra.mxu0 %v1861
  %1940 = vmatprep.subr.mxu0 0.0
  %1941 = vmatpush1.msra.mxu0 %v1862
  %1942 = vmatprep.subr.mxu0 0.0
  %1943 = vmatpush1.msra.mxu0 %v1863
  %1944 = vmatprep.subr.mxu0 0.0
  %1945 = vmatpush1.msra.mxu0 0.0
  %1946 = vmatprep.subr.mxu0 0.0
  %1947 = vmatpush1.msra.mxu0 0.0
  %1948 = vmatprep.subr.mxu0 0.0
  %1949 = vmatpush1.msra.mxu0 0.0
  %1950 = vmatprep.subr.mxu0 0.0
  %1951 = vmatpush1.msra.mxu0 0.0
  %1952 = vmatprep.subr.mxu0 0.0
  %1953 = vmatpush1.msra.mxu0 0.0
  %1954 = vmatprep.subr.mxu0 0.0
  %1955 = vmatpush1.msra.mxu0 0.0
  %1956 = vmatprep.subr.mxu0 0.0
  %1957 = vmatpush1.msra.mxu0 0.0
  %1958 = vmatprep.subr.mxu0 0.0
  %1959 = vmatpush1.msra.mxu0 0.0
  %1960 = vmatprep.subr.mxu0 0.0
  %1961 = vmatpush1.msra.mxu0 0.0
  %1962 = vmatprep.subr.mxu0 0.0
  %1963 = vmatpush1.msra.mxu0 0.0
  %1964 = vmatprep.subr.mxu0 0.0
  %1965 = vmatpush1.msra.mxu0 0.0
  %1966 = vmatprep.subr.mxu0 0.0
  %1967 = vmatpush1.msra.mxu0 0.0
  %1968 = vmatprep.subr.mxu0 0.0
  %1969 = vmatpush1.msra.mxu0 0.0
  %1970 = vmatprep.subr.mxu0 0.0
  %1971 = vmatpush1.msra.mxu0 0.0
  %1972 = vmatprep.subr.mxu0 0.0
  %1973 = vmatpush1.msra.mxu0 0.0
  %1974 = vmatprep.subr.mxu0 0.0
  %1975 = vmatpush1.msra.mxu0 0.0
  %1976 = vmatprep.mubr.f32.mxu0 0.0
  %1977 = vmatmul.mubr.f32.gmra.mrb[0].mxu0 %v1896
  %v1978 = vpop.f32.mrb[0].mxu0
  %v1979 = vadd.f32 0.0, %v1978
  %v1980 = vpop.f32.mrb[0].mxu0
  %1981 = vmatprep.mubr.f32.mxu0 0.0
  %1982 = vmatmul.mubr.f32.gmra.mrb[0].mxu0 %v1897
  %v1983 = vpop.f32.mrb[0].mxu0
  %v1984 = vadd.f32 0.0, %v1983
  %v1985 = vpop.f32.mrb[0].mxu0
  %1986 = vmatprep.mubr.f32.mxu0 0.0
  %1987 = vmatmul.mubr.f32.gmra.mrb[0].mxu0 %v1898
  %v1988 = vpop.f32.mrb[0].mxu0
  %v1989 = vadd.f32 0.0, %v1988
  %v1990 = vpop.f32.mrb[0].mxu0
  %1991 = vmatprep.mubr.f32.mxu0 0.0
  %1992 = vmatmul.mubr.f32.gmra.mrb[0].mxu0 %v1899
  %v1993 = vpop.f32.mrb[0].mxu0
  %v1994 = vadd.f32 0.0, %v1993
  %v1995 = vpop.f32.mrb[0].mxu0
  %1996 = vmatprep.mubr.f32.mxu0 0.0
  %1997 = vmatmul.mubr.f32.gmra.mrb[0].mxu0 %v1900
  %v1998 = vpop.f32.mrb[0].mxu0
  %v1999 = vadd.f32 0.0, %v1998
  %v2000 = vpop.f32.mrb[0].mxu0
  %2001 = vmatprep.mubr.f32.mxu0 0.0
  %2002 = vmatmul.mubr.f32.gmra.mrb[0].mxu0 %v1901
  %v2003 = vpop.f32.mrb[0].mxu0
  %v2004 = vadd.f32 0.0, %v2003
  %v2005 = vpop.f32.mrb[0].mxu0
  %2006 = vmatprep.mubr.f32.mxu0 0.0
  %2007 = vmatmul.mubr.f32.gmra.mrb[0].mxu0 %v1902
  %v2008 = vpop.f32.mrb[0].mxu0
  %v2009 = vadd.f32 0.0, %v2008
  %v2010 = vpop.f32.mrb[0].mxu0
  %2011 = vmatprep.mubr.f32.mxu0 0.0
  %2012 = vmatmul.mubr.f32.gmra.mrb[0].mxu0 %v1903
  %v2013 = vpop.f32.mrb[0].mxu0
  %v2014 = vadd.f32 0.0, %v2013
  %v2015 = vpop.f32.mrb[0].mxu0
  %2016 = vmatprep.mubr.f32.mxu0 0.0
  %2017 = vmatmul.mubr.f32.gmra.mrb[0].mxu0 %v1904
  %v2018 = vpop.f32.mrb[0].mxu0
  %v2019 = vadd.f32 0.0, %v2018
  %v2020 = vpop.f32.mrb[0].mxu0
  %2021 = vmatprep.mubr.f32.mxu0 0.0
  %2022 = vmatmul.mubr.f32.gmra.mrb[0].mxu0 %v1905
  %v2023 = vpop.f32.mrb[0].mxu0
  %v2024 = vadd.f32 0.0, %v2023
  %v2025 = vpop.f32.mrb[0].mxu0
  %2026 = vmatprep.mubr.f32.mxu0 0.0
  %2027 = vmatmul.mubr.f32.gmra.mrb[0].mxu0 %v1906
  %v2028 = vpop.f32.mrb[0].mxu0
  %v2029 = vadd.f32 0.0, %v2028
  %v2030 = vpop.f32.mrb[0].mxu0
  %2031 = vmatprep.mubr.f32.mxu0 0.0
  %2032 = vmatmul.mubr.f32.gmra.mrb[0].mxu0 %v1907
  %v2033 = vpop.f32.mrb[0].mxu0
  %v2034 = vadd.f32 0.0, %v2033
  %v2035 = vpop.f32.mrb[0].mxu0
  %2036 = vmatprep.mubr.f32.mxu0 0.0
  %2037 = vmatmul.mubr.f32.gmra.mrb[0].mxu0 %v1908
  %v2038 = vpop.f32.mrb[0].mxu0
  %v2039 = vadd.f32 0.0, %v2038
  %v2040 = vpop.f32.mrb[0].mxu0
  %2041 = vmatprep.mubr.f32.mxu0 0.0
  %2042 = vmatmul.mubr.f32.gmra.mrb[0].mxu0 %v1909
  %v2043 = vpop.f32.mrb[0].mxu0
  %v2044 = vadd.f32 0.0, %v2043
  %v2045 = vpop.f32.mrb[0].mxu0
  %2046 = vmatprep.mubr.f32.mxu0 0.0
  %2047 = vmatmul.mubr.f32.gmra.mrb[0].mxu0 %v1910
  %v2048 = vpop.f32.mrb[0].mxu0
  %v2049 = vadd.f32 0.0, %v2048
  %v2050 = vpop.f32.mrb[0].mxu0
  %2051 = vmatprep.mubr.f32.mxu0 0.0
  %2052 = vmatmul.mubr.f32.gmra.mrb[0].mxu0 %v1911
  %v2053 = vpop.f32.mrb[0].mxu0
  %v2054 = vadd.f32 0.0, %v2053
  %v2055 = vpop.f32.mrb[0].mxu0
  %2056 = vdwg.mxu0
  %2057 = vmatprep.subr.mxu0 0.0
  %2058 = vmatpush1.msra.mxu0 %v916
  %2059 = vmatprep.subr.mxu0 0.0
  %2060 = vmatpush1.msra.mxu0 %v917
  %2061 = vmatprep.subr.mxu0 0.0
  %2062 = vmatpush1.msra.mxu0 %v918
  %2063 = vmatprep.subr.mxu0 0.0
  %2064 = vmatpush1.msra.mxu0 %v919
  %2065 = vmatprep.subr.mxu0 0.0
  %2066 = vmatpush1.msra.mxu0 %v920
  %2067 = vmatprep.subr.mxu0 0.0
  %2068 = vmatpush1.msra.mxu0 %v921
  %2069 = vmatprep.subr.mxu0 0.0
  %2070 = vmatpush1.msra.mxu0 %v922
  %2071 = vmatprep.subr.mxu0 0.0
  %2072 = vmatpush1.msra.mxu0 %v923
  %2073 = vmatprep.subr.mxu0 0.0
  %2074 = vmatpush1.msra.mxu0 %v924
  %2075 = vmatprep.subr.mxu0 0.0
  %2076 = vmatpush1.msra.mxu0 %v925
  %2077 = vmatprep.subr.mxu0 0.0
  %2078 = vmatpush1.msra.mxu0 %v926
  %2079 = vmatprep.subr.mxu0 0.0
  %2080 = vmatpush1.msra.mxu0 %v927
  %2081 = vmatprep.subr.mxu0 0.0
  %2082 = vmatpush1.msra.mxu0 %v928
  %2083 = vmatprep.subr.mxu0 0.0
  %2084 = vmatpush1.msra.mxu0 %v929
  %2085 = vmatprep.subr.mxu0 0.0
  %2086 = vmatpush1.msra.mxu0 %v930
  %2087 = vmatprep.subr.mxu0 0.0
  %2088 = vmatpush1.msra.mxu0 %v931
  %2089 = vmatprep.subr.mxu0 0.0
  %2090 = vmatpush1.msra.mxu0 0.0
  %2091 = vmatprep.subr.mxu0 0.0
  %2092 = vmatpush1.msra.mxu0 0.0
  %2093 = vmatprep.subr.mxu0 0.0
  %2094 = vmatpush1.msra.mxu0 0.0
  %2095 = vmatprep.subr.mxu0 0.0
  %2096 = vmatpush1.msra.mxu0 0.0
  %2097 = vmatprep.subr.mxu0 0.0
  %2098 = vmatpush1.msra.mxu0 0.0
  %2099 = vmatprep.subr.mxu0 0.0
  %2100 = vmatpush1.msra.mxu0 0.0
  %2101 = vmatprep.subr.mxu0 0.0
  %2102 = vmatpush1.msra.mxu0 0.0
  %2103 = vmatprep.subr.mxu0 0.0
  %2104 = vmatpush1.msra.mxu0 0.0
  %2105 = vmatprep.subr.mxu0 0.0
  %2106 = vmatpush1.msra.mxu0 0.0
  %2107 = vmatprep.subr.mxu0 0.0
  %2108 = vmatpush1.msra.mxu0 0.0
  %2109 = vmatprep.subr.mxu0 0.0
  %2110 = vmatpush1.msra.mxu0 0.0
  %2111 = vmatprep.subr.mxu0 0.0
  %2112 = vmatpush1.msra.mxu0 0.0
  %2113 = vmatprep.subr.mxu0 0.0
  %2114 = vmatpush1.msra.mxu0 0.0
  %2115 = vmatprep.subr.mxu0 0.0
  %2116 = vmatpush1.msra.mxu0 0.0
  %2117 = vmatprep.subr.mxu0 0.0
  %2118 = vmatpush1.msra.mxu0 0.0
  %2119 = vmatprep.subr.mxu0 0.0
  %2120 = vmatpush1.msra.mxu0 0.0
  %2121 = vmatprep.mubr.f32.mxu0 0.0
  %2122 = vmatmul.mubr.f32.gmra.mrb[0].mxu0 %v1896
  %v2123 = vpop.f32.mrb[0].mxu0
  %v2124 = vadd.f32 0.0, %v2123
  %v2125 = vpop.f32.mrb[0].mxu0
  %2126 = vmatprep.mubr.f32.mxu0 0.0
  %2127 = vmatmul.mubr.f32.gmra.mrb[0].mxu0 %v1897
  %v2128 = vpop.f32.mrb[0].mxu0
  %v2129 = vadd.f32 0.0, %v2128
  %v2130 = vpop.f32.mrb[0].mxu0
  %2131 = vmatprep.mubr.f32.mxu0 0.0
  %2132 = vmatmul.mubr.f32.gmra.mrb[0].mxu0 %v1898
  %v2133 = vpop.f32.mrb[0].mxu0
  %v2134 = vadd.f32 0.0, %v2133
  %v2135 = vpop.f32.mrb[0].mxu0
  %2136 = vmatprep.mubr.f32.mxu0 0.0
  %2137 = vmatmul.mubr.f32.gmra.mrb[0].mxu0 %v1899
  %v2138 = vpop.f32.mrb[0].mxu0
  %v2139 = vadd.f32 0.0, %v2138
  %v2140 = vpop.f32.mrb[0].mxu0
  %2141 = vmatprep.mubr.f32.mxu0 0.0
  %2142 = vmatmul.mubr.f32.gmra.mrb[0].mxu0 %v1900
  %v2143 = vpop.f32.mrb[0].mxu0
  %v2144 = vadd.f32 0.0, %v2143
  %v2145 = vpop.f32.mrb[0].mxu0
  %2146 = vmatprep.mubr.f32.mxu0 0.0
  %2147 = vmatmul.mubr.f32.gmra.mrb[0].mxu0 %v1901
  %v2148 = vpop.f32.mrb[0].mxu0
  %v2149 = vadd.f32 0.0, %v2148
  %v2150 = vpop.f32.mrb[0].mxu0
  %2151 = vmatprep.mubr.f32.mxu0 0.0
  %2152 = vmatmul.mubr.f32.gmra.mrb[0].mxu0 %v1902
  %v2153 = vpop.f32.mrb[0].mxu0
  %v2154 = vadd.f32 0.0, %v2153
  %v2155 = vpop.f32.mrb[0].mxu0
  %2156 = vmatprep.mubr.f32.mxu0 0.0
  %2157 = vmatmul.mubr.f32.gmra.mrb[0].mxu0 %v1903
  %v2158 = vpop.f32.mrb[0].mxu0
  %v2159 = vadd.f32 0.0, %v2158
  %v2160 = vpop.f32.mrb[0].mxu0
  %2161 = vmatprep.mubr.f32.mxu0 0.0
  %2162 = vmatmul.mubr.f32.gmra.mrb[0].mxu0 %v1904
  %v2163 = vpop.f32.mrb[0].mxu0
  %v2164 = vadd.f32 0.0, %v2163
  %v2165 = vpop.f32.mrb[0].mxu0
  %2166 = vmatprep.mubr.f32.mxu0 0.0
  %2167 = vmatmul.mubr.f32.gmra.mrb[0].mxu0 %v1905
  %v2168 = vpop.f32.mrb[0].mxu0
  %v2169 = vadd.f32 0.0, %v2168
  %v2170 = vpop.f32.mrb[0].mxu0
  %2171 = vmatprep.mubr.f32.mxu0 0.0
  %2172 = vmatmul.mubr.f32.gmra.mrb[0].mxu0 %v1906
  %v2173 = vpop.f32.mrb[0].mxu0
  %v2174 = vadd.f32 0.0, %v2173
  %v2175 = vpop.f32.mrb[0].mxu0
  %2176 = vmatprep.mubr.f32.mxu0 0.0
  %2177 = vmatmul.mubr.f32.gmra.mrb[0].mxu0 %v1907
  %v2178 = vpop.f32.mrb[0].mxu0
  %v2179 = vadd.f32 0.0, %v2178
  %v2180 = vpop.f32.mrb[0].mxu0
  %2181 = vmatprep.mubr.f32.mxu0 0.0
  %2182 = vmatmul.mubr.f32.gmra.mrb[0].mxu0 %v1908
  %v2183 = vpop.f32.mrb[0].mxu0
  %v2184 = vadd.f32 0.0, %v2183
  %v2185 = vpop.f32.mrb[0].mxu0
  %2186 = vmatprep.mubr.f32.mxu0 0.0
  %2187 = vmatmul.mubr.f32.gmra.mrb[0].mxu0 %v1909
  %v2188 = vpop.f32.mrb[0].mxu0
  %v2189 = vadd.f32 0.0, %v2188
  %v2190 = vpop.f32.mrb[0].mxu0
  %2191 = vmatprep.mubr.f32.mxu0 0.0
  %2192 = vmatmul.mubr.f32.gmra.mrb[0].mxu0 %v1910
  %v2193 = vpop.f32.mrb[0].mxu0
  %v2194 = vadd.f32 0.0, %v2193
  %v2195 = vpop.f32.mrb[0].mxu0
  %2196 = vmatprep.mubr.f32.mxu0 0.0
  %2197 = vmatmul.mubr.f32.gmra.mrb[0].mxu0 %v1911
  %v2198 = vpop.f32.mrb[0].mxu0
  %v2199 = vadd.f32 0.0, %v2198
  %v2200 = vpop.f32.mrb[0].mxu0
  %2201 = vdwg.mxu0
  %vm2202 = vcmp.eq.f32.partialorder %v2124, %v916
  %vm2203 = vcmp.eq.f32.partialorder %v2129, %v917
  %vm2204 = vcmp.eq.f32.partialorder %v2134, %v918
  %vm2205 = vcmp.eq.f32.partialorder %v2139, %v919
  %vm2206 = vcmp.eq.f32.partialorder %v2144, %v920
  %vm2207 = vcmp.eq.f32.partialorder %v2149, %v921
  %vm2208 = vcmp.eq.f32.partialorder %v2154, %v922
  %vm2209 = vcmp.eq.f32.partialorder %v2159, %v923
  %vm2210 = vcmp.eq.f32.partialorder %v2164, %v924
  %vm2211 = vcmp.eq.f32.partialorder %v2169, %v925
  %vm2212 = vcmp.eq.f32.partialorder %v2174, %v926
  %vm2213 = vcmp.eq.f32.partialorder %v2179, %v927
  %vm2214 = vcmp.eq.f32.partialorder %v2184, %v928
  %vm2215 = vcmp.eq.f32.partialorder %v2189, %v929
  %vm2216 = vcmp.eq.f32.partialorder %v2194, %v930
  %vm2217 = vcmp.eq.f32.partialorder %v2199, %v931
  %v2218 = vmax.f32 %v1848, %v1979
  %v2219 = vmax.f32 %v1849, %v1984
  %v2220 = vmax.f32 %v1850, %v1989
  %v2221 = vmax.f32 %v1851, %v1994
  %v2222 = vmax.f32 %v1852, %v1999
  %v2223 = vmax.f32 %v1853, %v2004
  %v2224 = vmax.f32 %v1854, %v2009
  %v2225 = vmax.f32 %v1855, %v2014
  %v2226 = vmax.f32 %v1856, %v2019
  %v2227 = vmax.f32 %v1857, %v2024
  %v2228 = vmax.f32 %v1858, %v2029
  %v2229 = vmax.f32 %v1859, %v2034
  %v2230 = vmax.f32 %v1860, %v2039
  %v2231 = vmax.f32 %v1861, %v2044
  %v2232 = vmax.f32 %v1862, %v2049
  %v2233 = vmax.f32 %v1863, %v2054
  %v2234 = vsel %vm2202, 1, 0
  %v2235 = vsel %vm2203, 1, 0
  %v2236 = vsel %vm2204, 1, 0
  %v2237 = vsel %vm2205, 1, 0
  %v2238 = vsel %vm2206, 1, 0
  %v2239 = vsel %vm2207, 1, 0
  %v2240 = vsel %vm2208, 1, 0
  %v2241 = vsel %vm2209, 1, 0
  %v2242 = vsel %vm2210, 1, 0
  %v2243 = vsel %vm2211, 1, 0
  %v2244 = vsel %vm2212, 1, 0
  %v2245 = vsel %vm2213, 1, 0
  %v2246 = vsel %vm2214, 1, 0
  %v2247 = vsel %vm2215, 1, 0
  %v2248 = vsel %vm2216, 1, 0
  %v2249 = vsel %vm2217, 1, 0
  %2250 = vset.pattern.permute.xlu0 0
  %2251 = vperm.xlu0 %2250, %v2234
  %v2252 = vpop.permute.xlu0 %2251
  %2253 = vset.pattern.permute.xlu0 0
  %2254 = vperm.xlu0 %2253, %v2235
  %v2255 = vpop.permute.xlu0 %2254
  %2256 = vset.pattern.permute.xlu0 0
  %2257 = vperm.xlu0 %2256, %v2236
  %v2258 = vpop.permute.xlu0 %2257
  %2259 = vset.pattern.permute.xlu0 0
  %2260 = vperm.xlu0 %2259, %v2237
  %v2261 = vpop.permute.xlu0 %2260
  %2262 = vset.pattern.permute.xlu0 0
  %2263 = vperm.xlu0 %2262, %v2238
  %v2264 = vpop.permute.xlu0 %2263
  %2265 = vset.pattern.permute.xlu0 0
  %2266 = vperm.xlu0 %2265, %v2239
  %v2267 = vpop.permute.xlu0 %2266
  %2268 = vset.pattern.permute.xlu0 0
  %2269 = vperm.xlu0 %2268, %v2240
  %v2270 = vpop.permute.xlu0 %2269
  %2271 = vset.pattern.permute.xlu0 0
  %2272 = vperm.xlu0 %2271, %v2241
  %v2273 = vpop.permute.xlu0 %2272
  %2274 = vset.pattern.permute.xlu0 0
  %2275 = vperm.xlu0 %2274, %v2242
  %v2276 = vpop.permute.xlu0 %2275
  %2277 = vset.pattern.permute.xlu0 0
  %2278 = vperm.xlu0 %2277, %v2243
  %v2279 = vpop.permute.xlu0 %2278
  %2280 = vset.pattern.permute.xlu0 0
  %2281 = vperm.xlu0 %2280, %v2244
  %v2282 = vpop.permute.xlu0 %2281
  %2283 = vset.pattern.permute.xlu0 0
  %2284 = vperm.xlu0 %2283, %v2245
  %v2285 = vpop.permute.xlu0 %2284
  %2286 = vset.pattern.permute.xlu0 0
  %2287 = vperm.xlu0 %2286, %v2246
  %v2288 = vpop.permute.xlu0 %2287
  %2289 = vset.pattern.permute.xlu0 0
  %2290 = vperm.xlu0 %2289, %v2247
  %v2291 = vpop.permute.xlu0 %2290
  %2292 = vset.pattern.permute.xlu0 0
  %2293 = vperm.xlu0 %2292, %v2248
  %v2294 = vpop.permute.xlu0 %2293
  %2295 = vset.pattern.permute.xlu0 0
  %2296 = vperm.xlu0 %2295, %v2249
  %v2297 = vpop.permute.xlu0 %2296
  %vm2298 = vcmp.eq.s32.totalorder %v2252, 1
  %vm2299 = vcmp.eq.s32.totalorder %v2255, 1
  %vm2300 = vcmp.eq.s32.totalorder %v2258, 1
  %vm2301 = vcmp.eq.s32.totalorder %v2261, 1
  %vm2302 = vcmp.eq.s32.totalorder %v2264, 1
  %vm2303 = vcmp.eq.s32.totalorder %v2267, 1
  %vm2304 = vcmp.eq.s32.totalorder %v2270, 1
  %vm2305 = vcmp.eq.s32.totalorder %v2273, 1
  %vm2306 = vcmp.eq.s32.totalorder %v2276, 1
  %vm2307 = vcmp.eq.s32.totalorder %v2279, 1
  %vm2308 = vcmp.eq.s32.totalorder %v2282, 1
  %vm2309 = vcmp.eq.s32.totalorder %v2285, 1
  %vm2310 = vcmp.eq.s32.totalorder %v2288, 1
  %vm2311 = vcmp.eq.s32.totalorder %v2291, 1
  %vm2312 = vcmp.eq.s32.totalorder %v2294, 1
  %vm2313 = vcmp.eq.s32.totalorder %v2297, 1
  %v2314 = vsel %vm2298, %v2218, %v1848
  %v2315 = vsel %vm2299, %v2219, %v1849
  %v2316 = vsel %vm2300, %v2220, %v1850
  %v2317 = vsel %vm2301, %v2221, %v1851
  %v2318 = vsel %vm2302, %v2222, %v1852
  %v2319 = vsel %vm2303, %v2223, %v1853
  %v2320 = vsel %vm2304, %v2224, %v1854
  %v2321 = vsel %vm2305, %v2225, %v1855
  %v2322 = vsel %vm2306, %v2226, %v1856
  %v2323 = vsel %vm2307, %v2227, %v1857
  %v2324 = vsel %vm2308, %v2228, %v1858
  %v2325 = vsel %vm2309, %v2229, %v1859
  %v2326 = vsel %vm2310, %v2230, %v1860
  %v2327 = vsel %vm2311, %v2231, %v1861
  %v2328 = vsel %vm2312, %v2232, %v1862
  %v2329 = vsel %vm2313, %v2233, %v1863
  %vm2330 = vcmp.eq.s32.totalorder %v900, 8
  %vm2331 = vcmp.eq.s32.totalorder %v901, 8
  %vm2332 = vcmp.eq.s32.totalorder %v902, 8
  %vm2333 = vcmp.eq.s32.totalorder %v903, 8
  %vm2334 = vcmp.eq.s32.totalorder %v904, 8
  %vm2335 = vcmp.eq.s32.totalorder %v905, 8
  %vm2336 = vcmp.eq.s32.totalorder %v906, 8
  %vm2337 = vcmp.eq.s32.totalorder %v907, 8
  %vm2338 = vcmp.eq.s32.totalorder %v908, 8
  %vm2339 = vcmp.eq.s32.totalorder %v909, 8
  %vm2340 = vcmp.eq.s32.totalorder %v910, 8
  %vm2341 = vcmp.eq.s32.totalorder %v911, 8
  %vm2342 = vcmp.eq.s32.totalorder %v912, 8
  %vm2343 = vcmp.eq.s32.totalorder %v913, 8
  %vm2344 = vcmp.eq.s32.totalorder %v914, 8
  %vm2345 = vcmp.eq.s32.totalorder %v915, 8
  %v2346 = vsel %vm2330, 1, 0
  %v2347 = vsel %vm2331, 1, 0
  %v2348 = vsel %vm2332, 1, 0
  %v2349 = vsel %vm2333, 1, 0
  %v2350 = vsel %vm2334, 1, 0
  %v2351 = vsel %vm2335, 1, 0
  %v2352 = vsel %vm2336, 1, 0
  %v2353 = vsel %vm2337, 1, 0
  %v2354 = vsel %vm2338, 1, 0
  %v2355 = vsel %vm2339, 1, 0
  %v2356 = vsel %vm2340, 1, 0
  %v2357 = vsel %vm2341, 1, 0
  %v2358 = vsel %vm2342, 1, 0
  %v2359 = vsel %vm2343, 1, 0
  %v2360 = vsel %vm2344, 1, 0
  %v2361 = vsel %vm2345, 1, 0
  %v2362 = vcvt.s32.f32 %v2346
  %v2363 = vcvt.s32.f32 %v2347
  %v2364 = vcvt.s32.f32 %v2348
  %v2365 = vcvt.s32.f32 %v2349
  %v2366 = vcvt.s32.f32 %v2350
  %v2367 = vcvt.s32.f32 %v2351
  %v2368 = vcvt.s32.f32 %v2352
  %v2369 = vcvt.s32.f32 %v2353
  %v2370 = vcvt.s32.f32 %v2354
  %v2371 = vcvt.s32.f32 %v2355
  %v2372 = vcvt.s32.f32 %v2356
  %v2373 = vcvt.s32.f32 %v2357
  %v2374 = vcvt.s32.f32 %v2358
  %v2375 = vcvt.s32.f32 %v2359
  %v2376 = vcvt.s32.f32 %v2360
  %v2377 = vcvt.s32.f32 %v2361
  %2378 = vmatprep.subr.mxu0 0.0
  %2379 = vmatpush1.msra.mxu0 %v2314
  %2380 = vmatprep.subr.mxu0 0.0
  %2381 = vmatpush1.msra.mxu0 %v2315
  %2382 = vmatprep.subr.mxu0 0.0
  %2383 = vmatpush1.msra.mxu0 %v2316
  %2384 = vmatprep.subr.mxu0 0.0
  %2385 = vmatpush1.msra.mxu0 %v2317
  %2386 = vmatprep.subr.mxu0 0.0
  %2387 = vmatpush1.msra.mxu0 %v2318
  %2388 = vmatprep.subr.mxu0 0.0
  %2389 = vmatpush1.msra.mxu0 %v2319
  %2390 = vmatprep.subr.mxu0 0.0
  %2391 = vmatpush1.msra.mxu0 %v2320
  %2392 = vmatprep.subr.mxu0 0.0
  %2393 = vmatpush1.msra.mxu0 %v2321
  %2394 = vmatprep.subr.mxu0 0.0
  %2395 = vmatpush1.msra.mxu0 %v2322
  %2396 = vmatprep.subr.mxu0 0.0
  %2397 = vmatpush1.msra.mxu0 %v2323
  %2398 = vmatprep.subr.mxu0 0.0
  %2399 = vmatpush1.msra.mxu0 %v2324
  %2400 = vmatprep.subr.mxu0 0.0
  %2401 = vmatpush1.msra.mxu0 %v2325
  %2402 = vmatprep.subr.mxu0 0.0
  %2403 = vmatpush1.msra.mxu0 %v2326
  %2404 = vmatprep.subr.mxu0 0.0
  %2405 = vmatpush1.msra.mxu0 %v2327
  %2406 = vmatprep.subr.mxu0 0.0
  %2407 = vmatpush1.msra.mxu0 %v2328
  %2408 = vmatprep.subr.mxu0 0.0
  %2409 = vmatpush1.msra.mxu0 %v2329
  %2410 = vmatprep.subr.mxu0 0.0
  %2411 = vmatpush1.msra.mxu0 0.0
  %2412 = vmatprep.subr.mxu0 0.0
  %2413 = vmatpush1.msra.mxu0 0.0
  %2414 = vmatprep.subr.mxu0 0.0
  %2415 = vmatpush1.msra.mxu0 0.0
  %2416 = vmatprep.subr.mxu0 0.0
  %2417 = vmatpush1.msra.mxu0 0.0
  %2418 = vmatprep.subr.mxu0 0.0
  %2419 = vmatpush1.msra.mxu0 0.0
  %2420 = vmatprep.subr.mxu0 0.0
  %2421 = vmatpush1.msra.mxu0 0.0
  %2422 = vmatprep.subr.mxu0 0.0
  %2423 = vmatpush1.msra.mxu0 0.0
  %2424 = vmatprep.subr.mxu0 0.0
  %2425 = vmatpush1.msra.mxu0 0.0
  %2426 = vmatprep.subr.mxu0 0.0
  %2427 = vmatpush1.msra.mxu0 0.0
  %2428 = vmatprep.subr.mxu0 0.0
  %2429 = vmatpush1.msra.mxu0 0.0
  %2430 = vmatprep.subr.mxu0 0.0
  %2431 = vmatpush1.msra.mxu0 0.0
  %2432 = vmatprep.subr.mxu0 0.0
  %2433 = vmatpush1.msra.mxu0 0.0
  %2434 = vmatprep.subr.mxu0 0.0
  %2435 = vmatpush1.msra.mxu0 0.0
  %2436 = vmatprep.subr.mxu0 0.0
  %2437 = vmatpush1.msra.mxu0 0.0
  %2438 = vmatprep.subr.mxu0 0.0
  %2439 = vmatpush1.msra.mxu0 0.0
  %2440 = vmatprep.subr.mxu0 0.0
  %2441 = vmatpush1.msra.mxu0 0.0
  %2442 = vmatprep.mubr.f32.mxu0 0.0
  %2443 = vmatmul.mubr.f32.gmra.mrb[0].mxu0 %v2362
  %v2444 = vpop.f32.mrb[0].mxu0
  %v2445 = vadd.f32 0.0, %v2444
  %v2446 = vpop.f32.mrb[0].mxu0
  %2447 = vmatprep.mubr.f32.mxu0 0.0
  %2448 = vmatmul.mubr.f32.gmra.mrb[0].mxu0 %v2363
  %v2449 = vpop.f32.mrb[0].mxu0
  %v2450 = vadd.f32 0.0, %v2449
  %v2451 = vpop.f32.mrb[0].mxu0
  %2452 = vmatprep.mubr.f32.mxu0 0.0
  %2453 = vmatmul.mubr.f32.gmra.mrb[0].mxu0 %v2364
  %v2454 = vpop.f32.mrb[0].mxu0
  %v2455 = vadd.f32 0.0, %v2454
  %v2456 = vpop.f32.mrb[0].mxu0
  %2457 = vmatprep.mubr.f32.mxu0 0.0
  %2458 = vmatmul.mubr.f32.gmra.mrb[0].mxu0 %v2365
  %v2459 = vpop.f32.mrb[0].mxu0
  %v2460 = vadd.f32 0.0, %v2459
  %v2461 = vpop.f32.mrb[0].mxu0
  %2462 = vmatprep.mubr.f32.mxu0 0.0
  %2463 = vmatmul.mubr.f32.gmra.mrb[0].mxu0 %v2366
  %v2464 = vpop.f32.mrb[0].mxu0
  %v2465 = vadd.f32 0.0, %v2464
  %v2466 = vpop.f32.mrb[0].mxu0
  %2467 = vmatprep.mubr.f32.mxu0 0.0
  %2468 = vmatmul.mubr.f32.gmra.mrb[0].mxu0 %v2367
  %v2469 = vpop.f32.mrb[0].mxu0
  %v2470 = vadd.f32 0.0, %v2469
  %v2471 = vpop.f32.mrb[0].mxu0
  %2472 = vmatprep.mubr.f32.mxu0 0.0
  %2473 = vmatmul.mubr.f32.gmra.mrb[0].mxu0 %v2368
  %v2474 = vpop.f32.mrb[0].mxu0
  %v2475 = vadd.f32 0.0, %v2474
  %v2476 = vpop.f32.mrb[0].mxu0
  %2477 = vmatprep.mubr.f32.mxu0 0.0
  %2478 = vmatmul.mubr.f32.gmra.mrb[0].mxu0 %v2369
  %v2479 = vpop.f32.mrb[0].mxu0
  %v2480 = vadd.f32 0.0, %v2479
  %v2481 = vpop.f32.mrb[0].mxu0
  %2482 = vmatprep.mubr.f32.mxu0 0.0
  %2483 = vmatmul.mubr.f32.gmra.mrb[0].mxu0 %v2370
  %v2484 = vpop.f32.mrb[0].mxu0
  %v2485 = vadd.f32 0.0, %v2484
  %v2486 = vpop.f32.mrb[0].mxu0
  %2487 = vmatprep.mubr.f32.mxu0 0.0
  %2488 = vmatmul.mubr.f32.gmra.mrb[0].mxu0 %v2371
  %v2489 = vpop.f32.mrb[0].mxu0
  %v2490 = vadd.f32 0.0, %v2489
  %v2491 = vpop.f32.mrb[0].mxu0
  %2492 = vmatprep.mubr.f32.mxu0 0.0
  %2493 = vmatmul.mubr.f32.gmra.mrb[0].mxu0 %v2372
  %v2494 = vpop.f32.mrb[0].mxu0
  %v2495 = vadd.f32 0.0, %v2494
  %v2496 = vpop.f32.mrb[0].mxu0
  %2497 = vmatprep.mubr.f32.mxu0 0.0
  %2498 = vmatmul.mubr.f32.gmra.mrb[0].mxu0 %v2373
  %v2499 = vpop.f32.mrb[0].mxu0
  %v2500 = vadd.f32 0.0, %v2499
  %v2501 = vpop.f32.mrb[0].mxu0
  %2502 = vmatprep.mubr.f32.mxu0 0.0
  %2503 = vmatmul.mubr.f32.gmra.mrb[0].mxu0 %v2374
  %v2504 = vpop.f32.mrb[0].mxu0
  %v2505 = vadd.f32 0.0, %v2504
  %v2506 = vpop.f32.mrb[0].mxu0
  %2507 = vmatprep.mubr.f32.mxu0 0.0
  %2508 = vmatmul.mubr.f32.gmra.mrb[0].mxu0 %v2375
  %v2509 = vpop.f32.mrb[0].mxu0
  %v2510 = vadd.f32 0.0, %v2509
  %v2511 = vpop.f32.mrb[0].mxu0
  %2512 = vmatprep.mubr.f32.mxu0 0.0
  %2513 = vmatmul.mubr.f32.gmra.mrb[0].mxu0 %v2376
  %v2514 = vpop.f32.mrb[0].mxu0
  %v2515 = vadd.f32 0.0, %v2514
  %v2516 = vpop.f32.mrb[0].mxu0
  %2517 = vmatprep.mubr.f32.mxu0 0.0
  %2518 = vmatmul.mubr.f32.gmra.mrb[0].mxu0 %v2377
  %v2519 = vpop.f32.mrb[0].mxu0
  %v2520 = vadd.f32 0.0, %v2519
  %v2521 = vpop.f32.mrb[0].mxu0
  %2522 = vdwg.mxu0
  %2523 = vmatprep.subr.mxu0 0.0
  %2524 = vmatpush1.msra.mxu0 %v916
  %2525 = vmatprep.subr.mxu0 0.0
  %2526 = vmatpush1.msra.mxu0 %v917
  %2527 = vmatprep.subr.mxu0 0.0
  %2528 = vmatpush1.msra.mxu0 %v918
  %2529 = vmatprep.subr.mxu0 0.0
  %2530 = vmatpush1.msra.mxu0 %v919
  %2531 = vmatprep.subr.mxu0 0.0
  %2532 = vmatpush1.msra.mxu0 %v920
  %2533 = vmatprep.subr.mxu0 0.0
  %2534 = vmatpush1.msra.mxu0 %v921
  %2535 = vmatprep.subr.mxu0 0.0
  %2536 = vmatpush1.msra.mxu0 %v922
  %2537 = vmatprep.subr.mxu0 0.0
  %2538 = vmatpush1.msra.mxu0 %v923
  %2539 = vmatprep.subr.mxu0 0.0
  %2540 = vmatpush1.msra.mxu0 %v924
  %2541 = vmatprep.subr.mxu0 0.0
  %2542 = vmatpush1.msra.mxu0 %v925
  %2543 = vmatprep.subr.mxu0 0.0
  %2544 = vmatpush1.msra.mxu0 %v926
  %2545 = vmatprep.subr.mxu0 0.0
  %2546 = vmatpush1.msra.mxu0 %v927
  %2547 = vmatprep.subr.mxu0 0.0
  %2548 = vmatpush1.msra.mxu0 %v928
  %2549 = vmatprep.subr.mxu0 0.0
  %2550 = vmatpush1.msra.mxu0 %v929
  %2551 = vmatprep.subr.mxu0 0.0
  %2552 = vmatpush1.msra.mxu0 %v930
  %2553 = vmatprep.subr.mxu0 0.0
  %2554 = vmatpush1.msra.mxu0 %v931
  %2555 = vmatprep.subr.mxu0 0.0
  %2556 = vmatpush1.msra.mxu0 0.0
  %2557 = vmatprep.subr.mxu0 0.0
  %2558 = vmatpush1.msra.mxu0 0.0
  %2559 = vmatprep.subr.mxu0 0.0
  %2560 = vmatpush1.msra.mxu0 0.0
  %2561 = vmatprep.subr.mxu0 0.0
  %2562 = vmatpush1.msra.mxu0 0.0
  %2563 = vmatprep.subr.mxu0 0.0
  %2564 = vmatpush1.msra.mxu0 0.0
  %2565 = vmatprep.subr.mxu0 0.0
  %2566 = vmatpush1.msra.mxu0 0.0
  %2567 = vmatprep.subr.mxu0 0.0
  %2568 = vmatpush1.msra.mxu0 0.0
  %2569 = vmatprep.subr.mxu0 0.0
  %2570 = vmatpush1.msra.mxu0 0.0
  %2571 = vmatprep.subr.mxu0 0.0
  %2572 = vmatpush1.msra.mxu0 0.0
  %2573 = vmatprep.subr.mxu0 0.0
  %2574 = vmatpush1.msra.mxu0 0.0
  %2575 = vmatprep.subr.mxu0 0.0
  %2576 = vmatpush1.msra.mxu0 0.0
  %2577 = vmatprep.subr.mxu0 0.0
  %2578 = vmatpush1.msra.mxu0 0.0
  %2579 = vmatprep.subr.mxu0 0.0
  %2580 = vmatpush1.msra.mxu0 0.0
  %2581 = vmatprep.subr.mxu0 0.0
  %2582 = vmatpush1.msra.mxu0 0.0
  %2583 = vmatprep.subr.mxu0 0.0
  %2584 = vmatpush1.msra.mxu0 0.0
  %2585 = vmatprep.subr.mxu0 0.0
  %2586 = vmatpush1.msra.mxu0 0.0
  %2587 = vmatprep.mubr.f32.mxu0 0.0
  %2588 = vmatmul.mubr.f32.gmra.mrb[0].mxu0 %v2362
  %v2589 = vpop.f32.mrb[0].mxu0
  %v2590 = vadd.f32 0.0, %v2589
  %v2591 = vpop.f32.mrb[0].mxu0
  %2592 = vmatprep.mubr.f32.mxu0 0.0
  %2593 = vmatmul.mubr.f32.gmra.mrb[0].mxu0 %v2363
  %v2594 = vpop.f32.mrb[0].mxu0
  %v2595 = vadd.f32 0.0, %v2594
  %v2596 = vpop.f32.mrb[0].mxu0
  %2597 = vmatprep.mubr.f32.mxu0 0.0
  %2598 = vmatmul.mubr.f32.gmra.mrb[0].mxu0 %v2364
  %v2599 = vpop.f32.mrb[0].mxu0
  %v2600 = vadd.f32 0.0, %v2599
  %v2601 = vpop.f32.mrb[0].mxu0
  %2602 = vmatprep.mubr.f32.mxu0 0.0
  %2603 = vmatmul.mubr.f32.gmra.mrb[0].mxu0 %v2365
  %v2604 = vpop.f32.mrb[0].mxu0
  %v2605 = vadd.f32 0.0, %v2604
  %v2606 = vpop.f32.mrb[0].mxu0
  %2607 = vmatprep.mubr.f32.mxu0 0.0
  %2608 = vmatmul.mubr.f32.gmra.mrb[0].mxu0 %v2366
  %v2609 = vpop.f32.mrb[0].mxu0
  %v2610 = vadd.f32 0.0, %v2609
  %v2611 = vpop.f32.mrb[0].mxu0
  %2612 = vmatprep.mubr.f32.mxu0 0.0
  %2613 = vmatmul.mubr.f32.gmra.mrb[0].mxu0 %v2367
  %v2614 = vpop.f32.mrb[0].mxu0
  %v2615 = vadd.f32 0.0, %v2614
  %v2616 = vpop.f32.mrb[0].mxu0
  %2617 = vmatprep.mubr.f32.mxu0 0.0
  %2618 = vmatmul.mubr.f32.gmra.mrb[0].mxu0 %v2368
  %v2619 = vpop.f32.mrb[0].mxu0
  %v2620 = vadd.f32 0.0, %v2619
  %v2621 = vpop.f32.mrb[0].mxu0
  %2622 = vmatprep.mubr.f32.mxu0 0.0
  %2623 = vmatmul.mubr.f32.gmra.mrb[0].mxu0 %v2369
  %v2624 = vpop.f32.mrb[0].mxu0
  %v2625 = vadd.f32 0.0, %v2624
  %v2626 = vpop.f32.mrb[0].mxu0
  %2627 = vmatprep.mubr.f32.mxu0 0.0
  %2628 = vmatmul.mubr.f32.gmra.mrb[0].mxu0 %v2370
  %v2629 = vpop.f32.mrb[0].mxu0
  %v2630 = vadd.f32 0.0, %v2629
  %v2631 = vpop.f32.mrb[0].mxu0
  %2632 = vmatprep.mubr.f32.mxu0 0.0
  %2633 = vmatmul.mubr.f32.gmra.mrb[0].mxu0 %v2371
  %v2634 = vpop.f32.mrb[0].mxu0
  %v2635 = vadd.f32 0.0, %v2634
  %v2636 = vpop.f32.mrb[0].mxu0
  %2637 = vmatprep.mubr.f32.mxu0 0.0
  %2638 = vmatmul.mubr.f32.gmra.mrb[0].mxu0 %v2372
  %v2639 = vpop.f32.mrb[0].mxu0
  %v2640 = vadd.f32 0.0, %v2639
  %v2641 = vpop.f32.mrb[0].mxu0
  %2642 = vmatprep.mubr.f32.mxu0 0.0
  %2643 = vmatmul.mubr.f32.gmra.mrb[0].mxu0 %v2373
  %v2644 = vpop.f32.mrb[0].mxu0
  %v2645 = vadd.f32 0.0, %v2644
  %v2646 = vpop.f32.mrb[0].mxu0
  %2647 = vmatprep.mubr.f32.mxu0 0.0
  %2648 = vmatmul.mubr.f32.gmra.mrb[0].mxu0 %v2374
  %v2649 = vpop.f32.mrb[0].mxu0
  %v2650 = vadd.f32 0.0, %v2649
  %v2651 = vpop.f32.mrb[0].mxu0
  %2652 = vmatprep.mubr.f32.mxu0 0.0
  %2653 = vmatmul.mubr.f32.gmra.mrb[0].mxu0 %v2375
  %v2654 = vpop.f32.mrb[0].mxu0
  %v2655 = vadd.f32 0.0, %v2654
  %v2656 = vpop.f32.mrb[0].mxu0
  %2657 = vmatprep.mubr.f32.mxu0 0.0
  %2658 = vmatmul.mubr.f32.gmra.mrb[0].mxu0 %v2376
  %v2659 = vpop.f32.mrb[0].mxu0
  %v2660 = vadd.f32 0.0, %v2659
  %v2661 = vpop.f32.mrb[0].mxu0
  %2662 = vmatprep.mubr.f32.mxu0 0.0
  %2663 = vmatmul.mubr.f32.gmra.mrb[0].mxu0 %v2377
  %v2664 = vpop.f32.mrb[0].mxu0
  %v2665 = vadd.f32 0.0, %v2664
  %v2666 = vpop.f32.mrb[0].mxu0
  %2667 = vdwg.mxu0
  %vm2668 = vcmp.eq.f32.partialorder %v2590, %v916
  %vm2669 = vcmp.eq.f32.partialorder %v2595, %v917
  %vm2670 = vcmp.eq.f32.partialorder %v2600, %v918
  %vm2671 = vcmp.eq.f32.partialorder %v2605, %v919
  %vm2672 = vcmp.eq.f32.partialorder %v2610, %v920
  %vm2673 = vcmp.eq.f32.partialorder %v2615, %v921
  %vm2674 = vcmp.eq.f32.partialorder %v2620, %v922
  %vm2675 = vcmp.eq.f32.partialorder %v2625, %v923
  %vm2676 = vcmp.eq.f32.partialorder %v2630, %v924
  %vm2677 = vcmp.eq.f32.partialorder %v2635, %v925
  %vm2678 = vcmp.eq.f32.partialorder %v2640, %v926
  %vm2679 = vcmp.eq.f32.partialorder %v2645, %v927
  %vm2680 = vcmp.eq.f32.partialorder %v2650, %v928
  %vm2681 = vcmp.eq.f32.partialorder %v2655, %v929
  %vm2682 = vcmp.eq.f32.partialorder %v2660, %v930
  %vm2683 = vcmp.eq.f32.partialorder %v2665, %v931
  %v2684 = vmax.f32 %v2314, %v2445
  %v2685 = vmax.f32 %v2315, %v2450
  %v2686 = vmax.f32 %v2316, %v2455
  %v2687 = vmax.f32 %v2317, %v2460
  %v2688 = vmax.f32 %v2318, %v2465
  %v2689 = vmax.f32 %v2319, %v2470
  %v2690 = vmax.f32 %v2320, %v2475
  %v2691 = vmax.f32 %v2321, %v2480
  %v2692 = vmax.f32 %v2322, %v2485
  %v2693 = vmax.f32 %v2323, %v2490
  %v2694 = vmax.f32 %v2324, %v2495
  %v2695 = vmax.f32 %v2325, %v2500
  %v2696 = vmax.f32 %v2326, %v2505
  %v2697 = vmax.f32 %v2327, %v2510
  %v2698 = vmax.f32 %v2328, %v2515
  %v2699 = vmax.f32 %v2329, %v2520
  %v2700 = vsel %vm2668, 1, 0
  %v2701 = vsel %vm2669, 1, 0
  %v2702 = vsel %vm2670, 1, 0
  %v2703 = vsel %vm2671, 1, 0
  %v2704 = vsel %vm2672, 1, 0
  %v2705 = vsel %vm2673, 1, 0
  %v2706 = vsel %vm2674, 1, 0
  %v2707 = vsel %vm2675, 1, 0
  %v2708 = vsel %vm2676, 1, 0
  %v2709 = vsel %vm2677, 1, 0
  %v2710 = vsel %vm2678, 1, 0
  %v2711 = vsel %vm2679, 1, 0
  %v2712 = vsel %vm2680, 1, 0
  %v2713 = vsel %vm2681, 1, 0
  %v2714 = vsel %vm2682, 1, 0
  %v2715 = vsel %vm2683, 1, 0
  %2716 = vset.pattern.permute.xlu0 0
  %2717 = vperm.xlu0 %2716, %v2700
  %v2718 = vpop.permute.xlu0 %2717
  %2719 = vset.pattern.permute.xlu0 0
  %2720 = vperm.xlu0 %2719, %v2701
  %v2721 = vpop.permute.xlu0 %2720
  %2722 = vset.pattern.permute.xlu0 0
  %2723 = vperm.xlu0 %2722, %v2702
  %v2724 = vpop.permute.xlu0 %2723
  %2725 = vset.pattern.permute.xlu0 0
  %2726 = vperm.xlu0 %2725, %v2703
  %v2727 = vpop.permute.xlu0 %2726
  %2728 = vset.pattern.permute.xlu0 0
  %2729 = vperm.xlu0 %2728, %v2704
  %v2730 = vpop.permute.xlu0 %2729
  %2731 = vset.pattern.permute.xlu0 0
  %2732 = vperm.xlu0 %2731, %v2705
  %v2733 = vpop.permute.xlu0 %2732
  %2734 = vset.pattern.permute.xlu0 0
  %2735 = vperm.xlu0 %2734, %v2706
  %v2736 = vpop.permute.xlu0 %2735
  %2737 = vset.pattern.permute.xlu0 0
  %2738 = vperm.xlu0 %2737, %v2707
  %v2739 = vpop.permute.xlu0 %2738
  %2740 = vset.pattern.permute.xlu0 0
  %2741 = vperm.xlu0 %2740, %v2708
  %v2742 = vpop.permute.xlu0 %2741
  %2743 = vset.pattern.permute.xlu0 0
  %2744 = vperm.xlu0 %2743, %v2709
  %v2745 = vpop.permute.xlu0 %2744
  %2746 = vset.pattern.permute.xlu0 0
  %2747 = vperm.xlu0 %2746, %v2710
  %v2748 = vpop.permute.xlu0 %2747
  %2749 = vset.pattern.permute.xlu0 0
  %2750 = vperm.xlu0 %2749, %v2711
  %v2751 = vpop.permute.xlu0 %2750
  %2752 = vset.pattern.permute.xlu0 0
  %2753 = vperm.xlu0 %2752, %v2712
  %v2754 = vpop.permute.xlu0 %2753
  %2755 = vset.pattern.permute.xlu0 0
  %2756 = vperm.xlu0 %2755, %v2713
  %v2757 = vpop.permute.xlu0 %2756
  %2758 = vset.pattern.permute.xlu0 0
  %2759 = vperm.xlu0 %2758, %v2714
  %v2760 = vpop.permute.xlu0 %2759
  %2761 = vset.pattern.permute.xlu0 0
  %2762 = vperm.xlu0 %2761, %v2715
  %v2763 = vpop.permute.xlu0 %2762
  %vm2764 = vcmp.eq.s32.totalorder %v2718, 1
  %vm2765 = vcmp.eq.s32.totalorder %v2721, 1
  %vm2766 = vcmp.eq.s32.totalorder %v2724, 1
  %vm2767 = vcmp.eq.s32.totalorder %v2727, 1
  %vm2768 = vcmp.eq.s32.totalorder %v2730, 1
  %vm2769 = vcmp.eq.s32.totalorder %v2733, 1
  %vm2770 = vcmp.eq.s32.totalorder %v2736, 1
  %vm2771 = vcmp.eq.s32.totalorder %v2739, 1
  %vm2772 = vcmp.eq.s32.totalorder %v2742, 1
  %vm2773 = vcmp.eq.s32.totalorder %v2745, 1
  %vm2774 = vcmp.eq.s32.totalorder %v2748, 1
  %vm2775 = vcmp.eq.s32.totalorder %v2751, 1
  %vm2776 = vcmp.eq.s32.totalorder %v2754, 1
  %vm2777 = vcmp.eq.s32.totalorder %v2757, 1
  %vm2778 = vcmp.eq.s32.totalorder %v2760, 1
  %vm2779 = vcmp.eq.s32.totalorder %v2763, 1
  %v2780 = vsel %vm2764, %v2684, %v2314
  %v2781 = vsel %vm2765, %v2685, %v2315
  %v2782 = vsel %vm2766, %v2686, %v2316
  %v2783 = vsel %vm2767, %v2687, %v2317
  %v2784 = vsel %vm2768, %v2688, %v2318
  %v2785 = vsel %vm2769, %v2689, %v2319
  %v2786 = vsel %vm2770, %v2690, %v2320
  %v2787 = vsel %vm2771, %v2691, %v2321
  %v2788 = vsel %vm2772, %v2692, %v2322
  %v2789 = vsel %vm2773, %v2693, %v2323
  %v2790 = vsel %vm2774, %v2694, %v2324
  %v2791 = vsel %vm2775, %v2695, %v2325
  %v2792 = vsel %vm2776, %v2696, %v2326
  %v2793 = vsel %vm2777, %v2697, %v2327
  %v2794 = vsel %vm2778, %v2698, %v2328
  %v2795 = vsel %vm2779, %v2699, %v2329
  %vm2796 = vcmp.eq.s32.totalorder %v900, 16
  %vm2797 = vcmp.eq.s32.totalorder %v901, 16
  %vm2798 = vcmp.eq.s32.totalorder %v902, 16
  %vm2799 = vcmp.eq.s32.totalorder %v903, 16
  %vm2800 = vcmp.eq.s32.totalorder %v904, 16
  %vm2801 = vcmp.eq.s32.totalorder %v905, 16
  %vm2802 = vcmp.eq.s32.totalorder %v906, 16
  %vm2803 = vcmp.eq.s32.totalorder %v907, 16
  %vm2804 = vcmp.eq.s32.totalorder %v908, 16
  %vm2805 = vcmp.eq.s32.totalorder %v909, 16
  %vm2806 = vcmp.eq.s32.totalorder %v910, 16
  %vm2807 = vcmp.eq.s32.totalorder %v911, 16
  %vm2808 = vcmp.eq.s32.totalorder %v912, 16
  %vm2809 = vcmp.eq.s32.totalorder %v913, 16
  %vm2810 = vcmp.eq.s32.totalorder %v914, 16
  %vm2811 = vcmp.eq.s32.totalorder %v915, 16
  %v2812 = vsel %vm2796, 1, 0
  %v2813 = vsel %vm2797, 1, 0
  %v2814 = vsel %vm2798, 1, 0
  %v2815 = vsel %vm2799, 1, 0
  %v2816 = vsel %vm2800, 1, 0
  %v2817 = vsel %vm2801, 1, 0
  %v2818 = vsel %vm2802, 1, 0
  %v2819 = vsel %vm2803, 1, 0
  %v2820 = vsel %vm2804, 1, 0
  %v2821 = vsel %vm2805, 1, 0
  %v2822 = vsel %vm2806, 1, 0
  %v2823 = vsel %vm2807, 1, 0
  %v2824 = vsel %vm2808, 1, 0
  %v2825 = vsel %vm2809, 1, 0
  %v2826 = vsel %vm2810, 1, 0
  %v2827 = vsel %vm2811, 1, 0
  %v2828 = vcvt.s32.f32 %v2812
  %v2829 = vcvt.s32.f32 %v2813
  %v2830 = vcvt.s32.f32 %v2814
  %v2831 = vcvt.s32.f32 %v2815
  %v2832 = vcvt.s32.f32 %v2816
  %v2833 = vcvt.s32.f32 %v2817
  %v2834 = vcvt.s32.f32 %v2818
  %v2835 = vcvt.s32.f32 %v2819
  %v2836 = vcvt.s32.f32 %v2820
  %v2837 = vcvt.s32.f32 %v2821
  %v2838 = vcvt.s32.f32 %v2822
  %v2839 = vcvt.s32.f32 %v2823
  %v2840 = vcvt.s32.f32 %v2824
  %v2841 = vcvt.s32.f32 %v2825
  %v2842 = vcvt.s32.f32 %v2826
  %v2843 = vcvt.s32.f32 %v2827
  %2844 = vmatprep.subr.mxu0 0.0
  %2845 = vmatpush1.msra.mxu0 %v2780
  %2846 = vmatprep.subr.mxu0 0.0
  %2847 = vmatpush1.msra.mxu0 %v2781
  %2848 = vmatprep.subr.mxu0 0.0
  %2849 = vmatpush1.msra.mxu0 %v2782
  %2850 = vmatprep.subr.mxu0 0.0
  %2851 = vmatpush1.msra.mxu0 %v2783
  %2852 = vmatprep.subr.mxu0 0.0
  %2853 = vmatpush1.msra.mxu0 %v2784
  %2854 = vmatprep.subr.mxu0 0.0
  %2855 = vmatpush1.msra.mxu0 %v2785
  %2856 = vmatprep.subr.mxu0 0.0
  %2857 = vmatpush1.msra.mxu0 %v2786
  %2858 = vmatprep.subr.mxu0 0.0
  %2859 = vmatpush1.msra.mxu0 %v2787
  %2860 = vmatprep.subr.mxu0 0.0
  %2861 = vmatpush1.msra.mxu0 %v2788
  %2862 = vmatprep.subr.mxu0 0.0
  %2863 = vmatpush1.msra.mxu0 %v2789
  %2864 = vmatprep.subr.mxu0 0.0
  %2865 = vmatpush1.msra.mxu0 %v2790
  %2866 = vmatprep.subr.mxu0 0.0
  %2867 = vmatpush1.msra.mxu0 %v2791
  %2868 = vmatprep.subr.mxu0 0.0
  %2869 = vmatpush1.msra.mxu0 %v2792
  %2870 = vmatprep.subr.mxu0 0.0
  %2871 = vmatpush1.msra.mxu0 %v2793
  %2872 = vmatprep.subr.mxu0 0.0
  %2873 = vmatpush1.msra.mxu0 %v2794
  %2874 = vmatprep.subr.mxu0 0.0
  %2875 = vmatpush1.msra.mxu0 %v2795
  %2876 = vmatprep.subr.mxu0 0.0
  %2877 = vmatpush1.msra.mxu0 0.0
  %2878 = vmatprep.subr.mxu0 0.0
  %2879 = vmatpush1.msra.mxu0 0.0
  %2880 = vmatprep.subr.mxu0 0.0
  %2881 = vmatpush1.msra.mxu0 0.0
  %2882 = vmatprep.subr.mxu0 0.0
  %2883 = vmatpush1.msra.mxu0 0.0
  %2884 = vmatprep.subr.mxu0 0.0
  %2885 = vmatpush1.msra.mxu0 0.0
  %2886 = vmatprep.subr.mxu0 0.0
  %2887 = vmatpush1.msra.mxu0 0.0
  %2888 = vmatprep.subr.mxu0 0.0
  %2889 = vmatpush1.msra.mxu0 0.0
  %2890 = vmatprep.subr.mxu0 0.0
  %2891 = vmatpush1.msra.mxu0 0.0
  %2892 = vmatprep.subr.mxu0 0.0
  %2893 = vmatpush1.msra.mxu0 0.0
  %2894 = vmatprep.subr.mxu0 0.0
  %2895 = vmatpush1.msra.mxu0 0.0
  %2896 = vmatprep.subr.mxu0 0.0
  %2897 = vmatpush1.msra.mxu0 0.0
  %2898 = vmatprep.subr.mxu0 0.0
  %2899 = vmatpush1.msra.mxu0 0.0
  %2900 = vmatprep.subr.mxu0 0.0
  %2901 = vmatpush1.msra.mxu0 0.0
  %2902 = vmatprep.subr.mxu0 0.0
  %2903 = vmatpush1.msra.mxu0 0.0
  %2904 = vmatprep.subr.mxu0 0.0
  %2905 = vmatpush1.msra.mxu0 0.0
  %2906 = vmatprep.subr.mxu0 0.0
  %2907 = vmatpush1.msra.mxu0 0.0
  %2908 = vmatprep.mubr.f32.mxu0 0.0
  %2909 = vmatmul.mubr.f32.gmra.mrb[0].mxu0 %v2828
  %v2910 = vpop.f32.mrb[0].mxu0
  %v2911 = vadd.f32 0.0, %v2910
  %v2912 = vpop.f32.mrb[0].mxu0
  %2913 = vmatprep.mubr.f32.mxu0 0.0
  %2914 = vmatmul.mubr.f32.gmra.mrb[0].mxu0 %v2829
  %v2915 = vpop.f32.mrb[0].mxu0
  %v2916 = vadd.f32 0.0, %v2915
  %v2917 = vpop.f32.mrb[0].mxu0
  %2918 = vmatprep.mubr.f32.mxu0 0.0
  %2919 = vmatmul.mubr.f32.gmra.mrb[0].mxu0 %v2830
  %v2920 = vpop.f32.mrb[0].mxu0
  %v2921 = vadd.f32 0.0, %v2920
  %v2922 = vpop.f32.mrb[0].mxu0
  %2923 = vmatprep.mubr.f32.mxu0 0.0
  %2924 = vmatmul.mubr.f32.gmra.mrb[0].mxu0 %v2831
  %v2925 = vpop.f32.mrb[0].mxu0
  %v2926 = vadd.f32 0.0, %v2925
  %v2927 = vpop.f32.mrb[0].mxu0
  %2928 = vmatprep.mubr.f32.mxu0 0.0
  %2929 = vmatmul.mubr.f32.gmra.mrb[0].mxu0 %v2832
  %v2930 = vpop.f32.mrb[0].mxu0
  %v2931 = vadd.f32 0.0, %v2930
  %v2932 = vpop.f32.mrb[0].mxu0
  %2933 = vmatprep.mubr.f32.mxu0 0.0
  %2934 = vmatmul.mubr.f32.gmra.mrb[0].mxu0 %v2833
  %v2935 = vpop.f32.mrb[0].mxu0
  %v2936 = vadd.f32 0.0, %v2935
  %v2937 = vpop.f32.mrb[0].mxu0
  %2938 = vmatprep.mubr.f32.mxu0 0.0
  %2939 = vmatmul.mubr.f32.gmra.mrb[0].mxu0 %v2834
  %v2940 = vpop.f32.mrb[0].mxu0
  %v2941 = vadd.f32 0.0, %v2940
  %v2942 = vpop.f32.mrb[0].mxu0
  %2943 = vmatprep.mubr.f32.mxu0 0.0
  %2944 = vmatmul.mubr.f32.gmra.mrb[0].mxu0 %v2835
  %v2945 = vpop.f32.mrb[0].mxu0
  %v2946 = vadd.f32 0.0, %v2945
  %v2947 = vpop.f32.mrb[0].mxu0
  %2948 = vmatprep.mubr.f32.mxu0 0.0
  %2949 = vmatmul.mubr.f32.gmra.mrb[0].mxu0 %v2836
  %v2950 = vpop.f32.mrb[0].mxu0
  %v2951 = vadd.f32 0.0, %v2950
  %v2952 = vpop.f32.mrb[0].mxu0
  %2953 = vmatprep.mubr.f32.mxu0 0.0
  %2954 = vmatmul.mubr.f32.gmra.mrb[0].mxu0 %v2837
  %v2955 = vpop.f32.mrb[0].mxu0
  %v2956 = vadd.f32 0.0, %v2955
  %v2957 = vpop.f32.mrb[0].mxu0
  %2958 = vmatprep.mubr.f32.mxu0 0.0
  %2959 = vmatmul.mubr.f32.gmra.mrb[0].mxu0 %v2838
  %v2960 = vpop.f32.mrb[0].mxu0
  %v2961 = vadd.f32 0.0, %v2960
  %v2962 = vpop.f32.mrb[0].mxu0
  %2963 = vmatprep.mubr.f32.mxu0 0.0
  %2964 = vmatmul.mubr.f32.gmra.mrb[0].mxu0 %v2839
  %v2965 = vpop.f32.mrb[0].mxu0
  %v2966 = vadd.f32 0.0, %v2965
  %v2967 = vpop.f32.mrb[0].mxu0
  %2968 = vmatprep.mubr.f32.mxu0 0.0
  %2969 = vmatmul.mubr.f32.gmra.mrb[0].mxu0 %v2840
  %v2970 = vpop.f32.mrb[0].mxu0
  %v2971 = vadd.f32 0.0, %v2970
  %v2972 = vpop.f32.mrb[0].mxu0
  %2973 = vmatprep.mubr.f32.mxu0 0.0
  %2974 = vmatmul.mubr.f32.gmra.mrb[0].mxu0 %v2841
  %v2975 = vpop.f32.mrb[0].mxu0
  %v2976 = vadd.f32 0.0, %v2975
  %v2977 = vpop.f32.mrb[0].mxu0
  %2978 = vmatprep.mubr.f32.mxu0 0.0
  %2979 = vmatmul.mubr.f32.gmra.mrb[0].mxu0 %v2842
  %v2980 = vpop.f32.mrb[0].mxu0
  %v2981 = vadd.f32 0.0, %v2980
  %v2982 = vpop.f32.mrb[0].mxu0
  %2983 = vmatprep.mubr.f32.mxu0 0.0
  %2984 = vmatmul.mubr.f32.gmra.mrb[0].mxu0 %v2843
  %v2985 = vpop.f32.mrb[0].mxu0
  %v2986 = vadd.f32 0.0, %v2985
  %v2987 = vpop.f32.mrb[0].mxu0
  %2988 = vdwg.mxu0
  %2989 = vmatprep.subr.mxu0 0.0
  %2990 = vmatpush1.msra.mxu0 %v916
  %2991 = vmatprep.subr.mxu0 0.0
  %2992 = vmatpush1.msra.mxu0 %v917
  %2993 = vmatprep.subr.mxu0 0.0
  %2994 = vmatpush1.msra.mxu0 %v918
  %2995 = vmatprep.subr.mxu0 0.0
  %2996 = vmatpush1.msra.mxu0 %v919
  %2997 = vmatprep.subr.mxu0 0.0
  %2998 = vmatpush1.msra.mxu0 %v920
  %2999 = vmatprep.subr.mxu0 0.0
  %3000 = vmatpush1.msra.mxu0 %v921
  %3001 = vmatprep.subr.mxu0 0.0
  %3002 = vmatpush1.msra.mxu0 %v922
  %3003 = vmatprep.subr.mxu0 0.0
  %3004 = vmatpush1.msra.mxu0 %v923
  %3005 = vmatprep.subr.mxu0 0.0
  %3006 = vmatpush1.msra.mxu0 %v924
  %3007 = vmatprep.subr.mxu0 0.0
  %3008 = vmatpush1.msra.mxu0 %v925
  %3009 = vmatprep.subr.mxu0 0.0
  %3010 = vmatpush1.msra.mxu0 %v926
  %3011 = vmatprep.subr.mxu0 0.0
  %3012 = vmatpush1.msra.mxu0 %v927
  %3013 = vmatprep.subr.mxu0 0.0
  %3014 = vmatpush1.msra.mxu0 %v928
  %3015 = vmatprep.subr.mxu0 0.0
  %3016 = vmatpush1.msra.mxu0 %v929
  %3017 = vmatprep.subr.mxu0 0.0
  %3018 = vmatpush1.msra.mxu0 %v930
  %3019 = vmatprep.subr.mxu0 0.0
  %3020 = vmatpush1.msra.mxu0 %v931
  %3021 = vmatprep.subr.mxu0 0.0
  %3022 = vmatpush1.msra.mxu0 0.0
  %3023 = vmatprep.subr.mxu0 0.0
  %3024 = vmatpush1.msra.mxu0 0.0
  %3025 = vmatprep.subr.mxu0 0.0
  %3026 = vmatpush1.msra.mxu0 0.0
  %3027 = vmatprep.subr.mxu0 0.0
  %3028 = vmatpush1.msra.mxu0 0.0
  %3029 = vmatprep.subr.mxu0 0.0
  %3030 = vmatpush1.msra.mxu0 0.0
  %3031 = vmatprep.subr.mxu0 0.0
  %3032 = vmatpush1.msra.mxu0 0.0
  %3033 = vmatprep.subr.mxu0 0.0
  %3034 = vmatpush1.msra.mxu0 0.0
  %3035 = vmatprep.subr.mxu0 0.0
  %3036 = vmatpush1.msra.mxu0 0.0
  %3037 = vmatprep.subr.mxu0 0.0
  %3038 = vmatpush1.msra.mxu0 0.0
  %3039 = vmatprep.subr.mxu0 0.0
  %3040 = vmatpush1.msra.mxu0 0.0
  %3041 = vmatprep.subr.mxu0 0.0
  %3042 = vmatpush1.msra.mxu0 0.0
  %3043 = vmatprep.subr.mxu0 0.0
  %3044 = vmatpush1.msra.mxu0 0.0
  %3045 = vmatprep.subr.mxu0 0.0
  %3046 = vmatpush1.msra.mxu0 0.0
  %3047 = vmatprep.subr.mxu0 0.0
  %3048 = vmatpush1.msra.mxu0 0.0
  %3049 = vmatprep.subr.mxu0 0.0
  %3050 = vmatpush1.msra.mxu0 0.0
  %3051 = vmatprep.subr.mxu0 0.0
  %3052 = vmatpush1.msra.mxu0 0.0
  %3053 = vmatprep.mubr.f32.mxu0 0.0
  %3054 = vmatmul.mubr.f32.gmra.mrb[0].mxu0 %v2828
  %v3055 = vpop.f32.mrb[0].mxu0
  %v3056 = vadd.f32 0.0, %v3055
  %v3057 = vpop.f32.mrb[0].mxu0
  %3058 = vmatprep.mubr.f32.mxu0 0.0
  %3059 = vmatmul.mubr.f32.gmra.mrb[0].mxu0 %v2829
  %v3060 = vpop.f32.mrb[0].mxu0
  %v3061 = vadd.f32 0.0, %v3060
  %v3062 = vpop.f32.mrb[0].mxu0
  %3063 = vmatprep.mubr.f32.mxu0 0.0
  %3064 = vmatmul.mubr.f32.gmra.mrb[0].mxu0 %v2830
  %v3065 = vpop.f32.mrb[0].mxu0
  %v3066 = vadd.f32 0.0, %v3065
  %v3067 = vpop.f32.mrb[0].mxu0
  %3068 = vmatprep.mubr.f32.mxu0 0.0
  %3069 = vmatmul.mubr.f32.gmra.mrb[0].mxu0 %v2831
  %v3070 = vpop.f32.mrb[0].mxu0
  %v3071 = vadd.f32 0.0, %v3070
  %v3072 = vpop.f32.mrb[0].mxu0
  %3073 = vmatprep.mubr.f32.mxu0 0.0
  %3074 = vmatmul.mubr.f32.gmra.mrb[0].mxu0 %v2832
  %v3075 = vpop.f32.mrb[0].mxu0
  %v3076 = vadd.f32 0.0, %v3075
  %v3077 = vpop.f32.mrb[0].mxu0
  %3078 = vmatprep.mubr.f32.mxu0 0.0
  %3079 = vmatmul.mubr.f32.gmra.mrb[0].mxu0 %v2833
  %v3080 = vpop.f32.mrb[0].mxu0
  %v3081 = vadd.f32 0.0, %v3080
  %v3082 = vpop.f32.mrb[0].mxu0
  %3083 = vmatprep.mubr.f32.mxu0 0.0
  %3084 = vmatmul.mubr.f32.gmra.mrb[0].mxu0 %v2834
  %v3085 = vpop.f32.mrb[0].mxu0
  %v3086 = vadd.f32 0.0, %v3085
  %v3087 = vpop.f32.mrb[0].mxu0
  %3088 = vmatprep.mubr.f32.mxu0 0.0
  %3089 = vmatmul.mubr.f32.gmra.mrb[0].mxu0 %v2835
  %v3090 = vpop.f32.mrb[0].mxu0
  %v3091 = vadd.f32 0.0, %v3090
  %v3092 = vpop.f32.mrb[0].mxu0
  %3093 = vmatprep.mubr.f32.mxu0 0.0
  %3094 = vmatmul.mubr.f32.gmra.mrb[0].mxu0 %v2836
  %v3095 = vpop.f32.mrb[0].mxu0
  %v3096 = vadd.f32 0.0, %v3095
  %v3097 = vpop.f32.mrb[0].mxu0
  %3098 = vmatprep.mubr.f32.mxu0 0.0
  %3099 = vmatmul.mubr.f32.gmra.mrb[0].mxu0 %v2837
  %v3100 = vpop.f32.mrb[0].mxu0
  %v3101 = vadd.f32 0.0, %v3100
  %v3102 = vpop.f32.mrb[0].mxu0
  %3103 = vmatprep.mubr.f32.mxu0 0.0
  %3104 = vmatmul.mubr.f32.gmra.mrb[0].mxu0 %v2838
  %v3105 = vpop.f32.mrb[0].mxu0
  %v3106 = vadd.f32 0.0, %v3105
  %v3107 = vpop.f32.mrb[0].mxu0
  %3108 = vmatprep.mubr.f32.mxu0 0.0
  %3109 = vmatmul.mubr.f32.gmra.mrb[0].mxu0 %v2839
  %v3110 = vpop.f32.mrb[0].mxu0
  %v3111 = vadd.f32 0.0, %v3110
  %v3112 = vpop.f32.mrb[0].mxu0
  %3113 = vmatprep.mubr.f32.mxu0 0.0
  %3114 = vmatmul.mubr.f32.gmra.mrb[0].mxu0 %v2840
  %v3115 = vpop.f32.mrb[0].mxu0
  %v3116 = vadd.f32 0.0, %v3115
  %v3117 = vpop.f32.mrb[0].mxu0
  %3118 = vmatprep.mubr.f32.mxu0 0.0
  %3119 = vmatmul.mubr.f32.gmra.mrb[0].mxu0 %v2841
  %v3120 = vpop.f32.mrb[0].mxu0
  %v3121 = vadd.f32 0.0, %v3120
  %v3122 = vpop.f32.mrb[0].mxu0
  %3123 = vmatprep.mubr.f32.mxu0 0.0
  %3124 = vmatmul.mubr.f32.gmra.mrb[0].mxu0 %v2842
  %v3125 = vpop.f32.mrb[0].mxu0
  %v3126 = vadd.f32 0.0, %v3125
  %v3127 = vpop.f32.mrb[0].mxu0
  %3128 = vmatprep.mubr.f32.mxu0 0.0
  %3129 = vmatmul.mubr.f32.gmra.mrb[0].mxu0 %v2843
  %v3130 = vpop.f32.mrb[0].mxu0
  %v3131 = vadd.f32 0.0, %v3130
  %v3132 = vpop.f32.mrb[0].mxu0
  %3133 = vdwg.mxu0
  %vm3134 = vcmp.eq.f32.partialorder %v3056, %v916
  %vm3135 = vcmp.eq.f32.partialorder %v3061, %v917
  %vm3136 = vcmp.eq.f32.partialorder %v3066, %v918
  %vm3137 = vcmp.eq.f32.partialorder %v3071, %v919
  %vm3138 = vcmp.eq.f32.partialorder %v3076, %v920
  %vm3139 = vcmp.eq.f32.partialorder %v3081, %v921
  %vm3140 = vcmp.eq.f32.partialorder %v3086, %v922
  %vm3141 = vcmp.eq.f32.partialorder %v3091, %v923
  %vm3142 = vcmp.eq.f32.partialorder %v3096, %v924
  %vm3143 = vcmp.eq.f32.partialorder %v3101, %v925
  %vm3144 = vcmp.eq.f32.partialorder %v3106, %v926
  %vm3145 = vcmp.eq.f32.partialorder %v3111, %v927
  %vm3146 = vcmp.eq.f32.partialorder %v3116, %v928
  %vm3147 = vcmp.eq.f32.partialorder %v3121, %v929
  %vm3148 = vcmp.eq.f32.partialorder %v3126, %v930
  %vm3149 = vcmp.eq.f32.partialorder %v3131, %v931
  %v3150 = vmax.f32 %v2780, %v2911
  %v3151 = vmax.f32 %v2781, %v2916
  %v3152 = vmax.f32 %v2782, %v2921
  %v3153 = vmax.f32 %v2783, %v2926
  %v3154 = vmax.f32 %v2784, %v2931
  %v3155 = vmax.f32 %v2785, %v2936
  %v3156 = vmax.f32 %v2786, %v2941
  %v3157 = vmax.f32 %v2787, %v2946
  %v3158 = vmax.f32 %v2788, %v2951
  %v3159 = vmax.f32 %v2789, %v2956
  %v3160 = vmax.f32 %v2790, %v2961
  %v3161 = vmax.f32 %v2791, %v2966
  %v3162 = vmax.f32 %v2792, %v2971
  %v3163 = vmax.f32 %v2793, %v2976
  %v3164 = vmax.f32 %v2794, %v2981
  %v3165 = vmax.f32 %v2795, %v2986
  %v3166 = vsel %vm3134, 1, 0
  %v3167 = vsel %vm3135, 1, 0
  %v3168 = vsel %vm3136, 1, 0
  %v3169 = vsel %vm3137, 1, 0
  %v3170 = vsel %vm3138, 1, 0
  %v3171 = vsel %vm3139, 1, 0
  %v3172 = vsel %vm3140, 1, 0
  %v3173 = vsel %vm3141, 1, 0
  %v3174 = vsel %vm3142, 1, 0
  %v3175 = vsel %vm3143, 1, 0
  %v3176 = vsel %vm3144, 1, 0
  %v3177 = vsel %vm3145, 1, 0
  %v3178 = vsel %vm3146, 1, 0
  %v3179 = vsel %vm3147, 1, 0
  %v3180 = vsel %vm3148, 1, 0
  %v3181 = vsel %vm3149, 1, 0
  %3182 = vset.pattern.permute.xlu0 0
  %3183 = vperm.xlu0 %3182, %v3166
  %v3184 = vpop.permute.xlu0 %3183
  %3185 = vset.pattern.permute.xlu0 0
  %3186 = vperm.xlu0 %3185, %v3167
  %v3187 = vpop.permute.xlu0 %3186
  %3188 = vset.pattern.permute.xlu0 0
  %3189 = vperm.xlu0 %3188, %v3168
  %v3190 = vpop.permute.xlu0 %3189
  %3191 = vset.pattern.permute.xlu0 0
  %3192 = vperm.xlu0 %3191, %v3169
  %v3193 = vpop.permute.xlu0 %3192
  %3194 = vset.pattern.permute.xlu0 0
  %3195 = vperm.xlu0 %3194, %v3170
  %v3196 = vpop.permute.xlu0 %3195
  %3197 = vset.pattern.permute.xlu0 0
  %3198 = vperm.xlu0 %3197, %v3171
  %v3199 = vpop.permute.xlu0 %3198
  %3200 = vset.pattern.permute.xlu0 0
  %3201 = vperm.xlu0 %3200, %v3172
  %v3202 = vpop.permute.xlu0 %3201
  %3203 = vset.pattern.permute.xlu0 0
  %3204 = vperm.xlu0 %3203, %v3173
  %v3205 = vpop.permute.xlu0 %3204
  %3206 = vset.pattern.permute.xlu0 0
  %3207 = vperm.xlu0 %3206, %v3174
  %v3208 = vpop.permute.xlu0 %3207
  %3209 = vset.pattern.permute.xlu0 0
  %3210 = vperm.xlu0 %3209, %v3175
  %v3211 = vpop.permute.xlu0 %3210
  %3212 = vset.pattern.permute.xlu0 0
  %3213 = vperm.xlu0 %3212, %v3176
  %v3214 = vpop.permute.xlu0 %3213
  %3215 = vset.pattern.permute.xlu0 0
  %3216 = vperm.xlu0 %3215, %v3177
  %v3217 = vpop.permute.xlu0 %3216
  %3218 = vset.pattern.permute.xlu0 0
  %3219 = vperm.xlu0 %3218, %v3178
  %v3220 = vpop.permute.xlu0 %3219
  %3221 = vset.pattern.permute.xlu0 0
  %3222 = vperm.xlu0 %3221, %v3179
  %v3223 = vpop.permute.xlu0 %3222
  %3224 = vset.pattern.permute.xlu0 0
  %3225 = vperm.xlu0 %3224, %v3180
  %v3226 = vpop.permute.xlu0 %3225
  %3227 = vset.pattern.permute.xlu0 0
  %3228 = vperm.xlu0 %3227, %v3181
  %v3229 = vpop.permute.xlu0 %3228
  %vm3230 = vcmp.eq.s32.totalorder %v3184, 1
  %vm3231 = vcmp.eq.s32.totalorder %v3187, 1
  %vm3232 = vcmp.eq.s32.totalorder %v3190, 1
  %vm3233 = vcmp.eq.s32.totalorder %v3193, 1
  %vm3234 = vcmp.eq.s32.totalorder %v3196, 1
  %vm3235 = vcmp.eq.s32.totalorder %v3199, 1
  %vm3236 = vcmp.eq.s32.totalorder %v3202, 1
  %vm3237 = vcmp.eq.s32.totalorder %v3205, 1
  %vm3238 = vcmp.eq.s32.totalorder %v3208, 1
  %vm3239 = vcmp.eq.s32.totalorder %v3211, 1
  %vm3240 = vcmp.eq.s32.totalorder %v3214, 1
  %vm3241 = vcmp.eq.s32.totalorder %v3217, 1
  %vm3242 = vcmp.eq.s32.totalorder %v3220, 1
  %vm3243 = vcmp.eq.s32.totalorder %v3223, 1
  %vm3244 = vcmp.eq.s32.totalorder %v3226, 1
  %vm3245 = vcmp.eq.s32.totalorder %v3229, 1
  %v3246 = vsel %vm3230, %v3150, %v2780
  %v3247 = vsel %vm3231, %v3151, %v2781
  %v3248 = vsel %vm3232, %v3152, %v2782
  %v3249 = vsel %vm3233, %v3153, %v2783
  %v3250 = vsel %vm3234, %v3154, %v2784
  %v3251 = vsel %vm3235, %v3155, %v2785
  %v3252 = vsel %vm3236, %v3156, %v2786
  %v3253 = vsel %vm3237, %v3157, %v2787
  %v3254 = vsel %vm3238, %v3158, %v2788
  %v3255 = vsel %vm3239, %v3159, %v2789
  %v3256 = vsel %vm3240, %v3160, %v2790
  %v3257 = vsel %vm3241, %v3161, %v2791
  %v3258 = vsel %vm3242, %v3162, %v2792
  %v3259 = vsel %vm3243, %v3163, %v2793
  %v3260 = vsel %vm3244, %v3164, %v2794
  %v3261 = vsel %vm3245, %v3165, %v2795
  %vm3262 = vcmp.eq.s32.totalorder %v900, 32
  %vm3263 = vcmp.eq.s32.totalorder %v901, 32
  %vm3264 = vcmp.eq.s32.totalorder %v902, 32
  %vm3265 = vcmp.eq.s32.totalorder %v903, 32
  %vm3266 = vcmp.eq.s32.totalorder %v904, 32
  %vm3267 = vcmp.eq.s32.totalorder %v905, 32
  %vm3268 = vcmp.eq.s32.totalorder %v906, 32
  %vm3269 = vcmp.eq.s32.totalorder %v907, 32
  %vm3270 = vcmp.eq.s32.totalorder %v908, 32
  %vm3271 = vcmp.eq.s32.totalorder %v909, 32
  %vm3272 = vcmp.eq.s32.totalorder %v910, 32
  %vm3273 = vcmp.eq.s32.totalorder %v911, 32
  %vm3274 = vcmp.eq.s32.totalorder %v912, 32
  %vm3275 = vcmp.eq.s32.totalorder %v913, 32
  %vm3276 = vcmp.eq.s32.totalorder %v914, 32
  %vm3277 = vcmp.eq.s32.totalorder %v915, 32
  %v3278 = vsel %vm3262, 1, 0
  %v3279 = vsel %vm3263, 1, 0
  %v3280 = vsel %vm3264, 1, 0
  %v3281 = vsel %vm3265, 1, 0
  %v3282 = vsel %vm3266, 1, 0
  %v3283 = vsel %vm3267, 1, 0
  %v3284 = vsel %vm3268, 1, 0
  %v3285 = vsel %vm3269, 1, 0
  %v3286 = vsel %vm3270, 1, 0
  %v3287 = vsel %vm3271, 1, 0
  %v3288 = vsel %vm3272, 1, 0
  %v3289 = vsel %vm3273, 1, 0
  %v3290 = vsel %vm3274, 1, 0
  %v3291 = vsel %vm3275, 1, 0
  %v3292 = vsel %vm3276, 1, 0
  %v3293 = vsel %vm3277, 1, 0
  %v3294 = vcvt.s32.f32 %v3278
  %v3295 = vcvt.s32.f32 %v3279
  %v3296 = vcvt.s32.f32 %v3280
  %v3297 = vcvt.s32.f32 %v3281
  %v3298 = vcvt.s32.f32 %v3282
  %v3299 = vcvt.s32.f32 %v3283
  %v3300 = vcvt.s32.f32 %v3284
  %v3301 = vcvt.s32.f32 %v3285
  %v3302 = vcvt.s32.f32 %v3286
  %v3303 = vcvt.s32.f32 %v3287
  %v3304 = vcvt.s32.f32 %v3288
  %v3305 = vcvt.s32.f32 %v3289
  %v3306 = vcvt.s32.f32 %v3290
  %v3307 = vcvt.s32.f32 %v3291
  %v3308 = vcvt.s32.f32 %v3292
  %v3309 = vcvt.s32.f32 %v3293
  %3310 = vmatprep.subr.mxu0 0.0
  %3311 = vmatpush1.msra.mxu0 %v3246
  %3312 = vmatprep.subr.mxu0 0.0
  %3313 = vmatpush1.msra.mxu0 %v3247
  %3314 = vmatprep.subr.mxu0 0.0
  %3315 = vmatpush1.msra.mxu0 %v3248
  %3316 = vmatprep.subr.mxu0 0.0
  %3317 = vmatpush1.msra.mxu0 %v3249
  %3318 = vmatprep.subr.mxu0 0.0
  %3319 = vmatpush1.msra.mxu0 %v3250
  %3320 = vmatprep.subr.mxu0 0.0
  %3321 = vmatpush1.msra.mxu0 %v3251
  %3322 = vmatprep.subr.mxu0 0.0
  %3323 = vmatpush1.msra.mxu0 %v3252
  %3324 = vmatprep.subr.mxu0 0.0
  %3325 = vmatpush1.msra.mxu0 %v3253
  %3326 = vmatprep.subr.mxu0 0.0
  %3327 = vmatpush1.msra.mxu0 %v3254
  %3328 = vmatprep.subr.mxu0 0.0
  %3329 = vmatpush1.msra.mxu0 %v3255
  %3330 = vmatprep.subr.mxu0 0.0
  %3331 = vmatpush1.msra.mxu0 %v3256
  %3332 = vmatprep.subr.mxu0 0.0
  %3333 = vmatpush1.msra.mxu0 %v3257
  %3334 = vmatprep.subr.mxu0 0.0
  %3335 = vmatpush1.msra.mxu0 %v3258
  %3336 = vmatprep.subr.mxu0 0.0
  %3337 = vmatpush1.msra.mxu0 %v3259
  %3338 = vmatprep.subr.mxu0 0.0
  %3339 = vmatpush1.msra.mxu0 %v3260
  %3340 = vmatprep.subr.mxu0 0.0
  %3341 = vmatpush1.msra.mxu0 %v3261
  %3342 = vmatprep.subr.mxu0 0.0
  %3343 = vmatpush1.msra.mxu0 0.0
  %3344 = vmatprep.subr.mxu0 0.0
  %3345 = vmatpush1.msra.mxu0 0.0
  %3346 = vmatprep.subr.mxu0 0.0
  %3347 = vmatpush1.msra.mxu0 0.0
  %3348 = vmatprep.subr.mxu0 0.0
  %3349 = vmatpush1.msra.mxu0 0.0
  %3350 = vmatprep.subr.mxu0 0.0
  %3351 = vmatpush1.msra.mxu0 0.0
  %3352 = vmatprep.subr.mxu0 0.0
  %3353 = vmatpush1.msra.mxu0 0.0
  %3354 = vmatprep.subr.mxu0 0.0
  %3355 = vmatpush1.msra.mxu0 0.0
  %3356 = vmatprep.subr.mxu0 0.0
  %3357 = vmatpush1.msra.mxu0 0.0
  %3358 = vmatprep.subr.mxu0 0.0
  %3359 = vmatpush1.msra.mxu0 0.0
  %3360 = vmatprep.subr.mxu0 0.0
  %3361 = vmatpush1.msra.mxu0 0.0
  %3362 = vmatprep.subr.mxu0 0.0
  %3363 = vmatpush1.msra.mxu0 0.0
  %3364 = vmatprep.subr.mxu0 0.0
  %3365 = vmatpush1.msra.mxu0 0.0
  %3366 = vmatprep.subr.mxu0 0.0
  %3367 = vmatpush1.msra.mxu0 0.0
  %3368 = vmatprep.subr.mxu0 0.0
  %3369 = vmatpush1.msra.mxu0 0.0
  %3370 = vmatprep.subr.mxu0 0.0
  %3371 = vmatpush1.msra.mxu0 0.0
  %3372 = vmatprep.subr.mxu0 0.0
  %3373 = vmatpush1.msra.mxu0 0.0
  %3374 = vmatprep.mubr.f32.mxu0 0.0
  %3375 = vmatmul.mubr.f32.gmra.mrb[0].mxu0 %v3294
  %v3376 = vpop.f32.mrb[0].mxu0
  %v3377 = vadd.f32 0.0, %v3376
  %v3378 = vpop.f32.mrb[0].mxu0
  %3379 = vmatprep.mubr.f32.mxu0 0.0
  %3380 = vmatmul.mubr.f32.gmra.mrb[0].mxu0 %v3295
  %v3381 = vpop.f32.mrb[0].mxu0
  %v3382 = vadd.f32 0.0, %v3381
  %v3383 = vpop.f32.mrb[0].mxu0
  %3384 = vmatprep.mubr.f32.mxu0 0.0
  %3385 = vmatmul.mubr.f32.gmra.mrb[0].mxu0 %v3296
  %v3386 = vpop.f32.mrb[0].mxu0
  %v3387 = vadd.f32 0.0, %v3386
  %v3388 = vpop.f32.mrb[0].mxu0
  %3389 = vmatprep.mubr.f32.mxu0 0.0
  %3390 = vmatmul.mubr.f32.gmra.mrb[0].mxu0 %v3297
  %v3391 = vpop.f32.mrb[0].mxu0
  %v3392 = vadd.f32 0.0, %v3391
  %v3393 = vpop.f32.mrb[0].mxu0
  %3394 = vmatprep.mubr.f32.mxu0 0.0
  %3395 = vmatmul.mubr.f32.gmra.mrb[0].mxu0 %v3298
  %v3396 = vpop.f32.mrb[0].mxu0
  %v3397 = vadd.f32 0.0, %v3396
  %v3398 = vpop.f32.mrb[0].mxu0
  %3399 = vmatprep.mubr.f32.mxu0 0.0
  %3400 = vmatmul.mubr.f32.gmra.mrb[0].mxu0 %v3299
  %v3401 = vpop.f32.mrb[0].mxu0
  %v3402 = vadd.f32 0.0, %v3401
  %v3403 = vpop.f32.mrb[0].mxu0
  %3404 = vmatprep.mubr.f32.mxu0 0.0
  %3405 = vmatmul.mubr.f32.gmra.mrb[0].mxu0 %v3300
  %v3406 = vpop.f32.mrb[0].mxu0
  %v3407 = vadd.f32 0.0, %v3406
  %v3408 = vpop.f32.mrb[0].mxu0
  %3409 = vmatprep.mubr.f32.mxu0 0.0
  %3410 = vmatmul.mubr.f32.gmra.mrb[0].mxu0 %v3301
  %v3411 = vpop.f32.mrb[0].mxu0
  %v3412 = vadd.f32 0.0, %v3411
  %v3413 = vpop.f32.mrb[0].mxu0
  %3414 = vmatprep.mubr.f32.mxu0 0.0
  %3415 = vmatmul.mubr.f32.gmra.mrb[0].mxu0 %v3302
  %v3416 = vpop.f32.mrb[0].mxu0
  %v3417 = vadd.f32 0.0, %v3416
  %v3418 = vpop.f32.mrb[0].mxu0
  %3419 = vmatprep.mubr.f32.mxu0 0.0
  %3420 = vmatmul.mubr.f32.gmra.mrb[0].mxu0 %v3303
  %v3421 = vpop.f32.mrb[0].mxu0
  %v3422 = vadd.f32 0.0, %v3421
  %v3423 = vpop.f32.mrb[0].mxu0
  %3424 = vmatprep.mubr.f32.mxu0 0.0
  %3425 = vmatmul.mubr.f32.gmra.mrb[0].mxu0 %v3304
  %v3426 = vpop.f32.mrb[0].mxu0
  %v3427 = vadd.f32 0.0, %v3426
  %v3428 = vpop.f32.mrb[0].mxu0
  %3429 = vmatprep.mubr.f32.mxu0 0.0
  %3430 = vmatmul.mubr.f32.gmra.mrb[0].mxu0 %v3305
  %v3431 = vpop.f32.mrb[0].mxu0
  %v3432 = vadd.f32 0.0, %v3431
  %v3433 = vpop.f32.mrb[0].mxu0
  %3434 = vmatprep.mubr.f32.mxu0 0.0
  %3435 = vmatmul.mubr.f32.gmra.mrb[0].mxu0 %v3306
  %v3436 = vpop.f32.mrb[0].mxu0
  %v3437 = vadd.f32 0.0, %v3436
  %v3438 = vpop.f32.mrb[0].mxu0
  %3439 = vmatprep.mubr.f32.mxu0 0.0
  %3440 = vmatmul.mubr.f32.gmra.mrb[0].mxu0 %v3307
  %v3441 = vpop.f32.mrb[0].mxu0
  %v3442 = vadd.f32 0.0, %v3441
  %v3443 = vpop.f32.mrb[0].mxu0
  %3444 = vmatprep.mubr.f32.mxu0 0.0
  %3445 = vmatmul.mubr.f32.gmra.mrb[0].mxu0 %v3308
  %v3446 = vpop.f32.mrb[0].mxu0
  %v3447 = vadd.f32 0.0, %v3446
  %v3448 = vpop.f32.mrb[0].mxu0
  %3449 = vmatprep.mubr.f32.mxu0 0.0
  %3450 = vmatmul.mubr.f32.gmra.mrb[0].mxu0 %v3309
  %v3451 = vpop.f32.mrb[0].mxu0
  %v3452 = vadd.f32 0.0, %v3451
  %v3453 = vpop.f32.mrb[0].mxu0
  %3454 = vdwg.mxu0
  %3455 = vmatprep.subr.mxu0 0.0
  %3456 = vmatpush1.msra.mxu0 %v916
  %3457 = vmatprep.subr.mxu0 0.0
  %3458 = vmatpush1.msra.mxu0 %v917
  %3459 = vmatprep.subr.mxu0 0.0
  %3460 = vmatpush1.msra.mxu0 %v918
  %3461 = vmatprep.subr.mxu0 0.0
  %3462 = vmatpush1.msra.mxu0 %v919
  %3463 = vmatprep.subr.mxu0 0.0
  %3464 = vmatpush1.msra.mxu0 %v920
  %3465 = vmatprep.subr.mxu0 0.0
  %3466 = vmatpush1.msra.mxu0 %v921
  %3467 = vmatprep.subr.mxu0 0.0
  %3468 = vmatpush1.msra.mxu0 %v922
  %3469 = vmatprep.subr.mxu0 0.0
  %3470 = vmatpush1.msra.mxu0 %v923
  %3471 = vmatprep.subr.mxu0 0.0
  %3472 = vmatpush1.msra.mxu0 %v924
  %3473 = vmatprep.subr.mxu0 0.0
  %3474 = vmatpush1.msra.mxu0 %v925
  %3475 = vmatprep.subr.mxu0 0.0
  %3476 = vmatpush1.msra.mxu0 %v926
  %3477 = vmatprep.subr.mxu0 0.0
  %3478 = vmatpush1.msra.mxu0 %v927
  %3479 = vmatprep.subr.mxu0 0.0
  %3480 = vmatpush1.msra.mxu0 %v928
  %3481 = vmatprep.subr.mxu0 0.0
  %3482 = vmatpush1.msra.mxu0 %v929
  %3483 = vmatprep.subr.mxu0 0.0
  %3484 = vmatpush1.msra.mxu0 %v930
  %3485 = vmatprep.subr.mxu0 0.0
  %3486 = vmatpush1.msra.mxu0 %v931
  %3487 = vmatprep.subr.mxu0 0.0
  %3488 = vmatpush1.msra.mxu0 0.0
  %3489 = vmatprep.subr.mxu0 0.0
  %3490 = vmatpush1.msra.mxu0 0.0
  %3491 = vmatprep.subr.mxu0 0.0
  %3492 = vmatpush1.msra.mxu0 0.0
  %3493 = vmatprep.subr.mxu0 0.0
  %3494 = vmatpush1.msra.mxu0 0.0
  %3495 = vmatprep.subr.mxu0 0.0
  %3496 = vmatpush1.msra.mxu0 0.0
  %3497 = vmatprep.subr.mxu0 0.0
  %3498 = vmatpush1.msra.mxu0 0.0
  %3499 = vmatprep.subr.mxu0 0.0
  %3500 = vmatpush1.msra.mxu0 0.0
  %3501 = vmatprep.subr.mxu0 0.0
  %3502 = vmatpush1.msra.mxu0 0.0
  %3503 = vmatprep.subr.mxu0 0.0
  %3504 = vmatpush1.msra.mxu0 0.0
  %3505 = vmatprep.subr.mxu0 0.0
  %3506 = vmatpush1.msra.mxu0 0.0
  %3507 = vmatprep.subr.mxu0 0.0
  %3508 = vmatpush1.msra.mxu0 0.0
  %3509 = vmatprep.subr.mxu0 0.0
  %3510 = vmatpush1.msra.mxu0 0.0
  %3511 = vmatprep.subr.mxu0 0.0
  %3512 = vmatpush1.msra.mxu0 0.0
  %3513 = vmatprep.subr.mxu0 0.0
  %3514 = vmatpush1.msra.mxu0 0.0
  %3515 = vmatprep.subr.mxu0 0.0
  %3516 = vmatpush1.msra.mxu0 0.0
  %3517 = vmatprep.subr.mxu0 0.0
  %3518 = vmatpush1.msra.mxu0 0.0
  %3519 = vmatprep.mubr.f32.mxu0 0.0
  %3520 = vmatmul.mubr.f32.gmra.mrb[0].mxu0 %v3294
  %v3521 = vpop.f32.mrb[0].mxu0
  %v3522 = vadd.f32 0.0, %v3521
  %v3523 = vpop.f32.mrb[0].mxu0
  %3524 = vmatprep.mubr.f32.mxu0 0.0
  %3525 = vmatmul.mubr.f32.gmra.mrb[0].mxu0 %v3295
  %v3526 = vpop.f32.mrb[0].mxu0
  %v3527 = vadd.f32 0.0, %v3526
  %v3528 = vpop.f32.mrb[0].mxu0
  %3529 = vmatprep.mubr.f32.mxu0 0.0
  %3530 = vmatmul.mubr.f32.gmra.mrb[0].mxu0 %v3296
  %v3531 = vpop.f32.mrb[0].mxu0
  %v3532 = vadd.f32 0.0, %v3531
  %v3533 = vpop.f32.mrb[0].mxu0
  %3534 = vmatprep.mubr.f32.mxu0 0.0
  %3535 = vmatmul.mubr.f32.gmra.mrb[0].mxu0 %v3297
  %v3536 = vpop.f32.mrb[0].mxu0
  %v3537 = vadd.f32 0.0, %v3536
  %v3538 = vpop.f32.mrb[0].mxu0
  %3539 = vmatprep.mubr.f32.mxu0 0.0
  %3540 = vmatmul.mubr.f32.gmra.mrb[0].mxu0 %v3298
  %v3541 = vpop.f32.mrb[0].mxu0
  %v3542 = vadd.f32 0.0, %v3541
  %v3543 = vpop.f32.mrb[0].mxu0
  %3544 = vmatprep.mubr.f32.mxu0 0.0
  %3545 = vmatmul.mubr.f32.gmra.mrb[0].mxu0 %v3299
  %v3546 = vpop.f32.mrb[0].mxu0
  %v3547 = vadd.f32 0.0, %v3546
  %v3548 = vpop.f32.mrb[0].mxu0
  %3549 = vmatprep.mubr.f32.mxu0 0.0
  %3550 = vmatmul.mubr.f32.gmra.mrb[0].mxu0 %v3300
  %v3551 = vpop.f32.mrb[0].mxu0
  %v3552 = vadd.f32 0.0, %v3551
  %v3553 = vpop.f32.mrb[0].mxu0
  %3554 = vmatprep.mubr.f32.mxu0 0.0
  %3555 = vmatmul.mubr.f32.gmra.mrb[0].mxu0 %v3301
  %v3556 = vpop.f32.mrb[0].mxu0
  %v3557 = vadd.f32 0.0, %v3556
  %v3558 = vpop.f32.mrb[0].mxu0
  %3559 = vmatprep.mubr.f32.mxu0 0.0
  %3560 = vmatmul.mubr.f32.gmra.mrb[0].mxu0 %v3302
  %v3561 = vpop.f32.mrb[0].mxu0
  %v3562 = vadd.f32 0.0, %v3561
  %v3563 = vpop.f32.mrb[0].mxu0
  %3564 = vmatprep.mubr.f32.mxu0 0.0
  %3565 = vmatmul.mubr.f32.gmra.mrb[0].mxu0 %v3303
  %v3566 = vpop.f32.mrb[0].mxu0
  %v3567 = vadd.f32 0.0, %v3566
  %v3568 = vpop.f32.mrb[0].mxu0
  %3569 = vmatprep.mubr.f32.mxu0 0.0
  %3570 = vmatmul.mubr.f32.gmra.mrb[0].mxu0 %v3304
  %v3571 = vpop.f32.mrb[0].mxu0
  %v3572 = vadd.f32 0.0, %v3571
  %v3573 = vpop.f32.mrb[0].mxu0
  %3574 = vmatprep.mubr.f32.mxu0 0.0
  %3575 = vmatmul.mubr.f32.gmra.mrb[0].mxu0 %v3305
  %v3576 = vpop.f32.mrb[0].mxu0
  %v3577 = vadd.f32 0.0, %v3576
  %v3578 = vpop.f32.mrb[0].mxu0
  %3579 = vmatprep.mubr.f32.mxu0 0.0
  %3580 = vmatmul.mubr.f32.gmra.mrb[0].mxu0 %v3306
  %v3581 = vpop.f32.mrb[0].mxu0
  %v3582 = vadd.f32 0.0, %v3581
  %v3583 = vpop.f32.mrb[0].mxu0
  %3584 = vmatprep.mubr.f32.mxu0 0.0
  %3585 = vmatmul.mubr.f32.gmra.mrb[0].mxu0 %v3307
  %v3586 = vpop.f32.mrb[0].mxu0
  %v3587 = vadd.f32 0.0, %v3586
  %v3588 = vpop.f32.mrb[0].mxu0
  %3589 = vmatprep.mubr.f32.mxu0 0.0
  %3590 = vmatmul.mubr.f32.gmra.mrb[0].mxu0 %v3308
  %v3591 = vpop.f32.mrb[0].mxu0
  %v3592 = vadd.f32 0.0, %v3591
  %v3593 = vpop.f32.mrb[0].mxu0
  %3594 = vmatprep.mubr.f32.mxu0 0.0
  %3595 = vmatmul.mubr.f32.gmra.mrb[0].mxu0 %v3309
  %v3596 = vpop.f32.mrb[0].mxu0
  %v3597 = vadd.f32 0.0, %v3596
  %v3598 = vpop.f32.mrb[0].mxu0
  %3599 = vdwg.mxu0
  %vm3600 = vcmp.eq.f32.partialorder %v3522, %v916
  %vm3601 = vcmp.eq.f32.partialorder %v3527, %v917
  %vm3602 = vcmp.eq.f32.partialorder %v3532, %v918
  %vm3603 = vcmp.eq.f32.partialorder %v3537, %v919
  %vm3604 = vcmp.eq.f32.partialorder %v3542, %v920
  %vm3605 = vcmp.eq.f32.partialorder %v3547, %v921
  %vm3606 = vcmp.eq.f32.partialorder %v3552, %v922
  %vm3607 = vcmp.eq.f32.partialorder %v3557, %v923
  %vm3608 = vcmp.eq.f32.partialorder %v3562, %v924
  %vm3609 = vcmp.eq.f32.partialorder %v3567, %v925
  %vm3610 = vcmp.eq.f32.partialorder %v3572, %v926
  %vm3611 = vcmp.eq.f32.partialorder %v3577, %v927
  %vm3612 = vcmp.eq.f32.partialorder %v3582, %v928
  %vm3613 = vcmp.eq.f32.partialorder %v3587, %v929
  %vm3614 = vcmp.eq.f32.partialorder %v3592, %v930
  %vm3615 = vcmp.eq.f32.partialorder %v3597, %v931
  %v3616 = vmax.f32 %v3246, %v3377
  %v3617 = vmax.f32 %v3247, %v3382
  %v3618 = vmax.f32 %v3248, %v3387
  %v3619 = vmax.f32 %v3249, %v3392
  %v3620 = vmax.f32 %v3250, %v3397
  %v3621 = vmax.f32 %v3251, %v3402
  %v3622 = vmax.f32 %v3252, %v3407
  %v3623 = vmax.f32 %v3253, %v3412
  %v3624 = vmax.f32 %v3254, %v3417
  %v3625 = vmax.f32 %v3255, %v3422
  %v3626 = vmax.f32 %v3256, %v3427
  %v3627 = vmax.f32 %v3257, %v3432
  %v3628 = vmax.f32 %v3258, %v3437
  %v3629 = vmax.f32 %v3259, %v3442
  %v3630 = vmax.f32 %v3260, %v3447
  %v3631 = vmax.f32 %v3261, %v3452
  %v3632 = vsel %vm3600, 1, 0
  %v3633 = vsel %vm3601, 1, 0
  %v3634 = vsel %vm3602, 1, 0
  %v3635 = vsel %vm3603, 1, 0
  %v3636 = vsel %vm3604, 1, 0
  %v3637 = vsel %vm3605, 1, 0
  %v3638 = vsel %vm3606, 1, 0
  %v3639 = vsel %vm3607, 1, 0
  %v3640 = vsel %vm3608, 1, 0
  %v3641 = vsel %vm3609, 1, 0
  %v3642 = vsel %vm3610, 1, 0
  %v3643 = vsel %vm3611, 1, 0
  %v3644 = vsel %vm3612, 1, 0
  %v3645 = vsel %vm3613, 1, 0
  %v3646 = vsel %vm3614, 1, 0
  %v3647 = vsel %vm3615, 1, 0
  %3648 = vset.pattern.permute.xlu0 0
  %3649 = vperm.xlu0 %3648, %v3632
  %v3650 = vpop.permute.xlu0 %3649
  %3651 = vset.pattern.permute.xlu0 0
  %3652 = vperm.xlu0 %3651, %v3633
  %v3653 = vpop.permute.xlu0 %3652
  %3654 = vset.pattern.permute.xlu0 0
  %3655 = vperm.xlu0 %3654, %v3634
  %v3656 = vpop.permute.xlu0 %3655
  %3657 = vset.pattern.permute.xlu0 0
  %3658 = vperm.xlu0 %3657, %v3635
  %v3659 = vpop.permute.xlu0 %3658
  %3660 = vset.pattern.permute.xlu0 0
  %3661 = vperm.xlu0 %3660, %v3636
  %v3662 = vpop.permute.xlu0 %3661
  %3663 = vset.pattern.permute.xlu0 0
  %3664 = vperm.xlu0 %3663, %v3637
  %v3665 = vpop.permute.xlu0 %3664
  %3666 = vset.pattern.permute.xlu0 0
  %3667 = vperm.xlu0 %3666, %v3638
  %v3668 = vpop.permute.xlu0 %3667
  %3669 = vset.pattern.permute.xlu0 0
  %3670 = vperm.xlu0 %3669, %v3639
  %v3671 = vpop.permute.xlu0 %3670
  %3672 = vset.pattern.permute.xlu0 0
  %3673 = vperm.xlu0 %3672, %v3640
  %v3674 = vpop.permute.xlu0 %3673
  %3675 = vset.pattern.permute.xlu0 0
  %3676 = vperm.xlu0 %3675, %v3641
  %v3677 = vpop.permute.xlu0 %3676
  %3678 = vset.pattern.permute.xlu0 0
  %3679 = vperm.xlu0 %3678, %v3642
  %v3680 = vpop.permute.xlu0 %3679
  %3681 = vset.pattern.permute.xlu0 0
  %3682 = vperm.xlu0 %3681, %v3643
  %v3683 = vpop.permute.xlu0 %3682
  %3684 = vset.pattern.permute.xlu0 0
  %3685 = vperm.xlu0 %3684, %v3644
  %v3686 = vpop.permute.xlu0 %3685
  %3687 = vset.pattern.permute.xlu0 0
  %3688 = vperm.xlu0 %3687, %v3645
  %v3689 = vpop.permute.xlu0 %3688
  %3690 = vset.pattern.permute.xlu0 0
  %3691 = vperm.xlu0 %3690, %v3646
  %v3692 = vpop.permute.xlu0 %3691
  %3693 = vset.pattern.permute.xlu0 0
  %3694 = vperm.xlu0 %3693, %v3647
  %v3695 = vpop.permute.xlu0 %3694
  %vm3696 = vcmp.eq.s32.totalorder %v3650, 1
  %vm3697 = vcmp.eq.s32.totalorder %v3653, 1
  %vm3698 = vcmp.eq.s32.totalorder %v3656, 1
  %vm3699 = vcmp.eq.s32.totalorder %v3659, 1
  %vm3700 = vcmp.eq.s32.totalorder %v3662, 1
  %vm3701 = vcmp.eq.s32.totalorder %v3665, 1
  %vm3702 = vcmp.eq.s32.totalorder %v3668, 1
  %vm3703 = vcmp.eq.s32.totalorder %v3671, 1
  %vm3704 = vcmp.eq.s32.totalorder %v3674, 1
  %vm3705 = vcmp.eq.s32.totalorder %v3677, 1
  %vm3706 = vcmp.eq.s32.totalorder %v3680, 1
  %vm3707 = vcmp.eq.s32.totalorder %v3683, 1
  %vm3708 = vcmp.eq.s32.totalorder %v3686, 1
  %vm3709 = vcmp.eq.s32.totalorder %v3689, 1
  %vm3710 = vcmp.eq.s32.totalorder %v3692, 1
  %vm3711 = vcmp.eq.s32.totalorder %v3695, 1
  %v3712 = vsel %vm3696, %v3616, %v3246
  %v3713 = vsel %vm3697, %v3617, %v3247
  %v3714 = vsel %vm3698, %v3618, %v3248
  %v3715 = vsel %vm3699, %v3619, %v3249
  %v3716 = vsel %vm3700, %v3620, %v3250
  %v3717 = vsel %vm3701, %v3621, %v3251
  %v3718 = vsel %vm3702, %v3622, %v3252
  %v3719 = vsel %vm3703, %v3623, %v3253
  %v3720 = vsel %vm3704, %v3624, %v3254
  %v3721 = vsel %vm3705, %v3625, %v3255
  %v3722 = vsel %vm3706, %v3626, %v3256
  %v3723 = vsel %vm3707, %v3627, %v3257
  %v3724 = vsel %vm3708, %v3628, %v3258
  %v3725 = vsel %vm3709, %v3629, %v3259
  %v3726 = vsel %vm3710, %v3630, %v3260
  %v3727 = vsel %vm3711, %v3631, %v3261
  %vm3728 = vcmp.eq.s32.totalorder %v900, 64
  %vm3729 = vcmp.eq.s32.totalorder %v901, 64
  %vm3730 = vcmp.eq.s32.totalorder %v902, 64
  %vm3731 = vcmp.eq.s32.totalorder %v903, 64
  %vm3732 = vcmp.eq.s32.totalorder %v904, 64
  %vm3733 = vcmp.eq.s32.totalorder %v905, 64
  %vm3734 = vcmp.eq.s32.totalorder %v906, 64
  %vm3735 = vcmp.eq.s32.totalorder %v907, 64
  %vm3736 = vcmp.eq.s32.totalorder %v908, 64
  %vm3737 = vcmp.eq.s32.totalorder %v909, 64
  %vm3738 = vcmp.eq.s32.totalorder %v910, 64
  %vm3739 = vcmp.eq.s32.totalorder %v911, 64
  %vm3740 = vcmp.eq.s32.totalorder %v912, 64
  %vm3741 = vcmp.eq.s32.totalorder %v913, 64
  %vm3742 = vcmp.eq.s32.totalorder %v914, 64
  %vm3743 = vcmp.eq.s32.totalorder %v915, 64
  %v3744 = vsel %vm3728, 1, 0
  %v3745 = vsel %vm3729, 1, 0
  %v3746 = vsel %vm3730, 1, 0
  %v3747 = vsel %vm3731, 1, 0
  %v3748 = vsel %vm3732, 1, 0
  %v3749 = vsel %vm3733, 1, 0
  %v3750 = vsel %vm3734, 1, 0
  %v3751 = vsel %vm3735, 1, 0
  %v3752 = vsel %vm3736, 1, 0
  %v3753 = vsel %vm3737, 1, 0
  %v3754 = vsel %vm3738, 1, 0
  %v3755 = vsel %vm3739, 1, 0
  %v3756 = vsel %vm3740, 1, 0
  %v3757 = vsel %vm3741, 1, 0
  %v3758 = vsel %vm3742, 1, 0
  %v3759 = vsel %vm3743, 1, 0
  %v3760 = vcvt.s32.f32 %v3744
  %v3761 = vcvt.s32.f32 %v3745
  %v3762 = vcvt.s32.f32 %v3746
  %v3763 = vcvt.s32.f32 %v3747
  %v3764 = vcvt.s32.f32 %v3748
  %v3765 = vcvt.s32.f32 %v3749
  %v3766 = vcvt.s32.f32 %v3750
  %v3767 = vcvt.s32.f32 %v3751
  %v3768 = vcvt.s32.f32 %v3752
  %v3769 = vcvt.s32.f32 %v3753
  %v3770 = vcvt.s32.f32 %v3754
  %v3771 = vcvt.s32.f32 %v3755
  %v3772 = vcvt.s32.f32 %v3756
  %v3773 = vcvt.s32.f32 %v3757
  %v3774 = vcvt.s32.f32 %v3758
  %v3775 = vcvt.s32.f32 %v3759
  %3776 = vmatprep.subr.mxu0 0.0
  %3777 = vmatpush1.msra.mxu0 %v3712
  %3778 = vmatprep.subr.mxu0 0.0
  %3779 = vmatpush1.msra.mxu0 %v3713
  %3780 = vmatprep.subr.mxu0 0.0
  %3781 = vmatpush1.msra.mxu0 %v3714
  %3782 = vmatprep.subr.mxu0 0.0
  %3783 = vmatpush1.msra.mxu0 %v3715
  %3784 = vmatprep.subr.mxu0 0.0
  %3785 = vmatpush1.msra.mxu0 %v3716
  %3786 = vmatprep.subr.mxu0 0.0
  %3787 = vmatpush1.msra.mxu0 %v3717
  %3788 = vmatprep.subr.mxu0 0.0
  %3789 = vmatpush1.msra.mxu0 %v3718
  %3790 = vmatprep.subr.mxu0 0.0
  %3791 = vmatpush1.msra.mxu0 %v3719
  %3792 = vmatprep.subr.mxu0 0.0
  %3793 = vmatpush1.msra.mxu0 %v3720
  %3794 = vmatprep.subr.mxu0 0.0
  %3795 = vmatpush1.msra.mxu0 %v3721
  %3796 = vmatprep.subr.mxu0 0.0
  %3797 = vmatpush1.msra.mxu0 %v3722
  %3798 = vmatprep.subr.mxu0 0.0
  %3799 = vmatpush1.msra.mxu0 %v3723
  %3800 = vmatprep.subr.mxu0 0.0
  %3801 = vmatpush1.msra.mxu0 %v3724
  %3802 = vmatprep.subr.mxu0 0.0
  %3803 = vmatpush1.msra.mxu0 %v3725
  %3804 = vmatprep.subr.mxu0 0.0
  %3805 = vmatpush1.msra.mxu0 %v3726
  %3806 = vmatprep.subr.mxu0 0.0
  %3807 = vmatpush1.msra.mxu0 %v3727
  %3808 = vmatprep.subr.mxu0 0.0
  %3809 = vmatpush1.msra.mxu0 0.0
  %3810 = vmatprep.subr.mxu0 0.0
  %3811 = vmatpush1.msra.mxu0 0.0
  %3812 = vmatprep.subr.mxu0 0.0
  %3813 = vmatpush1.msra.mxu0 0.0
  %3814 = vmatprep.subr.mxu0 0.0
  %3815 = vmatpush1.msra.mxu0 0.0
  %3816 = vmatprep.subr.mxu0 0.0
  %3817 = vmatpush1.msra.mxu0 0.0
  %3818 = vmatprep.subr.mxu0 0.0
  %3819 = vmatpush1.msra.mxu0 0.0
  %3820 = vmatprep.subr.mxu0 0.0
  %3821 = vmatpush1.msra.mxu0 0.0
  %3822 = vmatprep.subr.mxu0 0.0
  %3823 = vmatpush1.msra.mxu0 0.0
  %3824 = vmatprep.subr.mxu0 0.0
  %3825 = vmatpush1.msra.mxu0 0.0
  %3826 = vmatprep.subr.mxu0 0.0
  %3827 = vmatpush1.msra.mxu0 0.0
  %3828 = vmatprep.subr.mxu0 0.0
  %3829 = vmatpush1.msra.mxu0 0.0
  %3830 = vmatprep.subr.mxu0 0.0
  %3831 = vmatpush1.msra.mxu0 0.0
  %3832 = vmatprep.subr.mxu0 0.0
  %3833 = vmatpush1.msra.mxu0 0.0
  %3834 = vmatprep.subr.mxu0 0.0
  %3835 = vmatpush1.msra.mxu0 0.0
  %3836 = vmatprep.subr.mxu0 0.0
  %3837 = vmatpush1.msra.mxu0 0.0
  %3838 = vmatprep.subr.mxu0 0.0
  %3839 = vmatpush1.msra.mxu0 0.0
  %3840 = vmatprep.mubr.f32.mxu0 0.0
  %3841 = vmatmul.mubr.f32.gmra.mrb[0].mxu0 %v3760
  %v3842 = vpop.f32.mrb[0].mxu0
  %v3843 = vadd.f32 0.0, %v3842
  %v3844 = vpop.f32.mrb[0].mxu0
  %3845 = vmatprep.mubr.f32.mxu0 0.0
  %3846 = vmatmul.mubr.f32.gmra.mrb[0].mxu0 %v3761
  %v3847 = vpop.f32.mrb[0].mxu0
  %v3848 = vadd.f32 0.0, %v3847
  %v3849 = vpop.f32.mrb[0].mxu0
  %3850 = vmatprep.mubr.f32.mxu0 0.0
  %3851 = vmatmul.mubr.f32.gmra.mrb[0].mxu0 %v3762
  %v3852 = vpop.f32.mrb[0].mxu0
  %v3853 = vadd.f32 0.0, %v3852
  %v3854 = vpop.f32.mrb[0].mxu0
  %3855 = vmatprep.mubr.f32.mxu0 0.0
  %3856 = vmatmul.mubr.f32.gmra.mrb[0].mxu0 %v3763
  %v3857 = vpop.f32.mrb[0].mxu0
  %v3858 = vadd.f32 0.0, %v3857
  %v3859 = vpop.f32.mrb[0].mxu0
  %3860 = vmatprep.mubr.f32.mxu0 0.0
  %3861 = vmatmul.mubr.f32.gmra.mrb[0].mxu0 %v3764
  %v3862 = vpop.f32.mrb[0].mxu0
  %v3863 = vadd.f32 0.0, %v3862
  %v3864 = vpop.f32.mrb[0].mxu0
  %3865 = vmatprep.mubr.f32.mxu0 0.0
  %3866 = vmatmul.mubr.f32.gmra.mrb[0].mxu0 %v3765
  %v3867 = vpop.f32.mrb[0].mxu0
  %v3868 = vadd.f32 0.0, %v3867
  %v3869 = vpop.f32.mrb[0].mxu0
  %3870 = vmatprep.mubr.f32.mxu0 0.0
  %3871 = vmatmul.mubr.f32.gmra.mrb[0].mxu0 %v3766
  %v3872 = vpop.f32.mrb[0].mxu0
  %v3873 = vadd.f32 0.0, %v3872
  %v3874 = vpop.f32.mrb[0].mxu0
  %3875 = vmatprep.mubr.f32.mxu0 0.0
  %3876 = vmatmul.mubr.f32.gmra.mrb[0].mxu0 %v3767
  %v3877 = vpop.f32.mrb[0].mxu0
  %v3878 = vadd.f32 0.0, %v3877
  %v3879 = vpop.f32.mrb[0].mxu0
  %3880 = vmatprep.mubr.f32.mxu0 0.0
  %3881 = vmatmul.mubr.f32.gmra.mrb[0].mxu0 %v3768
  %v3882 = vpop.f32.mrb[0].mxu0
  %v3883 = vadd.f32 0.0, %v3882
  %v3884 = vpop.f32.mrb[0].mxu0
  %3885 = vmatprep.mubr.f32.mxu0 0.0
  %3886 = vmatmul.mubr.f32.gmra.mrb[0].mxu0 %v3769
  %v3887 = vpop.f32.mrb[0].mxu0
  %v3888 = vadd.f32 0.0, %v3887
  %v3889 = vpop.f32.mrb[0].mxu0
  %3890 = vmatprep.mubr.f32.mxu0 0.0
  %3891 = vmatmul.mubr.f32.gmra.mrb[0].mxu0 %v3770
  %v3892 = vpop.f32.mrb[0].mxu0
  %v3893 = vadd.f32 0.0, %v3892
  %v3894 = vpop.f32.mrb[0].mxu0
  %3895 = vmatprep.mubr.f32.mxu0 0.0
  %3896 = vmatmul.mubr.f32.gmra.mrb[0].mxu0 %v3771
  %v3897 = vpop.f32.mrb[0].mxu0
  %v3898 = vadd.f32 0.0, %v3897
  %v3899 = vpop.f32.mrb[0].mxu0
  %3900 = vmatprep.mubr.f32.mxu0 0.0
  %3901 = vmatmul.mubr.f32.gmra.mrb[0].mxu0 %v3772
  %v3902 = vpop.f32.mrb[0].mxu0
  %v3903 = vadd.f32 0.0, %v3902
  %v3904 = vpop.f32.mrb[0].mxu0
  %3905 = vmatprep.mubr.f32.mxu0 0.0
  %3906 = vmatmul.mubr.f32.gmra.mrb[0].mxu0 %v3773
  %v3907 = vpop.f32.mrb[0].mxu0
  %v3908 = vadd.f32 0.0, %v3907
  %v3909 = vpop.f32.mrb[0].mxu0
  %3910 = vmatprep.mubr.f32.mxu0 0.0
  %3911 = vmatmul.mubr.f32.gmra.mrb[0].mxu0 %v3774
  %v3912 = vpop.f32.mrb[0].mxu0
  %v3913 = vadd.f32 0.0, %v3912
  %v3914 = vpop.f32.mrb[0].mxu0
  %3915 = vmatprep.mubr.f32.mxu0 0.0
  %3916 = vmatmul.mubr.f32.gmra.mrb[0].mxu0 %v3775
  %v3917 = vpop.f32.mrb[0].mxu0
  %v3918 = vadd.f32 0.0, %v3917
  %v3919 = vpop.f32.mrb[0].mxu0
  %3920 = vdwg.mxu0
  %3921 = vmatprep.subr.mxu0 0.0
  %3922 = vmatpush1.msra.mxu0 %v916
  %3923 = vmatprep.subr.mxu0 0.0
  %3924 = vmatpush1.msra.mxu0 %v917
  %3925 = vmatprep.subr.mxu0 0.0
  %3926 = vmatpush1.msra.mxu0 %v918
  %3927 = vmatprep.subr.mxu0 0.0
  %3928 = vmatpush1.msra.mxu0 %v919
  %3929 = vmatprep.subr.mxu0 0.0
  %3930 = vmatpush1.msra.mxu0 %v920
  %3931 = vmatprep.subr.mxu0 0.0
  %3932 = vmatpush1.msra.mxu0 %v921
  %3933 = vmatprep.subr.mxu0 0.0
  %3934 = vmatpush1.msra.mxu0 %v922
  %3935 = vmatprep.subr.mxu0 0.0
  %3936 = vmatpush1.msra.mxu0 %v923
  %3937 = vmatprep.subr.mxu0 0.0
  %3938 = vmatpush1.msra.mxu0 %v924
  %3939 = vmatprep.subr.mxu0 0.0
  %3940 = vmatpush1.msra.mxu0 %v925
  %3941 = vmatprep.subr.mxu0 0.0
  %3942 = vmatpush1.msra.mxu0 %v926
  %3943 = vmatprep.subr.mxu0 0.0
  %3944 = vmatpush1.msra.mxu0 %v927
  %3945 = vmatprep.subr.mxu0 0.0
  %3946 = vmatpush1.msra.mxu0 %v928
  %3947 = vmatprep.subr.mxu0 0.0
  %3948 = vmatpush1.msra.mxu0 %v929
  %3949 = vmatprep.subr.mxu0 0.0
  %3950 = vmatpush1.msra.mxu0 %v930
  %3951 = vmatprep.subr.mxu0 0.0
  %3952 = vmatpush1.msra.mxu0 %v931
  %3953 = vmatprep.subr.mxu0 0.0
  %3954 = vmatpush1.msra.mxu0 0.0
  %3955 = vmatprep.subr.mxu0 0.0
  %3956 = vmatpush1.msra.mxu0 0.0
  %3957 = vmatprep.subr.mxu0 0.0
  %3958 = vmatpush1.msra.mxu0 0.0
  %3959 = vmatprep.subr.mxu0 0.0
  %3960 = vmatpush1.msra.mxu0 0.0
  %3961 = vmatprep.subr.mxu0 0.0
  %3962 = vmatpush1.msra.mxu0 0.0
  %3963 = vmatprep.subr.mxu0 0.0
  %3964 = vmatpush1.msra.mxu0 0.0
  %3965 = vmatprep.subr.mxu0 0.0
  %3966 = vmatpush1.msra.mxu0 0.0
  %3967 = vmatprep.subr.mxu0 0.0
  %3968 = vmatpush1.msra.mxu0 0.0
  %3969 = vmatprep.subr.mxu0 0.0
  %3970 = vmatpush1.msra.mxu0 0.0
  %3971 = vmatprep.subr.mxu0 0.0
  %3972 = vmatpush1.msra.mxu0 0.0
  %3973 = vmatprep.subr.mxu0 0.0
  %3974 = vmatpush1.msra.mxu0 0.0
  %3975 = vmatprep.subr.mxu0 0.0
  %3976 = vmatpush1.msra.mxu0 0.0
  %3977 = vmatprep.subr.mxu0 0.0
  %3978 = vmatpush1.msra.mxu0 0.0
  %3979 = vmatprep.subr.mxu0 0.0
  %3980 = vmatpush1.msra.mxu0 0.0
  %3981 = vmatprep.subr.mxu0 0.0
  %3982 = vmatpush1.msra.mxu0 0.0
  %3983 = vmatprep.subr.mxu0 0.0
  %3984 = vmatpush1.msra.mxu0 0.0
  %3985 = vmatprep.mubr.f32.mxu0 0.0
  %3986 = vmatmul.mubr.f32.gmra.mrb[0].mxu0 %v3760
  %v3987 = vpop.f32.mrb[0].mxu0
  %v3988 = vadd.f32 0.0, %v3987
  %v3989 = vpop.f32.mrb[0].mxu0
  %3990 = vmatprep.mubr.f32.mxu0 0.0
  %3991 = vmatmul.mubr.f32.gmra.mrb[0].mxu0 %v3761
  %v3992 = vpop.f32.mrb[0].mxu0
  %v3993 = vadd.f32 0.0, %v3992
  %v3994 = vpop.f32.mrb[0].mxu0
  %3995 = vmatprep.mubr.f32.mxu0 0.0
  %3996 = vmatmul.mubr.f32.gmra.mrb[0].mxu0 %v3762
  %v3997 = vpop.f32.mrb[0].mxu0
  %v3998 = vadd.f32 0.0, %v3997
  %v3999 = vpop.f32.mrb[0].mxu0
  %4000 = vmatprep.mubr.f32.mxu0 0.0
  %4001 = vmatmul.mubr.f32.gmra.mrb[0].mxu0 %v3763
  %v4002 = vpop.f32.mrb[0].mxu0
  %v4003 = vadd.f32 0.0, %v4002
  %v4004 = vpop.f32.mrb[0].mxu0
  %4005 = vmatprep.mubr.f32.mxu0 0.0
  %4006 = vmatmul.mubr.f32.gmra.mrb[0].mxu0 %v3764
  %v4007 = vpop.f32.mrb[0].mxu0
  %v4008 = vadd.f32 0.0, %v4007
  %v4009 = vpop.f32.mrb[0].mxu0
  %4010 = vmatprep.mubr.f32.mxu0 0.0
  %4011 = vmatmul.mubr.f32.gmra.mrb[0].mxu0 %v3765
  %v4012 = vpop.f32.mrb[0].mxu0
  %v4013 = vadd.f32 0.0, %v4012
  %v4014 = vpop.f32.mrb[0].mxu0
  %4015 = vmatprep.mubr.f32.mxu0 0.0
  %4016 = vmatmul.mubr.f32.gmra.mrb[0].mxu0 %v3766
  %v4017 = vpop.f32.mrb[0].mxu0
  %v4018 = vadd.f32 0.0, %v4017
  %v4019 = vpop.f32.mrb[0].mxu0
  %4020 = vmatprep.mubr.f32.mxu0 0.0
  %4021 = vmatmul.mubr.f32.gmra.mrb[0].mxu0 %v3767
  %v4022 = vpop.f32.mrb[0].mxu0
  %v4023 = vadd.f32 0.0, %v4022
  %v4024 = vpop.f32.mrb[0].mxu0
  %4025 = vmatprep.mubr.f32.mxu0 0.0
  %4026 = vmatmul.mubr.f32.gmra.mrb[0].mxu0 %v3768
  %v4027 = vpop.f32.mrb[0].mxu0
  %v4028 = vadd.f32 0.0, %v4027
  %v4029 = vpop.f32.mrb[0].mxu0
  %4030 = vmatprep.mubr.f32.mxu0 0.0
  %4031 = vmatmul.mubr.f32.gmra.mrb[0].mxu0 %v3769
  %v4032 = vpop.f32.mrb[0].mxu0
  %v4033 = vadd.f32 0.0, %v4032
  %v4034 = vpop.f32.mrb[0].mxu0
  %4035 = vmatprep.mubr.f32.mxu0 0.0
  %4036 = vmatmul.mubr.f32.gmra.mrb[0].mxu0 %v3770
  %v4037 = vpop.f32.mrb[0].mxu0
  %v4038 = vadd.f32 0.0, %v4037
  %v4039 = vpop.f32.mrb[0].mxu0
  %4040 = vmatprep.mubr.f32.mxu0 0.0
  %4041 = vmatmul.mubr.f32.gmra.mrb[0].mxu0 %v3771
  %v4042 = vpop.f32.mrb[0].mxu0
  %v4043 = vadd.f32 0.0, %v4042
  %v4044 = vpop.f32.mrb[0].mxu0
  %4045 = vmatprep.mubr.f32.mxu0 0.0
  %4046 = vmatmul.mubr.f32.gmra.mrb[0].mxu0 %v3772
  %v4047 = vpop.f32.mrb[0].mxu0
  %v4048 = vadd.f32 0.0, %v4047
  %v4049 = vpop.f32.mrb[0].mxu0
  %4050 = vmatprep.mubr.f32.mxu0 0.0
  %4051 = vmatmul.mubr.f32.gmra.mrb[0].mxu0 %v3773
  %v4052 = vpop.f32.mrb[0].mxu0
  %v4053 = vadd.f32 0.0, %v4052
  %v4054 = vpop.f32.mrb[0].mxu0
  %4055 = vmatprep.mubr.f32.mxu0 0.0
  %4056 = vmatmul.mubr.f32.gmra.mrb[0].mxu0 %v3774
  %v4057 = vpop.f32.mrb[0].mxu0
  %v4058 = vadd.f32 0.0, %v4057
  %v4059 = vpop.f32.mrb[0].mxu0
  %4060 = vmatprep.mubr.f32.mxu0 0.0
  %4061 = vmatmul.mubr.f32.gmra.mrb[0].mxu0 %v3775
  %v4062 = vpop.f32.mrb[0].mxu0
  %v4063 = vadd.f32 0.0, %v4062
  %v4064 = vpop.f32.mrb[0].mxu0
  %4065 = vdwg.mxu0
  %vm4066 = vcmp.eq.f32.partialorder %v3988, %v916
  %vm4067 = vcmp.eq.f32.partialorder %v3993, %v917
  %vm4068 = vcmp.eq.f32.partialorder %v3998, %v918
  %vm4069 = vcmp.eq.f32.partialorder %v4003, %v919
  %vm4070 = vcmp.eq.f32.partialorder %v4008, %v920
  %vm4071 = vcmp.eq.f32.partialorder %v4013, %v921
  %vm4072 = vcmp.eq.f32.partialorder %v4018, %v922
  %vm4073 = vcmp.eq.f32.partialorder %v4023, %v923
  %vm4074 = vcmp.eq.f32.partialorder %v4028, %v924
  %vm4075 = vcmp.eq.f32.partialorder %v4033, %v925
  %vm4076 = vcmp.eq.f32.partialorder %v4038, %v926
  %vm4077 = vcmp.eq.f32.partialorder %v4043, %v927
  %vm4078 = vcmp.eq.f32.partialorder %v4048, %v928
  %vm4079 = vcmp.eq.f32.partialorder %v4053, %v929
  %vm4080 = vcmp.eq.f32.partialorder %v4058, %v930
  %vm4081 = vcmp.eq.f32.partialorder %v4063, %v931
  %v4082 = vmax.f32 %v3712, %v3843
  %v4083 = vmax.f32 %v3713, %v3848
  %v4084 = vmax.f32 %v3714, %v3853
  %v4085 = vmax.f32 %v3715, %v3858
  %v4086 = vmax.f32 %v3716, %v3863
  %v4087 = vmax.f32 %v3717, %v3868
  %v4088 = vmax.f32 %v3718, %v3873
  %v4089 = vmax.f32 %v3719, %v3878
  %v4090 = vmax.f32 %v3720, %v3883
  %v4091 = vmax.f32 %v3721, %v3888
  %v4092 = vmax.f32 %v3722, %v3893
  %v4093 = vmax.f32 %v3723, %v3898
  %v4094 = vmax.f32 %v3724, %v3903
  %v4095 = vmax.f32 %v3725, %v3908
  %v4096 = vmax.f32 %v3726, %v3913
  %v4097 = vmax.f32 %v3727, %v3918
  %v4098 = vsel %vm4066, 1, 0
  %v4099 = vsel %vm4067, 1, 0
  %v4100 = vsel %vm4068, 1, 0
  %v4101 = vsel %vm4069, 1, 0
  %v4102 = vsel %vm4070, 1, 0
  %v4103 = vsel %vm4071, 1, 0
  %v4104 = vsel %vm4072, 1, 0
  %v4105 = vsel %vm4073, 1, 0
  %v4106 = vsel %vm4074, 1, 0
  %v4107 = vsel %vm4075, 1, 0
  %v4108 = vsel %vm4076, 1, 0
  %v4109 = vsel %vm4077, 1, 0
  %v4110 = vsel %vm4078, 1, 0
  %v4111 = vsel %vm4079, 1, 0
  %v4112 = vsel %vm4080, 1, 0
  %v4113 = vsel %vm4081, 1, 0
  %4114 = vset.pattern.permute.xlu0 0
  %4115 = vperm.xlu0 %4114, %v4098
  %v4116 = vpop.permute.xlu0 %4115
  %4117 = vset.pattern.permute.xlu0 0
  %4118 = vperm.xlu0 %4117, %v4099
  %v4119 = vpop.permute.xlu0 %4118
  %4120 = vset.pattern.permute.xlu0 0
  %4121 = vperm.xlu0 %4120, %v4100
  %v4122 = vpop.permute.xlu0 %4121
  %4123 = vset.pattern.permute.xlu0 0
  %4124 = vperm.xlu0 %4123, %v4101
  %v4125 = vpop.permute.xlu0 %4124
  %4126 = vset.pattern.permute.xlu0 0
  %4127 = vperm.xlu0 %4126, %v4102
  %v4128 = vpop.permute.xlu0 %4127
  %4129 = vset.pattern.permute.xlu0 0
  %4130 = vperm.xlu0 %4129, %v4103
  %v4131 = vpop.permute.xlu0 %4130
  %4132 = vset.pattern.permute.xlu0 0
  %4133 = vperm.xlu0 %4132, %v4104
  %v4134 = vpop.permute.xlu0 %4133
  %4135 = vset.pattern.permute.xlu0 0
  %4136 = vperm.xlu0 %4135, %v4105
  %v4137 = vpop.permute.xlu0 %4136
  %4138 = vset.pattern.permute.xlu0 0
  %4139 = vperm.xlu0 %4138, %v4106
  %v4140 = vpop.permute.xlu0 %4139
  %4141 = vset.pattern.permute.xlu0 0
  %4142 = vperm.xlu0 %4141, %v4107
  %v4143 = vpop.permute.xlu0 %4142
  %4144 = vset.pattern.permute.xlu0 0
  %4145 = vperm.xlu0 %4144, %v4108
  %v4146 = vpop.permute.xlu0 %4145
  %4147 = vset.pattern.permute.xlu0 0
  %4148 = vperm.xlu0 %4147, %v4109
  %v4149 = vpop.permute.xlu0 %4148
  %4150 = vset.pattern.permute.xlu0 0
  %4151 = vperm.xlu0 %4150, %v4110
  %v4152 = vpop.permute.xlu0 %4151
  %4153 = vset.pattern.permute.xlu0 0
  %4154 = vperm.xlu0 %4153, %v4111
  %v4155 = vpop.permute.xlu0 %4154
  %4156 = vset.pattern.permute.xlu0 0
  %4157 = vperm.xlu0 %4156, %v4112
  %v4158 = vpop.permute.xlu0 %4157
  %4159 = vset.pattern.permute.xlu0 0
  %4160 = vperm.xlu0 %4159, %v4113
  %v4161 = vpop.permute.xlu0 %4160
  %vm4162 = vcmp.eq.s32.totalorder %v4116, 1
  %vm4163 = vcmp.eq.s32.totalorder %v4119, 1
  %vm4164 = vcmp.eq.s32.totalorder %v4122, 1
  %vm4165 = vcmp.eq.s32.totalorder %v4125, 1
  %vm4166 = vcmp.eq.s32.totalorder %v4128, 1
  %vm4167 = vcmp.eq.s32.totalorder %v4131, 1
  %vm4168 = vcmp.eq.s32.totalorder %v4134, 1
  %vm4169 = vcmp.eq.s32.totalorder %v4137, 1
  %vm4170 = vcmp.eq.s32.totalorder %v4140, 1
  %vm4171 = vcmp.eq.s32.totalorder %v4143, 1
  %vm4172 = vcmp.eq.s32.totalorder %v4146, 1
  %vm4173 = vcmp.eq.s32.totalorder %v4149, 1
  %vm4174 = vcmp.eq.s32.totalorder %v4152, 1
  %vm4175 = vcmp.eq.s32.totalorder %v4155, 1
  %vm4176 = vcmp.eq.s32.totalorder %v4158, 1
  %vm4177 = vcmp.eq.s32.totalorder %v4161, 1
  %v4178 = vsel %vm4162, %v4082, %v3712
  %v4179 = vsel %vm4163, %v4083, %v3713
  %v4180 = vsel %vm4164, %v4084, %v3714
  %v4181 = vsel %vm4165, %v4085, %v3715
  %v4182 = vsel %vm4166, %v4086, %v3716
  %v4183 = vsel %vm4167, %v4087, %v3717
  %v4184 = vsel %vm4168, %v4088, %v3718
  %v4185 = vsel %vm4169, %v4089, %v3719
  %v4186 = vsel %vm4170, %v4090, %v3720
  %v4187 = vsel %vm4171, %v4091, %v3721
  %v4188 = vsel %vm4172, %v4092, %v3722
  %v4189 = vsel %vm4173, %v4093, %v3723
  %v4190 = vsel %vm4174, %v4094, %v3724
  %v4191 = vsel %vm4175, %v4095, %v3725
  %v4192 = vsel %vm4176, %v4096, %v3726
  %v4193 = vsel %vm4177, %v4097, %v3727
  %vm4194 = vcmp.eq.s32.totalorder %v900, 4294967295
  %vm4195 = vcmp.eq.s32.totalorder %v901, 4294967295
  %vm4196 = vcmp.eq.s32.totalorder %v902, 4294967295
  %vm4197 = vcmp.eq.s32.totalorder %v903, 4294967295
  %vm4198 = vcmp.eq.s32.totalorder %v904, 4294967295
  %vm4199 = vcmp.eq.s32.totalorder %v905, 4294967295
  %vm4200 = vcmp.eq.s32.totalorder %v906, 4294967295
  %vm4201 = vcmp.eq.s32.totalorder %v907, 4294967295
  %vm4202 = vcmp.eq.s32.totalorder %v908, 4294967295
  %vm4203 = vcmp.eq.s32.totalorder %v909, 4294967295
  %vm4204 = vcmp.eq.s32.totalorder %v910, 4294967295
  %vm4205 = vcmp.eq.s32.totalorder %v911, 4294967295
  %vm4206 = vcmp.eq.s32.totalorder %v912, 4294967295
  %vm4207 = vcmp.eq.s32.totalorder %v913, 4294967295
  %vm4208 = vcmp.eq.s32.totalorder %v914, 4294967295
  %vm4209 = vcmp.eq.s32.totalorder %v915, 4294967295
  %v4210 = vsel %vm4194, 1, 0
  %v4211 = vsel %vm4195, 1, 0
  %v4212 = vsel %vm4196, 1, 0
  %v4213 = vsel %vm4197, 1, 0
  %v4214 = vsel %vm4198, 1, 0
  %v4215 = vsel %vm4199, 1, 0
  %v4216 = vsel %vm4200, 1, 0
  %v4217 = vsel %vm4201, 1, 0
  %v4218 = vsel %vm4202, 1, 0
  %v4219 = vsel %vm4203, 1, 0
  %v4220 = vsel %vm4204, 1, 0
  %v4221 = vsel %vm4205, 1, 0
  %v4222 = vsel %vm4206, 1, 0
  %v4223 = vsel %vm4207, 1, 0
  %v4224 = vsel %vm4208, 1, 0
  %v4225 = vsel %vm4209, 1, 0
  %v4226 = vcvt.s32.f32 %v4210
  %v4227 = vcvt.s32.f32 %v4211
  %v4228 = vcvt.s32.f32 %v4212
  %v4229 = vcvt.s32.f32 %v4213
  %v4230 = vcvt.s32.f32 %v4214
  %v4231 = vcvt.s32.f32 %v4215
  %v4232 = vcvt.s32.f32 %v4216
  %v4233 = vcvt.s32.f32 %v4217
  %v4234 = vcvt.s32.f32 %v4218
  %v4235 = vcvt.s32.f32 %v4219
  %v4236 = vcvt.s32.f32 %v4220
  %v4237 = vcvt.s32.f32 %v4221
  %v4238 = vcvt.s32.f32 %v4222
  %v4239 = vcvt.s32.f32 %v4223
  %v4240 = vcvt.s32.f32 %v4224
  %v4241 = vcvt.s32.f32 %v4225
  %4242 = vmatprep.subr.mxu0 0.0
  %4243 = vmatpush1.msra.mxu0 %v916
  %4244 = vmatprep.subr.mxu0 0.0
  %4245 = vmatpush1.msra.mxu0 %v917
  %4246 = vmatprep.subr.mxu0 0.0
  %4247 = vmatpush1.msra.mxu0 %v918
  %4248 = vmatprep.subr.mxu0 0.0
  %4249 = vmatpush1.msra.mxu0 %v919
  %4250 = vmatprep.subr.mxu0 0.0
  %4251 = vmatpush1.msra.mxu0 %v920
  %4252 = vmatprep.subr.mxu0 0.0
  %4253 = vmatpush1.msra.mxu0 %v921
  %4254 = vmatprep.subr.mxu0 0.0
  %4255 = vmatpush1.msra.mxu0 %v922
  %4256 = vmatprep.subr.mxu0 0.0
  %4257 = vmatpush1.msra.mxu0 %v923
  %4258 = vmatprep.subr.mxu0 0.0
  %4259 = vmatpush1.msra.mxu0 %v924
  %4260 = vmatprep.subr.mxu0 0.0
  %4261 = vmatpush1.msra.mxu0 %v925
  %4262 = vmatprep.subr.mxu0 0.0
  %4263 = vmatpush1.msra.mxu0 %v926
  %4264 = vmatprep.subr.mxu0 0.0
  %4265 = vmatpush1.msra.mxu0 %v927
  %4266 = vmatprep.subr.mxu0 0.0
  %4267 = vmatpush1.msra.mxu0 %v928
  %4268 = vmatprep.subr.mxu0 0.0
  %4269 = vmatpush1.msra.mxu0 %v929
  %4270 = vmatprep.subr.mxu0 0.0
  %4271 = vmatpush1.msra.mxu0 %v930
  %4272 = vmatprep.subr.mxu0 0.0
  %4273 = vmatpush1.msra.mxu0 %v931
  %4274 = vmatprep.subr.mxu0 0.0
  %4275 = vmatpush1.msra.mxu0 0.0
  %4276 = vmatprep.subr.mxu0 0.0
  %4277 = vmatpush1.msra.mxu0 0.0
  %4278 = vmatprep.subr.mxu0 0.0
  %4279 = vmatpush1.msra.mxu0 0.0
  %4280 = vmatprep.subr.mxu0 0.0
  %4281 = vmatpush1.msra.mxu0 0.0
  %4282 = vmatprep.subr.mxu0 0.0
  %4283 = vmatpush1.msra.mxu0 0.0
  %4284 = vmatprep.subr.mxu0 0.0
  %4285 = vmatpush1.msra.mxu0 0.0
  %4286 = vmatprep.subr.mxu0 0.0
  %4287 = vmatpush1.msra.mxu0 0.0
  %4288 = vmatprep.subr.mxu0 0.0
  %4289 = vmatpush1.msra.mxu0 0.0
  %4290 = vmatprep.subr.mxu0 0.0
  %4291 = vmatpush1.msra.mxu0 0.0
  %4292 = vmatprep.subr.mxu0 0.0
  %4293 = vmatpush1.msra.mxu0 0.0
  %4294 = vmatprep.subr.mxu0 0.0
  %4295 = vmatpush1.msra.mxu0 0.0
  %4296 = vmatprep.subr.mxu0 0.0
  %4297 = vmatpush1.msra.mxu0 0.0
  %4298 = vmatprep.subr.mxu0 0.0
  %4299 = vmatpush1.msra.mxu0 0.0
  %4300 = vmatprep.subr.mxu0 0.0
  %4301 = vmatpush1.msra.mxu0 0.0
  %4302 = vmatprep.subr.mxu0 0.0
  %4303 = vmatpush1.msra.mxu0 0.0
  %4304 = vmatprep.subr.mxu0 0.0
  %4305 = vmatpush1.msra.mxu0 0.0
  %4306 = vmatprep.mubr.f32.mxu0 0.0
  %4307 = vmatmul.mubr.f32.gmra.mrb[0].mxu0 %v4226
  %v4308 = vpop.f32.mrb[0].mxu0
  %v4309 = vadd.f32 0.0, %v4308
  %v4310 = vpop.f32.mrb[0].mxu0
  %4311 = vmatprep.mubr.f32.mxu0 0.0
  %4312 = vmatmul.mubr.f32.gmra.mrb[0].mxu0 %v4227
  %v4313 = vpop.f32.mrb[0].mxu0
  %v4314 = vadd.f32 0.0, %v4313
  %v4315 = vpop.f32.mrb[0].mxu0
  %4316 = vmatprep.mubr.f32.mxu0 0.0
  %4317 = vmatmul.mubr.f32.gmra.mrb[0].mxu0 %v4228
  %v4318 = vpop.f32.mrb[0].mxu0
  %v4319 = vadd.f32 0.0, %v4318
  %v4320 = vpop.f32.mrb[0].mxu0
  %4321 = vmatprep.mubr.f32.mxu0 0.0
  %4322 = vmatmul.mubr.f32.gmra.mrb[0].mxu0 %v4229
  %v4323 = vpop.f32.mrb[0].mxu0
  %v4324 = vadd.f32 0.0, %v4323
  %v4325 = vpop.f32.mrb[0].mxu0
  %4326 = vmatprep.mubr.f32.mxu0 0.0
  %4327 = vmatmul.mubr.f32.gmra.mrb[0].mxu0 %v4230
  %v4328 = vpop.f32.mrb[0].mxu0
  %v4329 = vadd.f32 0.0, %v4328
  %v4330 = vpop.f32.mrb[0].mxu0
  %4331 = vmatprep.mubr.f32.mxu0 0.0
  %4332 = vmatmul.mubr.f32.gmra.mrb[0].mxu0 %v4231
  %v4333 = vpop.f32.mrb[0].mxu0
  %v4334 = vadd.f32 0.0, %v4333
  %v4335 = vpop.f32.mrb[0].mxu0
  %4336 = vmatprep.mubr.f32.mxu0 0.0
  %4337 = vmatmul.mubr.f32.gmra.mrb[0].mxu0 %v4232
  %v4338 = vpop.f32.mrb[0].mxu0
  %v4339 = vadd.f32 0.0, %v4338
  %v4340 = vpop.f32.mrb[0].mxu0
  %4341 = vmatprep.mubr.f32.mxu0 0.0
  %4342 = vmatmul.mubr.f32.gmra.mrb[0].mxu0 %v4233
  %v4343 = vpop.f32.mrb[0].mxu0
  %v4344 = vadd.f32 0.0, %v4343
  %v4345 = vpop.f32.mrb[0].mxu0
  %4346 = vmatprep.mubr.f32.mxu0 0.0
  %4347 = vmatmul.mubr.f32.gmra.mrb[0].mxu0 %v4234
  %v4348 = vpop.f32.mrb[0].mxu0
  %v4349 = vadd.f32 0.0, %v4348
  %v4350 = vpop.f32.mrb[0].mxu0
  %4351 = vmatprep.mubr.f32.mxu0 0.0
  %4352 = vmatmul.mubr.f32.gmra.mrb[0].mxu0 %v4235
  %v4353 = vpop.f32.mrb[0].mxu0
  %v4354 = vadd.f32 0.0, %v4353
  %v4355 = vpop.f32.mrb[0].mxu0
  %4356 = vmatprep.mubr.f32.mxu0 0.0
  %4357 = vmatmul.mubr.f32.gmra.mrb[0].mxu0 %v4236
  %v4358 = vpop.f32.mrb[0].mxu0
  %v4359 = vadd.f32 0.0, %v4358
  %v4360 = vpop.f32.mrb[0].mxu0
  %4361 = vmatprep.mubr.f32.mxu0 0.0
  %4362 = vmatmul.mubr.f32.gmra.mrb[0].mxu0 %v4237
  %v4363 = vpop.f32.mrb[0].mxu0
  %v4364 = vadd.f32 0.0, %v4363
  %v4365 = vpop.f32.mrb[0].mxu0
  %4366 = vmatprep.mubr.f32.mxu0 0.0
  %4367 = vmatmul.mubr.f32.gmra.mrb[0].mxu0 %v4238
  %v4368 = vpop.f32.mrb[0].mxu0
  %v4369 = vadd.f32 0.0, %v4368
  %v4370 = vpop.f32.mrb[0].mxu0
  %4371 = vmatprep.mubr.f32.mxu0 0.0
  %4372 = vmatmul.mubr.f32.gmra.mrb[0].mxu0 %v4239
  %v4373 = vpop.f32.mrb[0].mxu0
  %v4374 = vadd.f32 0.0, %v4373
  %v4375 = vpop.f32.mrb[0].mxu0
  %4376 = vmatprep.mubr.f32.mxu0 0.0
  %4377 = vmatmul.mubr.f32.gmra.mrb[0].mxu0 %v4240
  %v4378 = vpop.f32.mrb[0].mxu0
  %v4379 = vadd.f32 0.0, %v4378
  %v4380 = vpop.f32.mrb[0].mxu0
  %4381 = vmatprep.mubr.f32.mxu0 0.0
  %4382 = vmatmul.mubr.f32.gmra.mrb[0].mxu0 %v4241
  %v4383 = vpop.f32.mrb[0].mxu0
  %v4384 = vadd.f32 0.0, %v4383
  %v4385 = vpop.f32.mrb[0].mxu0
  %4386 = vdwg.mxu0
  %vm4387 = vcmp.ne.f32.partialorder %v4309, %v916
  %vm4388 = vcmp.ne.f32.partialorder %v4314, %v917
  %vm4389 = vcmp.ne.f32.partialorder %v4319, %v918
  %vm4390 = vcmp.ne.f32.partialorder %v4324, %v919
  %vm4391 = vcmp.ne.f32.partialorder %v4329, %v920
  %vm4392 = vcmp.ne.f32.partialorder %v4334, %v921
  %vm4393 = vcmp.ne.f32.partialorder %v4339, %v922
  %vm4394 = vcmp.ne.f32.partialorder %v4344, %v923
  %vm4395 = vcmp.ne.f32.partialorder %v4349, %v924
  %vm4396 = vcmp.ne.f32.partialorder %v4354, %v925
  %vm4397 = vcmp.ne.f32.partialorder %v4359, %v926
  %vm4398 = vcmp.ne.f32.partialorder %v4364, %v927
  %vm4399 = vcmp.ne.f32.partialorder %v4369, %v928
  %vm4400 = vcmp.ne.f32.partialorder %v4374, %v929
  %vm4401 = vcmp.ne.f32.partialorder %v4379, %v930
  %vm4402 = vcmp.ne.f32.partialorder %v4384, %v931
  %vm4403 = vcmp.eq.s32.totalorder %v884, 127
  %vm4404 = vcmp.eq.s32.totalorder %v885, 127
  %vm4405 = vcmp.eq.s32.totalorder %v886, 127
  %vm4406 = vcmp.eq.s32.totalorder %v887, 127
  %vm4407 = vcmp.eq.s32.totalorder %v888, 127
  %vm4408 = vcmp.eq.s32.totalorder %v889, 127
  %vm4409 = vcmp.eq.s32.totalorder %v890, 127
  %vm4410 = vcmp.eq.s32.totalorder %v891, 127
  %vm4411 = vcmp.eq.s32.totalorder %v892, 127
  %vm4412 = vcmp.eq.s32.totalorder %v893, 127
  %vm4413 = vcmp.eq.s32.totalorder %v894, 127
  %vm4414 = vcmp.eq.s32.totalorder %v895, 127
  %vm4415 = vcmp.eq.s32.totalorder %v896, 127
  %vm4416 = vcmp.eq.s32.totalorder %v897, 127
  %vm4417 = vcmp.eq.s32.totalorder %v898, 127
  %vm4418 = vcmp.eq.s32.totalorder %v899, 127
  %vm4419 = vmor %vm4387, %vm4403
  %vm4420 = vmor %vm4388, %vm4404
  %vm4421 = vmor %vm4389, %vm4405
  %vm4422 = vmor %vm4390, %vm4406
  %vm4423 = vmor %vm4391, %vm4407
  %vm4424 = vmor %vm4392, %vm4408
  %vm4425 = vmor %vm4393, %vm4409
  %vm4426 = vmor %vm4394, %vm4410
  %vm4427 = vmor %vm4395, %vm4411
  %vm4428 = vmor %vm4396, %vm4412
  %vm4429 = vmor %vm4397, %vm4413
  %vm4430 = vmor %vm4398, %vm4414
  %vm4431 = vmor %vm4399, %vm4415
  %vm4432 = vmor %vm4400, %vm4416
  %vm4433 = vmor %vm4401, %vm4417
  %vm4434 = vmor %vm4402, %vm4418
  %v4435 = vsel %vm4419, 1, 0
  %v4436 = vsel %vm4420, 1, 0
  %v4437 = vsel %vm4421, 1, 0
  %v4438 = vsel %vm4422, 1, 0
  %v4439 = vsel %vm4423, 1, 0
  %v4440 = vsel %vm4424, 1, 0
  %v4441 = vsel %vm4425, 1, 0
  %v4442 = vsel %vm4426, 1, 0
  %v4443 = vsel %vm4427, 1, 0
  %v4444 = vsel %vm4428, 1, 0
  %v4445 = vsel %vm4429, 1, 0
  %v4446 = vsel %vm4430, 1, 0
  %v4447 = vsel %vm4431, 1, 0
  %v4448 = vsel %vm4432, 1, 0
  %v4449 = vsel %vm4433, 1, 0
  %v4450 = vsel %vm4434, 1, 0
  %4451 = vset.pattern.permute.xlu0 0
  %4452 = vperm.xlu0 %4451, %v4435
  %v4453 = vpop.permute.xlu0 %4452
  %4454 = vset.pattern.permute.xlu0 0
  %4455 = vperm.xlu0 %4454, %v4436
  %v4456 = vpop.permute.xlu0 %4455
  %4457 = vset.pattern.permute.xlu0 0
  %4458 = vperm.xlu0 %4457, %v4437
  %v4459 = vpop.permute.xlu0 %4458
  %4460 = vset.pattern.permute.xlu0 0
  %4461 = vperm.xlu0 %4460, %v4438
  %v4462 = vpop.permute.xlu0 %4461
  %4463 = vset.pattern.permute.xlu0 0
  %4464 = vperm.xlu0 %4463, %v4439
  %v4465 = vpop.permute.xlu0 %4464
  %4466 = vset.pattern.permute.xlu0 0
  %4467 = vperm.xlu0 %4466, %v4440
  %v4468 = vpop.permute.xlu0 %4467
  %4469 = vset.pattern.permute.xlu0 0
  %4470 = vperm.xlu0 %4469, %v4441
  %v4471 = vpop.permute.xlu0 %4470
  %4472 = vset.pattern.permute.xlu0 0
  %4473 = vperm.xlu0 %4472, %v4442
  %v4474 = vpop.permute.xlu0 %4473
  %4475 = vset.pattern.permute.xlu0 0
  %4476 = vperm.xlu0 %4475, %v4443
  %v4477 = vpop.permute.xlu0 %4476
  %4478 = vset.pattern.permute.xlu0 0
  %4479 = vperm.xlu0 %4478, %v4444
  %v4480 = vpop.permute.xlu0 %4479
  %4481 = vset.pattern.permute.xlu0 0
  %4482 = vperm.xlu0 %4481, %v4445
  %v4483 = vpop.permute.xlu0 %4482
  %4484 = vset.pattern.permute.xlu0 0
  %4485 = vperm.xlu0 %4484, %v4446
  %v4486 = vpop.permute.xlu0 %4485
  %4487 = vset.pattern.permute.xlu0 0
  %4488 = vperm.xlu0 %4487, %v4447
  %v4489 = vpop.permute.xlu0 %4488
  %4490 = vset.pattern.permute.xlu0 0
  %4491 = vperm.xlu0 %4490, %v4448
  %v4492 = vpop.permute.xlu0 %4491
  %4493 = vset.pattern.permute.xlu0 0
  %4494 = vperm.xlu0 %4493, %v4449
  %v4495 = vpop.permute.xlu0 %4494
  %4496 = vset.pattern.permute.xlu0 0
  %4497 = vperm.xlu0 %4496, %v4450
  %v4498 = vpop.permute.xlu0 %4497
  %vm4499 = vcmp.eq.s32.totalorder %v4453, 1
  %vm4500 = vcmp.eq.s32.totalorder %v4456, 1
  %vm4501 = vcmp.eq.s32.totalorder %v4459, 1
  %vm4502 = vcmp.eq.s32.totalorder %v4462, 1
  %vm4503 = vcmp.eq.s32.totalorder %v4465, 1
  %vm4504 = vcmp.eq.s32.totalorder %v4468, 1
  %vm4505 = vcmp.eq.s32.totalorder %v4471, 1
  %vm4506 = vcmp.eq.s32.totalorder %v4474, 1
  %vm4507 = vcmp.eq.s32.totalorder %v4477, 1
  %vm4508 = vcmp.eq.s32.totalorder %v4480, 1
  %vm4509 = vcmp.eq.s32.totalorder %v4483, 1
  %vm4510 = vcmp.eq.s32.totalorder %v4486, 1
  %vm4511 = vcmp.eq.s32.totalorder %v4489, 1
  %vm4512 = vcmp.eq.s32.totalorder %v4492, 1
  %vm4513 = vcmp.eq.s32.totalorder %v4495, 1
  %vm4514 = vcmp.eq.s32.totalorder %v4498, 1
  %vm4515 = vmand %vm152, %vm4499
  %vm4516 = vmand %vm153, %vm4499
  %vm4517 = vmand %vm154, %vm4500
  %vm4518 = vmand %vm155, %vm4500
  %vm4519 = vmand %vm156, %vm4501
  %vm4520 = vmand %vm157, %vm4501
  %vm4521 = vmand %vm158, %vm4502
  %vm4522 = vmand %vm159, %vm4502
  %vm4523 = vmand %vm160, %vm4503
  %vm4524 = vmand %vm161, %vm4503
  %vm4525 = vmand %vm162, %vm4504
  %vm4526 = vmand %vm163, %vm4504
  %vm4527 = vmand %vm164, %vm4505
  %vm4528 = vmand %vm165, %vm4505
  %vm4529 = vmand %vm166, %vm4506
  %vm4530 = vmand %vm167, %vm4506
  %vm4531 = vmand %vm168, %vm4507
  %vm4532 = vmand %vm169, %vm4507
  %vm4533 = vmand %vm170, %vm4508
  %vm4534 = vmand %vm171, %vm4508
  %vm4535 = vmand %vm172, %vm4509
  %vm4536 = vmand %vm173, %vm4509
  %vm4537 = vmand %vm174, %vm4510
  %vm4538 = vmand %vm175, %vm4510
  %vm4539 = vmand %vm176, %vm4511
  %vm4540 = vmand %vm177, %vm4511
  %vm4541 = vmand %vm178, %vm4512
  %vm4542 = vmand %vm179, %vm4512
  %vm4543 = vmand %vm180, %vm4513
  %vm4544 = vmand %vm181, %vm4513
  %vm4545 = vmand %vm182, %vm4514
  %vm4546 = vmand %vm183, %vm4514
  %v4547 = vsel %vm4515, 1, 0
  %v4548 = vsel %vm4516, 1, 0
  %v4549 = vsel %vm4517, 1, 0
  %v4550 = vsel %vm4518, 1, 0
  %v4551 = vsel %vm4519, 1, 0
  %v4552 = vsel %vm4520, 1, 0
  %v4553 = vsel %vm4521, 1, 0
  %v4554 = vsel %vm4522, 1, 0
  %v4555 = vsel %vm4523, 1, 0
  %v4556 = vsel %vm4524, 1, 0
  %v4557 = vsel %vm4525, 1, 0
  %v4558 = vsel %vm4526, 1, 0
  %v4559 = vsel %vm4527, 1, 0
  %v4560 = vsel %vm4528, 1, 0
  %v4561 = vsel %vm4529, 1, 0
  %v4562 = vsel %vm4530, 1, 0
  %v4563 = vsel %vm4531, 1, 0
  %v4564 = vsel %vm4532, 1, 0
  %v4565 = vsel %vm4533, 1, 0
  %v4566 = vsel %vm4534, 1, 0
  %v4567 = vsel %vm4535, 1, 0
  %v4568 = vsel %vm4536, 1, 0
  %v4569 = vsel %vm4537, 1, 0
  %v4570 = vsel %vm4538, 1, 0
  %v4571 = vsel %vm4539, 1, 0
  %v4572 = vsel %vm4540, 1, 0
  %v4573 = vsel %vm4541, 1, 0
  %v4574 = vsel %vm4542, 1, 0
  %v4575 = vsel %vm4543, 1, 0
  %v4576 = vsel %vm4544, 1, 0
  %v4577 = vsel %vm4545, 1, 0
  %v4578 = vsel %vm4546, 1, 0
  %v4579 = vcvt.s32.f32 %v4547
  %v4580 = vcvt.s32.f32 %v4548
  %v4581 = vcvt.s32.f32 %v4549
  %v4582 = vcvt.s32.f32 %v4550
  %v4583 = vcvt.s32.f32 %v4551
  %v4584 = vcvt.s32.f32 %v4552
  %v4585 = vcvt.s32.f32 %v4553
  %v4586 = vcvt.s32.f32 %v4554
  %v4587 = vcvt.s32.f32 %v4555
  %v4588 = vcvt.s32.f32 %v4556
  %v4589 = vcvt.s32.f32 %v4557
  %v4590 = vcvt.s32.f32 %v4558
  %v4591 = vcvt.s32.f32 %v4559
  %v4592 = vcvt.s32.f32 %v4560
  %v4593 = vcvt.s32.f32 %v4561
  %v4594 = vcvt.s32.f32 %v4562
  %v4595 = vcvt.s32.f32 %v4563
  %v4596 = vcvt.s32.f32 %v4564
  %v4597 = vcvt.s32.f32 %v4565
  %v4598 = vcvt.s32.f32 %v4566
  %v4599 = vcvt.s32.f32 %v4567
  %v4600 = vcvt.s32.f32 %v4568
  %v4601 = vcvt.s32.f32 %v4569
  %v4602 = vcvt.s32.f32 %v4570
  %v4603 = vcvt.s32.f32 %v4571
  %v4604 = vcvt.s32.f32 %v4572
  %v4605 = vcvt.s32.f32 %v4573
  %v4606 = vcvt.s32.f32 %v4574
  %v4607 = vcvt.s32.f32 %v4575
  %v4608 = vcvt.s32.f32 %v4576
  %v4609 = vcvt.s32.f32 %v4577
  %v4610 = vcvt.s32.f32 %v4578
  %4611 = vxpose.xlu0.b32.start [1/16] %v4579, 128
  %4612 = vxpose.xlu0.b32.cont [2/16] %v4581, 128
  %4613 = vxpose.xlu0.b32.cont [3/16] %v4583, 128
  %4614 = vxpose.xlu0.b32.cont [4/16] %v4585, 128
  %4615 = vxpose.xlu0.b32.cont [5/16] %v4587, 128
  %4616 = vxpose.xlu0.b32.cont [6/16] %v4589, 128
  %4617 = vxpose.xlu0.b32.cont [7/16] %v4591, 128
  %4618 = vxpose.xlu0.b32.cont [8/16] %v4593, 128
  %4619 = vxpose.xlu0.b32.cont [9/16] %v4595, 128
  %4620 = vxpose.xlu0.b32.cont [10/16] %v4597, 128
  %4621 = vxpose.xlu0.b32.cont [11/16] %v4599, 128
  %4622 = vxpose.xlu0.b32.cont [12/16] %v4601, 128
  %4623 = vxpose.xlu0.b32.cont [13/16] %v4603, 128
  %4624 = vxpose.xlu0.b32.cont [14/16] %v4605, 128
  %4625 = vxpose.xlu0.b32.cont [15/16] %v4607, 128
  %4626 = vxpose.xlu0.b32.end [16/16] %v4609, 128
  %v4627 = vpop.trf.xlu0
  %v4628 = vpop.trf.xlu0
  %v4629 = vpop.trf.xlu0
  %v4630 = vpop.trf.xlu0
  %v4631 = vpop.trf.xlu0
  %v4632 = vpop.trf.xlu0
  %v4633 = vpop.trf.xlu0
  %v4634 = vpop.trf.xlu0
  %v4635 = vpop.trf.xlu0
  %v4636 = vpop.trf.xlu0
  %v4637 = vpop.trf.xlu0
  %v4638 = vpop.trf.xlu0
  %v4639 = vpop.trf.xlu0
  %v4640 = vpop.trf.xlu0
  %v4641 = vpop.trf.xlu0
  %v4642 = vpop.trf.xlu0
  %4643 = vxpose.xlu0.b32.start [1/16] %v4580, 128
  %4644 = vxpose.xlu0.b32.cont [2/16] %v4582, 128
  %4645 = vxpose.xlu0.b32.cont [3/16] %v4584, 128
  %4646 = vxpose.xlu0.b32.cont [4/16] %v4586, 128
  %4647 = vxpose.xlu0.b32.cont [5/16] %v4588, 128
  %4648 = vxpose.xlu0.b32.cont [6/16] %v4590, 128
  %4649 = vxpose.xlu0.b32.cont [7/16] %v4592, 128
  %4650 = vxpose.xlu0.b32.cont [8/16] %v4594, 128
  %4651 = vxpose.xlu0.b32.cont [9/16] %v4596, 128
  %4652 = vxpose.xlu0.b32.cont [10/16] %v4598, 128
  %4653 = vxpose.xlu0.b32.cont [11/16] %v4600, 128
  %4654 = vxpose.xlu0.b32.cont [12/16] %v4602, 128
  %4655 = vxpose.xlu0.b32.cont [13/16] %v4604, 128
  %4656 = vxpose.xlu0.b32.cont [14/16] %v4606, 128
  %4657 = vxpose.xlu0.b32.cont [15/16] %v4608, 128
  %4658 = vxpose.xlu0.b32.end [16/16] %v4610, 128
  %v4659 = vpop.trf.xlu0
  %v4660 = vpop.trf.xlu0
  %v4661 = vpop.trf.xlu0
  %v4662 = vpop.trf.xlu0
  %v4663 = vpop.trf.xlu0
  %v4664 = vpop.trf.xlu0
  %v4665 = vpop.trf.xlu0
  %v4666 = vpop.trf.xlu0
  %v4667 = vpop.trf.xlu0
  %v4668 = vpop.trf.xlu0
  %v4669 = vpop.trf.xlu0
  %v4670 = vpop.trf.xlu0
  %v4671 = vpop.trf.xlu0
  %v4672 = vpop.trf.xlu0
  %v4673 = vpop.trf.xlu0
  %v4674 = vpop.trf.xlu0
  %4675 = vmatprep.subr.mxu0 0.0
  %4676 = vmatpush1.msra.mxu0 %v4178
  %4677 = vmatprep.subr.mxu0 0.0
  %4678 = vmatpush1.msra.mxu0 %v4179
  %4679 = vmatprep.subr.mxu0 0.0
  %4680 = vmatpush1.msra.mxu0 %v4180
  %4681 = vmatprep.subr.mxu0 0.0
  %4682 = vmatpush1.msra.mxu0 %v4181
  %4683 = vmatprep.subr.mxu0 0.0
  %4684 = vmatpush1.msra.mxu0 %v4182
  %4685 = vmatprep.subr.mxu0 0.0
  %4686 = vmatpush1.msra.mxu0 %v4183
  %4687 = vmatprep.subr.mxu0 0.0
  %4688 = vmatpush1.msra.mxu0 %v4184
  %4689 = vmatprep.subr.mxu0 0.0
  %4690 = vmatpush1.msra.mxu0 %v4185
  %4691 = vmatprep.subr.mxu0 0.0
  %4692 = vmatpush1.msra.mxu0 %v4186
  %4693 = vmatprep.subr.mxu0 0.0
  %4694 = vmatpush1.msra.mxu0 %v4187
  %4695 = vmatprep.subr.mxu0 0.0
  %4696 = vmatpush1.msra.mxu0 %v4188
  %4697 = vmatprep.subr.mxu0 0.0
  %4698 = vmatpush1.msra.mxu0 %v4189
  %4699 = vmatprep.subr.mxu0 0.0
  %4700 = vmatpush1.msra.mxu0 %v4190
  %4701 = vmatprep.subr.mxu0 0.0
  %4702 = vmatpush1.msra.mxu0 %v4191
  %4703 = vmatprep.subr.mxu0 0.0
  %4704 = vmatpush1.msra.mxu0 %v4192
  %4705 = vmatprep.subr.mxu0 0.0
  %4706 = vmatpush1.msra.mxu0 %v4193
  %4707 = vmatprep.subr.mxu0 0.0
  %4708 = vmatpush1.msra.mxu0 0.0
  %4709 = vmatprep.subr.mxu0 0.0
  %4710 = vmatpush1.msra.mxu0 0.0
  %4711 = vmatprep.subr.mxu0 0.0
  %4712 = vmatpush1.msra.mxu0 0.0
  %4713 = vmatprep.subr.mxu0 0.0
  %4714 = vmatpush1.msra.mxu0 0.0
  %4715 = vmatprep.subr.mxu0 0.0
  %4716 = vmatpush1.msra.mxu0 0.0
  %4717 = vmatprep.subr.mxu0 0.0
  %4718 = vmatpush1.msra.mxu0 0.0
  %4719 = vmatprep.subr.mxu0 0.0
  %4720 = vmatpush1.msra.mxu0 0.0
  %4721 = vmatprep.subr.mxu0 0.0
  %4722 = vmatpush1.msra.mxu0 0.0
  %4723 = vmatprep.subr.mxu0 0.0
  %4724 = vmatpush1.msra.mxu0 0.0
  %4725 = vmatprep.subr.mxu0 0.0
  %4726 = vmatpush1.msra.mxu0 0.0
  %4727 = vmatprep.subr.mxu0 0.0
  %4728 = vmatpush1.msra.mxu0 0.0
  %4729 = vmatprep.subr.mxu0 0.0
  %4730 = vmatpush1.msra.mxu0 0.0
  %4731 = vmatprep.subr.mxu0 0.0
  %4732 = vmatpush1.msra.mxu0 0.0
  %4733 = vmatprep.subr.mxu0 0.0
  %4734 = vmatpush1.msra.mxu0 0.0
  %4735 = vmatprep.subr.mxu0 0.0
  %4736 = vmatpush1.msra.mxu0 0.0
  %4737 = vmatprep.subr.mxu0 0.0
  %4738 = vmatpush1.msra.mxu0 0.0
  %4739 = vmatprep.mubr.f32.mxu0 0.0
  %4740 = vmatmul.mubr.f32.gmra.mrb[0].mxu0 %v4627
  %v4741 = vpop.f32.mrb[0].mxu0
  %v4742 = vadd.f32 0.0, %v4741
  %v4743 = vpop.f32.mrb[0].mxu0
  %4744 = vmatprep.mubr.f32.mxu0 0.0
  %4745 = vmatmul.mubr.f32.gmra.mrb[0].mxu0 %v4628
  %v4746 = vpop.f32.mrb[0].mxu0
  %v4747 = vadd.f32 0.0, %v4746
  %v4748 = vpop.f32.mrb[0].mxu0
  %4749 = vmatprep.mubr.f32.mxu0 0.0
  %4750 = vmatmul.mubr.f32.gmra.mrb[0].mxu0 %v4629
  %v4751 = vpop.f32.mrb[0].mxu0
  %v4752 = vadd.f32 0.0, %v4751
  %v4753 = vpop.f32.mrb[0].mxu0
  %4754 = vmatprep.mubr.f32.mxu0 0.0
  %4755 = vmatmul.mubr.f32.gmra.mrb[0].mxu0 %v4630
  %v4756 = vpop.f32.mrb[0].mxu0
  %v4757 = vadd.f32 0.0, %v4756
  %v4758 = vpop.f32.mrb[0].mxu0
  %4759 = vmatprep.mubr.f32.mxu0 0.0
  %4760 = vmatmul.mubr.f32.gmra.mrb[0].mxu0 %v4631
  %v4761 = vpop.f32.mrb[0].mxu0
  %v4762 = vadd.f32 0.0, %v4761
  %v4763 = vpop.f32.mrb[0].mxu0
  %4764 = vmatprep.mubr.f32.mxu0 0.0
  %4765 = vmatmul.mubr.f32.gmra.mrb[0].mxu0 %v4632
  %v4766 = vpop.f32.mrb[0].mxu0
  %v4767 = vadd.f32 0.0, %v4766
  %v4768 = vpop.f32.mrb[0].mxu0
  %4769 = vmatprep.mubr.f32.mxu0 0.0
  %4770 = vmatmul.mubr.f32.gmra.mrb[0].mxu0 %v4633
  %v4771 = vpop.f32.mrb[0].mxu0
  %v4772 = vadd.f32 0.0, %v4771
  %v4773 = vpop.f32.mrb[0].mxu0
  %4774 = vmatprep.mubr.f32.mxu0 0.0
  %4775 = vmatmul.mubr.f32.gmra.mrb[0].mxu0 %v4634
  %v4776 = vpop.f32.mrb[0].mxu0
  %v4777 = vadd.f32 0.0, %v4776
  %v4778 = vpop.f32.mrb[0].mxu0
  %4779 = vmatprep.mubr.f32.mxu0 0.0
  %4780 = vmatmul.mubr.f32.gmra.mrb[0].mxu0 %v4635
  %v4781 = vpop.f32.mrb[0].mxu0
  %v4782 = vadd.f32 0.0, %v4781
  %v4783 = vpop.f32.mrb[0].mxu0
  %4784 = vmatprep.mubr.f32.mxu0 0.0
  %4785 = vmatmul.mubr.f32.gmra.mrb[0].mxu0 %v4636
  %v4786 = vpop.f32.mrb[0].mxu0
  %v4787 = vadd.f32 0.0, %v4786
  %v4788 = vpop.f32.mrb[0].mxu0
  %4789 = vmatprep.mubr.f32.mxu0 0.0
  %4790 = vmatmul.mubr.f32.gmra.mrb[0].mxu0 %v4637
  %v4791 = vpop.f32.mrb[0].mxu0
  %v4792 = vadd.f32 0.0, %v4791
  %v4793 = vpop.f32.mrb[0].mxu0
  %4794 = vmatprep.mubr.f32.mxu0 0.0
  %4795 = vmatmul.mubr.f32.gmra.mrb[0].mxu0 %v4638
  %v4796 = vpop.f32.mrb[0].mxu0
  %v4797 = vadd.f32 0.0, %v4796
  %v4798 = vpop.f32.mrb[0].mxu0
  %4799 = vmatprep.mubr.f32.mxu0 0.0
  %4800 = vmatmul.mubr.f32.gmra.mrb[0].mxu0 %v4639
  %v4801 = vpop.f32.mrb[0].mxu0
  %v4802 = vadd.f32 0.0, %v4801
  %v4803 = vpop.f32.mrb[0].mxu0
  %4804 = vmatprep.mubr.f32.mxu0 0.0
  %4805 = vmatmul.mubr.f32.gmra.mrb[0].mxu0 %v4640
  %v4806 = vpop.f32.mrb[0].mxu0
  %v4807 = vadd.f32 0.0, %v4806
  %v4808 = vpop.f32.mrb[0].mxu0
  %4809 = vmatprep.mubr.f32.mxu0 0.0
  %4810 = vmatmul.mubr.f32.gmra.mrb[0].mxu0 %v4641
  %v4811 = vpop.f32.mrb[0].mxu0
  %v4812 = vadd.f32 0.0, %v4811
  %v4813 = vpop.f32.mrb[0].mxu0
  %4814 = vmatprep.mubr.f32.mxu0 0.0
  %4815 = vmatmul.mubr.f32.gmra.mrb[0].mxu0 %v4642
  %v4816 = vpop.f32.mrb[0].mxu0
  %v4817 = vadd.f32 0.0, %v4816
  %v4818 = vpop.f32.mrb[0].mxu0
  %4819 = vmatprep.mubr.f32.mxu0 0.0
  %4820 = vmatmul.mubr.f32.gmra.mrb[0].mxu0 %v4659
  %v4821 = vpop.f32.mrb[0].mxu0
  %v4822 = vadd.f32 0.0, %v4821
  %v4823 = vpop.f32.mrb[0].mxu0
  %4824 = vmatprep.mubr.f32.mxu0 0.0
  %4825 = vmatmul.mubr.f32.gmra.mrb[0].mxu0 %v4660
  %v4826 = vpop.f32.mrb[0].mxu0
  %v4827 = vadd.f32 0.0, %v4826
  %v4828 = vpop.f32.mrb[0].mxu0
  %4829 = vmatprep.mubr.f32.mxu0 0.0
  %4830 = vmatmul.mubr.f32.gmra.mrb[0].mxu0 %v4661
  %v4831 = vpop.f32.mrb[0].mxu0
  %v4832 = vadd.f32 0.0, %v4831
  %v4833 = vpop.f32.mrb[0].mxu0
  %4834 = vmatprep.mubr.f32.mxu0 0.0
  %4835 = vmatmul.mubr.f32.gmra.mrb[0].mxu0 %v4662
  %v4836 = vpop.f32.mrb[0].mxu0
  %v4837 = vadd.f32 0.0, %v4836
  %v4838 = vpop.f32.mrb[0].mxu0
  %4839 = vmatprep.mubr.f32.mxu0 0.0
  %4840 = vmatmul.mubr.f32.gmra.mrb[0].mxu0 %v4663
  %v4841 = vpop.f32.mrb[0].mxu0
  %v4842 = vadd.f32 0.0, %v4841
  %v4843 = vpop.f32.mrb[0].mxu0
  %4844 = vmatprep.mubr.f32.mxu0 0.0
  %4845 = vmatmul.mubr.f32.gmra.mrb[0].mxu0 %v4664
  %v4846 = vpop.f32.mrb[0].mxu0
  %v4847 = vadd.f32 0.0, %v4846
  %v4848 = vpop.f32.mrb[0].mxu0
  %4849 = vmatprep.mubr.f32.mxu0 0.0
  %4850 = vmatmul.mubr.f32.gmra.mrb[0].mxu0 %v4665
  %v4851 = vpop.f32.mrb[0].mxu0
  %v4852 = vadd.f32 0.0, %v4851
  %v4853 = vpop.f32.mrb[0].mxu0
  %4854 = vmatprep.mubr.f32.mxu0 0.0
  %4855 = vmatmul.mubr.f32.gmra.mrb[0].mxu0 %v4666
  %v4856 = vpop.f32.mrb[0].mxu0
  %v4857 = vadd.f32 0.0, %v4856
  %v4858 = vpop.f32.mrb[0].mxu0
  %4859 = vmatprep.mubr.f32.mxu0 0.0
  %4860 = vmatmul.mubr.f32.gmra.mrb[0].mxu0 %v4667
  %v4861 = vpop.f32.mrb[0].mxu0
  %v4862 = vadd.f32 0.0, %v4861
  %v4863 = vpop.f32.mrb[0].mxu0
  %4864 = vmatprep.mubr.f32.mxu0 0.0
  %4865 = vmatmul.mubr.f32.gmra.mrb[0].mxu0 %v4668
  %v4866 = vpop.f32.mrb[0].mxu0
  %v4867 = vadd.f32 0.0, %v4866
  %v4868 = vpop.f32.mrb[0].mxu0
  %4869 = vmatprep.mubr.f32.mxu0 0.0
  %4870 = vmatmul.mubr.f32.gmra.mrb[0].mxu0 %v4669
  %v4871 = vpop.f32.mrb[0].mxu0
  %v4872 = vadd.f32 0.0, %v4871
  %v4873 = vpop.f32.mrb[0].mxu0
  %4874 = vmatprep.mubr.f32.mxu0 0.0
  %4875 = vmatmul.mubr.f32.gmra.mrb[0].mxu0 %v4670
  %v4876 = vpop.f32.mrb[0].mxu0
  %v4877 = vadd.f32 0.0, %v4876
  %v4878 = vpop.f32.mrb[0].mxu0
  %4879 = vmatprep.mubr.f32.mxu0 0.0
  %4880 = vmatmul.mubr.f32.gmra.mrb[0].mxu0 %v4671
  %v4881 = vpop.f32.mrb[0].mxu0
  %v4882 = vadd.f32 0.0, %v4881
  %v4883 = vpop.f32.mrb[0].mxu0
  %4884 = vmatprep.mubr.f32.mxu0 0.0
  %4885 = vmatmul.mubr.f32.gmra.mrb[0].mxu0 %v4672
  %v4886 = vpop.f32.mrb[0].mxu0
  %v4887 = vadd.f32 0.0, %v4886
  %v4888 = vpop.f32.mrb[0].mxu0
  %4889 = vmatprep.mubr.f32.mxu0 0.0
  %4890 = vmatmul.mubr.f32.gmra.mrb[0].mxu0 %v4673
  %v4891 = vpop.f32.mrb[0].mxu0
  %v4892 = vadd.f32 0.0, %v4891
  %v4893 = vpop.f32.mrb[0].mxu0
  %4894 = vmatprep.mubr.f32.mxu0 0.0
  %4895 = vmatmul.mubr.f32.gmra.mrb[0].mxu0 %v4674
  %v4896 = vpop.f32.mrb[0].mxu0
  %v4897 = vadd.f32 0.0, %v4896
  %v4898 = vpop.f32.mrb[0].mxu0
  %4899 = vdwg.mxu0
  %s4900 = scalar_lea.vmem %s8, %s30
  %v4901 = vld [vmem:[%s4900] sm:$0xff]
  %v4902 = vld [vmem:[%s4900 + $0x8] sm:$0xff]
  %v4903 = vld [vmem:[%s4900 + $0x10] sm:$0xff]
  %v4904 = vld [vmem:[%s4900 + $0x18] sm:$0xff]
  %v4905 = vld [vmem:[%s4900 + $0x20] sm:$0xff]
  %v4906 = vld [vmem:[%s4900 + $0x28] sm:$0xff]
  %v4907 = vld [vmem:[%s4900 + $0x30] sm:$0xff]
  %v4908 = vld [vmem:[%s4900 + $0x38] sm:$0xff]
  %v4909 = vld [vmem:[%s4900 + $0x40] sm:$0xff]
  %v4910 = vld [vmem:[%s4900 + $0x48] sm:$0xff]
  %v4911 = vld [vmem:[%s4900 + $0x50] sm:$0xff]
  %v4912 = vld [vmem:[%s4900 + $0x58] sm:$0xff]
  %v4913 = vld [vmem:[%s4900 + $0x60] sm:$0xff]
  %v4914 = vld [vmem:[%s4900 + $0x68] sm:$0xff]
  %v4915 = vld [vmem:[%s4900 + $0x70] sm:$0xff]
  %v4916 = vld [vmem:[%s4900 + $0x78] sm:$0xff]
  %v4917 = vld [vmem:[%s4900 + $0x80] sm:$0xff]
  %v4918 = vld [vmem:[%s4900 + $0x88] sm:$0xff]
  %v4919 = vld [vmem:[%s4900 + $0x90] sm:$0xff]
  %v4920 = vld [vmem:[%s4900 + $0x98] sm:$0xff]
  %v4921 = vld [vmem:[%s4900 + $0xa0] sm:$0xff]
  %v4922 = vld [vmem:[%s4900 + $0xa8] sm:$0xff]
  %v4923 = vld [vmem:[%s4900 + $0xb0] sm:$0xff]
  %v4924 = vld [vmem:[%s4900 + $0xb8] sm:$0xff]
  %v4925 = vld [vmem:[%s4900 + $0xc0] sm:$0xff]
  %v4926 = vld [vmem:[%s4900 + $0xc8] sm:$0xff]
  %v4927 = vld [vmem:[%s4900 + $0xd0] sm:$0xff]
  %v4928 = vld [vmem:[%s4900 + $0xd8] sm:$0xff]
  %v4929 = vld [vmem:[%s4900 + $0xe0] sm:$0xff]
  %v4930 = vld [vmem:[%s4900 + $0xe8] sm:$0xff]
  %v4931 = vld [vmem:[%s4900 + $0xf0] sm:$0xff]
  %v4932 = vld [vmem:[%s4900 + $0xf8] sm:$0xff]
  %v4933 = vmax.f32 %v4901, %v4742
  %v4934 = vmax.f32 %v4902, %v4747
  %v4935 = vmax.f32 %v4903, %v4752
  %v4936 = vmax.f32 %v4904, %v4757
  %v4937 = vmax.f32 %v4905, %v4762
  %v4938 = vmax.f32 %v4906, %v4767
  %v4939 = vmax.f32 %v4907, %v4772
  %v4940 = vmax.f32 %v4908, %v4777
  %v4941 = vmax.f32 %v4909, %v4782
  %v4942 = vmax.f32 %v4910, %v4787
  %v4943 = vmax.f32 %v4911, %v4792
  %v4944 = vmax.f32 %v4912, %v4797
  %v4945 = vmax.f32 %v4913, %v4802
  %v4946 = vmax.f32 %v4914, %v4807
  %v4947 = vmax.f32 %v4915, %v4812
  %v4948 = vmax.f32 %v4916, %v4817
  %v4949 = vmax.f32 %v4917, %v4822
  %v4950 = vmax.f32 %v4918, %v4827
  %v4951 = vmax.f32 %v4919, %v4832
  %v4952 = vmax.f32 %v4920, %v4837
  %v4953 = vmax.f32 %v4921, %v4842
  %v4954 = vmax.f32 %v4922, %v4847
  %v4955 = vmax.f32 %v4923, %v4852
  %v4956 = vmax.f32 %v4924, %v4857
  %v4957 = vmax.f32 %v4925, %v4862
  %v4958 = vmax.f32 %v4926, %v4867
  %v4959 = vmax.f32 %v4927, %v4872
  %v4960 = vmax.f32 %v4928, %v4877
  %v4961 = vmax.f32 %v4929, %v4882
  %v4962 = vmax.f32 %v4930, %v4887
  %v4963 = vmax.f32 %v4931, %v4892
  %v4964 = vmax.f32 %v4932, %v4897
  %4965 = vst.msk [vmem:[%s4900] sm:$0xff] %vm434, %v4933
  %4966 = vst.msk [vmem:[%s4900 + $0x8] sm:$0xff] %vm434, %v4934
  %4967 = vst.msk [vmem:[%s4900 + $0x10] sm:$0xff] %vm434, %v4935
  %4968 = vst.msk [vmem:[%s4900 + $0x18] sm:$0xff] %vm434, %v4936
  %4969 = vst.msk [vmem:[%s4900 + $0x20] sm:$0xff] %vm434, %v4937
  %4970 = vst.msk [vmem:[%s4900 + $0x28] sm:$0xff] %vm434, %v4938
  %4971 = vst.msk [vmem:[%s4900 + $0x30] sm:$0xff] %vm434, %v4939
  %4972 = vst.msk [vmem:[%s4900 + $0x38] sm:$0xff] %vm434, %v4940
  %4973 = vst.msk [vmem:[%s4900 + $0x40] sm:$0xff] %vm434, %v4941
  %4974 = vst.msk [vmem:[%s4900 + $0x48] sm:$0xff] %vm434, %v4942
  %4975 = vst.msk [vmem:[%s4900 + $0x50] sm:$0xff] %vm434, %v4943
  %4976 = vst.msk [vmem:[%s4900 + $0x58] sm:$0xff] %vm434, %v4944
  %4977 = vst.msk [vmem:[%s4900 + $0x60] sm:$0xff] %vm434, %v4945
  %4978 = vst.msk [vmem:[%s4900 + $0x68] sm:$0xff] %vm434, %v4946
  %4979 = vst.msk [vmem:[%s4900 + $0x70] sm:$0xff] %vm434, %v4947
  %4980 = vst.msk [vmem:[%s4900 + $0x78] sm:$0xff] %vm434, %v4948
  %4981 = vst.msk [vmem:[%s4900 + $0x80] sm:$0xff] %vm434, %v4949
  %4982 = vst.msk [vmem:[%s4900 + $0x88] sm:$0xff] %vm434, %v4950
  %4983 = vst.msk [vmem:[%s4900 + $0x90] sm:$0xff] %vm434, %v4951
  %4984 = vst.msk [vmem:[%s4900 + $0x98] sm:$0xff] %vm434, %v4952
  %4985 = vst.msk [vmem:[%s4900 + $0xa0] sm:$0xff] %vm434, %v4953
  %4986 = vst.msk [vmem:[%s4900 + $0xa8] sm:$0xff] %vm434, %v4954
  %4987 = vst.msk [vmem:[%s4900 + $0xb0] sm:$0xff] %vm434, %v4955
  %4988 = vst.msk [vmem:[%s4900 + $0xb8] sm:$0xff] %vm434, %v4956
  %4989 = vst.msk [vmem:[%s4900 + $0xc0] sm:$0xff] %vm434, %v4957
  %4990 = vst.msk [vmem:[%s4900 + $0xc8] sm:$0xff] %vm434, %v4958
  %4991 = vst.msk [vmem:[%s4900 + $0xd0] sm:$0xff] %vm434, %v4959
  %4992 = vst.msk [vmem:[%s4900 + $0xd8] sm:$0xff] %vm434, %v4960
  %4993 = vst.msk [vmem:[%s4900 + $0xe0] sm:$0xff] %vm434, %v4961
  %4994 = vst.msk [vmem:[%s4900 + $0xe8] sm:$0xff] %vm434, %v4962
  %4995 = vst.msk [vmem:[%s4900 + $0xf0] sm:$0xff] %vm434, %v4963
  %4996 = vst.msk [vmem:[%s4900 + $0xf8] sm:$0xff] %vm434, %v4964
  // Predicated region
  $region34: #{_forward.5} parent=0 // pred_check
    _
  $region35: #{_forward.5} parent=0 // pred_check_branch
    %4998 = sbr.rel (0) target = $region37
  $region36: #{_forward.5} parent=0 // pred_region
    _
  $region37: #{_forward.5} parent=0 // pred_fallthru
    _
  // Predicated region
  $region38: #{_forward.5} parent=0 // pred_check
    _
  $region39: #{_forward.5} parent=0 // pred_check_branch
    %5000 = sbr.rel (0) target = $region41
  $region40: #{_forward.5} parent=0 // pred_region
    _
  $region41: #{_forward.5} parent=0 // pred_fallthru
    _

// kernel: _forward.4
$region0: #{_forward.4}
  #allocation0 [shape = 'u32[]', space=smem, size = 0x4, offset = 0x4, fixed_abs, tag = 'smem constant byte address 0x4 - core index']
  #allocation1 [shape = 'u32[144,128]{1,0:T(1,128)}', space=vmem, size = 0x12000, scoped, tag = 'internal scratch']
  #allocation2 [shape = 's32[1]{0}', space=sflag, size = 0x4, scoped, tag = 'scoped memory for _forward.4']
  #allocation3 [shape = 's32[1]{0:T(128)S(6)}', space=smem, size = 0x200, scoped, tag = 'prefetched SMEM operand 0']
  %s0 = inlined_call_operand.<no memory space> [shape: s32[1], index: 0, kind: input, shape index: {}]
  %s1 = inlined_call_operand.vmem [shape: f32[128,8], index: 1, kind: input, shape index: {}]
  %s2 = inlined_call_operand.vmem [shape: s32[128,1], index: 2, kind: input, shape index: {}]
  %s3 = inlined_call_operand.vmem [shape: f32[256,8], index: 3, kind: input, shape index: {}]
  %s4 = inlined_call_operand.vmem [shape: f32[8,32], index: 4, kind: input, shape index: {}]
  %s5 = inlined_call_operand.vmem [shape: f32[8,32], index: 5, kind: input, shape index: {}]
  %s6 = inlined_call_operand.vmem [shape: f32[1,32], index: 6, kind: input, shape index: {}]
  %s7 = inlined_call_operand.vmem [shape: f32[1,32], index: 7, kind: input, shape index: {}]
  %s8 = inlined_call_operand.vmem [shape: f32[128,32], index: 8, kind: output, shape index: {0}]
  %s9 = inlined_call_operand.vmem [shape: f32[256,32], index: 9, kind: output, shape index: {1}]
  %10 = xla_tuple %s8, %s9
  %s11 = sld [smem:[#allocation0]]
  $region50: #{_forward.4} parent=0
    _
  %s13 = ssub.s32 1, %s11
  %s14 = scalar_select 0, %s13, %s11
  %15 = sst [smem:[#allocation3]] %s0
  // Predicated region
  $region2: #{_forward.4} parent=0 // pred_check
    _
  $region3: #{_forward.4} parent=0 // pred_check_branch
    %17 = sbr.rel (0) target = $region5
  $region4: #{_forward.4} parent=0 // pred_region
    _
  $region5: #{_forward.4} parent=0 // pred_fallthru
    _
  // Predicated region
  $region6: #{_forward.4} parent=0 // pred_check
    _
  $region7: #{_forward.4} parent=0 // pred_check_branch
    %19 = sbr.rel (0) target = $region9
  $region8: #{_forward.4} parent=0 // pred_region
    _
  $region9: #{_forward.4} parent=0 // pred_fallthru
    _
  // Predicated region
  $region10: #{_forward.4} parent=0 // pred_check
    _
  $region11: #{_forward.4} parent=0 // pred_check_branch
    %21 = sbr.rel (0) target = $region13
  $region12: #{_forward.4} parent=0 // pred_region
    _
  $region13: #{_forward.4} parent=0 // pred_fallthru
    _
  // Predicated region
  $region14: #{_forward.4} parent=0 // pred_check
    _
  $region15: #{_forward.4} parent=0 // pred_check_branch
    %23 = sbr.rel (0) target = $region17
  $region16: #{_forward.4} parent=0 // pred_region
    _
  $region17: #{_forward.4} parent=0 // pred_fallthru
    _
  // Predicated region
  $region18: #{_forward.4} parent=0 // pred_check
    _
  $region19: #{_forward.4} parent=0 // pred_check_branch
    %25 = sbr.rel (0) target = $region21
  $region20: #{_forward.4} parent=0 // pred_region
    _
  $region21: #{_forward.4} parent=0 // pred_fallthru
    _
  // Predicated region
  $region22: #{_forward.4} parent=0 // pred_check
    _
  $region23: #{_forward.4} parent=0 // pred_check_branch
    %27 = sbr.rel (0) target = $region25
  $region24: #{_forward.4} parent=0 // pred_region
    _
  $region25: #{_forward.4} parent=0 // pred_fallthru
    _
  // Predicated region
  $region26: #{_forward.4} parent=0 // pred_check
    _
  $region27: #{_forward.4} parent=0 // pred_check_branch
    %29 = sbr.rel (0) target = $region29
  $region28: #{_forward.4} parent=0 // pred_region
    _
  $region29: #{_forward.4} parent=0 // pred_fallthru
    _
  %s30 = sld [smem:[#allocation3]]
  %s31 = smul.u32 %s30, 128
  %p32 = scmp.eq.s32.totalorder 0, 0
  // Predicated region
  $region30: #{_forward.4} parent=0 // pred_check
    %p33 = pneg %p32
  $region31: #{_forward.4} parent=0 // pred_check_branch
    %35 = sbr.rel (%p33) target = $region33
  $region32: #{_forward.4} parent=0 // pred_region
    %vm36 = vcmask 261120
    %37 = vst.msk [vmem:[%s9] sm:$0xff] %vm36, 0.0
    %38 = vst.msk [vmem:[%s9 + $0x8] sm:$0xff] %vm36, 0.0
    %39 = vst.msk [vmem:[%s9 + $0x10] sm:$0xff] %vm36, 0.0
    %40 = vst.msk [vmem:[%s9 + $0x18] sm:$0xff] %vm36, 0.0
    %41 = vst.msk [vmem:[%s9 + $0x20] sm:$0xff] %vm36, 0.0
    %42 = vst.msk [vmem:[%s9 + $0x28] sm:$0xff] %vm36, 0.0
    %43 = vst.msk [vmem:[%s9 + $0x30] sm:$0xff] %vm36, 0.0
    %44 = vst.msk [vmem:[%s9 + $0x38] sm:$0xff] %vm36, 0.0
    %45 = vst.msk [vmem:[%s9 + $0x40] sm:$0xff] %vm36, 0.0
    %46 = vst.msk [vmem:[%s9 + $0x48] sm:$0xff] %vm36, 0.0
    %47 = vst.msk [vmem:[%s9 + $0x50] sm:$0xff] %vm36, 0.0
    %48 = vst.msk [vmem:[%s9 + $0x58] sm:$0xff] %vm36, 0.0
    %49 = vst.msk [vmem:[%s9 + $0x60] sm:$0xff] %vm36, 0.0
    %50 = vst.msk [vmem:[%s9 + $0x68] sm:$0xff] %vm36, 0.0
    %51 = vst.msk [vmem:[%s9 + $0x70] sm:$0xff] %vm36, 0.0
    %52 = vst.msk [vmem:[%s9 + $0x78] sm:$0xff] %vm36, 0.0
    %53 = vst.msk [vmem:[%s9 + $0x80] sm:$0xff] %vm36, 0.0
    %54 = vst.msk [vmem:[%s9 + $0x88] sm:$0xff] %vm36, 0.0
    %55 = vst.msk [vmem:[%s9 + $0x90] sm:$0xff] %vm36, 0.0
    %56 = vst.msk [vmem:[%s9 + $0x98] sm:$0xff] %vm36, 0.0
    %57 = vst.msk [vmem:[%s9 + $0xa0] sm:$0xff] %vm36, 0.0
    %58 = vst.msk [vmem:[%s9 + $0xa8] sm:$0xff] %vm36, 0.0
    %59 = vst.msk [vmem:[%s9 + $0xb0] sm:$0xff] %vm36, 0.0
    %60 = vst.msk [vmem:[%s9 + $0xb8] sm:$0xff] %vm36, 0.0
    %61 = vst.msk [vmem:[%s9 + $0xc0] sm:$0xff] %vm36, 0.0
    %62 = vst.msk [vmem:[%s9 + $0xc8] sm:$0xff] %vm36, 0.0
    %63 = vst.msk [vmem:[%s9 + $0xd0] sm:$0xff] %vm36, 0.0
    %64 = vst.msk [vmem:[%s9 + $0xd8] sm:$0xff] %vm36, 0.0
    %65 = vst.msk [vmem:[%s9 + $0xe0] sm:$0xff] %vm36, 0.0
    %66 = vst.msk [vmem:[%s9 + $0xe8] sm:$0xff] %vm36, 0.0
    %67 = vst.msk [vmem:[%s9 + $0xf0] sm:$0xff] %vm36, 0.0
    %68 = vst.msk [vmem:[%s9 + $0xf8] sm:$0xff] %vm36, 0.0
  $region33: #{_forward.4} parent=0 // pred_fallthru
    _
  %v69 = vld [vmem:[%s2] sm:$0xff]
  %v70 = vld [vmem:[%s2 + $0x8] sm:$0xff]
  %v71 = vld [vmem:[%s2 + $0x10] sm:$0xff]
  %v72 = vld [vmem:[%s2 + $0x18] sm:$0xff]
  %v73 = vld [vmem:[%s2 + $0x20] sm:$0xff]
  %v74 = vld [vmem:[%s2 + $0x28] sm:$0xff]
  %v75 = vld [vmem:[%s2 + $0x30] sm:$0xff]
  %v76 = vld [vmem:[%s2 + $0x38] sm:$0xff]
  %v77 = vld [vmem:[%s2 + $0x40] sm:$0xff]
  %v78 = vld [vmem:[%s2 + $0x48] sm:$0xff]
  %v79 = vld [vmem:[%s2 + $0x50] sm:$0xff]
  %v80 = vld [vmem:[%s2 + $0x58] sm:$0xff]
  %v81 = vld [vmem:[%s2 + $0x60] sm:$0xff]
  %v82 = vld [vmem:[%s2 + $0x68] sm:$0xff]
  %v83 = vld [vmem:[%s2 + $0x70] sm:$0xff]
  %v84 = vld [vmem:[%s2 + $0x78] sm:$0xff]
  %v85 = vstv %s31
  %v86 = vsub.s32 %v69, %v85
  %v87 = vsub.s32 %v70, %v85
  %v88 = vsub.s32 %v71, %v85
  %v89 = vsub.s32 %v72, %v85
  %v90 = vsub.s32 %v73, %v85
  %v91 = vsub.s32 %v74, %v85
  %v92 = vsub.s32 %v75, %v85
  %v93 = vsub.s32 %v76, %v85
  %v94 = vsub.s32 %v77, %v85
  %v95 = vsub.s32 %v78, %v85
  %v96 = vsub.s32 %v79, %v85
  %v97 = vsub.s32 %v80, %v85
  %v98 = vsub.s32 %v81, %v85
  %v99 = vsub.s32 %v82, %v85
  %v100 = vsub.s32 %v83, %v85
  %v101 = vsub.s32 %v84, %v85
  %v102 = vlaneseq
  %v103 = vand.u32 %v102, 127
  %v104 = vadd.s32 %v103, 128
  %105 = vset.pattern.permute.xlu0 0
  %106 = vperm.xlu0 %105, %v86
  %v107 = vpop.permute.xlu0 %106
  %108 = vset.pattern.permute.xlu0 0
  %109 = vperm.xlu0 %108, %v87
  %v110 = vpop.permute.xlu0 %109
  %111 = vset.pattern.permute.xlu0 0
  %112 = vperm.xlu0 %111, %v88
  %v113 = vpop.permute.xlu0 %112
  %114 = vset.pattern.permute.xlu0 0
  %115 = vperm.xlu0 %114, %v89
  %v116 = vpop.permute.xlu0 %115
  %117 = vset.pattern.permute.xlu0 0
  %118 = vperm.xlu0 %117, %v90
  %v119 = vpop.permute.xlu0 %118
  %120 = vset.pattern.permute.xlu0 0
  %121 = vperm.xlu0 %120, %v91
  %v122 = vpop.permute.xlu0 %121
  %123 = vset.pattern.permute.xlu0 0
  %124 = vperm.xlu0 %123, %v92
  %v125 = vpop.permute.xlu0 %124
  %126 = vset.pattern.permute.xlu0 0
  %127 = vperm.xlu0 %126, %v93
  %v128 = vpop.permute.xlu0 %127
  %129 = vset.pattern.permute.xlu0 0
  %130 = vperm.xlu0 %129, %v94
  %v131 = vpop.permute.xlu0 %130
  %132 = vset.pattern.permute.xlu0 0
  %133 = vperm.xlu0 %132, %v95
  %v134 = vpop.permute.xlu0 %133
  %135 = vset.pattern.permute.xlu0 0
  %136 = vperm.xlu0 %135, %v96
  %v137 = vpop.permute.xlu0 %136
  %138 = vset.pattern.permute.xlu0 0
  %139 = vperm.xlu0 %138, %v97
  %v140 = vpop.permute.xlu0 %139
  %141 = vset.pattern.permute.xlu0 0
  %142 = vperm.xlu0 %141, %v98
  %v143 = vpop.permute.xlu0 %142
  %144 = vset.pattern.permute.xlu0 0
  %145 = vperm.xlu0 %144, %v99
  %v146 = vpop.permute.xlu0 %145
  %147 = vset.pattern.permute.xlu0 0
  %148 = vperm.xlu0 %147, %v100
  %v149 = vpop.permute.xlu0 %148
  %150 = vset.pattern.permute.xlu0 0
  %151 = vperm.xlu0 %150, %v101
  %v152 = vpop.permute.xlu0 %151
  %vm153 = vcmp.eq.s32.totalorder %v107, %v103
  %vm154 = vcmp.eq.s32.totalorder %v107, %v104
  %vm155 = vcmp.eq.s32.totalorder %v110, %v103
  %vm156 = vcmp.eq.s32.totalorder %v110, %v104
  %vm157 = vcmp.eq.s32.totalorder %v113, %v103
  %vm158 = vcmp.eq.s32.totalorder %v113, %v104
  %vm159 = vcmp.eq.s32.totalorder %v116, %v103
  %vm160 = vcmp.eq.s32.totalorder %v116, %v104
  %vm161 = vcmp.eq.s32.totalorder %v119, %v103
  %vm162 = vcmp.eq.s32.totalorder %v119, %v104
  %vm163 = vcmp.eq.s32.totalorder %v122, %v103
  %vm164 = vcmp.eq.s32.totalorder %v122, %v104
  %vm165 = vcmp.eq.s32.totalorder %v125, %v103
  %vm166 = vcmp.eq.s32.totalorder %v125, %v104
  %vm167 = vcmp.eq.s32.totalorder %v128, %v103
  %vm168 = vcmp.eq.s32.totalorder %v128, %v104
  %vm169 = vcmp.eq.s32.totalorder %v131, %v103
  %vm170 = vcmp.eq.s32.totalorder %v131, %v104
  %vm171 = vcmp.eq.s32.totalorder %v134, %v103
  %vm172 = vcmp.eq.s32.totalorder %v134, %v104
  %vm173 = vcmp.eq.s32.totalorder %v137, %v103
  %vm174 = vcmp.eq.s32.totalorder %v137, %v104
  %vm175 = vcmp.eq.s32.totalorder %v140, %v103
  %vm176 = vcmp.eq.s32.totalorder %v140, %v104
  %vm177 = vcmp.eq.s32.totalorder %v143, %v103
  %vm178 = vcmp.eq.s32.totalorder %v143, %v104
  %vm179 = vcmp.eq.s32.totalorder %v146, %v103
  %vm180 = vcmp.eq.s32.totalorder %v146, %v104
  %vm181 = vcmp.eq.s32.totalorder %v149, %v103
  %vm182 = vcmp.eq.s32.totalorder %v149, %v104
  %vm183 = vcmp.eq.s32.totalorder %v152, %v103
  %vm184 = vcmp.eq.s32.totalorder %v152, %v104
  %s185 = scalar_lea.vmem %s3, %s31
  %v186 = vld [vmem:[%s185] sm:$0xff]
  %v187 = vld [vmem:[%s185 + $0x8] sm:$0xff]
  %v188 = vld [vmem:[%s185 + $0x10] sm:$0xff]
  %v189 = vld [vmem:[%s185 + $0x18] sm:$0xff]
  %v190 = vld [vmem:[%s185 + $0x20] sm:$0xff]
  %v191 = vld [vmem:[%s185 + $0x28] sm:$0xff]
  %v192 = vld [vmem:[%s185 + $0x30] sm:$0xff]
  %v193 = vld [vmem:[%s185 + $0x38] sm:$0xff]
  %v194 = vld [vmem:[%s185 + $0x40] sm:$0xff]
  %v195 = vld [vmem:[%s185 + $0x48] sm:$0xff]
  %v196 = vld [vmem:[%s185 + $0x50] sm:$0xff]
  %v197 = vld [vmem:[%s185 + $0x58] sm:$0xff]
  %v198 = vld [vmem:[%s185 + $0x60] sm:$0xff]
  %v199 = vld [vmem:[%s185 + $0x68] sm:$0xff]
  %v200 = vld [vmem:[%s185 + $0x70] sm:$0xff]
  %v201 = vld [vmem:[%s185 + $0x78] sm:$0xff]
  %v202 = vld [vmem:[%s185 + $0x80] sm:$0xff]
  %v203 = vld [vmem:[%s185 + $0x88] sm:$0xff]
  %v204 = vld [vmem:[%s185 + $0x90] sm:$0xff]
  %v205 = vld [vmem:[%s185 + $0x98] sm:$0xff]
  %v206 = vld [vmem:[%s185 + $0xa0] sm:$0xff]
  %v207 = vld [vmem:[%s185 + $0xa8] sm:$0xff]
  %v208 = vld [vmem:[%s185 + $0xb0] sm:$0xff]
  %v209 = vld [vmem:[%s185 + $0xb8] sm:$0xff]
  %v210 = vld [vmem:[%s185 + $0xc0] sm:$0xff]
  %v211 = vld [vmem:[%s185 + $0xc8] sm:$0xff]
  %v212 = vld [vmem:[%s185 + $0xd0] sm:$0xff]
  %v213 = vld [vmem:[%s185 + $0xd8] sm:$0xff]
  %v214 = vld [vmem:[%s185 + $0xe0] sm:$0xff]
  %v215 = vld [vmem:[%s185 + $0xe8] sm:$0xff]
  %v216 = vld [vmem:[%s185 + $0xf0] sm:$0xff]
  %v217 = vld [vmem:[%s185 + $0xf8] sm:$0xff]
  %v218 = vsel %vm153, 1, 0
  %v219 = vsel %vm154, 1, 0
  %v220 = vsel %vm155, 1, 0
  %v221 = vsel %vm156, 1, 0
  %v222 = vsel %vm157, 1, 0
  %v223 = vsel %vm158, 1, 0
  %v224 = vsel %vm159, 1, 0
  %v225 = vsel %vm160, 1, 0
  %v226 = vsel %vm161, 1, 0
  %v227 = vsel %vm162, 1, 0
  %v228 = vsel %vm163, 1, 0
  %v229 = vsel %vm164, 1, 0
  %v230 = vsel %vm165, 1, 0
  %v231 = vsel %vm166, 1, 0
  %v232 = vsel %vm167, 1, 0
  %v233 = vsel %vm168, 1, 0
  %v234 = vsel %vm169, 1, 0
  %v235 = vsel %vm170, 1, 0
  %v236 = vsel %vm171, 1, 0
  %v237 = vsel %vm172, 1, 0
  %v238 = vsel %vm173, 1, 0
  %v239 = vsel %vm174, 1, 0
  %v240 = vsel %vm175, 1, 0
  %v241 = vsel %vm176, 1, 0
  %v242 = vsel %vm177, 1, 0
  %v243 = vsel %vm178, 1, 0
  %v244 = vsel %vm179, 1, 0
  %v245 = vsel %vm180, 1, 0
  %v246 = vsel %vm181, 1, 0
  %v247 = vsel %vm182, 1, 0
  %v248 = vsel %vm183, 1, 0
  %v249 = vsel %vm184, 1, 0
  %v250 = vcvt.s32.f32 %v218
  %v251 = vcvt.s32.f32 %v219
  %v252 = vcvt.s32.f32 %v220
  %v253 = vcvt.s32.f32 %v221
  %v254 = vcvt.s32.f32 %v222
  %v255 = vcvt.s32.f32 %v223
  %v256 = vcvt.s32.f32 %v224
  %v257 = vcvt.s32.f32 %v225
  %v258 = vcvt.s32.f32 %v226
  %v259 = vcvt.s32.f32 %v227
  %v260 = vcvt.s32.f32 %v228
  %v261 = vcvt.s32.f32 %v229
  %v262 = vcvt.s32.f32 %v230
  %v263 = vcvt.s32.f32 %v231
  %v264 = vcvt.s32.f32 %v232
  %v265 = vcvt.s32.f32 %v233
  %v266 = vcvt.s32.f32 %v234
  %v267 = vcvt.s32.f32 %v235
  %v268 = vcvt.s32.f32 %v236
  %v269 = vcvt.s32.f32 %v237
  %v270 = vcvt.s32.f32 %v238
  %v271 = vcvt.s32.f32 %v239
  %v272 = vcvt.s32.f32 %v240
  %v273 = vcvt.s32.f32 %v241
  %v274 = vcvt.s32.f32 %v242
  %v275 = vcvt.s32.f32 %v243
  %v276 = vcvt.s32.f32 %v244
  %v277 = vcvt.s32.f32 %v245
  %v278 = vcvt.s32.f32 %v246
  %v279 = vcvt.s32.f32 %v247
  %v280 = vcvt.s32.f32 %v248
  %v281 = vcvt.s32.f32 %v249
  %282 = vmatprep.subr.mxu0 0.0
  %283 = vmatpush1.msra.mxu0 %v186
  %284 = vmatprep.subr.mxu0 0.0
  %285 = vmatpush1.msra.mxu0 %v187
  %286 = vmatprep.subr.mxu0 0.0
  %287 = vmatpush1.msra.mxu0 %v188
  %288 = vmatprep.subr.mxu0 0.0
  %289 = vmatpush1.msra.mxu0 %v189
  %290 = vmatprep.subr.mxu0 0.0
  %291 = vmatpush1.msra.mxu0 %v190
  %292 = vmatprep.subr.mxu0 0.0
  %293 = vmatpush1.msra.mxu0 %v191
  %294 = vmatprep.subr.mxu0 0.0
  %295 = vmatpush1.msra.mxu0 %v192
  %296 = vmatprep.subr.mxu0 0.0
  %297 = vmatpush1.msra.mxu0 %v193
  %298 = vmatprep.subr.mxu0 0.0
  %299 = vmatpush1.msra.mxu0 %v194
  %300 = vmatprep.subr.mxu0 0.0
  %301 = vmatpush1.msra.mxu0 %v195
  %302 = vmatprep.subr.mxu0 0.0
  %303 = vmatpush1.msra.mxu0 %v196
  %304 = vmatprep.subr.mxu0 0.0
  %305 = vmatpush1.msra.mxu0 %v197
  %306 = vmatprep.subr.mxu0 0.0
  %307 = vmatpush1.msra.mxu0 %v198
  %308 = vmatprep.subr.mxu0 0.0
  %309 = vmatpush1.msra.mxu0 %v199
  %310 = vmatprep.subr.mxu0 0.0
  %311 = vmatpush1.msra.mxu0 %v200
  %312 = vmatprep.subr.mxu0 0.0
  %313 = vmatpush1.msra.mxu0 %v201
  %314 = vmatprep.subr.mxu0 0.0
  %315 = vmatpush1.msra.mxu0 %v202
  %316 = vmatprep.subr.mxu0 0.0
  %317 = vmatpush1.msra.mxu0 %v203
  %318 = vmatprep.subr.mxu0 0.0
  %319 = vmatpush1.msra.mxu0 %v204
  %320 = vmatprep.subr.mxu0 0.0
  %321 = vmatpush1.msra.mxu0 %v205
  %322 = vmatprep.subr.mxu0 0.0
  %323 = vmatpush1.msra.mxu0 %v206
  %324 = vmatprep.subr.mxu0 0.0
  %325 = vmatpush1.msra.mxu0 %v207
  %326 = vmatprep.subr.mxu0 0.0
  %327 = vmatpush1.msra.mxu0 %v208
  %328 = vmatprep.subr.mxu0 0.0
  %329 = vmatpush1.msra.mxu0 %v209
  %330 = vmatprep.subr.mxu0 0.0
  %331 = vmatpush1.msra.mxu0 %v210
  %332 = vmatprep.subr.mxu0 0.0
  %333 = vmatpush1.msra.mxu0 %v211
  %334 = vmatprep.subr.mxu0 0.0
  %335 = vmatpush1.msra.mxu0 %v212
  %336 = vmatprep.subr.mxu0 0.0
  %337 = vmatpush1.msra.mxu0 %v213
  %338 = vmatprep.subr.mxu0 0.0
  %339 = vmatpush1.msra.mxu0 %v214
  %340 = vmatprep.subr.mxu0 0.0
  %341 = vmatpush1.msra.mxu0 %v215
  %342 = vmatprep.subr.mxu0 0.0
  %343 = vmatpush1.msra.mxu0 %v216
  %344 = vmatprep.subr.mxu0 0.0
  %345 = vmatpush1.msra.mxu0 %v217
  %346 = vmatprep.mubr.f32.mxu0 %v251
  %347 = vmatmul.mubr.f32.gmra.mrb[0].mxu0 %v250
  %v348 = vpop.f32.mrb[0].mxu0
  %v349 = vadd.f32 0.0, %v348
  %v350 = vpop.f32.mrb[0].mxu0
  %351 = vmatprep.mubr.f32.mxu0 %v253
  %352 = vmatmul.mubr.f32.gmra.mrb[0].mxu0 %v252
  %v353 = vpop.f32.mrb[0].mxu0
  %v354 = vadd.f32 0.0, %v353
  %v355 = vpop.f32.mrb[0].mxu0
  %356 = vmatprep.mubr.f32.mxu0 %v255
  %357 = vmatmul.mubr.f32.gmra.mrb[0].mxu0 %v254
  %v358 = vpop.f32.mrb[0].mxu0
  %v359 = vadd.f32 0.0, %v358
  %v360 = vpop.f32.mrb[0].mxu0
  %361 = vmatprep.mubr.f32.mxu0 %v257
  %362 = vmatmul.mubr.f32.gmra.mrb[0].mxu0 %v256
  %v363 = vpop.f32.mrb[0].mxu0
  %v364 = vadd.f32 0.0, %v363
  %v365 = vpop.f32.mrb[0].mxu0
  %366 = vmatprep.mubr.f32.mxu0 %v259
  %367 = vmatmul.mubr.f32.gmra.mrb[0].mxu0 %v258
  %v368 = vpop.f32.mrb[0].mxu0
  %v369 = vadd.f32 0.0, %v368
  %v370 = vpop.f32.mrb[0].mxu0
  %371 = vmatprep.mubr.f32.mxu0 %v261
  %372 = vmatmul.mubr.f32.gmra.mrb[0].mxu0 %v260
  %v373 = vpop.f32.mrb[0].mxu0
  %v374 = vadd.f32 0.0, %v373
  %v375 = vpop.f32.mrb[0].mxu0
  %376 = vmatprep.mubr.f32.mxu0 %v263
  %377 = vmatmul.mubr.f32.gmra.mrb[0].mxu0 %v262
  %v378 = vpop.f32.mrb[0].mxu0
  %v379 = vadd.f32 0.0, %v378
  %v380 = vpop.f32.mrb[0].mxu0
  %381 = vmatprep.mubr.f32.mxu0 %v265
  %382 = vmatmul.mubr.f32.gmra.mrb[0].mxu0 %v264
  %v383 = vpop.f32.mrb[0].mxu0
  %v384 = vadd.f32 0.0, %v383
  %v385 = vpop.f32.mrb[0].mxu0
  %386 = vmatprep.mubr.f32.mxu0 %v267
  %387 = vmatmul.mubr.f32.gmra.mrb[0].mxu0 %v266
  %v388 = vpop.f32.mrb[0].mxu0
  %v389 = vadd.f32 0.0, %v388
  %v390 = vpop.f32.mrb[0].mxu0
  %391 = vmatprep.mubr.f32.mxu0 %v269
  %392 = vmatmul.mubr.f32.gmra.mrb[0].mxu0 %v268
  %v393 = vpop.f32.mrb[0].mxu0
  %v394 = vadd.f32 0.0, %v393
  %v395 = vpop.f32.mrb[0].mxu0
  %396 = vmatprep.mubr.f32.mxu0 %v271
  %397 = vmatmul.mubr.f32.gmra.mrb[0].mxu0 %v270
  %v398 = vpop.f32.mrb[0].mxu0
  %v399 = vadd.f32 0.0, %v398
  %v400 = vpop.f32.mrb[0].mxu0
  %401 = vmatprep.mubr.f32.mxu0 %v273
  %402 = vmatmul.mubr.f32.gmra.mrb[0].mxu0 %v272
  %v403 = vpop.f32.mrb[0].mxu0
  %v404 = vadd.f32 0.0, %v403
  %v405 = vpop.f32.mrb[0].mxu0
  %406 = vmatprep.mubr.f32.mxu0 %v275
  %407 = vmatmul.mubr.f32.gmra.mrb[0].mxu0 %v274
  %v408 = vpop.f32.mrb[0].mxu0
  %v409 = vadd.f32 0.0, %v408
  %v410 = vpop.f32.mrb[0].mxu0
  %411 = vmatprep.mubr.f32.mxu0 %v277
  %412 = vmatmul.mubr.f32.gmra.mrb[0].mxu0 %v276
  %v413 = vpop.f32.mrb[0].mxu0
  %v414 = vadd.f32 0.0, %v413
  %v415 = vpop.f32.mrb[0].mxu0
  %416 = vmatprep.mubr.f32.mxu0 %v279
  %417 = vmatmul.mubr.f32.gmra.mrb[0].mxu0 %v278
  %v418 = vpop.f32.mrb[0].mxu0
  %v419 = vadd.f32 0.0, %v418
  %v420 = vpop.f32.mrb[0].mxu0
  %421 = vmatprep.mubr.f32.mxu0 %v281
  %422 = vmatmul.mubr.f32.gmra.mrb[0].mxu0 %v280
  %v423 = vpop.f32.mrb[0].mxu0
  %v424 = vadd.f32 0.0, %v423
  %v425 = vpop.f32.mrb[0].mxu0
  %426 = vdwg.mxu0
  %v427 = vld [vmem:[%s1] sm:$0xff]
  %v428 = vld [vmem:[%s1 + $0x8] sm:$0xff]
  %v429 = vld [vmem:[%s1 + $0x10] sm:$0xff]
  %v430 = vld [vmem:[%s1 + $0x18] sm:$0xff]
  %v431 = vld [vmem:[%s1 + $0x20] sm:$0xff]
  %v432 = vld [vmem:[%s1 + $0x28] sm:$0xff]
  %v433 = vld [vmem:[%s1 + $0x30] sm:$0xff]
  %v434 = vld [vmem:[%s1 + $0x38] sm:$0xff]
  %v435 = vld [vmem:[%s1 + $0x40] sm:$0xff]
  %v436 = vld [vmem:[%s1 + $0x48] sm:$0xff]
  %v437 = vld [vmem:[%s1 + $0x50] sm:$0xff]
  %v438 = vld [vmem:[%s1 + $0x58] sm:$0xff]
  %v439 = vld [vmem:[%s1 + $0x60] sm:$0xff]
  %v440 = vld [vmem:[%s1 + $0x68] sm:$0xff]
  %v441 = vld [vmem:[%s1 + $0x70] sm:$0xff]
  %v442 = vld [vmem:[%s1 + $0x78] sm:$0xff]
  %v443 = vld [vmem:[%s4] sm:$0xff]
  %v444 = vld [vmem:[%s5] sm:$0xff]
  %vm445 = vcmask 64512
  %v447 = vsel %vm445, %v349, 0
  %v450 = vsel %vm445, %v354, 0
  %v453 = vsel %vm445, %v359, 0
  %v456 = vsel %vm445, %v364, 0
  %v459 = vsel %vm445, %v369, 0
  %v462 = vsel %vm445, %v374, 0
  %v465 = vsel %vm445, %v379, 0
  %v468 = vsel %vm445, %v384, 0
  %v471 = vsel %vm445, %v389, 0
  %v474 = vsel %vm445, %v394, 0
  %v477 = vsel %vm445, %v399, 0
  %v480 = vsel %vm445, %v404, 0
  %v483 = vsel %vm445, %v409, 0
  %v486 = vsel %vm445, %v414, 0
  %v489 = vsel %vm445, %v419, 0
  %v492 = vsel %vm445, %v424, 0
  %494 = vmatprep.subr.mxu0 0.0
  %495 = vmatpush1.msra.mxu0 %v444
  %496 = vmatprep.subr.mxu0 0.0
  %497 = vmatpush1.msra.mxu0 0.0
  %498 = vmatprep.subr.mxu0 0.0
  %499 = vmatpush1.msra.mxu0 0.0
  %500 = vmatprep.subr.mxu0 0.0
  %501 = vmatpush1.msra.mxu0 0.0
  %502 = vmatprep.subr.mxu0 0.0
  %503 = vmatpush1.msra.mxu0 0.0
  %504 = vmatprep.subr.mxu0 0.0
  %505 = vmatpush1.msra.mxu0 0.0
  %506 = vmatprep.subr.mxu0 0.0
  %507 = vmatpush1.msra.mxu0 0.0
  %508 = vmatprep.subr.mxu0 0.0
  %509 = vmatpush1.msra.mxu0 0.0
  %510 = vmatprep.subr.mxu0 0.0
  %511 = vmatpush1.msra.mxu0 0.0
  %512 = vmatprep.subr.mxu0 0.0
  %513 = vmatpush1.msra.mxu0 0.0
  %514 = vmatprep.subr.mxu0 0.0
  %515 = vmatpush1.msra.mxu0 0.0
  %516 = vmatprep.subr.mxu0 0.0
  %517 = vmatpush1.msra.mxu0 0.0
  %518 = vmatprep.subr.mxu0 0.0
  %519 = vmatpush1.msra.mxu0 0.0
  %520 = vmatprep.subr.mxu0 0.0
  %521 = vmatpush1.msra.mxu0 0.0
  %522 = vmatprep.subr.mxu0 0.0
  %523 = vmatpush1.msra.mxu0 0.0
  %524 = vmatprep.subr.mxu0 0.0
  %525 = vmatpush1.msra.mxu0 0.0
  %526 = vmatprep.subr.mxu0 0.0
  %527 = vmatpush1.msra.mxu0 0.0
  %528 = vmatprep.subr.mxu0 0.0
  %529 = vmatpush1.msra.mxu0 0.0
  %530 = vmatprep.subr.mxu0 0.0
  %531 = vmatpush1.msra.mxu0 0.0
  %532 = vmatprep.subr.mxu0 0.0
  %533 = vmatpush1.msra.mxu0 0.0
  %534 = vmatprep.subr.mxu0 0.0
  %535 = vmatpush1.msra.mxu0 0.0
  %536 = vmatprep.subr.mxu0 0.0
  %537 = vmatpush1.msra.mxu0 0.0
  %538 = vmatprep.subr.mxu0 0.0
  %539 = vmatpush1.msra.mxu0 0.0
  %540 = vmatprep.subr.mxu0 0.0
  %541 = vmatpush1.msra.mxu0 0.0
  %542 = vmatprep.subr.mxu0 0.0
  %543 = vmatpush1.msra.mxu0 0.0
  %544 = vmatprep.subr.mxu0 0.0
  %545 = vmatpush1.msra.mxu0 0.0
  %546 = vmatprep.subr.mxu0 0.0
  %547 = vmatpush1.msra.mxu0 0.0
  %548 = vmatprep.subr.mxu0 0.0
  %549 = vmatpush1.msra.mxu0 0.0
  %550 = vmatprep.subr.mxu0 0.0
  %551 = vmatpush1.msra.mxu0 0.0
  %552 = vmatprep.subr.mxu0 0.0
  %553 = vmatpush1.msra.mxu0 0.0
  %554 = vmatprep.subr.mxu0 0.0
  %555 = vmatpush1.msra.mxu0 0.0
  %556 = vmatprep.subr.mxu0 0.0
  %557 = vmatpush1.msra.mxu0 0.0
  %558 = vmatprep.mubr.f32.mxu0 0.0
  %559 = vmatmul.mubr.f32.gmra.mrb[0].mxu0 %v447
  %v560 = vpop.f32.mrb[0].mxu0
  %v561 = vadd.f32 0.0, %v560
  %v562 = vpop.f32.mrb[0].mxu0
  %563 = vmatprep.mubr.f32.mxu0 0.0
  %564 = vmatmul.mubr.f32.gmra.mrb[0].mxu0 %v450
  %v565 = vpop.f32.mrb[0].mxu0
  %v566 = vadd.f32 0.0, %v565
  %v567 = vpop.f32.mrb[0].mxu0
  %568 = vmatprep.mubr.f32.mxu0 0.0
  %569 = vmatmul.mubr.f32.gmra.mrb[0].mxu0 %v453
  %v570 = vpop.f32.mrb[0].mxu0
  %v571 = vadd.f32 0.0, %v570
  %v572 = vpop.f32.mrb[0].mxu0
  %573 = vmatprep.mubr.f32.mxu0 0.0
  %574 = vmatmul.mubr.f32.gmra.mrb[0].mxu0 %v456
  %v575 = vpop.f32.mrb[0].mxu0
  %v576 = vadd.f32 0.0, %v575
  %v577 = vpop.f32.mrb[0].mxu0
  %578 = vmatprep.mubr.f32.mxu0 0.0
  %579 = vmatmul.mubr.f32.gmra.mrb[0].mxu0 %v459
  %v580 = vpop.f32.mrb[0].mxu0
  %v581 = vadd.f32 0.0, %v580
  %v582 = vpop.f32.mrb[0].mxu0
  %583 = vmatprep.mubr.f32.mxu0 0.0
  %584 = vmatmul.mubr.f32.gmra.mrb[0].mxu0 %v462
  %v585 = vpop.f32.mrb[0].mxu0
  %v586 = vadd.f32 0.0, %v585
  %v587 = vpop.f32.mrb[0].mxu0
  %588 = vmatprep.mubr.f32.mxu0 0.0
  %589 = vmatmul.mubr.f32.gmra.mrb[0].mxu0 %v465
  %v590 = vpop.f32.mrb[0].mxu0
  %v591 = vadd.f32 0.0, %v590
  %v592 = vpop.f32.mrb[0].mxu0
  %593 = vmatprep.mubr.f32.mxu0 0.0
  %594 = vmatmul.mubr.f32.gmra.mrb[0].mxu0 %v468
  %v595 = vpop.f32.mrb[0].mxu0
  %v596 = vadd.f32 0.0, %v595
  %v597 = vpop.f32.mrb[0].mxu0
  %598 = vmatprep.mubr.f32.mxu0 0.0
  %599 = vmatmul.mubr.f32.gmra.mrb[0].mxu0 %v471
  %v600 = vpop.f32.mrb[0].mxu0
  %v601 = vadd.f32 0.0, %v600
  %v602 = vpop.f32.mrb[0].mxu0
  %603 = vmatprep.mubr.f32.mxu0 0.0
  %604 = vmatmul.mubr.f32.gmra.mrb[0].mxu0 %v474
  %v605 = vpop.f32.mrb[0].mxu0
  %v606 = vadd.f32 0.0, %v605
  %v607 = vpop.f32.mrb[0].mxu0
  %608 = vmatprep.mubr.f32.mxu0 0.0
  %609 = vmatmul.mubr.f32.gmra.mrb[0].mxu0 %v477
  %v610 = vpop.f32.mrb[0].mxu0
  %v611 = vadd.f32 0.0, %v610
  %v612 = vpop.f32.mrb[0].mxu0
  %613 = vmatprep.mubr.f32.mxu0 0.0
  %614 = vmatmul.mubr.f32.gmra.mrb[0].mxu0 %v480
  %v615 = vpop.f32.mrb[0].mxu0
  %v616 = vadd.f32 0.0, %v615
  %v617 = vpop.f32.mrb[0].mxu0
  %618 = vmatprep.mubr.f32.mxu0 0.0
  %619 = vmatmul.mubr.f32.gmra.mrb[0].mxu0 %v483
  %v620 = vpop.f32.mrb[0].mxu0
  %v621 = vadd.f32 0.0, %v620
  %v622 = vpop.f32.mrb[0].mxu0
  %623 = vmatprep.mubr.f32.mxu0 0.0
  %624 = vmatmul.mubr.f32.gmra.mrb[0].mxu0 %v486
  %v625 = vpop.f32.mrb[0].mxu0
  %v626 = vadd.f32 0.0, %v625
  %v627 = vpop.f32.mrb[0].mxu0
  %628 = vmatprep.mubr.f32.mxu0 0.0
  %629 = vmatmul.mubr.f32.gmra.mrb[0].mxu0 %v489
  %v630 = vpop.f32.mrb[0].mxu0
  %v631 = vadd.f32 0.0, %v630
  %v632 = vpop.f32.mrb[0].mxu0
  %633 = vmatprep.mubr.f32.mxu0 0.0
  %634 = vmatmul.mubr.f32.gmra.mrb[0].mxu0 %v492
  %v635 = vpop.f32.mrb[0].mxu0
  %v636 = vadd.f32 0.0, %v635
  %v637 = vpop.f32.mrb[0].mxu0
  %638 = vdwg.mxu0
  %v640 = vsel %vm445, %v427, 0
  %v643 = vsel %vm445, %v428, 0
  %v646 = vsel %vm445, %v429, 0
  %v649 = vsel %vm445, %v430, 0
  %v652 = vsel %vm445, %v431, 0
  %v655 = vsel %vm445, %v432, 0
  %v658 = vsel %vm445, %v433, 0
  %v661 = vsel %vm445, %v434, 0
  %v664 = vsel %vm445, %v435, 0
  %v667 = vsel %vm445, %v436, 0
  %v670 = vsel %vm445, %v437, 0
  %v673 = vsel %vm445, %v438, 0
  %v676 = vsel %vm445, %v439, 0
  %v679 = vsel %vm445, %v440, 0
  %v682 = vsel %vm445, %v441, 0
  %v685 = vsel %vm445, %v442, 0
  %687 = vmatprep.subr.mxu0 0.0
  %688 = vmatpush1.msra.mxu0 %v443
  %689 = vmatprep.subr.mxu0 0.0
  %690 = vmatpush1.msra.mxu0 0.0
  %691 = vmatprep.subr.mxu0 0.0
  %692 = vmatpush1.msra.mxu0 0.0
  %693 = vmatprep.subr.mxu0 0.0
  %694 = vmatpush1.msra.mxu0 0.0
  %695 = vmatprep.subr.mxu0 0.0
  %696 = vmatpush1.msra.mxu0 0.0
  %697 = vmatprep.subr.mxu0 0.0
  %698 = vmatpush1.msra.mxu0 0.0
  %699 = vmatprep.subr.mxu0 0.0
  %700 = vmatpush1.msra.mxu0 0.0
  %701 = vmatprep.subr.mxu0 0.0
  %702 = vmatpush1.msra.mxu0 0.0
  %703 = vmatprep.subr.mxu0 0.0
  %704 = vmatpush1.msra.mxu0 0.0
  %705 = vmatprep.subr.mxu0 0.0
  %706 = vmatpush1.msra.mxu0 0.0
  %707 = vmatprep.subr.mxu0 0.0
  %708 = vmatpush1.msra.mxu0 0.0
  %709 = vmatprep.subr.mxu0 0.0
  %710 = vmatpush1.msra.mxu0 0.0
  %711 = vmatprep.subr.mxu0 0.0
  %712 = vmatpush1.msra.mxu0 0.0
  %713 = vmatprep.subr.mxu0 0.0
  %714 = vmatpush1.msra.mxu0 0.0
  %715 = vmatprep.subr.mxu0 0.0
  %716 = vmatpush1.msra.mxu0 0.0
  %717 = vmatprep.subr.mxu0 0.0
  %718 = vmatpush1.msra.mxu0 0.0
  %719 = vmatprep.subr.mxu0 0.0
  %720 = vmatpush1.msra.mxu0 0.0
  %721 = vmatprep.subr.mxu0 0.0
  %722 = vmatpush1.msra.mxu0 0.0
  %723 = vmatprep.subr.mxu0 0.0
  %724 = vmatpush1.msra.mxu0 0.0
  %725 = vmatprep.subr.mxu0 0.0
  %726 = vmatpush1.msra.mxu0 0.0
  %727 = vmatprep.subr.mxu0 0.0
  %728 = vmatpush1.msra.mxu0 0.0
  %729 = vmatprep.subr.mxu0 0.0
  %730 = vmatpush1.msra.mxu0 0.0
  %731 = vmatprep.subr.mxu0 0.0
  %732 = vmatpush1.msra.mxu0 0.0
  %733 = vmatprep.subr.mxu0 0.0
  %734 = vmatpush1.msra.mxu0 0.0
  %735 = vmatprep.subr.mxu0 0.0
  %736 = vmatpush1.msra.mxu0 0.0
  %737 = vmatprep.subr.mxu0 0.0
  %738 = vmatpush1.msra.mxu0 0.0
  %739 = vmatprep.subr.mxu0 0.0
  %740 = vmatpush1.msra.mxu0 0.0
  %741 = vmatprep.subr.mxu0 0.0
  %742 = vmatpush1.msra.mxu0 0.0
  %743 = vmatprep.subr.mxu0 0.0
  %744 = vmatpush1.msra.mxu0 0.0
  %745 = vmatprep.subr.mxu0 0.0
  %746 = vmatpush1.msra.mxu0 0.0
  %747 = vmatprep.subr.mxu0 0.0
  %748 = vmatpush1.msra.mxu0 0.0
  %749 = vmatprep.subr.mxu0 0.0
  %750 = vmatpush1.msra.mxu0 0.0
  %751 = vmatprep.mubr.f32.mxu0 0.0
  %752 = vmatmul.mubr.f32.gmra.mrb[0].mxu0 %v640
  %v753 = vpop.f32.mrb[0].mxu0
  %v754 = vadd.f32 %v561, %v753
  %v755 = vpop.f32.mrb[0].mxu0
  %756 = vmatprep.mubr.f32.mxu0 0.0
  %757 = vmatmul.mubr.f32.gmra.mrb[0].mxu0 %v643
  %v758 = vpop.f32.mrb[0].mxu0
  %v759 = vadd.f32 %v566, %v758
  %v760 = vpop.f32.mrb[0].mxu0
  %761 = vmatprep.mubr.f32.mxu0 0.0
  %762 = vmatmul.mubr.f32.gmra.mrb[0].mxu0 %v646
  %v763 = vpop.f32.mrb[0].mxu0
  %v764 = vadd.f32 %v571, %v763
  %v765 = vpop.f32.mrb[0].mxu0
  %766 = vmatprep.mubr.f32.mxu0 0.0
  %767 = vmatmul.mubr.f32.gmra.mrb[0].mxu0 %v649
  %v768 = vpop.f32.mrb[0].mxu0
  %v769 = vadd.f32 %v576, %v768
  %v770 = vpop.f32.mrb[0].mxu0
  %771 = vmatprep.mubr.f32.mxu0 0.0
  %772 = vmatmul.mubr.f32.gmra.mrb[0].mxu0 %v652
  %v773 = vpop.f32.mrb[0].mxu0
  %v774 = vadd.f32 %v581, %v773
  %v775 = vpop.f32.mrb[0].mxu0
  %776 = vmatprep.mubr.f32.mxu0 0.0
  %777 = vmatmul.mubr.f32.gmra.mrb[0].mxu0 %v655
  %v778 = vpop.f32.mrb[0].mxu0
  %v779 = vadd.f32 %v586, %v778
  %v780 = vpop.f32.mrb[0].mxu0
  %781 = vmatprep.mubr.f32.mxu0 0.0
  %782 = vmatmul.mubr.f32.gmra.mrb[0].mxu0 %v658
  %v783 = vpop.f32.mrb[0].mxu0
  %v784 = vadd.f32 %v591, %v783
  %v785 = vpop.f32.mrb[0].mxu0
  %786 = vmatprep.mubr.f32.mxu0 0.0
  %787 = vmatmul.mubr.f32.gmra.mrb[0].mxu0 %v661
  %v788 = vpop.f32.mrb[0].mxu0
  %v789 = vadd.f32 %v596, %v788
  %v790 = vpop.f32.mrb[0].mxu0
  %791 = vmatprep.mubr.f32.mxu0 0.0
  %792 = vmatmul.mubr.f32.gmra.mrb[0].mxu0 %v664
  %v793 = vpop.f32.mrb[0].mxu0
  %v794 = vadd.f32 %v601, %v793
  %v795 = vpop.f32.mrb[0].mxu0
  %796 = vmatprep.mubr.f32.mxu0 0.0
  %797 = vmatmul.mubr.f32.gmra.mrb[0].mxu0 %v667
  %v798 = vpop.f32.mrb[0].mxu0
  %v799 = vadd.f32 %v606, %v798
  %v800 = vpop.f32.mrb[0].mxu0
  %801 = vmatprep.mubr.f32.mxu0 0.0
  %802 = vmatmul.mubr.f32.gmra.mrb[0].mxu0 %v670
  %v803 = vpop.f32.mrb[0].mxu0
  %v804 = vadd.f32 %v611, %v803
  %v805 = vpop.f32.mrb[0].mxu0
  %806 = vmatprep.mubr.f32.mxu0 0.0
  %807 = vmatmul.mubr.f32.gmra.mrb[0].mxu0 %v673
  %v808 = vpop.f32.mrb[0].mxu0
  %v809 = vadd.f32 %v616, %v808
  %v810 = vpop.f32.mrb[0].mxu0
  %811 = vmatprep.mubr.f32.mxu0 0.0
  %812 = vmatmul.mubr.f32.gmra.mrb[0].mxu0 %v676
  %v813 = vpop.f32.mrb[0].mxu0
  %v814 = vadd.f32 %v621, %v813
  %v815 = vpop.f32.mrb[0].mxu0
  %816 = vmatprep.mubr.f32.mxu0 0.0
  %817 = vmatmul.mubr.f32.gmra.mrb[0].mxu0 %v679
  %v818 = vpop.f32.mrb[0].mxu0
  %v819 = vadd.f32 %v626, %v818
  %v820 = vpop.f32.mrb[0].mxu0
  %821 = vmatprep.mubr.f32.mxu0 0.0
  %822 = vmatmul.mubr.f32.gmra.mrb[0].mxu0 %v682
  %v823 = vpop.f32.mrb[0].mxu0
  %v824 = vadd.f32 %v631, %v823
  %v825 = vpop.f32.mrb[0].mxu0
  %826 = vmatprep.mubr.f32.mxu0 0.0
  %827 = vmatmul.mubr.f32.gmra.mrb[0].mxu0 %v685
  %v828 = vpop.f32.mrb[0].mxu0
  %v829 = vadd.f32 %v636, %v828
  %v830 = vpop.f32.mrb[0].mxu0
  %831 = vdwg.mxu0
  %v832 = vld [vmem:[%s6] sm:$0x1]
  %v834 = vlaneseq
  %v835 = vshrl.u32 %v834, 7
  %v836 = vsub.s32 0, %v835
  %v837 = vrot.slane %v832, %v836
  %v839 = vmul.f32 %v754, %v837
  %v840 = vmul.f32 %v759, %v837
  %v841 = vmul.f32 %v764, %v837
  %v842 = vmul.f32 %v769, %v837
  %v843 = vmul.f32 %v774, %v837
  %v844 = vmul.f32 %v779, %v837
  %v845 = vmul.f32 %v784, %v837
  %v846 = vmul.f32 %v789, %v837
  %v847 = vmul.f32 %v794, %v837
  %v848 = vmul.f32 %v799, %v837
  %v849 = vmul.f32 %v804, %v837
  %v850 = vmul.f32 %v809, %v837
  %v851 = vmul.f32 %v814, %v837
  %v852 = vmul.f32 %v819, %v837
  %v853 = vmul.f32 %v824, %v837
  %v854 = vmul.f32 %v829, %v837
  %v855 = vld [vmem:[%s7] sm:$0x1]
  %v857 = vlaneseq
  %v858 = vshrl.u32 %v857, 7
  %v859 = vsub.s32 0, %v858
  %v860 = vrot.slane %v855, %v859
  %v862 = vadd.f32 %v839, %v860
  %v863 = vadd.f32 %v840, %v860
  %v864 = vadd.f32 %v841, %v860
  %v865 = vadd.f32 %v842, %v860
  %v866 = vadd.f32 %v843, %v860
  %v867 = vadd.f32 %v844, %v860
  %v868 = vadd.f32 %v845, %v860
  %v869 = vadd.f32 %v846, %v860
  %v870 = vadd.f32 %v847, %v860
  %v871 = vadd.f32 %v848, %v860
  %v872 = vadd.f32 %v849, %v860
  %v873 = vadd.f32 %v850, %v860
  %v874 = vadd.f32 %v851, %v860
  %v875 = vadd.f32 %v852, %v860
  %v876 = vadd.f32 %v853, %v860
  %v877 = vadd.f32 %v854, %v860
  %v878 = vmax.f32 %v862, 0.0
  %v879 = vmax.f32 %v863, 0.0
  %v880 = vmax.f32 %v864, 0.0
  %v881 = vmax.f32 %v865, 0.0
  %v882 = vmax.f32 %v866, 0.0
  %v883 = vmax.f32 %v867, 0.0
  %v884 = vmax.f32 %v868, 0.0
  %v885 = vmax.f32 %v869, 0.0
  %v886 = vmax.f32 %v870, 0.0
  %v887 = vmax.f32 %v871, 0.0
  %v888 = vmax.f32 %v872, 0.0
  %v889 = vmax.f32 %v873, 0.0
  %v890 = vmax.f32 %v874, 0.0
  %v891 = vmax.f32 %v875, 0.0
  %v892 = vmax.f32 %v876, 0.0
  %v893 = vmax.f32 %v877, 0.0
  %vm894 = vcmask 261120
  %895 = vst.msk [vmem:[%s8] sm:$0xff] %vm894, %v878
  %896 = vst.msk [vmem:[%s8 + $0x8] sm:$0xff] %vm894, %v879
  %897 = vst.msk [vmem:[%s8 + $0x10] sm:$0xff] %vm894, %v880
  %898 = vst.msk [vmem:[%s8 + $0x18] sm:$0xff] %vm894, %v881
  %899 = vst.msk [vmem:[%s8 + $0x20] sm:$0xff] %vm894, %v882
  %900 = vst.msk [vmem:[%s8 + $0x28] sm:$0xff] %vm894, %v883
  %901 = vst.msk [vmem:[%s8 + $0x30] sm:$0xff] %vm894, %v884
  %902 = vst.msk [vmem:[%s8 + $0x38] sm:$0xff] %vm894, %v885
  %903 = vst.msk [vmem:[%s8 + $0x40] sm:$0xff] %vm894, %v886
  %904 = vst.msk [vmem:[%s8 + $0x48] sm:$0xff] %vm894, %v887
  %905 = vst.msk [vmem:[%s8 + $0x50] sm:$0xff] %vm894, %v888
  %906 = vst.msk [vmem:[%s8 + $0x58] sm:$0xff] %vm894, %v889
  %907 = vst.msk [vmem:[%s8 + $0x60] sm:$0xff] %vm894, %v890
  %908 = vst.msk [vmem:[%s8 + $0x68] sm:$0xff] %vm894, %v891
  %909 = vst.msk [vmem:[%s8 + $0x70] sm:$0xff] %vm894, %v892
  %910 = vst.msk [vmem:[%s8 + $0x78] sm:$0xff] %vm894, %v893
  %v911 = vlaneseq
  %v912 = vshrl.u32 %v911, 7
  %v913 = vadd.s32 %v912, 8
  %v914 = vadd.s32 %v912, 16
  %v915 = vadd.s32 %v912, 24
  %v916 = vadd.s32 %v912, 32
  %v917 = vadd.s32 %v912, 40
  %v918 = vadd.s32 %v912, 48
  %v919 = vadd.s32 %v912, 56
  %v920 = vadd.s32 %v912, 64
  %v921 = vadd.s32 %v912, 72
  %v922 = vadd.s32 %v912, 80
  %v923 = vadd.s32 %v912, 88
  %v924 = vadd.s32 %v912, 96
  %v925 = vadd.s32 %v912, 104
  %v926 = vadd.s32 %v912, 112
  %v927 = vadd.s32 %v912, 120
  %v928 = vsub.s32 %v912, %v103
  %v929 = vsub.s32 %v913, %v103
  %v930 = vsub.s32 %v914, %v103
  %v931 = vsub.s32 %v915, %v103
  %v932 = vsub.s32 %v916, %v103
  %v933 = vsub.s32 %v917, %v103
  %v934 = vsub.s32 %v918, %v103
  %v935 = vsub.s32 %v919, %v103
  %v936 = vsub.s32 %v920, %v103
  %v937 = vsub.s32 %v921, %v103
  %v938 = vsub.s32 %v922, %v103
  %v939 = vsub.s32 %v923, %v103
  %v940 = vsub.s32 %v924, %v103
  %v941 = vsub.s32 %v925, %v103
  %v942 = vsub.s32 %v926, %v103
  %v943 = vsub.s32 %v927, %v103
  %v944 = vcvt.s32.f32 %v86
  %v945 = vcvt.s32.f32 %v87
  %v946 = vcvt.s32.f32 %v88
  %v947 = vcvt.s32.f32 %v89
  %v948 = vcvt.s32.f32 %v90
  %v949 = vcvt.s32.f32 %v91
  %v950 = vcvt.s32.f32 %v92
  %v951 = vcvt.s32.f32 %v93
  %v952 = vcvt.s32.f32 %v94
  %v953 = vcvt.s32.f32 %v95
  %v954 = vcvt.s32.f32 %v96
  %v955 = vcvt.s32.f32 %v97
  %v956 = vcvt.s32.f32 %v98
  %v957 = vcvt.s32.f32 %v99
  %v958 = vcvt.s32.f32 %v100
  %v959 = vcvt.s32.f32 %v101
  %vm960 = vcmp.eq.s32.totalorder %v928, 1
  %vm961 = vcmp.eq.s32.totalorder %v929, 1
  %vm962 = vcmp.eq.s32.totalorder %v930, 1
  %vm963 = vcmp.eq.s32.totalorder %v931, 1
  %vm964 = vcmp.eq.s32.totalorder %v932, 1
  %vm965 = vcmp.eq.s32.totalorder %v933, 1
  %vm966 = vcmp.eq.s32.totalorder %v934, 1
  %vm967 = vcmp.eq.s32.totalorder %v935, 1
  %vm968 = vcmp.eq.s32.totalorder %v936, 1
  %vm969 = vcmp.eq.s32.totalorder %v937, 1
  %vm970 = vcmp.eq.s32.totalorder %v938, 1
  %vm971 = vcmp.eq.s32.totalorder %v939, 1
  %vm972 = vcmp.eq.s32.totalorder %v940, 1
  %vm973 = vcmp.eq.s32.totalorder %v941, 1
  %vm974 = vcmp.eq.s32.totalorder %v942, 1
  %vm975 = vcmp.eq.s32.totalorder %v943, 1
  %v976 = vsel %vm960, 1, 0
  %v977 = vsel %vm961, 1, 0
  %v978 = vsel %vm962, 1, 0
  %v979 = vsel %vm963, 1, 0
  %v980 = vsel %vm964, 1, 0
  %v981 = vsel %vm965, 1, 0
  %v982 = vsel %vm966, 1, 0
  %v983 = vsel %vm967, 1, 0
  %v984 = vsel %vm968, 1, 0
  %v985 = vsel %vm969, 1, 0
  %v986 = vsel %vm970, 1, 0
  %v987 = vsel %vm971, 1, 0
  %v988 = vsel %vm972, 1, 0
  %v989 = vsel %vm973, 1, 0
  %v990 = vsel %vm974, 1, 0
  %v991 = vsel %vm975, 1, 0
  %v992 = vcvt.s32.f32 %v976
  %v993 = vcvt.s32.f32 %v977
  %v994 = vcvt.s32.f32 %v978
  %v995 = vcvt.s32.f32 %v979
  %v996 = vcvt.s32.f32 %v980
  %v997 = vcvt.s32.f32 %v981
  %v998 = vcvt.s32.f32 %v982
  %v999 = vcvt.s32.f32 %v983
  %v1000 = vcvt.s32.f32 %v984
  %v1001 = vcvt.s32.f32 %v985
  %v1002 = vcvt.s32.f32 %v986
  %v1003 = vcvt.s32.f32 %v987
  %v1004 = vcvt.s32.f32 %v988
  %v1005 = vcvt.s32.f32 %v989
  %v1006 = vcvt.s32.f32 %v990
  %v1007 = vcvt.s32.f32 %v991
  %1008 = vmatprep.subr.mxu0 0.0
  %1009 = vmatpush1.msra.mxu0 %v878
  %1010 = vmatprep.subr.mxu0 0.0
  %1011 = vmatpush1.msra.mxu0 %v879
  %1012 = vmatprep.subr.mxu0 0.0
  %1013 = vmatpush1.msra.mxu0 %v880
  %1014 = vmatprep.subr.mxu0 0.0
  %1015 = vmatpush1.msra.mxu0 %v881
  %1016 = vmatprep.subr.mxu0 0.0
  %1017 = vmatpush1.msra.mxu0 %v882
  %1018 = vmatprep.subr.mxu0 0.0
  %1019 = vmatpush1.msra.mxu0 %v883
  %1020 = vmatprep.subr.mxu0 0.0
  %1021 = vmatpush1.msra.mxu0 %v884
  %1022 = vmatprep.subr.mxu0 0.0
  %1023 = vmatpush1.msra.mxu0 %v885
  %1024 = vmatprep.subr.mxu0 0.0
  %1025 = vmatpush1.msra.mxu0 %v886
  %1026 = vmatprep.subr.mxu0 0.0
  %1027 = vmatpush1.msra.mxu0 %v887
  %1028 = vmatprep.subr.mxu0 0.0
  %1029 = vmatpush1.msra.mxu0 %v888
  %1030 = vmatprep.subr.mxu0 0.0
  %1031 = vmatpush1.msra.mxu0 %v889
  %1032 = vmatprep.subr.mxu0 0.0
  %1033 = vmatpush1.msra.mxu0 %v890
  %1034 = vmatprep.subr.mxu0 0.0
  %1035 = vmatpush1.msra.mxu0 %v891
  %1036 = vmatprep.subr.mxu0 0.0
  %1037 = vmatpush1.msra.mxu0 %v892
  %1038 = vmatprep.subr.mxu0 0.0
  %1039 = vmatpush1.msra.mxu0 %v893
  %1040 = vmatprep.subr.mxu0 0.0
  %1041 = vmatpush1.msra.mxu0 0.0
  %1042 = vmatprep.subr.mxu0 0.0
  %1043 = vmatpush1.msra.mxu0 0.0
  %1044 = vmatprep.subr.mxu0 0.0
  %1045 = vmatpush1.msra.mxu0 0.0
  %1046 = vmatprep.subr.mxu0 0.0
  %1047 = vmatpush1.msra.mxu0 0.0
  %1048 = vmatprep.subr.mxu0 0.0
  %1049 = vmatpush1.msra.mxu0 0.0
  %1050 = vmatprep.subr.mxu0 0.0
  %1051 = vmatpush1.msra.mxu0 0.0
  %1052 = vmatprep.subr.mxu0 0.0
  %1053 = vmatpush1.msra.mxu0 0.0
  %1054 = vmatprep.subr.mxu0 0.0
  %1055 = vmatpush1.msra.mxu0 0.0
  %1056 = vmatprep.subr.mxu0 0.0
  %1057 = vmatpush1.msra.mxu0 0.0
  %1058 = vmatprep.subr.mxu0 0.0
  %1059 = vmatpush1.msra.mxu0 0.0
  %1060 = vmatprep.subr.mxu0 0.0
  %1061 = vmatpush1.msra.mxu0 0.0
  %1062 = vmatprep.subr.mxu0 0.0
  %1063 = vmatpush1.msra.mxu0 0.0
  %1064 = vmatprep.subr.mxu0 0.0
  %1065 = vmatpush1.msra.mxu0 0.0
  %1066 = vmatprep.subr.mxu0 0.0
  %1067 = vmatpush1.msra.mxu0 0.0
  %1068 = vmatprep.subr.mxu0 0.0
  %1069 = vmatpush1.msra.mxu0 0.0
  %1070 = vmatprep.subr.mxu0 0.0
  %1071 = vmatpush1.msra.mxu0 0.0
  %1072 = vmatprep.mubr.f32.mxu0 0.0
  %1073 = vmatmul.mubr.f32.gmra.mrb[0].mxu0 %v992
  %v1074 = vpop.f32.mrb[0].mxu0
  %v1075 = vadd.f32 0.0, %v1074
  %v1076 = vpop.f32.mrb[0].mxu0
  %1077 = vmatprep.mubr.f32.mxu0 0.0
  %1078 = vmatmul.mubr.f32.gmra.mrb[0].mxu0 %v993
  %v1079 = vpop.f32.mrb[0].mxu0
  %v1080 = vadd.f32 0.0, %v1079
  %v1081 = vpop.f32.mrb[0].mxu0
  %1082 = vmatprep.mubr.f32.mxu0 0.0
  %1083 = vmatmul.mubr.f32.gmra.mrb[0].mxu0 %v994
  %v1084 = vpop.f32.mrb[0].mxu0
  %v1085 = vadd.f32 0.0, %v1084
  %v1086 = vpop.f32.mrb[0].mxu0
  %1087 = vmatprep.mubr.f32.mxu0 0.0
  %1088 = vmatmul.mubr.f32.gmra.mrb[0].mxu0 %v995
  %v1089 = vpop.f32.mrb[0].mxu0
  %v1090 = vadd.f32 0.0, %v1089
  %v1091 = vpop.f32.mrb[0].mxu0
  %1092 = vmatprep.mubr.f32.mxu0 0.0
  %1093 = vmatmul.mubr.f32.gmra.mrb[0].mxu0 %v996
  %v1094 = vpop.f32.mrb[0].mxu0
  %v1095 = vadd.f32 0.0, %v1094
  %v1096 = vpop.f32.mrb[0].mxu0
  %1097 = vmatprep.mubr.f32.mxu0 0.0
  %1098 = vmatmul.mubr.f32.gmra.mrb[0].mxu0 %v997
  %v1099 = vpop.f32.mrb[0].mxu0
  %v1100 = vadd.f32 0.0, %v1099
  %v1101 = vpop.f32.mrb[0].mxu0
  %1102 = vmatprep.mubr.f32.mxu0 0.0
  %1103 = vmatmul.mubr.f32.gmra.mrb[0].mxu0 %v998
  %v1104 = vpop.f32.mrb[0].mxu0
  %v1105 = vadd.f32 0.0, %v1104
  %v1106 = vpop.f32.mrb[0].mxu0
  %1107 = vmatprep.mubr.f32.mxu0 0.0
  %1108 = vmatmul.mubr.f32.gmra.mrb[0].mxu0 %v999
  %v1109 = vpop.f32.mrb[0].mxu0
  %v1110 = vadd.f32 0.0, %v1109
  %v1111 = vpop.f32.mrb[0].mxu0
  %1112 = vmatprep.mubr.f32.mxu0 0.0
  %1113 = vmatmul.mubr.f32.gmra.mrb[0].mxu0 %v1000
  %v1114 = vpop.f32.mrb[0].mxu0
  %v1115 = vadd.f32 0.0, %v1114
  %v1116 = vpop.f32.mrb[0].mxu0
  %1117 = vmatprep.mubr.f32.mxu0 0.0
  %1118 = vmatmul.mubr.f32.gmra.mrb[0].mxu0 %v1001
  %v1119 = vpop.f32.mrb[0].mxu0
  %v1120 = vadd.f32 0.0, %v1119
  %v1121 = vpop.f32.mrb[0].mxu0
  %1122 = vmatprep.mubr.f32.mxu0 0.0
  %1123 = vmatmul.mubr.f32.gmra.mrb[0].mxu0 %v1002
  %v1124 = vpop.f32.mrb[0].mxu0
  %v1125 = vadd.f32 0.0, %v1124
  %v1126 = vpop.f32.mrb[0].mxu0
  %1127 = vmatprep.mubr.f32.mxu0 0.0
  %1128 = vmatmul.mubr.f32.gmra.mrb[0].mxu0 %v1003
  %v1129 = vpop.f32.mrb[0].mxu0
  %v1130 = vadd.f32 0.0, %v1129
  %v1131 = vpop.f32.mrb[0].mxu0
  %1132 = vmatprep.mubr.f32.mxu0 0.0
  %1133 = vmatmul.mubr.f32.gmra.mrb[0].mxu0 %v1004
  %v1134 = vpop.f32.mrb[0].mxu0
  %v1135 = vadd.f32 0.0, %v1134
  %v1136 = vpop.f32.mrb[0].mxu0
  %1137 = vmatprep.mubr.f32.mxu0 0.0
  %1138 = vmatmul.mubr.f32.gmra.mrb[0].mxu0 %v1005
  %v1139 = vpop.f32.mrb[0].mxu0
  %v1140 = vadd.f32 0.0, %v1139
  %v1141 = vpop.f32.mrb[0].mxu0
  %1142 = vmatprep.mubr.f32.mxu0 0.0
  %1143 = vmatmul.mubr.f32.gmra.mrb[0].mxu0 %v1006
  %v1144 = vpop.f32.mrb[0].mxu0
  %v1145 = vadd.f32 0.0, %v1144
  %v1146 = vpop.f32.mrb[0].mxu0
  %1147 = vmatprep.mubr.f32.mxu0 0.0
  %1148 = vmatmul.mubr.f32.gmra.mrb[0].mxu0 %v1007
  %v1149 = vpop.f32.mrb[0].mxu0
  %v1150 = vadd.f32 0.0, %v1149
  %v1151 = vpop.f32.mrb[0].mxu0
  %1152 = vdwg.mxu0
  %1153 = vmatprep.subr.mxu0 0.0
  %1154 = vmatpush1.msra.mxu0 %v944
  %1155 = vmatprep.subr.mxu0 0.0
  %1156 = vmatpush1.msra.mxu0 %v945
  %1157 = vmatprep.subr.mxu0 0.0
  %1158 = vmatpush1.msra.mxu0 %v946
  %1159 = vmatprep.subr.mxu0 0.0
  %1160 = vmatpush1.msra.mxu0 %v947
  %1161 = vmatprep.subr.mxu0 0.0
  %1162 = vmatpush1.msra.mxu0 %v948
  %1163 = vmatprep.subr.mxu0 0.0
  %1164 = vmatpush1.msra.mxu0 %v949
  %1165 = vmatprep.subr.mxu0 0.0
  %1166 = vmatpush1.msra.mxu0 %v950
  %1167 = vmatprep.subr.mxu0 0.0
  %1168 = vmatpush1.msra.mxu0 %v951
  %1169 = vmatprep.subr.mxu0 0.0
  %1170 = vmatpush1.msra.mxu0 %v952
  %1171 = vmatprep.subr.mxu0 0.0
  %1172 = vmatpush1.msra.mxu0 %v953
  %1173 = vmatprep.subr.mxu0 0.0
  %1174 = vmatpush1.msra.mxu0 %v954
  %1175 = vmatprep.subr.mxu0 0.0
  %1176 = vmatpush1.msra.mxu0 %v955
  %1177 = vmatprep.subr.mxu0 0.0
  %1178 = vmatpush1.msra.mxu0 %v956
  %1179 = vmatprep.subr.mxu0 0.0
  %1180 = vmatpush1.msra.mxu0 %v957
  %1181 = vmatprep.subr.mxu0 0.0
  %1182 = vmatpush1.msra.mxu0 %v958
  %1183 = vmatprep.subr.mxu0 0.0
  %1184 = vmatpush1.msra.mxu0 %v959
  %1185 = vmatprep.subr.mxu0 0.0
  %1186 = vmatpush1.msra.mxu0 0.0
  %1187 = vmatprep.subr.mxu0 0.0
  %1188 = vmatpush1.msra.mxu0 0.0
  %1189 = vmatprep.subr.mxu0 0.0
  %1190 = vmatpush1.msra.mxu0 0.0
  %1191 = vmatprep.subr.mxu0 0.0
  %1192 = vmatpush1.msra.mxu0 0.0
  %1193 = vmatprep.subr.mxu0 0.0
  %1194 = vmatpush1.msra.mxu0 0.0
  %1195 = vmatprep.subr.mxu0 0.0
  %1196 = vmatpush1.msra.mxu0 0.0
  %1197 = vmatprep.subr.mxu0 0.0
  %1198 = vmatpush1.msra.mxu0 0.0
  %1199 = vmatprep.subr.mxu0 0.0
  %1200 = vmatpush1.msra.mxu0 0.0
  %1201 = vmatprep.subr.mxu0 0.0
  %1202 = vmatpush1.msra.mxu0 0.0
  %1203 = vmatprep.subr.mxu0 0.0
  %1204 = vmatpush1.msra.mxu0 0.0
  %1205 = vmatprep.subr.mxu0 0.0
  %1206 = vmatpush1.msra.mxu0 0.0
  %1207 = vmatprep.subr.mxu0 0.0
  %1208 = vmatpush1.msra.mxu0 0.0
  %1209 = vmatprep.subr.mxu0 0.0
  %1210 = vmatpush1.msra.mxu0 0.0
  %1211 = vmatprep.subr.mxu0 0.0
  %1212 = vmatpush1.msra.mxu0 0.0
  %1213 = vmatprep.subr.mxu0 0.0
  %1214 = vmatpush1.msra.mxu0 0.0
  %1215 = vmatprep.subr.mxu0 0.0
  %1216 = vmatpush1.msra.mxu0 0.0
  %1217 = vmatprep.mubr.f32.mxu0 0.0
  %1218 = vmatmul.mubr.f32.gmra.mrb[0].mxu0 %v992
  %v1219 = vpop.f32.mrb[0].mxu0
  %v1220 = vadd.f32 0.0, %v1219
  %v1221 = vpop.f32.mrb[0].mxu0
  %1222 = vmatprep.mubr.f32.mxu0 0.0
  %1223 = vmatmul.mubr.f32.gmra.mrb[0].mxu0 %v993
  %v1224 = vpop.f32.mrb[0].mxu0
  %v1225 = vadd.f32 0.0, %v1224
  %v1226 = vpop.f32.mrb[0].mxu0
  %1227 = vmatprep.mubr.f32.mxu0 0.0
  %1228 = vmatmul.mubr.f32.gmra.mrb[0].mxu0 %v994
  %v1229 = vpop.f32.mrb[0].mxu0
  %v1230 = vadd.f32 0.0, %v1229
  %v1231 = vpop.f32.mrb[0].mxu0
  %1232 = vmatprep.mubr.f32.mxu0 0.0
  %1233 = vmatmul.mubr.f32.gmra.mrb[0].mxu0 %v995
  %v1234 = vpop.f32.mrb[0].mxu0
  %v1235 = vadd.f32 0.0, %v1234
  %v1236 = vpop.f32.mrb[0].mxu0
  %1237 = vmatprep.mubr.f32.mxu0 0.0
  %1238 = vmatmul.mubr.f32.gmra.mrb[0].mxu0 %v996
  %v1239 = vpop.f32.mrb[0].mxu0
  %v1240 = vadd.f32 0.0, %v1239
  %v1241 = vpop.f32.mrb[0].mxu0
  %1242 = vmatprep.mubr.f32.mxu0 0.0
  %1243 = vmatmul.mubr.f32.gmra.mrb[0].mxu0 %v997
  %v1244 = vpop.f32.mrb[0].mxu0
  %v1245 = vadd.f32 0.0, %v1244
  %v1246 = vpop.f32.mrb[0].mxu0
  %1247 = vmatprep.mubr.f32.mxu0 0.0
  %1248 = vmatmul.mubr.f32.gmra.mrb[0].mxu0 %v998
  %v1249 = vpop.f32.mrb[0].mxu0
  %v1250 = vadd.f32 0.0, %v1249
  %v1251 = vpop.f32.mrb[0].mxu0
  %1252 = vmatprep.mubr.f32.mxu0 0.0
  %1253 = vmatmul.mubr.f32.gmra.mrb[0].mxu0 %v999
  %v1254 = vpop.f32.mrb[0].mxu0
  %v1255 = vadd.f32 0.0, %v1254
  %v1256 = vpop.f32.mrb[0].mxu0
  %1257 = vmatprep.mubr.f32.mxu0 0.0
  %1258 = vmatmul.mubr.f32.gmra.mrb[0].mxu0 %v1000
  %v1259 = vpop.f32.mrb[0].mxu0
  %v1260 = vadd.f32 0.0, %v1259
  %v1261 = vpop.f32.mrb[0].mxu0
  %1262 = vmatprep.mubr.f32.mxu0 0.0
  %1263 = vmatmul.mubr.f32.gmra.mrb[0].mxu0 %v1001
  %v1264 = vpop.f32.mrb[0].mxu0
  %v1265 = vadd.f32 0.0, %v1264
  %v1266 = vpop.f32.mrb[0].mxu0
  %1267 = vmatprep.mubr.f32.mxu0 0.0
  %1268 = vmatmul.mubr.f32.gmra.mrb[0].mxu0 %v1002
  %v1269 = vpop.f32.mrb[0].mxu0
  %v1270 = vadd.f32 0.0, %v1269
  %v1271 = vpop.f32.mrb[0].mxu0
  %1272 = vmatprep.mubr.f32.mxu0 0.0
  %1273 = vmatmul.mubr.f32.gmra.mrb[0].mxu0 %v1003
  %v1274 = vpop.f32.mrb[0].mxu0
  %v1275 = vadd.f32 0.0, %v1274
  %v1276 = vpop.f32.mrb[0].mxu0
  %1277 = vmatprep.mubr.f32.mxu0 0.0
  %1278 = vmatmul.mubr.f32.gmra.mrb[0].mxu0 %v1004
  %v1279 = vpop.f32.mrb[0].mxu0
  %v1280 = vadd.f32 0.0, %v1279
  %v1281 = vpop.f32.mrb[0].mxu0
  %1282 = vmatprep.mubr.f32.mxu0 0.0
  %1283 = vmatmul.mubr.f32.gmra.mrb[0].mxu0 %v1005
  %v1284 = vpop.f32.mrb[0].mxu0
  %v1285 = vadd.f32 0.0, %v1284
  %v1286 = vpop.f32.mrb[0].mxu0
  %1287 = vmatprep.mubr.f32.mxu0 0.0
  %1288 = vmatmul.mubr.f32.gmra.mrb[0].mxu0 %v1006
  %v1289 = vpop.f32.mrb[0].mxu0
  %v1290 = vadd.f32 0.0, %v1289
  %v1291 = vpop.f32.mrb[0].mxu0
  %1292 = vmatprep.mubr.f32.mxu0 0.0
  %1293 = vmatmul.mubr.f32.gmra.mrb[0].mxu0 %v1007
  %v1294 = vpop.f32.mrb[0].mxu0
  %v1295 = vadd.f32 0.0, %v1294
  %v1296 = vpop.f32.mrb[0].mxu0
  %1297 = vdwg.mxu0
  %vm1298 = vcmp.eq.f32.partialorder %v1220, %v944
  %vm1299 = vcmp.eq.f32.partialorder %v1225, %v945
  %vm1300 = vcmp.eq.f32.partialorder %v1230, %v946
  %vm1301 = vcmp.eq.f32.partialorder %v1235, %v947
  %vm1302 = vcmp.eq.f32.partialorder %v1240, %v948
  %vm1303 = vcmp.eq.f32.partialorder %v1245, %v949
  %vm1304 = vcmp.eq.f32.partialorder %v1250, %v950
  %vm1305 = vcmp.eq.f32.partialorder %v1255, %v951
  %vm1306 = vcmp.eq.f32.partialorder %v1260, %v952
  %vm1307 = vcmp.eq.f32.partialorder %v1265, %v953
  %vm1308 = vcmp.eq.f32.partialorder %v1270, %v954
  %vm1309 = vcmp.eq.f32.partialorder %v1275, %v955
  %vm1310 = vcmp.eq.f32.partialorder %v1280, %v956
  %vm1311 = vcmp.eq.f32.partialorder %v1285, %v957
  %vm1312 = vcmp.eq.f32.partialorder %v1290, %v958
  %vm1313 = vcmp.eq.f32.partialorder %v1295, %v959
  %v1314 = vmax.f32 %v878, %v1075
  %v1315 = vmax.f32 %v879, %v1080
  %v1316 = vmax.f32 %v880, %v1085
  %v1317 = vmax.f32 %v881, %v1090
  %v1318 = vmax.f32 %v882, %v1095
  %v1319 = vmax.f32 %v883, %v1100
  %v1320 = vmax.f32 %v884, %v1105
  %v1321 = vmax.f32 %v885, %v1110
  %v1322 = vmax.f32 %v886, %v1115
  %v1323 = vmax.f32 %v887, %v1120
  %v1324 = vmax.f32 %v888, %v1125
  %v1325 = vmax.f32 %v889, %v1130
  %v1326 = vmax.f32 %v890, %v1135
  %v1327 = vmax.f32 %v891, %v1140
  %v1328 = vmax.f32 %v892, %v1145
  %v1329 = vmax.f32 %v893, %v1150
  %v1330 = vsel %vm1298, 1, 0
  %v1331 = vsel %vm1299, 1, 0
  %v1332 = vsel %vm1300, 1, 0
  %v1333 = vsel %vm1301, 1, 0
  %v1334 = vsel %vm1302, 1, 0
  %v1335 = vsel %vm1303, 1, 0
  %v1336 = vsel %vm1304, 1, 0
  %v1337 = vsel %vm1305, 1, 0
  %v1338 = vsel %vm1306, 1, 0
  %v1339 = vsel %vm1307, 1, 0
  %v1340 = vsel %vm1308, 1, 0
  %v1341 = vsel %vm1309, 1, 0
  %v1342 = vsel %vm1310, 1, 0
  %v1343 = vsel %vm1311, 1, 0
  %v1344 = vsel %vm1312, 1, 0
  %v1345 = vsel %vm1313, 1, 0
  %1346 = vset.pattern.permute.xlu0 0
  %1347 = vperm.xlu0 %1346, %v1330
  %v1348 = vpop.permute.xlu0 %1347
  %1349 = vset.pattern.permute.xlu0 0
  %1350 = vperm.xlu0 %1349, %v1331
  %v1351 = vpop.permute.xlu0 %1350
  %1352 = vset.pattern.permute.xlu0 0
  %1353 = vperm.xlu0 %1352, %v1332
  %v1354 = vpop.permute.xlu0 %1353
  %1355 = vset.pattern.permute.xlu0 0
  %1356 = vperm.xlu0 %1355, %v1333
  %v1357 = vpop.permute.xlu0 %1356
  %1358 = vset.pattern.permute.xlu0 0
  %1359 = vperm.xlu0 %1358, %v1334
  %v1360 = vpop.permute.xlu0 %1359
  %1361 = vset.pattern.permute.xlu0 0
  %1362 = vperm.xlu0 %1361, %v1335
  %v1363 = vpop.permute.xlu0 %1362
  %1364 = vset.pattern.permute.xlu0 0
  %1365 = vperm.xlu0 %1364, %v1336
  %v1366 = vpop.permute.xlu0 %1365
  %1367 = vset.pattern.permute.xlu0 0
  %1368 = vperm.xlu0 %1367, %v1337
  %v1369 = vpop.permute.xlu0 %1368
  %1370 = vset.pattern.permute.xlu0 0
  %1371 = vperm.xlu0 %1370, %v1338
  %v1372 = vpop.permute.xlu0 %1371
  %1373 = vset.pattern.permute.xlu0 0
  %1374 = vperm.xlu0 %1373, %v1339
  %v1375 = vpop.permute.xlu0 %1374
  %1376 = vset.pattern.permute.xlu0 0
  %1377 = vperm.xlu0 %1376, %v1340
  %v1378 = vpop.permute.xlu0 %1377
  %1379 = vset.pattern.permute.xlu0 0
  %1380 = vperm.xlu0 %1379, %v1341
  %v1381 = vpop.permute.xlu0 %1380
  %1382 = vset.pattern.permute.xlu0 0
  %1383 = vperm.xlu0 %1382, %v1342
  %v1384 = vpop.permute.xlu0 %1383
  %1385 = vset.pattern.permute.xlu0 0
  %1386 = vperm.xlu0 %1385, %v1343
  %v1387 = vpop.permute.xlu0 %1386
  %1388 = vset.pattern.permute.xlu0 0
  %1389 = vperm.xlu0 %1388, %v1344
  %v1390 = vpop.permute.xlu0 %1389
  %1391 = vset.pattern.permute.xlu0 0
  %1392 = vperm.xlu0 %1391, %v1345
  %v1393 = vpop.permute.xlu0 %1392
  %vm1394 = vcmp.eq.s32.totalorder %v1348, 1
  %vm1395 = vcmp.eq.s32.totalorder %v1351, 1
  %vm1396 = vcmp.eq.s32.totalorder %v1354, 1
  %vm1397 = vcmp.eq.s32.totalorder %v1357, 1
  %vm1398 = vcmp.eq.s32.totalorder %v1360, 1
  %vm1399 = vcmp.eq.s32.totalorder %v1363, 1
  %vm1400 = vcmp.eq.s32.totalorder %v1366, 1
  %vm1401 = vcmp.eq.s32.totalorder %v1369, 1
  %vm1402 = vcmp.eq.s32.totalorder %v1372, 1
  %vm1403 = vcmp.eq.s32.totalorder %v1375, 1
  %vm1404 = vcmp.eq.s32.totalorder %v1378, 1
  %vm1405 = vcmp.eq.s32.totalorder %v1381, 1
  %vm1406 = vcmp.eq.s32.totalorder %v1384, 1
  %vm1407 = vcmp.eq.s32.totalorder %v1387, 1
  %vm1408 = vcmp.eq.s32.totalorder %v1390, 1
  %vm1409 = vcmp.eq.s32.totalorder %v1393, 1
  %v1410 = vsel %vm1394, %v1314, %v878
  %v1411 = vsel %vm1395, %v1315, %v879
  %v1412 = vsel %vm1396, %v1316, %v880
  %v1413 = vsel %vm1397, %v1317, %v881
  %v1414 = vsel %vm1398, %v1318, %v882
  %v1415 = vsel %vm1399, %v1319, %v883
  %v1416 = vsel %vm1400, %v1320, %v884
  %v1417 = vsel %vm1401, %v1321, %v885
  %v1418 = vsel %vm1402, %v1322, %v886
  %v1419 = vsel %vm1403, %v1323, %v887
  %v1420 = vsel %vm1404, %v1324, %v888
  %v1421 = vsel %vm1405, %v1325, %v889
  %v1422 = vsel %vm1406, %v1326, %v890
  %v1423 = vsel %vm1407, %v1327, %v891
  %v1424 = vsel %vm1408, %v1328, %v892
  %v1425 = vsel %vm1409, %v1329, %v893
  %vm1426 = vcmp.eq.s32.totalorder %v928, 2
  %vm1427 = vcmp.eq.s32.totalorder %v929, 2
  %vm1428 = vcmp.eq.s32.totalorder %v930, 2
  %vm1429 = vcmp.eq.s32.totalorder %v931, 2
  %vm1430 = vcmp.eq.s32.totalorder %v932, 2
  %vm1431 = vcmp.eq.s32.totalorder %v933, 2
  %vm1432 = vcmp.eq.s32.totalorder %v934, 2
  %vm1433 = vcmp.eq.s32.totalorder %v935, 2
  %vm1434 = vcmp.eq.s32.totalorder %v936, 2
  %vm1435 = vcmp.eq.s32.totalorder %v937, 2
  %vm1436 = vcmp.eq.s32.totalorder %v938, 2
  %vm1437 = vcmp.eq.s32.totalorder %v939, 2
  %vm1438 = vcmp.eq.s32.totalorder %v940, 2
  %vm1439 = vcmp.eq.s32.totalorder %v941, 2
  %vm1440 = vcmp.eq.s32.totalorder %v942, 2
  %vm1441 = vcmp.eq.s32.totalorder %v943, 2
  %v1442 = vsel %vm1426, 1, 0
  %v1443 = vsel %vm1427, 1, 0
  %v1444 = vsel %vm1428, 1, 0
  %v1445 = vsel %vm1429, 1, 0
  %v1446 = vsel %vm1430, 1, 0
  %v1447 = vsel %vm1431, 1, 0
  %v1448 = vsel %vm1432, 1, 0
  %v1449 = vsel %vm1433, 1, 0
  %v1450 = vsel %vm1434, 1, 0
  %v1451 = vsel %vm1435, 1, 0
  %v1452 = vsel %vm1436, 1, 0
  %v1453 = vsel %vm1437, 1, 0
  %v1454 = vsel %vm1438, 1, 0
  %v1455 = vsel %vm1439, 1, 0
  %v1456 = vsel %vm1440, 1, 0
  %v1457 = vsel %vm1441, 1, 0
  %v1458 = vcvt.s32.f32 %v1442
  %v1459 = vcvt.s32.f32 %v1443
  %v1460 = vcvt.s32.f32 %v1444
  %v1461 = vcvt.s32.f32 %v1445
  %v1462 = vcvt.s32.f32 %v1446
  %v1463 = vcvt.s32.f32 %v1447
  %v1464 = vcvt.s32.f32 %v1448
  %v1465 = vcvt.s32.f32 %v1449
  %v1466 = vcvt.s32.f32 %v1450
  %v1467 = vcvt.s32.f32 %v1451
  %v1468 = vcvt.s32.f32 %v1452
  %v1469 = vcvt.s32.f32 %v1453
  %v1470 = vcvt.s32.f32 %v1454
  %v1471 = vcvt.s32.f32 %v1455
  %v1472 = vcvt.s32.f32 %v1456
  %v1473 = vcvt.s32.f32 %v1457
  %1474 = vmatprep.subr.mxu0 0.0
  %1475 = vmatpush1.msra.mxu0 %v1410
  %1476 = vmatprep.subr.mxu0 0.0
  %1477 = vmatpush1.msra.mxu0 %v1411
  %1478 = vmatprep.subr.mxu0 0.0
  %1479 = vmatpush1.msra.mxu0 %v1412
  %1480 = vmatprep.subr.mxu0 0.0
  %1481 = vmatpush1.msra.mxu0 %v1413
  %1482 = vmatprep.subr.mxu0 0.0
  %1483 = vmatpush1.msra.mxu0 %v1414
  %1484 = vmatprep.subr.mxu0 0.0
  %1485 = vmatpush1.msra.mxu0 %v1415
  %1486 = vmatprep.subr.mxu0 0.0
  %1487 = vmatpush1.msra.mxu0 %v1416
  %1488 = vmatprep.subr.mxu0 0.0
  %1489 = vmatpush1.msra.mxu0 %v1417
  %1490 = vmatprep.subr.mxu0 0.0
  %1491 = vmatpush1.msra.mxu0 %v1418
  %1492 = vmatprep.subr.mxu0 0.0
  %1493 = vmatpush1.msra.mxu0 %v1419
  %1494 = vmatprep.subr.mxu0 0.0
  %1495 = vmatpush1.msra.mxu0 %v1420
  %1496 = vmatprep.subr.mxu0 0.0
  %1497 = vmatpush1.msra.mxu0 %v1421
  %1498 = vmatprep.subr.mxu0 0.0
  %1499 = vmatpush1.msra.mxu0 %v1422
  %1500 = vmatprep.subr.mxu0 0.0
  %1501 = vmatpush1.msra.mxu0 %v1423
  %1502 = vmatprep.subr.mxu0 0.0
  %1503 = vmatpush1.msra.mxu0 %v1424
  %1504 = vmatprep.subr.mxu0 0.0
  %1505 = vmatpush1.msra.mxu0 %v1425
  %1506 = vmatprep.subr.mxu0 0.0
  %1507 = vmatpush1.msra.mxu0 0.0
  %1508 = vmatprep.subr.mxu0 0.0
  %1509 = vmatpush1.msra.mxu0 0.0
  %1510 = vmatprep.subr.mxu0 0.0
  %1511 = vmatpush1.msra.mxu0 0.0
  %1512 = vmatprep.subr.mxu0 0.0
  %1513 = vmatpush1.msra.mxu0 0.0
  %1514 = vmatprep.subr.mxu0 0.0
  %1515 = vmatpush1.msra.mxu0 0.0
  %1516 = vmatprep.subr.mxu0 0.0
  %1517 = vmatpush1.msra.mxu0 0.0
  %1518 = vmatprep.subr.mxu0 0.0
  %1519 = vmatpush1.msra.mxu0 0.0
  %1520 = vmatprep.subr.mxu0 0.0
  %1521 = vmatpush1.msra.mxu0 0.0
  %1522 = vmatprep.subr.mxu0 0.0
  %1523 = vmatpush1.msra.mxu0 0.0
  %1524 = vmatprep.subr.mxu0 0.0
  %1525 = vmatpush1.msra.mxu0 0.0
  %1526 = vmatprep.subr.mxu0 0.0
  %1527 = vmatpush1.msra.mxu0 0.0
  %1528 = vmatprep.subr.mxu0 0.0
  %1529 = vmatpush1.msra.mxu0 0.0
  %1530 = vmatprep.subr.mxu0 0.0
  %1531 = vmatpush1.msra.mxu0 0.0
  %1532 = vmatprep.subr.mxu0 0.0
  %1533 = vmatpush1.msra.mxu0 0.0
  %1534 = vmatprep.subr.mxu0 0.0
  %1535 = vmatpush1.msra.mxu0 0.0
  %1536 = vmatprep.subr.mxu0 0.0
  %1537 = vmatpush1.msra.mxu0 0.0
  %1538 = vmatprep.mubr.f32.mxu0 0.0
  %1539 = vmatmul.mubr.f32.gmra.mrb[0].mxu0 %v1458
  %v1540 = vpop.f32.mrb[0].mxu0
  %v1541 = vadd.f32 0.0, %v1540
  %v1542 = vpop.f32.mrb[0].mxu0
  %1543 = vmatprep.mubr.f32.mxu0 0.0
  %1544 = vmatmul.mubr.f32.gmra.mrb[0].mxu0 %v1459
  %v1545 = vpop.f32.mrb[0].mxu0
  %v1546 = vadd.f32 0.0, %v1545
  %v1547 = vpop.f32.mrb[0].mxu0
  %1548 = vmatprep.mubr.f32.mxu0 0.0
  %1549 = vmatmul.mubr.f32.gmra.mrb[0].mxu0 %v1460
  %v1550 = vpop.f32.mrb[0].mxu0
  %v1551 = vadd.f32 0.0, %v1550
  %v1552 = vpop.f32.mrb[0].mxu0
  %1553 = vmatprep.mubr.f32.mxu0 0.0
  %1554 = vmatmul.mubr.f32.gmra.mrb[0].mxu0 %v1461
  %v1555 = vpop.f32.mrb[0].mxu0
  %v1556 = vadd.f32 0.0, %v1555
  %v1557 = vpop.f32.mrb[0].mxu0
  %1558 = vmatprep.mubr.f32.mxu0 0.0
  %1559 = vmatmul.mubr.f32.gmra.mrb[0].mxu0 %v1462
  %v1560 = vpop.f32.mrb[0].mxu0
  %v1561 = vadd.f32 0.0, %v1560
  %v1562 = vpop.f32.mrb[0].mxu0
  %1563 = vmatprep.mubr.f32.mxu0 0.0
  %1564 = vmatmul.mubr.f32.gmra.mrb[0].mxu0 %v1463
  %v1565 = vpop.f32.mrb[0].mxu0
  %v1566 = vadd.f32 0.0, %v1565
  %v1567 = vpop.f32.mrb[0].mxu0
  %1568 = vmatprep.mubr.f32.mxu0 0.0
  %1569 = vmatmul.mubr.f32.gmra.mrb[0].mxu0 %v1464
  %v1570 = vpop.f32.mrb[0].mxu0
  %v1571 = vadd.f32 0.0, %v1570
  %v1572 = vpop.f32.mrb[0].mxu0
  %1573 = vmatprep.mubr.f32.mxu0 0.0
  %1574 = vmatmul.mubr.f32.gmra.mrb[0].mxu0 %v1465
  %v1575 = vpop.f32.mrb[0].mxu0
  %v1576 = vadd.f32 0.0, %v1575
  %v1577 = vpop.f32.mrb[0].mxu0
  %1578 = vmatprep.mubr.f32.mxu0 0.0
  %1579 = vmatmul.mubr.f32.gmra.mrb[0].mxu0 %v1466
  %v1580 = vpop.f32.mrb[0].mxu0
  %v1581 = vadd.f32 0.0, %v1580
  %v1582 = vpop.f32.mrb[0].mxu0
  %1583 = vmatprep.mubr.f32.mxu0 0.0
  %1584 = vmatmul.mubr.f32.gmra.mrb[0].mxu0 %v1467
  %v1585 = vpop.f32.mrb[0].mxu0
  %v1586 = vadd.f32 0.0, %v1585
  %v1587 = vpop.f32.mrb[0].mxu0
  %1588 = vmatprep.mubr.f32.mxu0 0.0
  %1589 = vmatmul.mubr.f32.gmra.mrb[0].mxu0 %v1468
  %v1590 = vpop.f32.mrb[0].mxu0
  %v1591 = vadd.f32 0.0, %v1590
  %v1592 = vpop.f32.mrb[0].mxu0
  %1593 = vmatprep.mubr.f32.mxu0 0.0
  %1594 = vmatmul.mubr.f32.gmra.mrb[0].mxu0 %v1469
  %v1595 = vpop.f32.mrb[0].mxu0
  %v1596 = vadd.f32 0.0, %v1595
  %v1597 = vpop.f32.mrb[0].mxu0
  %1598 = vmatprep.mubr.f32.mxu0 0.0
  %1599 = vmatmul.mubr.f32.gmra.mrb[0].mxu0 %v1470
  %v1600 = vpop.f32.mrb[0].mxu0
  %v1601 = vadd.f32 0.0, %v1600
  %v1602 = vpop.f32.mrb[0].mxu0
  %1603 = vmatprep.mubr.f32.mxu0 0.0
  %1604 = vmatmul.mubr.f32.gmra.mrb[0].mxu0 %v1471
  %v1605 = vpop.f32.mrb[0].mxu0
  %v1606 = vadd.f32 0.0, %v1605
  %v1607 = vpop.f32.mrb[0].mxu0
  %1608 = vmatprep.mubr.f32.mxu0 0.0
  %1609 = vmatmul.mubr.f32.gmra.mrb[0].mxu0 %v1472
  %v1610 = vpop.f32.mrb[0].mxu0
  %v1611 = vadd.f32 0.0, %v1610
  %v1612 = vpop.f32.mrb[0].mxu0
  %1613 = vmatprep.mubr.f32.mxu0 0.0
  %1614 = vmatmul.mubr.f32.gmra.mrb[0].mxu0 %v1473
  %v1615 = vpop.f32.mrb[0].mxu0
  %v1616 = vadd.f32 0.0, %v1615
  %v1617 = vpop.f32.mrb[0].mxu0
  %1618 = vdwg.mxu0
  %1619 = vmatprep.subr.mxu0 0.0
  %1620 = vmatpush1.msra.mxu0 %v944
  %1621 = vmatprep.subr.mxu0 0.0
  %1622 = vmatpush1.msra.mxu0 %v945
  %1623 = vmatprep.subr.mxu0 0.0
  %1624 = vmatpush1.msra.mxu0 %v946
  %1625 = vmatprep.subr.mxu0 0.0
  %1626 = vmatpush1.msra.mxu0 %v947
  %1627 = vmatprep.subr.mxu0 0.0
  %1628 = vmatpush1.msra.mxu0 %v948
  %1629 = vmatprep.subr.mxu0 0.0
  %1630 = vmatpush1.msra.mxu0 %v949
  %1631 = vmatprep.subr.mxu0 0.0
  %1632 = vmatpush1.msra.mxu0 %v950
  %1633 = vmatprep.subr.mxu0 0.0
  %1634 = vmatpush1.msra.mxu0 %v951
  %1635 = vmatprep.subr.mxu0 0.0
  %1636 = vmatpush1.msra.mxu0 %v952
  %1637 = vmatprep.subr.mxu0 0.0
  %1638 = vmatpush1.msra.mxu0 %v953
  %1639 = vmatprep.subr.mxu0 0.0
  %1640 = vmatpush1.msra.mxu0 %v954
  %1641 = vmatprep.subr.mxu0 0.0
  %1642 = vmatpush1.msra.mxu0 %v955
  %1643 = vmatprep.subr.mxu0 0.0
  %1644 = vmatpush1.msra.mxu0 %v956
  %1645 = vmatprep.subr.mxu0 0.0
  %1646 = vmatpush1.msra.mxu0 %v957
  %1647 = vmatprep.subr.mxu0 0.0
  %1648 = vmatpush1.msra.mxu0 %v958
  %1649 = vmatprep.subr.mxu0 0.0
  %1650 = vmatpush1.msra.mxu0 %v959
  %1651 = vmatprep.subr.mxu0 0.0
  %1652 = vmatpush1.msra.mxu0 0.0
  %1653 = vmatprep.subr.mxu0 0.0
  %1654 = vmatpush1.msra.mxu0 0.0
  %1655 = vmatprep.subr.mxu0 0.0
  %1656 = vmatpush1.msra.mxu0 0.0
  %1657 = vmatprep.subr.mxu0 0.0
  %1658 = vmatpush1.msra.mxu0 0.0
  %1659 = vmatprep.subr.mxu0 0.0
  %1660 = vmatpush1.msra.mxu0 0.0
  %1661 = vmatprep.subr.mxu0 0.0
  %1662 = vmatpush1.msra.mxu0 0.0
  %1663 = vmatprep.subr.mxu0 0.0
  %1664 = vmatpush1.msra.mxu0 0.0
  %1665 = vmatprep.subr.mxu0 0.0
  %1666 = vmatpush1.msra.mxu0 0.0
  %1667 = vmatprep.subr.mxu0 0.0
  %1668 = vmatpush1.msra.mxu0 0.0
  %1669 = vmatprep.subr.mxu0 0.0
  %1670 = vmatpush1.msra.mxu0 0.0
  %1671 = vmatprep.subr.mxu0 0.0
  %1672 = vmatpush1.msra.mxu0 0.0
  %1673 = vmatprep.subr.mxu0 0.0
  %1674 = vmatpush1.msra.mxu0 0.0
  %1675 = vmatprep.subr.mxu0 0.0
  %1676 = vmatpush1.msra.mxu0 0.0
  %1677 = vmatprep.subr.mxu0 0.0
  %1678 = vmatpush1.msra.mxu0 0.0
  %1679 = vmatprep.subr.mxu0 0.0
  %1680 = vmatpush1.msra.mxu0 0.0
  %1681 = vmatprep.subr.mxu0 0.0
  %1682 = vmatpush1.msra.mxu0 0.0
  %1683 = vmatprep.mubr.f32.mxu0 0.0
  %1684 = vmatmul.mubr.f32.gmra.mrb[0].mxu0 %v1458
  %v1685 = vpop.f32.mrb[0].mxu0
  %v1686 = vadd.f32 0.0, %v1685
  %v1687 = vpop.f32.mrb[0].mxu0
  %1688 = vmatprep.mubr.f32.mxu0 0.0
  %1689 = vmatmul.mubr.f32.gmra.mrb[0].mxu0 %v1459
  %v1690 = vpop.f32.mrb[0].mxu0
  %v1691 = vadd.f32 0.0, %v1690
  %v1692 = vpop.f32.mrb[0].mxu0
  %1693 = vmatprep.mubr.f32.mxu0 0.0
  %1694 = vmatmul.mubr.f32.gmra.mrb[0].mxu0 %v1460
  %v1695 = vpop.f32.mrb[0].mxu0
  %v1696 = vadd.f32 0.0, %v1695
  %v1697 = vpop.f32.mrb[0].mxu0
  %1698 = vmatprep.mubr.f32.mxu0 0.0
  %1699 = vmatmul.mubr.f32.gmra.mrb[0].mxu0 %v1461
  %v1700 = vpop.f32.mrb[0].mxu0
  %v1701 = vadd.f32 0.0, %v1700
  %v1702 = vpop.f32.mrb[0].mxu0
  %1703 = vmatprep.mubr.f32.mxu0 0.0
  %1704 = vmatmul.mubr.f32.gmra.mrb[0].mxu0 %v1462
  %v1705 = vpop.f32.mrb[0].mxu0
  %v1706 = vadd.f32 0.0, %v1705
  %v1707 = vpop.f32.mrb[0].mxu0
  %1708 = vmatprep.mubr.f32.mxu0 0.0
  %1709 = vmatmul.mubr.f32.gmra.mrb[0].mxu0 %v1463
  %v1710 = vpop.f32.mrb[0].mxu0
  %v1711 = vadd.f32 0.0, %v1710
  %v1712 = vpop.f32.mrb[0].mxu0
  %1713 = vmatprep.mubr.f32.mxu0 0.0
  %1714 = vmatmul.mubr.f32.gmra.mrb[0].mxu0 %v1464
  %v1715 = vpop.f32.mrb[0].mxu0
  %v1716 = vadd.f32 0.0, %v1715
  %v1717 = vpop.f32.mrb[0].mxu0
  %1718 = vmatprep.mubr.f32.mxu0 0.0
  %1719 = vmatmul.mubr.f32.gmra.mrb[0].mxu0 %v1465
  %v1720 = vpop.f32.mrb[0].mxu0
  %v1721 = vadd.f32 0.0, %v1720
  %v1722 = vpop.f32.mrb[0].mxu0
  %1723 = vmatprep.mubr.f32.mxu0 0.0
  %1724 = vmatmul.mubr.f32.gmra.mrb[0].mxu0 %v1466
  %v1725 = vpop.f32.mrb[0].mxu0
  %v1726 = vadd.f32 0.0, %v1725
  %v1727 = vpop.f32.mrb[0].mxu0
  %1728 = vmatprep.mubr.f32.mxu0 0.0
  %1729 = vmatmul.mubr.f32.gmra.mrb[0].mxu0 %v1467
  %v1730 = vpop.f32.mrb[0].mxu0
  %v1731 = vadd.f32 0.0, %v1730
  %v1732 = vpop.f32.mrb[0].mxu0
  %1733 = vmatprep.mubr.f32.mxu0 0.0
  %1734 = vmatmul.mubr.f32.gmra.mrb[0].mxu0 %v1468
  %v1735 = vpop.f32.mrb[0].mxu0
  %v1736 = vadd.f32 0.0, %v1735
  %v1737 = vpop.f32.mrb[0].mxu0
  %1738 = vmatprep.mubr.f32.mxu0 0.0
  %1739 = vmatmul.mubr.f32.gmra.mrb[0].mxu0 %v1469
  %v1740 = vpop.f32.mrb[0].mxu0
  %v1741 = vadd.f32 0.0, %v1740
  %v1742 = vpop.f32.mrb[0].mxu0
  %1743 = vmatprep.mubr.f32.mxu0 0.0
  %1744 = vmatmul.mubr.f32.gmra.mrb[0].mxu0 %v1470
  %v1745 = vpop.f32.mrb[0].mxu0
  %v1746 = vadd.f32 0.0, %v1745
  %v1747 = vpop.f32.mrb[0].mxu0
  %1748 = vmatprep.mubr.f32.mxu0 0.0
  %1749 = vmatmul.mubr.f32.gmra.mrb[0].mxu0 %v1471
  %v1750 = vpop.f32.mrb[0].mxu0
  %v1751 = vadd.f32 0.0, %v1750
  %v1752 = vpop.f32.mrb[0].mxu0
  %1753 = vmatprep.mubr.f32.mxu0 0.0
  %1754 = vmatmul.mubr.f32.gmra.mrb[0].mxu0 %v1472
  %v1755 = vpop.f32.mrb[0].mxu0
  %v1756 = vadd.f32 0.0, %v1755
  %v1757 = vpop.f32.mrb[0].mxu0
  %1758 = vmatprep.mubr.f32.mxu0 0.0
  %1759 = vmatmul.mubr.f32.gmra.mrb[0].mxu0 %v1473
  %v1760 = vpop.f32.mrb[0].mxu0
  %v1761 = vadd.f32 0.0, %v1760
  %v1762 = vpop.f32.mrb[0].mxu0
  %1763 = vdwg.mxu0
  %vm1764 = vcmp.eq.f32.partialorder %v1686, %v944
  %vm1765 = vcmp.eq.f32.partialorder %v1691, %v945
  %vm1766 = vcmp.eq.f32.partialorder %v1696, %v946
  %vm1767 = vcmp.eq.f32.partialorder %v1701, %v947
  %vm1768 = vcmp.eq.f32.partialorder %v1706, %v948
  %vm1769 = vcmp.eq.f32.partialorder %v1711, %v949
  %vm1770 = vcmp.eq.f32.partialorder %v1716, %v950
  %vm1771 = vcmp.eq.f32.partialorder %v1721, %v951
  %vm1772 = vcmp.eq.f32.partialorder %v1726, %v952
  %vm1773 = vcmp.eq.f32.partialorder %v1731, %v953
  %vm1774 = vcmp.eq.f32.partialorder %v1736, %v954
  %vm1775 = vcmp.eq.f32.partialorder %v1741, %v955
  %vm1776 = vcmp.eq.f32.partialorder %v1746, %v956
  %vm1777 = vcmp.eq.f32.partialorder %v1751, %v957
  %vm1778 = vcmp.eq.f32.partialorder %v1756, %v958
  %vm1779 = vcmp.eq.f32.partialorder %v1761, %v959
  %v1780 = vmax.f32 %v1410, %v1541
  %v1781 = vmax.f32 %v1411, %v1546
  %v1782 = vmax.f32 %v1412, %v1551
  %v1783 = vmax.f32 %v1413, %v1556
  %v1784 = vmax.f32 %v1414, %v1561
  %v1785 = vmax.f32 %v1415, %v1566
  %v1786 = vmax.f32 %v1416, %v1571
  %v1787 = vmax.f32 %v1417, %v1576
  %v1788 = vmax.f32 %v1418, %v1581
  %v1789 = vmax.f32 %v1419, %v1586
  %v1790 = vmax.f32 %v1420, %v1591
  %v1791 = vmax.f32 %v1421, %v1596
  %v1792 = vmax.f32 %v1422, %v1601
  %v1793 = vmax.f32 %v1423, %v1606
  %v1794 = vmax.f32 %v1424, %v1611
  %v1795 = vmax.f32 %v1425, %v1616
  %v1796 = vsel %vm1764, 1, 0
  %v1797 = vsel %vm1765, 1, 0
  %v1798 = vsel %vm1766, 1, 0
  %v1799 = vsel %vm1767, 1, 0
  %v1800 = vsel %vm1768, 1, 0
  %v1801 = vsel %vm1769, 1, 0
  %v1802 = vsel %vm1770, 1, 0
  %v1803 = vsel %vm1771, 1, 0
  %v1804 = vsel %vm1772, 1, 0
  %v1805 = vsel %vm1773, 1, 0
  %v1806 = vsel %vm1774, 1, 0
  %v1807 = vsel %vm1775, 1, 0
  %v1808 = vsel %vm1776, 1, 0
  %v1809 = vsel %vm1777, 1, 0
  %v1810 = vsel %vm1778, 1, 0
  %v1811 = vsel %vm1779, 1, 0
  %1812 = vset.pattern.permute.xlu0 0
  %1813 = vperm.xlu0 %1812, %v1796
  %v1814 = vpop.permute.xlu0 %1813
  %1815 = vset.pattern.permute.xlu0 0
  %1816 = vperm.xlu0 %1815, %v1797
  %v1817 = vpop.permute.xlu0 %1816
  %1818 = vset.pattern.permute.xlu0 0
  %1819 = vperm.xlu0 %1818, %v1798
  %v1820 = vpop.permute.xlu0 %1819
  %1821 = vset.pattern.permute.xlu0 0
  %1822 = vperm.xlu0 %1821, %v1799
  %v1823 = vpop.permute.xlu0 %1822
  %1824 = vset.pattern.permute.xlu0 0
  %1825 = vperm.xlu0 %1824, %v1800
  %v1826 = vpop.permute.xlu0 %1825
  %1827 = vset.pattern.permute.xlu0 0
  %1828 = vperm.xlu0 %1827, %v1801
  %v1829 = vpop.permute.xlu0 %1828
  %1830 = vset.pattern.permute.xlu0 0
  %1831 = vperm.xlu0 %1830, %v1802
  %v1832 = vpop.permute.xlu0 %1831
  %1833 = vset.pattern.permute.xlu0 0
  %1834 = vperm.xlu0 %1833, %v1803
  %v1835 = vpop.permute.xlu0 %1834
  %1836 = vset.pattern.permute.xlu0 0
  %1837 = vperm.xlu0 %1836, %v1804
  %v1838 = vpop.permute.xlu0 %1837
  %1839 = vset.pattern.permute.xlu0 0
  %1840 = vperm.xlu0 %1839, %v1805
  %v1841 = vpop.permute.xlu0 %1840
  %1842 = vset.pattern.permute.xlu0 0
  %1843 = vperm.xlu0 %1842, %v1806
  %v1844 = vpop.permute.xlu0 %1843
  %1845 = vset.pattern.permute.xlu0 0
  %1846 = vperm.xlu0 %1845, %v1807
  %v1847 = vpop.permute.xlu0 %1846
  %1848 = vset.pattern.permute.xlu0 0
  %1849 = vperm.xlu0 %1848, %v1808
  %v1850 = vpop.permute.xlu0 %1849
  %1851 = vset.pattern.permute.xlu0 0
  %1852 = vperm.xlu0 %1851, %v1809
  %v1853 = vpop.permute.xlu0 %1852
  %1854 = vset.pattern.permute.xlu0 0
  %1855 = vperm.xlu0 %1854, %v1810
  %v1856 = vpop.permute.xlu0 %1855
  %1857 = vset.pattern.permute.xlu0 0
  %1858 = vperm.xlu0 %1857, %v1811
  %v1859 = vpop.permute.xlu0 %1858
  %vm1860 = vcmp.eq.s32.totalorder %v1814, 1
  %vm1861 = vcmp.eq.s32.totalorder %v1817, 1
  %vm1862 = vcmp.eq.s32.totalorder %v1820, 1
  %vm1863 = vcmp.eq.s32.totalorder %v1823, 1
  %vm1864 = vcmp.eq.s32.totalorder %v1826, 1
  %vm1865 = vcmp.eq.s32.totalorder %v1829, 1
  %vm1866 = vcmp.eq.s32.totalorder %v1832, 1
  %vm1867 = vcmp.eq.s32.totalorder %v1835, 1
  %vm1868 = vcmp.eq.s32.totalorder %v1838, 1
  %vm1869 = vcmp.eq.s32.totalorder %v1841, 1
  %vm1870 = vcmp.eq.s32.totalorder %v1844, 1
  %vm1871 = vcmp.eq.s32.totalorder %v1847, 1
  %vm1872 = vcmp.eq.s32.totalorder %v1850, 1
  %vm1873 = vcmp.eq.s32.totalorder %v1853, 1
  %vm1874 = vcmp.eq.s32.totalorder %v1856, 1
  %vm1875 = vcmp.eq.s32.totalorder %v1859, 1
  %v1876 = vsel %vm1860, %v1780, %v1410
  %v1877 = vsel %vm1861, %v1781, %v1411
  %v1878 = vsel %vm1862, %v1782, %v1412
  %v1879 = vsel %vm1863, %v1783, %v1413
  %v1880 = vsel %vm1864, %v1784, %v1414
  %v1881 = vsel %vm1865, %v1785, %v1415
  %v1882 = vsel %vm1866, %v1786, %v1416
  %v1883 = vsel %vm1867, %v1787, %v1417
  %v1884 = vsel %vm1868, %v1788, %v1418
  %v1885 = vsel %vm1869, %v1789, %v1419
  %v1886 = vsel %vm1870, %v1790, %v1420
  %v1887 = vsel %vm1871, %v1791, %v1421
  %v1888 = vsel %vm1872, %v1792, %v1422
  %v1889 = vsel %vm1873, %v1793, %v1423
  %v1890 = vsel %vm1874, %v1794, %v1424
  %v1891 = vsel %vm1875, %v1795, %v1425
  %vm1892 = vcmp.eq.s32.totalorder %v928, 4
  %vm1893 = vcmp.eq.s32.totalorder %v929, 4
  %vm1894 = vcmp.eq.s32.totalorder %v930, 4
  %vm1895 = vcmp.eq.s32.totalorder %v931, 4
  %vm1896 = vcmp.eq.s32.totalorder %v932, 4
  %vm1897 = vcmp.eq.s32.totalorder %v933, 4
  %vm1898 = vcmp.eq.s32.totalorder %v934, 4
  %vm1899 = vcmp.eq.s32.totalorder %v935, 4
  %vm1900 = vcmp.eq.s32.totalorder %v936, 4
  %vm1901 = vcmp.eq.s32.totalorder %v937, 4
  %vm1902 = vcmp.eq.s32.totalorder %v938, 4
  %vm1903 = vcmp.eq.s32.totalorder %v939, 4
  %vm1904 = vcmp.eq.s32.totalorder %v940, 4
  %vm1905 = vcmp.eq.s32.totalorder %v941, 4
  %vm1906 = vcmp.eq.s32.totalorder %v942, 4
  %vm1907 = vcmp.eq.s32.totalorder %v943, 4
  %v1908 = vsel %vm1892, 1, 0
  %v1909 = vsel %vm1893, 1, 0
  %v1910 = vsel %vm1894, 1, 0
  %v1911 = vsel %vm1895, 1, 0
  %v1912 = vsel %vm1896, 1, 0
  %v1913 = vsel %vm1897, 1, 0
  %v1914 = vsel %vm1898, 1, 0
  %v1915 = vsel %vm1899, 1, 0
  %v1916 = vsel %vm1900, 1, 0
  %v1917 = vsel %vm1901, 1, 0
  %v1918 = vsel %vm1902, 1, 0
  %v1919 = vsel %vm1903, 1, 0
  %v1920 = vsel %vm1904, 1, 0
  %v1921 = vsel %vm1905, 1, 0
  %v1922 = vsel %vm1906, 1, 0
  %v1923 = vsel %vm1907, 1, 0
  %v1924 = vcvt.s32.f32 %v1908
  %v1925 = vcvt.s32.f32 %v1909
  %v1926 = vcvt.s32.f32 %v1910
  %v1927 = vcvt.s32.f32 %v1911
  %v1928 = vcvt.s32.f32 %v1912
  %v1929 = vcvt.s32.f32 %v1913
  %v1930 = vcvt.s32.f32 %v1914
  %v1931 = vcvt.s32.f32 %v1915
  %v1932 = vcvt.s32.f32 %v1916
  %v1933 = vcvt.s32.f32 %v1917
  %v1934 = vcvt.s32.f32 %v1918
  %v1935 = vcvt.s32.f32 %v1919
  %v1936 = vcvt.s32.f32 %v1920
  %v1937 = vcvt.s32.f32 %v1921
  %v1938 = vcvt.s32.f32 %v1922
  %v1939 = vcvt.s32.f32 %v1923
  %1940 = vmatprep.subr.mxu0 0.0
  %1941 = vmatpush1.msra.mxu0 %v1876
  %1942 = vmatprep.subr.mxu0 0.0
  %1943 = vmatpush1.msra.mxu0 %v1877
  %1944 = vmatprep.subr.mxu0 0.0
  %1945 = vmatpush1.msra.mxu0 %v1878
  %1946 = vmatprep.subr.mxu0 0.0
  %1947 = vmatpush1.msra.mxu0 %v1879
  %1948 = vmatprep.subr.mxu0 0.0
  %1949 = vmatpush1.msra.mxu0 %v1880
  %1950 = vmatprep.subr.mxu0 0.0
  %1951 = vmatpush1.msra.mxu0 %v1881
  %1952 = vmatprep.subr.mxu0 0.0
  %1953 = vmatpush1.msra.mxu0 %v1882
  %1954 = vmatprep.subr.mxu0 0.0
  %1955 = vmatpush1.msra.mxu0 %v1883
  %1956 = vmatprep.subr.mxu0 0.0
  %1957 = vmatpush1.msra.mxu0 %v1884
  %1958 = vmatprep.subr.mxu0 0.0
  %1959 = vmatpush1.msra.mxu0 %v1885
  %1960 = vmatprep.subr.mxu0 0.0
  %1961 = vmatpush1.msra.mxu0 %v1886
  %1962 = vmatprep.subr.mxu0 0.0
  %1963 = vmatpush1.msra.mxu0 %v1887
  %1964 = vmatprep.subr.mxu0 0.0
  %1965 = vmatpush1.msra.mxu0 %v1888
  %1966 = vmatprep.subr.mxu0 0.0
  %1967 = vmatpush1.msra.mxu0 %v1889
  %1968 = vmatprep.subr.mxu0 0.0
  %1969 = vmatpush1.msra.mxu0 %v1890
  %1970 = vmatprep.subr.mxu0 0.0
  %1971 = vmatpush1.msra.mxu0 %v1891
  %1972 = vmatprep.subr.mxu0 0.0
  %1973 = vmatpush1.msra.mxu0 0.0
  %1974 = vmatprep.subr.mxu0 0.0
  %1975 = vmatpush1.msra.mxu0 0.0
  %1976 = vmatprep.subr.mxu0 0.0
  %1977 = vmatpush1.msra.mxu0 0.0
  %1978 = vmatprep.subr.mxu0 0.0
  %1979 = vmatpush1.msra.mxu0 0.0
  %1980 = vmatprep.subr.mxu0 0.0
  %1981 = vmatpush1.msra.mxu0 0.0
  %1982 = vmatprep.subr.mxu0 0.0
  %1983 = vmatpush1.msra.mxu0 0.0
  %1984 = vmatprep.subr.mxu0 0.0
  %1985 = vmatpush1.msra.mxu0 0.0
  %1986 = vmatprep.subr.mxu0 0.0
  %1987 = vmatpush1.msra.mxu0 0.0
  %1988 = vmatprep.subr.mxu0 0.0
  %1989 = vmatpush1.msra.mxu0 0.0
  %1990 = vmatprep.subr.mxu0 0.0
  %1991 = vmatpush1.msra.mxu0 0.0
  %1992 = vmatprep.subr.mxu0 0.0
  %1993 = vmatpush1.msra.mxu0 0.0
  %1994 = vmatprep.subr.mxu0 0.0
  %1995 = vmatpush1.msra.mxu0 0.0
  %1996 = vmatprep.subr.mxu0 0.0
  %1997 = vmatpush1.msra.mxu0 0.0
  %1998 = vmatprep.subr.mxu0 0.0
  %1999 = vmatpush1.msra.mxu0 0.0
  %2000 = vmatprep.subr.mxu0 0.0
  %2001 = vmatpush1.msra.mxu0 0.0
  %2002 = vmatprep.subr.mxu0 0.0
  %2003 = vmatpush1.msra.mxu0 0.0
  %2004 = vmatprep.mubr.f32.mxu0 0.0
  %2005 = vmatmul.mubr.f32.gmra.mrb[0].mxu0 %v1924
  %v2006 = vpop.f32.mrb[0].mxu0
  %v2007 = vadd.f32 0.0, %v2006
  %v2008 = vpop.f32.mrb[0].mxu0
  %2009 = vmatprep.mubr.f32.mxu0 0.0
  %2010 = vmatmul.mubr.f32.gmra.mrb[0].mxu0 %v1925
  %v2011 = vpop.f32.mrb[0].mxu0
  %v2012 = vadd.f32 0.0, %v2011
  %v2013 = vpop.f32.mrb[0].mxu0
  %2014 = vmatprep.mubr.f32.mxu0 0.0
  %2015 = vmatmul.mubr.f32.gmra.mrb[0].mxu0 %v1926
  %v2016 = vpop.f32.mrb[0].mxu0
  %v2017 = vadd.f32 0.0, %v2016
  %v2018 = vpop.f32.mrb[0].mxu0
  %2019 = vmatprep.mubr.f32.mxu0 0.0
  %2020 = vmatmul.mubr.f32.gmra.mrb[0].mxu0 %v1927
  %v2021 = vpop.f32.mrb[0].mxu0
  %v2022 = vadd.f32 0.0, %v2021
  %v2023 = vpop.f32.mrb[0].mxu0
  %2024 = vmatprep.mubr.f32.mxu0 0.0
  %2025 = vmatmul.mubr.f32.gmra.mrb[0].mxu0 %v1928
  %v2026 = vpop.f32.mrb[0].mxu0
  %v2027 = vadd.f32 0.0, %v2026
  %v2028 = vpop.f32.mrb[0].mxu0
  %2029 = vmatprep.mubr.f32.mxu0 0.0
  %2030 = vmatmul.mubr.f32.gmra.mrb[0].mxu0 %v1929
  %v2031 = vpop.f32.mrb[0].mxu0
  %v2032 = vadd.f32 0.0, %v2031
  %v2033 = vpop.f32.mrb[0].mxu0
  %2034 = vmatprep.mubr.f32.mxu0 0.0
  %2035 = vmatmul.mubr.f32.gmra.mrb[0].mxu0 %v1930
  %v2036 = vpop.f32.mrb[0].mxu0
  %v2037 = vadd.f32 0.0, %v2036
  %v2038 = vpop.f32.mrb[0].mxu0
  %2039 = vmatprep.mubr.f32.mxu0 0.0
  %2040 = vmatmul.mubr.f32.gmra.mrb[0].mxu0 %v1931
  %v2041 = vpop.f32.mrb[0].mxu0
  %v2042 = vadd.f32 0.0, %v2041
  %v2043 = vpop.f32.mrb[0].mxu0
  %2044 = vmatprep.mubr.f32.mxu0 0.0
  %2045 = vmatmul.mubr.f32.gmra.mrb[0].mxu0 %v1932
  %v2046 = vpop.f32.mrb[0].mxu0
  %v2047 = vadd.f32 0.0, %v2046
  %v2048 = vpop.f32.mrb[0].mxu0
  %2049 = vmatprep.mubr.f32.mxu0 0.0
  %2050 = vmatmul.mubr.f32.gmra.mrb[0].mxu0 %v1933
  %v2051 = vpop.f32.mrb[0].mxu0
  %v2052 = vadd.f32 0.0, %v2051
  %v2053 = vpop.f32.mrb[0].mxu0
  %2054 = vmatprep.mubr.f32.mxu0 0.0
  %2055 = vmatmul.mubr.f32.gmra.mrb[0].mxu0 %v1934
  %v2056 = vpop.f32.mrb[0].mxu0
  %v2057 = vadd.f32 0.0, %v2056
  %v2058 = vpop.f32.mrb[0].mxu0
  %2059 = vmatprep.mubr.f32.mxu0 0.0
  %2060 = vmatmul.mubr.f32.gmra.mrb[0].mxu0 %v1935
  %v2061 = vpop.f32.mrb[0].mxu0
  %v2062 = vadd.f32 0.0, %v2061
  %v2063 = vpop.f32.mrb[0].mxu0
  %2064 = vmatprep.mubr.f32.mxu0 0.0
  %2065 = vmatmul.mubr.f32.gmra.mrb[0].mxu0 %v1936
  %v2066 = vpop.f32.mrb[0].mxu0
  %v2067 = vadd.f32 0.0, %v2066
  %v2068 = vpop.f32.mrb[0].mxu0
  %2069 = vmatprep.mubr.f32.mxu0 0.0
  %2070 = vmatmul.mubr.f32.gmra.mrb[0].mxu0 %v1937
  %v2071 = vpop.f32.mrb[0].mxu0
  %v2072 = vadd.f32 0.0, %v2071
  %v2073 = vpop.f32.mrb[0].mxu0
  %2074 = vmatprep.mubr.f32.mxu0 0.0
  %2075 = vmatmul.mubr.f32.gmra.mrb[0].mxu0 %v1938
  %v2076 = vpop.f32.mrb[0].mxu0
  %v2077 = vadd.f32 0.0, %v2076
  %v2078 = vpop.f32.mrb[0].mxu0
  %2079 = vmatprep.mubr.f32.mxu0 0.0
  %2080 = vmatmul.mubr.f32.gmra.mrb[0].mxu0 %v1939
  %v2081 = vpop.f32.mrb[0].mxu0
  %v2082 = vadd.f32 0.0, %v2081
  %v2083 = vpop.f32.mrb[0].mxu0
  %2084 = vdwg.mxu0
  %2085 = vmatprep.subr.mxu0 0.0
  %2086 = vmatpush1.msra.mxu0 %v944
  %2087 = vmatprep.subr.mxu0 0.0
  %2088 = vmatpush1.msra.mxu0 %v945
  %2089 = vmatprep.subr.mxu0 0.0
  %2090 = vmatpush1.msra.mxu0 %v946
  %2091 = vmatprep.subr.mxu0 0.0
  %2092 = vmatpush1.msra.mxu0 %v947
  %2093 = vmatprep.subr.mxu0 0.0
  %2094 = vmatpush1.msra.mxu0 %v948
  %2095 = vmatprep.subr.mxu0 0.0
  %2096 = vmatpush1.msra.mxu0 %v949
  %2097 = vmatprep.subr.mxu0 0.0
  %2098 = vmatpush1.msra.mxu0 %v950
  %2099 = vmatprep.subr.mxu0 0.0
  %2100 = vmatpush1.msra.mxu0 %v951
  %2101 = vmatprep.subr.mxu0 0.0
  %2102 = vmatpush1.msra.mxu0 %v952
  %2103 = vmatprep.subr.mxu0 0.0
  %2104 = vmatpush1.msra.mxu0 %v953
  %2105 = vmatprep.subr.mxu0 0.0
  %2106 = vmatpush1.msra.mxu0 %v954
  %2107 = vmatprep.subr.mxu0 0.0
  %2108 = vmatpush1.msra.mxu0 %v955
  %2109 = vmatprep.subr.mxu0 0.0
  %2110 = vmatpush1.msra.mxu0 %v956
  %2111 = vmatprep.subr.mxu0 0.0
  %2112 = vmatpush1.msra.mxu0 %v957
  %2113 = vmatprep.subr.mxu0 0.0
  %2114 = vmatpush1.msra.mxu0 %v958
  %2115 = vmatprep.subr.mxu0 0.0
  %2116 = vmatpush1.msra.mxu0 %v959
  %2117 = vmatprep.subr.mxu0 0.0
  %2118 = vmatpush1.msra.mxu0 0.0
  %2119 = vmatprep.subr.mxu0 0.0
  %2120 = vmatpush1.msra.mxu0 0.0
  %2121 = vmatprep.subr.mxu0 0.0
  %2122 = vmatpush1.msra.mxu0 0.0
  %2123 = vmatprep.subr.mxu0 0.0
  %2124 = vmatpush1.msra.mxu0 0.0
  %2125 = vmatprep.subr.mxu0 0.0
  %2126 = vmatpush1.msra.mxu0 0.0
  %2127 = vmatprep.subr.mxu0 0.0
  %2128 = vmatpush1.msra.mxu0 0.0
  %2129 = vmatprep.subr.mxu0 0.0
  %2130 = vmatpush1.msra.mxu0 0.0
  %2131 = vmatprep.subr.mxu0 0.0
  %2132 = vmatpush1.msra.mxu0 0.0
  %2133 = vmatprep.subr.mxu0 0.0
  %2134 = vmatpush1.msra.mxu0 0.0
  %2135 = vmatprep.subr.mxu0 0.0
  %2136 = vmatpush1.msra.mxu0 0.0
  %2137 = vmatprep.subr.mxu0 0.0
  %2138 = vmatpush1.msra.mxu0 0.0
  %2139 = vmatprep.subr.mxu0 0.0
  %2140 = vmatpush1.msra.mxu0 0.0
  %2141 = vmatprep.subr.mxu0 0.0
  %2142 = vmatpush1.msra.mxu0 0.0
  %2143 = vmatprep.subr.mxu0 0.0
  %2144 = vmatpush1.msra.mxu0 0.0
  %2145 = vmatprep.subr.mxu0 0.0
  %2146 = vmatpush1.msra.mxu0 0.0
  %2147 = vmatprep.subr.mxu0 0.0
  %2148 = vmatpush1.msra.mxu0 0.0
  %2149 = vmatprep.mubr.f32.mxu0 0.0
  %2150 = vmatmul.mubr.f32.gmra.mrb[0].mxu0 %v1924
  %v2151 = vpop.f32.mrb[0].mxu0
  %v2152 = vadd.f32 0.0, %v2151
  %v2153 = vpop.f32.mrb[0].mxu0
  %2154 = vmatprep.mubr.f32.mxu0 0.0
  %2155 = vmatmul.mubr.f32.gmra.mrb[0].mxu0 %v1925
  %v2156 = vpop.f32.mrb[0].mxu0
  %v2157 = vadd.f32 0.0, %v2156
  %v2158 = vpop.f32.mrb[0].mxu0
  %2159 = vmatprep.mubr.f32.mxu0 0.0
  %2160 = vmatmul.mubr.f32.gmra.mrb[0].mxu0 %v1926
  %v2161 = vpop.f32.mrb[0].mxu0
  %v2162 = vadd.f32 0.0, %v2161
  %v2163 = vpop.f32.mrb[0].mxu0
  %2164 = vmatprep.mubr.f32.mxu0 0.0
  %2165 = vmatmul.mubr.f32.gmra.mrb[0].mxu0 %v1927
  %v2166 = vpop.f32.mrb[0].mxu0
  %v2167 = vadd.f32 0.0, %v2166
  %v2168 = vpop.f32.mrb[0].mxu0
  %2169 = vmatprep.mubr.f32.mxu0 0.0
  %2170 = vmatmul.mubr.f32.gmra.mrb[0].mxu0 %v1928
  %v2171 = vpop.f32.mrb[0].mxu0
  %v2172 = vadd.f32 0.0, %v2171
  %v2173 = vpop.f32.mrb[0].mxu0
  %2174 = vmatprep.mubr.f32.mxu0 0.0
  %2175 = vmatmul.mubr.f32.gmra.mrb[0].mxu0 %v1929
  %v2176 = vpop.f32.mrb[0].mxu0
  %v2177 = vadd.f32 0.0, %v2176
  %v2178 = vpop.f32.mrb[0].mxu0
  %2179 = vmatprep.mubr.f32.mxu0 0.0
  %2180 = vmatmul.mubr.f32.gmra.mrb[0].mxu0 %v1930
  %v2181 = vpop.f32.mrb[0].mxu0
  %v2182 = vadd.f32 0.0, %v2181
  %v2183 = vpop.f32.mrb[0].mxu0
  %2184 = vmatprep.mubr.f32.mxu0 0.0
  %2185 = vmatmul.mubr.f32.gmra.mrb[0].mxu0 %v1931
  %v2186 = vpop.f32.mrb[0].mxu0
  %v2187 = vadd.f32 0.0, %v2186
  %v2188 = vpop.f32.mrb[0].mxu0
  %2189 = vmatprep.mubr.f32.mxu0 0.0
  %2190 = vmatmul.mubr.f32.gmra.mrb[0].mxu0 %v1932
  %v2191 = vpop.f32.mrb[0].mxu0
  %v2192 = vadd.f32 0.0, %v2191
  %v2193 = vpop.f32.mrb[0].mxu0
  %2194 = vmatprep.mubr.f32.mxu0 0.0
  %2195 = vmatmul.mubr.f32.gmra.mrb[0].mxu0 %v1933
  %v2196 = vpop.f32.mrb[0].mxu0
  %v2197 = vadd.f32 0.0, %v2196
  %v2198 = vpop.f32.mrb[0].mxu0
  %2199 = vmatprep.mubr.f32.mxu0 0.0
  %2200 = vmatmul.mubr.f32.gmra.mrb[0].mxu0 %v1934
  %v2201 = vpop.f32.mrb[0].mxu0
  %v2202 = vadd.f32 0.0, %v2201
  %v2203 = vpop.f32.mrb[0].mxu0
  %2204 = vmatprep.mubr.f32.mxu0 0.0
  %2205 = vmatmul.mubr.f32.gmra.mrb[0].mxu0 %v1935
  %v2206 = vpop.f32.mrb[0].mxu0
  %v2207 = vadd.f32 0.0, %v2206
  %v2208 = vpop.f32.mrb[0].mxu0
  %2209 = vmatprep.mubr.f32.mxu0 0.0
  %2210 = vmatmul.mubr.f32.gmra.mrb[0].mxu0 %v1936
  %v2211 = vpop.f32.mrb[0].mxu0
  %v2212 = vadd.f32 0.0, %v2211
  %v2213 = vpop.f32.mrb[0].mxu0
  %2214 = vmatprep.mubr.f32.mxu0 0.0
  %2215 = vmatmul.mubr.f32.gmra.mrb[0].mxu0 %v1937
  %v2216 = vpop.f32.mrb[0].mxu0
  %v2217 = vadd.f32 0.0, %v2216
  %v2218 = vpop.f32.mrb[0].mxu0
  %2219 = vmatprep.mubr.f32.mxu0 0.0
  %2220 = vmatmul.mubr.f32.gmra.mrb[0].mxu0 %v1938
  %v2221 = vpop.f32.mrb[0].mxu0
  %v2222 = vadd.f32 0.0, %v2221
  %v2223 = vpop.f32.mrb[0].mxu0
  %2224 = vmatprep.mubr.f32.mxu0 0.0
  %2225 = vmatmul.mubr.f32.gmra.mrb[0].mxu0 %v1939
  %v2226 = vpop.f32.mrb[0].mxu0
  %v2227 = vadd.f32 0.0, %v2226
  %v2228 = vpop.f32.mrb[0].mxu0
  %2229 = vdwg.mxu0
  %vm2230 = vcmp.eq.f32.partialorder %v2152, %v944
  %vm2231 = vcmp.eq.f32.partialorder %v2157, %v945
  %vm2232 = vcmp.eq.f32.partialorder %v2162, %v946
  %vm2233 = vcmp.eq.f32.partialorder %v2167, %v947
  %vm2234 = vcmp.eq.f32.partialorder %v2172, %v948
  %vm2235 = vcmp.eq.f32.partialorder %v2177, %v949
  %vm2236 = vcmp.eq.f32.partialorder %v2182, %v950
  %vm2237 = vcmp.eq.f32.partialorder %v2187, %v951
  %vm2238 = vcmp.eq.f32.partialorder %v2192, %v952
  %vm2239 = vcmp.eq.f32.partialorder %v2197, %v953
  %vm2240 = vcmp.eq.f32.partialorder %v2202, %v954
  %vm2241 = vcmp.eq.f32.partialorder %v2207, %v955
  %vm2242 = vcmp.eq.f32.partialorder %v2212, %v956
  %vm2243 = vcmp.eq.f32.partialorder %v2217, %v957
  %vm2244 = vcmp.eq.f32.partialorder %v2222, %v958
  %vm2245 = vcmp.eq.f32.partialorder %v2227, %v959
  %v2246 = vmax.f32 %v1876, %v2007
  %v2247 = vmax.f32 %v1877, %v2012
  %v2248 = vmax.f32 %v1878, %v2017
  %v2249 = vmax.f32 %v1879, %v2022
  %v2250 = vmax.f32 %v1880, %v2027
  %v2251 = vmax.f32 %v1881, %v2032
  %v2252 = vmax.f32 %v1882, %v2037
  %v2253 = vmax.f32 %v1883, %v2042
  %v2254 = vmax.f32 %v1884, %v2047
  %v2255 = vmax.f32 %v1885, %v2052
  %v2256 = vmax.f32 %v1886, %v2057
  %v2257 = vmax.f32 %v1887, %v2062
  %v2258 = vmax.f32 %v1888, %v2067
  %v2259 = vmax.f32 %v1889, %v2072
  %v2260 = vmax.f32 %v1890, %v2077
  %v2261 = vmax.f32 %v1891, %v2082
  %v2262 = vsel %vm2230, 1, 0
  %v2263 = vsel %vm2231, 1, 0
  %v2264 = vsel %vm2232, 1, 0
  %v2265 = vsel %vm2233, 1, 0
  %v2266 = vsel %vm2234, 1, 0
  %v2267 = vsel %vm2235, 1, 0
  %v2268 = vsel %vm2236, 1, 0
  %v2269 = vsel %vm2237, 1, 0
  %v2270 = vsel %vm2238, 1, 0
  %v2271 = vsel %vm2239, 1, 0
  %v2272 = vsel %vm2240, 1, 0
  %v2273 = vsel %vm2241, 1, 0
  %v2274 = vsel %vm2242, 1, 0
  %v2275 = vsel %vm2243, 1, 0
  %v2276 = vsel %vm2244, 1, 0
  %v2277 = vsel %vm2245, 1, 0
  %2278 = vset.pattern.permute.xlu0 0
  %2279 = vperm.xlu0 %2278, %v2262
  %v2280 = vpop.permute.xlu0 %2279
  %2281 = vset.pattern.permute.xlu0 0
  %2282 = vperm.xlu0 %2281, %v2263
  %v2283 = vpop.permute.xlu0 %2282
  %2284 = vset.pattern.permute.xlu0 0
  %2285 = vperm.xlu0 %2284, %v2264
  %v2286 = vpop.permute.xlu0 %2285
  %2287 = vset.pattern.permute.xlu0 0
  %2288 = vperm.xlu0 %2287, %v2265
  %v2289 = vpop.permute.xlu0 %2288
  %2290 = vset.pattern.permute.xlu0 0
  %2291 = vperm.xlu0 %2290, %v2266
  %v2292 = vpop.permute.xlu0 %2291
  %2293 = vset.pattern.permute.xlu0 0
  %2294 = vperm.xlu0 %2293, %v2267
  %v2295 = vpop.permute.xlu0 %2294
  %2296 = vset.pattern.permute.xlu0 0
  %2297 = vperm.xlu0 %2296, %v2268
  %v2298 = vpop.permute.xlu0 %2297
  %2299 = vset.pattern.permute.xlu0 0
  %2300 = vperm.xlu0 %2299, %v2269
  %v2301 = vpop.permute.xlu0 %2300
  %2302 = vset.pattern.permute.xlu0 0
  %2303 = vperm.xlu0 %2302, %v2270
  %v2304 = vpop.permute.xlu0 %2303
  %2305 = vset.pattern.permute.xlu0 0
  %2306 = vperm.xlu0 %2305, %v2271
  %v2307 = vpop.permute.xlu0 %2306
  %2308 = vset.pattern.permute.xlu0 0
  %2309 = vperm.xlu0 %2308, %v2272
  %v2310 = vpop.permute.xlu0 %2309
  %2311 = vset.pattern.permute.xlu0 0
  %2312 = vperm.xlu0 %2311, %v2273
  %v2313 = vpop.permute.xlu0 %2312
  %2314 = vset.pattern.permute.xlu0 0
  %2315 = vperm.xlu0 %2314, %v2274
  %v2316 = vpop.permute.xlu0 %2315
  %2317 = vset.pattern.permute.xlu0 0
  %2318 = vperm.xlu0 %2317, %v2275
  %v2319 = vpop.permute.xlu0 %2318
  %2320 = vset.pattern.permute.xlu0 0
  %2321 = vperm.xlu0 %2320, %v2276
  %v2322 = vpop.permute.xlu0 %2321
  %2323 = vset.pattern.permute.xlu0 0
  %2324 = vperm.xlu0 %2323, %v2277
  %v2325 = vpop.permute.xlu0 %2324
  %vm2326 = vcmp.eq.s32.totalorder %v2280, 1
  %vm2327 = vcmp.eq.s32.totalorder %v2283, 1
  %vm2328 = vcmp.eq.s32.totalorder %v2286, 1
  %vm2329 = vcmp.eq.s32.totalorder %v2289, 1
  %vm2330 = vcmp.eq.s32.totalorder %v2292, 1
  %vm2331 = vcmp.eq.s32.totalorder %v2295, 1
  %vm2332 = vcmp.eq.s32.totalorder %v2298, 1
  %vm2333 = vcmp.eq.s32.totalorder %v2301, 1
  %vm2334 = vcmp.eq.s32.totalorder %v2304, 1
  %vm2335 = vcmp.eq.s32.totalorder %v2307, 1
  %vm2336 = vcmp.eq.s32.totalorder %v2310, 1
  %vm2337 = vcmp.eq.s32.totalorder %v2313, 1
  %vm2338 = vcmp.eq.s32.totalorder %v2316, 1
  %vm2339 = vcmp.eq.s32.totalorder %v2319, 1
  %vm2340 = vcmp.eq.s32.totalorder %v2322, 1
  %vm2341 = vcmp.eq.s32.totalorder %v2325, 1
  %v2342 = vsel %vm2326, %v2246, %v1876
  %v2343 = vsel %vm2327, %v2247, %v1877
  %v2344 = vsel %vm2328, %v2248, %v1878
  %v2345 = vsel %vm2329, %v2249, %v1879
  %v2346 = vsel %vm2330, %v2250, %v1880
  %v2347 = vsel %vm2331, %v2251, %v1881
  %v2348 = vsel %vm2332, %v2252, %v1882
  %v2349 = vsel %vm2333, %v2253, %v1883
  %v2350 = vsel %vm2334, %v2254, %v1884
  %v2351 = vsel %vm2335, %v2255, %v1885
  %v2352 = vsel %vm2336, %v2256, %v1886
  %v2353 = vsel %vm2337, %v2257, %v1887
  %v2354 = vsel %vm2338, %v2258, %v1888
  %v2355 = vsel %vm2339, %v2259, %v1889
  %v2356 = vsel %vm2340, %v2260, %v1890
  %v2357 = vsel %vm2341, %v2261, %v1891
  %vm2358 = vcmp.eq.s32.totalorder %v928, 8
  %vm2359 = vcmp.eq.s32.totalorder %v929, 8
  %vm2360 = vcmp.eq.s32.totalorder %v930, 8
  %vm2361 = vcmp.eq.s32.totalorder %v931, 8
  %vm2362 = vcmp.eq.s32.totalorder %v932, 8
  %vm2363 = vcmp.eq.s32.totalorder %v933, 8
  %vm2364 = vcmp.eq.s32.totalorder %v934, 8
  %vm2365 = vcmp.eq.s32.totalorder %v935, 8
  %vm2366 = vcmp.eq.s32.totalorder %v936, 8
  %vm2367 = vcmp.eq.s32.totalorder %v937, 8
  %vm2368 = vcmp.eq.s32.totalorder %v938, 8
  %vm2369 = vcmp.eq.s32.totalorder %v939, 8
  %vm2370 = vcmp.eq.s32.totalorder %v940, 8
  %vm2371 = vcmp.eq.s32.totalorder %v941, 8
  %vm2372 = vcmp.eq.s32.totalorder %v942, 8
  %vm2373 = vcmp.eq.s32.totalorder %v943, 8
  %v2374 = vsel %vm2358, 1, 0
  %v2375 = vsel %vm2359, 1, 0
  %v2376 = vsel %vm2360, 1, 0
  %v2377 = vsel %vm2361, 1, 0
  %v2378 = vsel %vm2362, 1, 0
  %v2379 = vsel %vm2363, 1, 0
  %v2380 = vsel %vm2364, 1, 0
  %v2381 = vsel %vm2365, 1, 0
  %v2382 = vsel %vm2366, 1, 0
  %v2383 = vsel %vm2367, 1, 0
  %v2384 = vsel %vm2368, 1, 0
  %v2385 = vsel %vm2369, 1, 0
  %v2386 = vsel %vm2370, 1, 0
  %v2387 = vsel %vm2371, 1, 0
  %v2388 = vsel %vm2372, 1, 0
  %v2389 = vsel %vm2373, 1, 0
  %v2390 = vcvt.s32.f32 %v2374
  %v2391 = vcvt.s32.f32 %v2375
  %v2392 = vcvt.s32.f32 %v2376
  %v2393 = vcvt.s32.f32 %v2377
  %v2394 = vcvt.s32.f32 %v2378
  %v2395 = vcvt.s32.f32 %v2379
  %v2396 = vcvt.s32.f32 %v2380
  %v2397 = vcvt.s32.f32 %v2381
  %v2398 = vcvt.s32.f32 %v2382
  %v2399 = vcvt.s32.f32 %v2383
  %v2400 = vcvt.s32.f32 %v2384
  %v2401 = vcvt.s32.f32 %v2385
  %v2402 = vcvt.s32.f32 %v2386
  %v2403 = vcvt.s32.f32 %v2387
  %v2404 = vcvt.s32.f32 %v2388
  %v2405 = vcvt.s32.f32 %v2389
  %2406 = vmatprep.subr.mxu0 0.0
  %2407 = vmatpush1.msra.mxu0 %v2342
  %2408 = vmatprep.subr.mxu0 0.0
  %2409 = vmatpush1.msra.mxu0 %v2343
  %2410 = vmatprep.subr.mxu0 0.0
  %2411 = vmatpush1.msra.mxu0 %v2344
  %2412 = vmatprep.subr.mxu0 0.0
  %2413 = vmatpush1.msra.mxu0 %v2345
  %2414 = vmatprep.subr.mxu0 0.0
  %2415 = vmatpush1.msra.mxu0 %v2346
  %2416 = vmatprep.subr.mxu0 0.0
  %2417 = vmatpush1.msra.mxu0 %v2347
  %2418 = vmatprep.subr.mxu0 0.0
  %2419 = vmatpush1.msra.mxu0 %v2348
  %2420 = vmatprep.subr.mxu0 0.0
  %2421 = vmatpush1.msra.mxu0 %v2349
  %2422 = vmatprep.subr.mxu0 0.0
  %2423 = vmatpush1.msra.mxu0 %v2350
  %2424 = vmatprep.subr.mxu0 0.0
  %2425 = vmatpush1.msra.mxu0 %v2351
  %2426 = vmatprep.subr.mxu0 0.0
  %2427 = vmatpush1.msra.mxu0 %v2352
  %2428 = vmatprep.subr.mxu0 0.0
  %2429 = vmatpush1.msra.mxu0 %v2353
  %2430 = vmatprep.subr.mxu0 0.0
  %2431 = vmatpush1.msra.mxu0 %v2354
  %2432 = vmatprep.subr.mxu0 0.0
  %2433 = vmatpush1.msra.mxu0 %v2355
  %2434 = vmatprep.subr.mxu0 0.0
  %2435 = vmatpush1.msra.mxu0 %v2356
  %2436 = vmatprep.subr.mxu0 0.0
  %2437 = vmatpush1.msra.mxu0 %v2357
  %2438 = vmatprep.subr.mxu0 0.0
  %2439 = vmatpush1.msra.mxu0 0.0
  %2440 = vmatprep.subr.mxu0 0.0
  %2441 = vmatpush1.msra.mxu0 0.0
  %2442 = vmatprep.subr.mxu0 0.0
  %2443 = vmatpush1.msra.mxu0 0.0
  %2444 = vmatprep.subr.mxu0 0.0
  %2445 = vmatpush1.msra.mxu0 0.0
  %2446 = vmatprep.subr.mxu0 0.0
  %2447 = vmatpush1.msra.mxu0 0.0
  %2448 = vmatprep.subr.mxu0 0.0
  %2449 = vmatpush1.msra.mxu0 0.0
  %2450 = vmatprep.subr.mxu0 0.0
  %2451 = vmatpush1.msra.mxu0 0.0
  %2452 = vmatprep.subr.mxu0 0.0
  %2453 = vmatpush1.msra.mxu0 0.0
  %2454 = vmatprep.subr.mxu0 0.0
  %2455 = vmatpush1.msra.mxu0 0.0
  %2456 = vmatprep.subr.mxu0 0.0
  %2457 = vmatpush1.msra.mxu0 0.0
  %2458 = vmatprep.subr.mxu0 0.0
  %2459 = vmatpush1.msra.mxu0 0.0
  %2460 = vmatprep.subr.mxu0 0.0
  %2461 = vmatpush1.msra.mxu0 0.0
  %2462 = vmatprep.subr.mxu0 0.0
  %2463 = vmatpush1.msra.mxu0 0.0
  %2464 = vmatprep.subr.mxu0 0.0
  %2465 = vmatpush1.msra.mxu0 0.0
  %2466 = vmatprep.subr.mxu0 0.0
  %2467 = vmatpush1.msra.mxu0 0.0
  %2468 = vmatprep.subr.mxu0 0.0
  %2469 = vmatpush1.msra.mxu0 0.0
  %2470 = vmatprep.mubr.f32.mxu0 0.0
  %2471 = vmatmul.mubr.f32.gmra.mrb[0].mxu0 %v2390
  %v2472 = vpop.f32.mrb[0].mxu0
  %v2473 = vadd.f32 0.0, %v2472
  %v2474 = vpop.f32.mrb[0].mxu0
  %2475 = vmatprep.mubr.f32.mxu0 0.0
  %2476 = vmatmul.mubr.f32.gmra.mrb[0].mxu0 %v2391
  %v2477 = vpop.f32.mrb[0].mxu0
  %v2478 = vadd.f32 0.0, %v2477
  %v2479 = vpop.f32.mrb[0].mxu0
  %2480 = vmatprep.mubr.f32.mxu0 0.0
  %2481 = vmatmul.mubr.f32.gmra.mrb[0].mxu0 %v2392
  %v2482 = vpop.f32.mrb[0].mxu0
  %v2483 = vadd.f32 0.0, %v2482
  %v2484 = vpop.f32.mrb[0].mxu0
  %2485 = vmatprep.mubr.f32.mxu0 0.0
  %2486 = vmatmul.mubr.f32.gmra.mrb[0].mxu0 %v2393
  %v2487 = vpop.f32.mrb[0].mxu0
  %v2488 = vadd.f32 0.0, %v2487
  %v2489 = vpop.f32.mrb[0].mxu0
  %2490 = vmatprep.mubr.f32.mxu0 0.0
  %2491 = vmatmul.mubr.f32.gmra.mrb[0].mxu0 %v2394
  %v2492 = vpop.f32.mrb[0].mxu0
  %v2493 = vadd.f32 0.0, %v2492
  %v2494 = vpop.f32.mrb[0].mxu0
  %2495 = vmatprep.mubr.f32.mxu0 0.0
  %2496 = vmatmul.mubr.f32.gmra.mrb[0].mxu0 %v2395
  %v2497 = vpop.f32.mrb[0].mxu0
  %v2498 = vadd.f32 0.0, %v2497
  %v2499 = vpop.f32.mrb[0].mxu0
  %2500 = vmatprep.mubr.f32.mxu0 0.0
  %2501 = vmatmul.mubr.f32.gmra.mrb[0].mxu0 %v2396
  %v2502 = vpop.f32.mrb[0].mxu0
  %v2503 = vadd.f32 0.0, %v2502
  %v2504 = vpop.f32.mrb[0].mxu0
  %2505 = vmatprep.mubr.f32.mxu0 0.0
  %2506 = vmatmul.mubr.f32.gmra.mrb[0].mxu0 %v2397
  %v2507 = vpop.f32.mrb[0].mxu0
  %v2508 = vadd.f32 0.0, %v2507
  %v2509 = vpop.f32.mrb[0].mxu0
  %2510 = vmatprep.mubr.f32.mxu0 0.0
  %2511 = vmatmul.mubr.f32.gmra.mrb[0].mxu0 %v2398
  %v2512 = vpop.f32.mrb[0].mxu0
  %v2513 = vadd.f32 0.0, %v2512
  %v2514 = vpop.f32.mrb[0].mxu0
  %2515 = vmatprep.mubr.f32.mxu0 0.0
  %2516 = vmatmul.mubr.f32.gmra.mrb[0].mxu0 %v2399
  %v2517 = vpop.f32.mrb[0].mxu0
  %v2518 = vadd.f32 0.0, %v2517
  %v2519 = vpop.f32.mrb[0].mxu0
  %2520 = vmatprep.mubr.f32.mxu0 0.0
  %2521 = vmatmul.mubr.f32.gmra.mrb[0].mxu0 %v2400
  %v2522 = vpop.f32.mrb[0].mxu0
  %v2523 = vadd.f32 0.0, %v2522
  %v2524 = vpop.f32.mrb[0].mxu0
  %2525 = vmatprep.mubr.f32.mxu0 0.0
  %2526 = vmatmul.mubr.f32.gmra.mrb[0].mxu0 %v2401
  %v2527 = vpop.f32.mrb[0].mxu0
  %v2528 = vadd.f32 0.0, %v2527
  %v2529 = vpop.f32.mrb[0].mxu0
  %2530 = vmatprep.mubr.f32.mxu0 0.0
  %2531 = vmatmul.mubr.f32.gmra.mrb[0].mxu0 %v2402
  %v2532 = vpop.f32.mrb[0].mxu0
  %v2533 = vadd.f32 0.0, %v2532
  %v2534 = vpop.f32.mrb[0].mxu0
  %2535 = vmatprep.mubr.f32.mxu0 0.0
  %2536 = vmatmul.mubr.f32.gmra.mrb[0].mxu0 %v2403
  %v2537 = vpop.f32.mrb[0].mxu0
  %v2538 = vadd.f32 0.0, %v2537
  %v2539 = vpop.f32.mrb[0].mxu0
  %2540 = vmatprep.mubr.f32.mxu0 0.0
  %2541 = vmatmul.mubr.f32.gmra.mrb[0].mxu0 %v2404
  %v2542 = vpop.f32.mrb[0].mxu0
  %v2543 = vadd.f32 0.0, %v2542
  %v2544 = vpop.f32.mrb[0].mxu0
  %2545 = vmatprep.mubr.f32.mxu0 0.0
  %2546 = vmatmul.mubr.f32.gmra.mrb[0].mxu0 %v2405
  %v2547 = vpop.f32.mrb[0].mxu0
  %v2548 = vadd.f32 0.0, %v2547
  %v2549 = vpop.f32.mrb[0].mxu0
  %2550 = vdwg.mxu0
  %2551 = vmatprep.subr.mxu0 0.0
  %2552 = vmatpush1.msra.mxu0 %v944
  %2553 = vmatprep.subr.mxu0 0.0
  %2554 = vmatpush1.msra.mxu0 %v945
  %2555 = vmatprep.subr.mxu0 0.0
  %2556 = vmatpush1.msra.mxu0 %v946
  %2557 = vmatprep.subr.mxu0 0.0
  %2558 = vmatpush1.msra.mxu0 %v947
  %2559 = vmatprep.subr.mxu0 0.0
  %2560 = vmatpush1.msra.mxu0 %v948
  %2561 = vmatprep.subr.mxu0 0.0
  %2562 = vmatpush1.msra.mxu0 %v949
  %2563 = vmatprep.subr.mxu0 0.0
  %2564 = vmatpush1.msra.mxu0 %v950
  %2565 = vmatprep.subr.mxu0 0.0
  %2566 = vmatpush1.msra.mxu0 %v951
  %2567 = vmatprep.subr.mxu0 0.0
  %2568 = vmatpush1.msra.mxu0 %v952
  %2569 = vmatprep.subr.mxu0 0.0
  %2570 = vmatpush1.msra.mxu0 %v953
  %2571 = vmatprep.subr.mxu0 0.0
  %2572 = vmatpush1.msra.mxu0 %v954
  %2573 = vmatprep.subr.mxu0 0.0
  %2574 = vmatpush1.msra.mxu0 %v955
  %2575 = vmatprep.subr.mxu0 0.0
  %2576 = vmatpush1.msra.mxu0 %v956
  %2577 = vmatprep.subr.mxu0 0.0
  %2578 = vmatpush1.msra.mxu0 %v957
  %2579 = vmatprep.subr.mxu0 0.0
  %2580 = vmatpush1.msra.mxu0 %v958
  %2581 = vmatprep.subr.mxu0 0.0
  %2582 = vmatpush1.msra.mxu0 %v959
  %2583 = vmatprep.subr.mxu0 0.0
  %2584 = vmatpush1.msra.mxu0 0.0
  %2585 = vmatprep.subr.mxu0 0.0
  %2586 = vmatpush1.msra.mxu0 0.0
  %2587 = vmatprep.subr.mxu0 0.0
  %2588 = vmatpush1.msra.mxu0 0.0
  %2589 = vmatprep.subr.mxu0 0.0
  %2590 = vmatpush1.msra.mxu0 0.0
  %2591 = vmatprep.subr.mxu0 0.0
  %2592 = vmatpush1.msra.mxu0 0.0
  %2593 = vmatprep.subr.mxu0 0.0
  %2594 = vmatpush1.msra.mxu0 0.0
  %2595 = vmatprep.subr.mxu0 0.0
  %2596 = vmatpush1.msra.mxu0 0.0
  %2597 = vmatprep.subr.mxu0 0.0
  %2598 = vmatpush1.msra.mxu0 0.0
  %2599 = vmatprep.subr.mxu0 0.0
  %2600 = vmatpush1.msra.mxu0 0.0
  %2601 = vmatprep.subr.mxu0 0.0
  %2602 = vmatpush1.msra.mxu0 0.0
  %2603 = vmatprep.subr.mxu0 0.0
  %2604 = vmatpush1.msra.mxu0 0.0
  %2605 = vmatprep.subr.mxu0 0.0
  %2606 = vmatpush1.msra.mxu0 0.0
  %2607 = vmatprep.subr.mxu0 0.0
  %2608 = vmatpush1.msra.mxu0 0.0
  %2609 = vmatprep.subr.mxu0 0.0
  %2610 = vmatpush1.msra.mxu0 0.0
  %2611 = vmatprep.subr.mxu0 0.0
  %2612 = vmatpush1.msra.mxu0 0.0
  %2613 = vmatprep.subr.mxu0 0.0
  %2614 = vmatpush1.msra.mxu0 0.0
  %2615 = vmatprep.mubr.f32.mxu0 0.0
  %2616 = vmatmul.mubr.f32.gmra.mrb[0].mxu0 %v2390
  %v2617 = vpop.f32.mrb[0].mxu0
  %v2618 = vadd.f32 0.0, %v2617
  %v2619 = vpop.f32.mrb[0].mxu0
  %2620 = vmatprep.mubr.f32.mxu0 0.0
  %2621 = vmatmul.mubr.f32.gmra.mrb[0].mxu0 %v2391
  %v2622 = vpop.f32.mrb[0].mxu0
  %v2623 = vadd.f32 0.0, %v2622
  %v2624 = vpop.f32.mrb[0].mxu0
  %2625 = vmatprep.mubr.f32.mxu0 0.0
  %2626 = vmatmul.mubr.f32.gmra.mrb[0].mxu0 %v2392
  %v2627 = vpop.f32.mrb[0].mxu0
  %v2628 = vadd.f32 0.0, %v2627
  %v2629 = vpop.f32.mrb[0].mxu0
  %2630 = vmatprep.mubr.f32.mxu0 0.0
  %2631 = vmatmul.mubr.f32.gmra.mrb[0].mxu0 %v2393
  %v2632 = vpop.f32.mrb[0].mxu0
  %v2633 = vadd.f32 0.0, %v2632
  %v2634 = vpop.f32.mrb[0].mxu0
  %2635 = vmatprep.mubr.f32.mxu0 0.0
  %2636 = vmatmul.mubr.f32.gmra.mrb[0].mxu0 %v2394
  %v2637 = vpop.f32.mrb[0].mxu0
  %v2638 = vadd.f32 0.0, %v2637
  %v2639 = vpop.f32.mrb[0].mxu0
  %2640 = vmatprep.mubr.f32.mxu0 0.0
  %2641 = vmatmul.mubr.f32.gmra.mrb[0].mxu0 %v2395
  %v2642 = vpop.f32.mrb[0].mxu0
  %v2643 = vadd.f32 0.0, %v2642
  %v2644 = vpop.f32.mrb[0].mxu0
  %2645 = vmatprep.mubr.f32.mxu0 0.0
  %2646 = vmatmul.mubr.f32.gmra.mrb[0].mxu0 %v2396
  %v2647 = vpop.f32.mrb[0].mxu0
  %v2648 = vadd.f32 0.0, %v2647
  %v2649 = vpop.f32.mrb[0].mxu0
  %2650 = vmatprep.mubr.f32.mxu0 0.0
  %2651 = vmatmul.mubr.f32.gmra.mrb[0].mxu0 %v2397
  %v2652 = vpop.f32.mrb[0].mxu0
  %v2653 = vadd.f32 0.0, %v2652
  %v2654 = vpop.f32.mrb[0].mxu0
  %2655 = vmatprep.mubr.f32.mxu0 0.0
  %2656 = vmatmul.mubr.f32.gmra.mrb[0].mxu0 %v2398
  %v2657 = vpop.f32.mrb[0].mxu0
  %v2658 = vadd.f32 0.0, %v2657
  %v2659 = vpop.f32.mrb[0].mxu0
  %2660 = vmatprep.mubr.f32.mxu0 0.0
  %2661 = vmatmul.mubr.f32.gmra.mrb[0].mxu0 %v2399
  %v2662 = vpop.f32.mrb[0].mxu0
  %v2663 = vadd.f32 0.0, %v2662
  %v2664 = vpop.f32.mrb[0].mxu0
  %2665 = vmatprep.mubr.f32.mxu0 0.0
  %2666 = vmatmul.mubr.f32.gmra.mrb[0].mxu0 %v2400
  %v2667 = vpop.f32.mrb[0].mxu0
  %v2668 = vadd.f32 0.0, %v2667
  %v2669 = vpop.f32.mrb[0].mxu0
  %2670 = vmatprep.mubr.f32.mxu0 0.0
  %2671 = vmatmul.mubr.f32.gmra.mrb[0].mxu0 %v2401
  %v2672 = vpop.f32.mrb[0].mxu0
  %v2673 = vadd.f32 0.0, %v2672
  %v2674 = vpop.f32.mrb[0].mxu0
  %2675 = vmatprep.mubr.f32.mxu0 0.0
  %2676 = vmatmul.mubr.f32.gmra.mrb[0].mxu0 %v2402
  %v2677 = vpop.f32.mrb[0].mxu0
  %v2678 = vadd.f32 0.0, %v2677
  %v2679 = vpop.f32.mrb[0].mxu0
  %2680 = vmatprep.mubr.f32.mxu0 0.0
  %2681 = vmatmul.mubr.f32.gmra.mrb[0].mxu0 %v2403
  %v2682 = vpop.f32.mrb[0].mxu0
  %v2683 = vadd.f32 0.0, %v2682
  %v2684 = vpop.f32.mrb[0].mxu0
  %2685 = vmatprep.mubr.f32.mxu0 0.0
  %2686 = vmatmul.mubr.f32.gmra.mrb[0].mxu0 %v2404
  %v2687 = vpop.f32.mrb[0].mxu0
  %v2688 = vadd.f32 0.0, %v2687
  %v2689 = vpop.f32.mrb[0].mxu0
  %2690 = vmatprep.mubr.f32.mxu0 0.0
  %2691 = vmatmul.mubr.f32.gmra.mrb[0].mxu0 %v2405
  %v2692 = vpop.f32.mrb[0].mxu0
  %v2693 = vadd.f32 0.0, %v2692
  %v2694 = vpop.f32.mrb[0].mxu0
  %2695 = vdwg.mxu0
  %vm2696 = vcmp.eq.f32.partialorder %v2618, %v944
  %vm2697 = vcmp.eq.f32.partialorder %v2623, %v945
  %vm2698 = vcmp.eq.f32.partialorder %v2628, %v946
  %vm2699 = vcmp.eq.f32.partialorder %v2633, %v947
  %vm2700 = vcmp.eq.f32.partialorder %v2638, %v948
  %vm2701 = vcmp.eq.f32.partialorder %v2643, %v949
  %vm2702 = vcmp.eq.f32.partialorder %v2648, %v950
  %vm2703 = vcmp.eq.f32.partialorder %v2653, %v951
  %vm2704 = vcmp.eq.f32.partialorder %v2658, %v952
  %vm2705 = vcmp.eq.f32.partialorder %v2663, %v953
  %vm2706 = vcmp.eq.f32.partialorder %v2668, %v954
  %vm2707 = vcmp.eq.f32.partialorder %v2673, %v955
  %vm2708 = vcmp.eq.f32.partialorder %v2678, %v956
  %vm2709 = vcmp.eq.f32.partialorder %v2683, %v957
  %vm2710 = vcmp.eq.f32.partialorder %v2688, %v958
  %vm2711 = vcmp.eq.f32.partialorder %v2693, %v959
  %v2712 = vmax.f32 %v2342, %v2473
  %v2713 = vmax.f32 %v2343, %v2478
  %v2714 = vmax.f32 %v2344, %v2483
  %v2715 = vmax.f32 %v2345, %v2488
  %v2716 = vmax.f32 %v2346, %v2493
  %v2717 = vmax.f32 %v2347, %v2498
  %v2718 = vmax.f32 %v2348, %v2503
  %v2719 = vmax.f32 %v2349, %v2508
  %v2720 = vmax.f32 %v2350, %v2513
  %v2721 = vmax.f32 %v2351, %v2518
  %v2722 = vmax.f32 %v2352, %v2523
  %v2723 = vmax.f32 %v2353, %v2528
  %v2724 = vmax.f32 %v2354, %v2533
  %v2725 = vmax.f32 %v2355, %v2538
  %v2726 = vmax.f32 %v2356, %v2543
  %v2727 = vmax.f32 %v2357, %v2548
  %v2728 = vsel %vm2696, 1, 0
  %v2729 = vsel %vm2697, 1, 0
  %v2730 = vsel %vm2698, 1, 0
  %v2731 = vsel %vm2699, 1, 0
  %v2732 = vsel %vm2700, 1, 0
  %v2733 = vsel %vm2701, 1, 0
  %v2734 = vsel %vm2702, 1, 0
  %v2735 = vsel %vm2703, 1, 0
  %v2736 = vsel %vm2704, 1, 0
  %v2737 = vsel %vm2705, 1, 0
  %v2738 = vsel %vm2706, 1, 0
  %v2739 = vsel %vm2707, 1, 0
  %v2740 = vsel %vm2708, 1, 0
  %v2741 = vsel %vm2709, 1, 0
  %v2742 = vsel %vm2710, 1, 0
  %v2743 = vsel %vm2711, 1, 0
  %2744 = vset.pattern.permute.xlu0 0
  %2745 = vperm.xlu0 %2744, %v2728
  %v2746 = vpop.permute.xlu0 %2745
  %2747 = vset.pattern.permute.xlu0 0
  %2748 = vperm.xlu0 %2747, %v2729
  %v2749 = vpop.permute.xlu0 %2748
  %2750 = vset.pattern.permute.xlu0 0
  %2751 = vperm.xlu0 %2750, %v2730
  %v2752 = vpop.permute.xlu0 %2751
  %2753 = vset.pattern.permute.xlu0 0
  %2754 = vperm.xlu0 %2753, %v2731
  %v2755 = vpop.permute.xlu0 %2754
  %2756 = vset.pattern.permute.xlu0 0
  %2757 = vperm.xlu0 %2756, %v2732
  %v2758 = vpop.permute.xlu0 %2757
  %2759 = vset.pattern.permute.xlu0 0
  %2760 = vperm.xlu0 %2759, %v2733
  %v2761 = vpop.permute.xlu0 %2760
  %2762 = vset.pattern.permute.xlu0 0
  %2763 = vperm.xlu0 %2762, %v2734
  %v2764 = vpop.permute.xlu0 %2763
  %2765 = vset.pattern.permute.xlu0 0
  %2766 = vperm.xlu0 %2765, %v2735
  %v2767 = vpop.permute.xlu0 %2766
  %2768 = vset.pattern.permute.xlu0 0
  %2769 = vperm.xlu0 %2768, %v2736
  %v2770 = vpop.permute.xlu0 %2769
  %2771 = vset.pattern.permute.xlu0 0
  %2772 = vperm.xlu0 %2771, %v2737
  %v2773 = vpop.permute.xlu0 %2772
  %2774 = vset.pattern.permute.xlu0 0
  %2775 = vperm.xlu0 %2774, %v2738
  %v2776 = vpop.permute.xlu0 %2775
  %2777 = vset.pattern.permute.xlu0 0
  %2778 = vperm.xlu0 %2777, %v2739
  %v2779 = vpop.permute.xlu0 %2778
  %2780 = vset.pattern.permute.xlu0 0
  %2781 = vperm.xlu0 %2780, %v2740
  %v2782 = vpop.permute.xlu0 %2781
  %2783 = vset.pattern.permute.xlu0 0
  %2784 = vperm.xlu0 %2783, %v2741
  %v2785 = vpop.permute.xlu0 %2784
  %2786 = vset.pattern.permute.xlu0 0
  %2787 = vperm.xlu0 %2786, %v2742
  %v2788 = vpop.permute.xlu0 %2787
  %2789 = vset.pattern.permute.xlu0 0
  %2790 = vperm.xlu0 %2789, %v2743
  %v2791 = vpop.permute.xlu0 %2790
  %vm2792 = vcmp.eq.s32.totalorder %v2746, 1
  %vm2793 = vcmp.eq.s32.totalorder %v2749, 1
  %vm2794 = vcmp.eq.s32.totalorder %v2752, 1
  %vm2795 = vcmp.eq.s32.totalorder %v2755, 1
  %vm2796 = vcmp.eq.s32.totalorder %v2758, 1
  %vm2797 = vcmp.eq.s32.totalorder %v2761, 1
  %vm2798 = vcmp.eq.s32.totalorder %v2764, 1
  %vm2799 = vcmp.eq.s32.totalorder %v2767, 1
  %vm2800 = vcmp.eq.s32.totalorder %v2770, 1
  %vm2801 = vcmp.eq.s32.totalorder %v2773, 1
  %vm2802 = vcmp.eq.s32.totalorder %v2776, 1
  %vm2803 = vcmp.eq.s32.totalorder %v2779, 1
  %vm2804 = vcmp.eq.s32.totalorder %v2782, 1
  %vm2805 = vcmp.eq.s32.totalorder %v2785, 1
  %vm2806 = vcmp.eq.s32.totalorder %v2788, 1
  %vm2807 = vcmp.eq.s32.totalorder %v2791, 1
  %v2808 = vsel %vm2792, %v2712, %v2342
  %v2809 = vsel %vm2793, %v2713, %v2343
  %v2810 = vsel %vm2794, %v2714, %v2344
  %v2811 = vsel %vm2795, %v2715, %v2345
  %v2812 = vsel %vm2796, %v2716, %v2346
  %v2813 = vsel %vm2797, %v2717, %v2347
  %v2814 = vsel %vm2798, %v2718, %v2348
  %v2815 = vsel %vm2799, %v2719, %v2349
  %v2816 = vsel %vm2800, %v2720, %v2350
  %v2817 = vsel %vm2801, %v2721, %v2351
  %v2818 = vsel %vm2802, %v2722, %v2352
  %v2819 = vsel %vm2803, %v2723, %v2353
  %v2820 = vsel %vm2804, %v2724, %v2354
  %v2821 = vsel %vm2805, %v2725, %v2355
  %v2822 = vsel %vm2806, %v2726, %v2356
  %v2823 = vsel %vm2807, %v2727, %v2357
  %vm2824 = vcmp.eq.s32.totalorder %v928, 16
  %vm2825 = vcmp.eq.s32.totalorder %v929, 16
  %vm2826 = vcmp.eq.s32.totalorder %v930, 16
  %vm2827 = vcmp.eq.s32.totalorder %v931, 16
  %vm2828 = vcmp.eq.s32.totalorder %v932, 16
  %vm2829 = vcmp.eq.s32.totalorder %v933, 16
  %vm2830 = vcmp.eq.s32.totalorder %v934, 16
  %vm2831 = vcmp.eq.s32.totalorder %v935, 16
  %vm2832 = vcmp.eq.s32.totalorder %v936, 16
  %vm2833 = vcmp.eq.s32.totalorder %v937, 16
  %vm2834 = vcmp.eq.s32.totalorder %v938, 16
  %vm2835 = vcmp.eq.s32.totalorder %v939, 16
  %vm2836 = vcmp.eq.s32.totalorder %v940, 16
  %vm2837 = vcmp.eq.s32.totalorder %v941, 16
  %vm2838 = vcmp.eq.s32.totalorder %v942, 16
  %vm2839 = vcmp.eq.s32.totalorder %v943, 16
  %v2840 = vsel %vm2824, 1, 0
  %v2841 = vsel %vm2825, 1, 0
  %v2842 = vsel %vm2826, 1, 0
  %v2843 = vsel %vm2827, 1, 0
  %v2844 = vsel %vm2828, 1, 0
  %v2845 = vsel %vm2829, 1, 0
  %v2846 = vsel %vm2830, 1, 0
  %v2847 = vsel %vm2831, 1, 0
  %v2848 = vsel %vm2832, 1, 0
  %v2849 = vsel %vm2833, 1, 0
  %v2850 = vsel %vm2834, 1, 0
  %v2851 = vsel %vm2835, 1, 0
  %v2852 = vsel %vm2836, 1, 0
  %v2853 = vsel %vm2837, 1, 0
  %v2854 = vsel %vm2838, 1, 0
  %v2855 = vsel %vm2839, 1, 0
  %v2856 = vcvt.s32.f32 %v2840
  %v2857 = vcvt.s32.f32 %v2841
  %v2858 = vcvt.s32.f32 %v2842
  %v2859 = vcvt.s32.f32 %v2843
  %v2860 = vcvt.s32.f32 %v2844
  %v2861 = vcvt.s32.f32 %v2845
  %v2862 = vcvt.s32.f32 %v2846
  %v2863 = vcvt.s32.f32 %v2847
  %v2864 = vcvt.s32.f32 %v2848
  %v2865 = vcvt.s32.f32 %v2849
  %v2866 = vcvt.s32.f32 %v2850
  %v2867 = vcvt.s32.f32 %v2851
  %v2868 = vcvt.s32.f32 %v2852
  %v2869 = vcvt.s32.f32 %v2853
  %v2870 = vcvt.s32.f32 %v2854
  %v2871 = vcvt.s32.f32 %v2855
  %2872 = vmatprep.subr.mxu0 0.0
  %2873 = vmatpush1.msra.mxu0 %v2808
  %2874 = vmatprep.subr.mxu0 0.0
  %2875 = vmatpush1.msra.mxu0 %v2809
  %2876 = vmatprep.subr.mxu0 0.0
  %2877 = vmatpush1.msra.mxu0 %v2810
  %2878 = vmatprep.subr.mxu0 0.0
  %2879 = vmatpush1.msra.mxu0 %v2811
  %2880 = vmatprep.subr.mxu0 0.0
  %2881 = vmatpush1.msra.mxu0 %v2812
  %2882 = vmatprep.subr.mxu0 0.0
  %2883 = vmatpush1.msra.mxu0 %v2813
  %2884 = vmatprep.subr.mxu0 0.0
  %2885 = vmatpush1.msra.mxu0 %v2814
  %2886 = vmatprep.subr.mxu0 0.0
  %2887 = vmatpush1.msra.mxu0 %v2815
  %2888 = vmatprep.subr.mxu0 0.0
  %2889 = vmatpush1.msra.mxu0 %v2816
  %2890 = vmatprep.subr.mxu0 0.0
  %2891 = vmatpush1.msra.mxu0 %v2817
  %2892 = vmatprep.subr.mxu0 0.0
  %2893 = vmatpush1.msra.mxu0 %v2818
  %2894 = vmatprep.subr.mxu0 0.0
  %2895 = vmatpush1.msra.mxu0 %v2819
  %2896 = vmatprep.subr.mxu0 0.0
  %2897 = vmatpush1.msra.mxu0 %v2820
  %2898 = vmatprep.subr.mxu0 0.0
  %2899 = vmatpush1.msra.mxu0 %v2821
  %2900 = vmatprep.subr.mxu0 0.0
  %2901 = vmatpush1.msra.mxu0 %v2822
  %2902 = vmatprep.subr.mxu0 0.0
  %2903 = vmatpush1.msra.mxu0 %v2823
  %2904 = vmatprep.subr.mxu0 0.0
  %2905 = vmatpush1.msra.mxu0 0.0
  %2906 = vmatprep.subr.mxu0 0.0
  %2907 = vmatpush1.msra.mxu0 0.0
  %2908 = vmatprep.subr.mxu0 0.0
  %2909 = vmatpush1.msra.mxu0 0.0
  %2910 = vmatprep.subr.mxu0 0.0
  %2911 = vmatpush1.msra.mxu0 0.0
  %2912 = vmatprep.subr.mxu0 0.0
  %2913 = vmatpush1.msra.mxu0 0.0
  %2914 = vmatprep.subr.mxu0 0.0
  %2915 = vmatpush1.msra.mxu0 0.0
  %2916 = vmatprep.subr.mxu0 0.0
  %2917 = vmatpush1.msra.mxu0 0.0
  %2918 = vmatprep.subr.mxu0 0.0
  %2919 = vmatpush1.msra.mxu0 0.0
  %2920 = vmatprep.subr.mxu0 0.0
  %2921 = vmatpush1.msra.mxu0 0.0
  %2922 = vmatprep.subr.mxu0 0.0
  %2923 = vmatpush1.msra.mxu0 0.0
  %2924 = vmatprep.subr.mxu0 0.0
  %2925 = vmatpush1.msra.mxu0 0.0
  %2926 = vmatprep.subr.mxu0 0.0
  %2927 = vmatpush1.msra.mxu0 0.0
  %2928 = vmatprep.subr.mxu0 0.0
  %2929 = vmatpush1.msra.mxu0 0.0
  %2930 = vmatprep.subr.mxu0 0.0
  %2931 = vmatpush1.msra.mxu0 0.0
  %2932 = vmatprep.subr.mxu0 0.0
  %2933 = vmatpush1.msra.mxu0 0.0
  %2934 = vmatprep.subr.mxu0 0.0
  %2935 = vmatpush1.msra.mxu0 0.0
  %2936 = vmatprep.mubr.f32.mxu0 0.0
  %2937 = vmatmul.mubr.f32.gmra.mrb[0].mxu0 %v2856
  %v2938 = vpop.f32.mrb[0].mxu0
  %v2939 = vadd.f32 0.0, %v2938
  %v2940 = vpop.f32.mrb[0].mxu0
  %2941 = vmatprep.mubr.f32.mxu0 0.0
  %2942 = vmatmul.mubr.f32.gmra.mrb[0].mxu0 %v2857
  %v2943 = vpop.f32.mrb[0].mxu0
  %v2944 = vadd.f32 0.0, %v2943
  %v2945 = vpop.f32.mrb[0].mxu0
  %2946 = vmatprep.mubr.f32.mxu0 0.0
  %2947 = vmatmul.mubr.f32.gmra.mrb[0].mxu0 %v2858
  %v2948 = vpop.f32.mrb[0].mxu0
  %v2949 = vadd.f32 0.0, %v2948
  %v2950 = vpop.f32.mrb[0].mxu0
  %2951 = vmatprep.mubr.f32.mxu0 0.0
  %2952 = vmatmul.mubr.f32.gmra.mrb[0].mxu0 %v2859
  %v2953 = vpop.f32.mrb[0].mxu0
  %v2954 = vadd.f32 0.0, %v2953
  %v2955 = vpop.f32.mrb[0].mxu0
  %2956 = vmatprep.mubr.f32.mxu0 0.0
  %2957 = vmatmul.mubr.f32.gmra.mrb[0].mxu0 %v2860
  %v2958 = vpop.f32.mrb[0].mxu0
  %v2959 = vadd.f32 0.0, %v2958
  %v2960 = vpop.f32.mrb[0].mxu0
  %2961 = vmatprep.mubr.f32.mxu0 0.0
  %2962 = vmatmul.mubr.f32.gmra.mrb[0].mxu0 %v2861
  %v2963 = vpop.f32.mrb[0].mxu0
  %v2964 = vadd.f32 0.0, %v2963
  %v2965 = vpop.f32.mrb[0].mxu0
  %2966 = vmatprep.mubr.f32.mxu0 0.0
  %2967 = vmatmul.mubr.f32.gmra.mrb[0].mxu0 %v2862
  %v2968 = vpop.f32.mrb[0].mxu0
  %v2969 = vadd.f32 0.0, %v2968
  %v2970 = vpop.f32.mrb[0].mxu0
  %2971 = vmatprep.mubr.f32.mxu0 0.0
  %2972 = vmatmul.mubr.f32.gmra.mrb[0].mxu0 %v2863
  %v2973 = vpop.f32.mrb[0].mxu0
  %v2974 = vadd.f32 0.0, %v2973
  %v2975 = vpop.f32.mrb[0].mxu0
  %2976 = vmatprep.mubr.f32.mxu0 0.0
  %2977 = vmatmul.mubr.f32.gmra.mrb[0].mxu0 %v2864
  %v2978 = vpop.f32.mrb[0].mxu0
  %v2979 = vadd.f32 0.0, %v2978
  %v2980 = vpop.f32.mrb[0].mxu0
  %2981 = vmatprep.mubr.f32.mxu0 0.0
  %2982 = vmatmul.mubr.f32.gmra.mrb[0].mxu0 %v2865
  %v2983 = vpop.f32.mrb[0].mxu0
  %v2984 = vadd.f32 0.0, %v2983
  %v2985 = vpop.f32.mrb[0].mxu0
  %2986 = vmatprep.mubr.f32.mxu0 0.0
  %2987 = vmatmul.mubr.f32.gmra.mrb[0].mxu0 %v2866
  %v2988 = vpop.f32.mrb[0].mxu0
  %v2989 = vadd.f32 0.0, %v2988
  %v2990 = vpop.f32.mrb[0].mxu0
  %2991 = vmatprep.mubr.f32.mxu0 0.0
  %2992 = vmatmul.mubr.f32.gmra.mrb[0].mxu0 %v2867
  %v2993 = vpop.f32.mrb[0].mxu0
  %v2994 = vadd.f32 0.0, %v2993
  %v2995 = vpop.f32.mrb[0].mxu0
  %2996 = vmatprep.mubr.f32.mxu0 0.0
  %2997 = vmatmul.mubr.f32.gmra.mrb[0].mxu0 %v2868
  %v2998 = vpop.f32.mrb[0].mxu0
  %v2999 = vadd.f32 0.0, %v2998
  %v3000 = vpop.f32.mrb[0].mxu0
  %3001 = vmatprep.mubr.f32.mxu0 0.0
  %3002 = vmatmul.mubr.f32.gmra.mrb[0].mxu0 %v2869
  %v3003 = vpop.f32.mrb[0].mxu0
  %v3004 = vadd.f32 0.0, %v3003
  %v3005 = vpop.f32.mrb[0].mxu0
  %3006 = vmatprep.mubr.f32.mxu0 0.0
  %3007 = vmatmul.mubr.f32.gmra.mrb[0].mxu0 %v2870
  %v3008 = vpop.f32.mrb[0].mxu0
  %v3009 = vadd.f32 0.0, %v3008
  %v3010 = vpop.f32.mrb[0].mxu0
  %3011 = vmatprep.mubr.f32.mxu0 0.0
  %3012 = vmatmul.mubr.f32.gmra.mrb[0].mxu0 %v2871
  %v3013 = vpop.f32.mrb[0].mxu0
  %v3014 = vadd.f32 0.0, %v3013
  %v3015 = vpop.f32.mrb[0].mxu0
  %3016 = vdwg.mxu0
  %3017 = vmatprep.subr.mxu0 0.0
  %3018 = vmatpush1.msra.mxu0 %v944
  %3019 = vmatprep.subr.mxu0 0.0
  %3020 = vmatpush1.msra.mxu0 %v945
  %3021 = vmatprep.subr.mxu0 0.0
  %3022 = vmatpush1.msra.mxu0 %v946
  %3023 = vmatprep.subr.mxu0 0.0
  %3024 = vmatpush1.msra.mxu0 %v947
  %3025 = vmatprep.subr.mxu0 0.0
  %3026 = vmatpush1.msra.mxu0 %v948
  %3027 = vmatprep.subr.mxu0 0.0
  %3028 = vmatpush1.msra.mxu0 %v949
  %3029 = vmatprep.subr.mxu0 0.0
  %3030 = vmatpush1.msra.mxu0 %v950
  %3031 = vmatprep.subr.mxu0 0.0
  %3032 = vmatpush1.msra.mxu0 %v951
  %3033 = vmatprep.subr.mxu0 0.0
  %3034 = vmatpush1.msra.mxu0 %v952
  %3035 = vmatprep.subr.mxu0 0.0
  %3036 = vmatpush1.msra.mxu0 %v953
  %3037 = vmatprep.subr.mxu0 0.0
  %3038 = vmatpush1.msra.mxu0 %v954
  %3039 = vmatprep.subr.mxu0 0.0
  %3040 = vmatpush1.msra.mxu0 %v955
  %3041 = vmatprep.subr.mxu0 0.0
  %3042 = vmatpush1.msra.mxu0 %v956
  %3043 = vmatprep.subr.mxu0 0.0
  %3044 = vmatpush1.msra.mxu0 %v957
  %3045 = vmatprep.subr.mxu0 0.0
  %3046 = vmatpush1.msra.mxu0 %v958
  %3047 = vmatprep.subr.mxu0 0.0
  %3048 = vmatpush1.msra.mxu0 %v959
  %3049 = vmatprep.subr.mxu0 0.0
  %3050 = vmatpush1.msra.mxu0 0.0
  %3051 = vmatprep.subr.mxu0 0.0
  %3052 = vmatpush1.msra.mxu0 0.0
  %3053 = vmatprep.subr.mxu0 0.0
  %3054 = vmatpush1.msra.mxu0 0.0
  %3055 = vmatprep.subr.mxu0 0.0
  %3056 = vmatpush1.msra.mxu0 0.0
  %3057 = vmatprep.subr.mxu0 0.0
  %3058 = vmatpush1.msra.mxu0 0.0
  %3059 = vmatprep.subr.mxu0 0.0
  %3060 = vmatpush1.msra.mxu0 0.0
  %3061 = vmatprep.subr.mxu0 0.0
  %3062 = vmatpush1.msra.mxu0 0.0
  %3063 = vmatprep.subr.mxu0 0.0
  %3064 = vmatpush1.msra.mxu0 0.0
  %3065 = vmatprep.subr.mxu0 0.0
  %3066 = vmatpush1.msra.mxu0 0.0
  %3067 = vmatprep.subr.mxu0 0.0
  %3068 = vmatpush1.msra.mxu0 0.0
  %3069 = vmatprep.subr.mxu0 0.0
  %3070 = vmatpush1.msra.mxu0 0.0
  %3071 = vmatprep.subr.mxu0 0.0
  %3072 = vmatpush1.msra.mxu0 0.0
  %3073 = vmatprep.subr.mxu0 0.0
  %3074 = vmatpush1.msra.mxu0 0.0
  %3075 = vmatprep.subr.mxu0 0.0
  %3076 = vmatpush1.msra.mxu0 0.0
  %3077 = vmatprep.subr.mxu0 0.0
  %3078 = vmatpush1.msra.mxu0 0.0
  %3079 = vmatprep.subr.mxu0 0.0
  %3080 = vmatpush1.msra.mxu0 0.0
  %3081 = vmatprep.mubr.f32.mxu0 0.0
  %3082 = vmatmul.mubr.f32.gmra.mrb[0].mxu0 %v2856
  %v3083 = vpop.f32.mrb[0].mxu0
  %v3084 = vadd.f32 0.0, %v3083
  %v3085 = vpop.f32.mrb[0].mxu0
  %3086 = vmatprep.mubr.f32.mxu0 0.0
  %3087 = vmatmul.mubr.f32.gmra.mrb[0].mxu0 %v2857
  %v3088 = vpop.f32.mrb[0].mxu0
  %v3089 = vadd.f32 0.0, %v3088
  %v3090 = vpop.f32.mrb[0].mxu0
  %3091 = vmatprep.mubr.f32.mxu0 0.0
  %3092 = vmatmul.mubr.f32.gmra.mrb[0].mxu0 %v2858
  %v3093 = vpop.f32.mrb[0].mxu0
  %v3094 = vadd.f32 0.0, %v3093
  %v3095 = vpop.f32.mrb[0].mxu0
  %3096 = vmatprep.mubr.f32.mxu0 0.0
  %3097 = vmatmul.mubr.f32.gmra.mrb[0].mxu0 %v2859
  %v3098 = vpop.f32.mrb[0].mxu0
  %v3099 = vadd.f32 0.0, %v3098
  %v3100 = vpop.f32.mrb[0].mxu0
  %3101 = vmatprep.mubr.f32.mxu0 0.0
  %3102 = vmatmul.mubr.f32.gmra.mrb[0].mxu0 %v2860
  %v3103 = vpop.f32.mrb[0].mxu0
  %v3104 = vadd.f32 0.0, %v3103
  %v3105 = vpop.f32.mrb[0].mxu0
  %3106 = vmatprep.mubr.f32.mxu0 0.0
  %3107 = vmatmul.mubr.f32.gmra.mrb[0].mxu0 %v2861
  %v3108 = vpop.f32.mrb[0].mxu0
  %v3109 = vadd.f32 0.0, %v3108
  %v3110 = vpop.f32.mrb[0].mxu0
  %3111 = vmatprep.mubr.f32.mxu0 0.0
  %3112 = vmatmul.mubr.f32.gmra.mrb[0].mxu0 %v2862
  %v3113 = vpop.f32.mrb[0].mxu0
  %v3114 = vadd.f32 0.0, %v3113
  %v3115 = vpop.f32.mrb[0].mxu0
  %3116 = vmatprep.mubr.f32.mxu0 0.0
  %3117 = vmatmul.mubr.f32.gmra.mrb[0].mxu0 %v2863
  %v3118 = vpop.f32.mrb[0].mxu0
  %v3119 = vadd.f32 0.0, %v3118
  %v3120 = vpop.f32.mrb[0].mxu0
  %3121 = vmatprep.mubr.f32.mxu0 0.0
  %3122 = vmatmul.mubr.f32.gmra.mrb[0].mxu0 %v2864
  %v3123 = vpop.f32.mrb[0].mxu0
  %v3124 = vadd.f32 0.0, %v3123
  %v3125 = vpop.f32.mrb[0].mxu0
  %3126 = vmatprep.mubr.f32.mxu0 0.0
  %3127 = vmatmul.mubr.f32.gmra.mrb[0].mxu0 %v2865
  %v3128 = vpop.f32.mrb[0].mxu0
  %v3129 = vadd.f32 0.0, %v3128
  %v3130 = vpop.f32.mrb[0].mxu0
  %3131 = vmatprep.mubr.f32.mxu0 0.0
  %3132 = vmatmul.mubr.f32.gmra.mrb[0].mxu0 %v2866
  %v3133 = vpop.f32.mrb[0].mxu0
  %v3134 = vadd.f32 0.0, %v3133
  %v3135 = vpop.f32.mrb[0].mxu0
  %3136 = vmatprep.mubr.f32.mxu0 0.0
  %3137 = vmatmul.mubr.f32.gmra.mrb[0].mxu0 %v2867
  %v3138 = vpop.f32.mrb[0].mxu0
  %v3139 = vadd.f32 0.0, %v3138
  %v3140 = vpop.f32.mrb[0].mxu0
  %3141 = vmatprep.mubr.f32.mxu0 0.0
  %3142 = vmatmul.mubr.f32.gmra.mrb[0].mxu0 %v2868
  %v3143 = vpop.f32.mrb[0].mxu0
  %v3144 = vadd.f32 0.0, %v3143
  %v3145 = vpop.f32.mrb[0].mxu0
  %3146 = vmatprep.mubr.f32.mxu0 0.0
  %3147 = vmatmul.mubr.f32.gmra.mrb[0].mxu0 %v2869
  %v3148 = vpop.f32.mrb[0].mxu0
  %v3149 = vadd.f32 0.0, %v3148
  %v3150 = vpop.f32.mrb[0].mxu0
  %3151 = vmatprep.mubr.f32.mxu0 0.0
  %3152 = vmatmul.mubr.f32.gmra.mrb[0].mxu0 %v2870
  %v3153 = vpop.f32.mrb[0].mxu0
  %v3154 = vadd.f32 0.0, %v3153
  %v3155 = vpop.f32.mrb[0].mxu0
  %3156 = vmatprep.mubr.f32.mxu0 0.0
  %3157 = vmatmul.mubr.f32.gmra.mrb[0].mxu0 %v2871
  %v3158 = vpop.f32.mrb[0].mxu0
  %v3159 = vadd.f32 0.0, %v3158
  %v3160 = vpop.f32.mrb[0].mxu0
  %3161 = vdwg.mxu0
  %vm3162 = vcmp.eq.f32.partialorder %v3084, %v944
  %vm3163 = vcmp.eq.f32.partialorder %v3089, %v945
  %vm3164 = vcmp.eq.f32.partialorder %v3094, %v946
  %vm3165 = vcmp.eq.f32.partialorder %v3099, %v947
  %vm3166 = vcmp.eq.f32.partialorder %v3104, %v948
  %vm3167 = vcmp.eq.f32.partialorder %v3109, %v949
  %vm3168 = vcmp.eq.f32.partialorder %v3114, %v950
  %vm3169 = vcmp.eq.f32.partialorder %v3119, %v951
  %vm3170 = vcmp.eq.f32.partialorder %v3124, %v952
  %vm3171 = vcmp.eq.f32.partialorder %v3129, %v953
  %vm3172 = vcmp.eq.f32.partialorder %v3134, %v954
  %vm3173 = vcmp.eq.f32.partialorder %v3139, %v955
  %vm3174 = vcmp.eq.f32.partialorder %v3144, %v956
  %vm3175 = vcmp.eq.f32.partialorder %v3149, %v957
  %vm3176 = vcmp.eq.f32.partialorder %v3154, %v958
  %vm3177 = vcmp.eq.f32.partialorder %v3159, %v959
  %v3178 = vmax.f32 %v2808, %v2939
  %v3179 = vmax.f32 %v2809, %v2944
  %v3180 = vmax.f32 %v2810, %v2949
  %v3181 = vmax.f32 %v2811, %v2954
  %v3182 = vmax.f32 %v2812, %v2959
  %v3183 = vmax.f32 %v2813, %v2964
  %v3184 = vmax.f32 %v2814, %v2969
  %v3185 = vmax.f32 %v2815, %v2974
  %v3186 = vmax.f32 %v2816, %v2979
  %v3187 = vmax.f32 %v2817, %v2984
  %v3188 = vmax.f32 %v2818, %v2989
  %v3189 = vmax.f32 %v2819, %v2994
  %v3190 = vmax.f32 %v2820, %v2999
  %v3191 = vmax.f32 %v2821, %v3004
  %v3192 = vmax.f32 %v2822, %v3009
  %v3193 = vmax.f32 %v2823, %v3014
  %v3194 = vsel %vm3162, 1, 0
  %v3195 = vsel %vm3163, 1, 0
  %v3196 = vsel %vm3164, 1, 0
  %v3197 = vsel %vm3165, 1, 0
  %v3198 = vsel %vm3166, 1, 0
  %v3199 = vsel %vm3167, 1, 0
  %v3200 = vsel %vm3168, 1, 0
  %v3201 = vsel %vm3169, 1, 0
  %v3202 = vsel %vm3170, 1, 0
  %v3203 = vsel %vm3171, 1, 0
  %v3204 = vsel %vm3172, 1, 0
  %v3205 = vsel %vm3173, 1, 0
  %v3206 = vsel %vm3174, 1, 0
  %v3207 = vsel %vm3175, 1, 0
  %v3208 = vsel %vm3176, 1, 0
  %v3209 = vsel %vm3177, 1, 0
  %3210 = vset.pattern.permute.xlu0 0
  %3211 = vperm.xlu0 %3210, %v3194
  %v3212 = vpop.permute.xlu0 %3211
  %3213 = vset.pattern.permute.xlu0 0
  %3214 = vperm.xlu0 %3213, %v3195
  %v3215 = vpop.permute.xlu0 %3214
  %3216 = vset.pattern.permute.xlu0 0
  %3217 = vperm.xlu0 %3216, %v3196
  %v3218 = vpop.permute.xlu0 %3217
  %3219 = vset.pattern.permute.xlu0 0
  %3220 = vperm.xlu0 %3219, %v3197
  %v3221 = vpop.permute.xlu0 %3220
  %3222 = vset.pattern.permute.xlu0 0
  %3223 = vperm.xlu0 %3222, %v3198
  %v3224 = vpop.permute.xlu0 %3223
  %3225 = vset.pattern.permute.xlu0 0
  %3226 = vperm.xlu0 %3225, %v3199
  %v3227 = vpop.permute.xlu0 %3226
  %3228 = vset.pattern.permute.xlu0 0
  %3229 = vperm.xlu0 %3228, %v3200
  %v3230 = vpop.permute.xlu0 %3229
  %3231 = vset.pattern.permute.xlu0 0
  %3232 = vperm.xlu0 %3231, %v3201
  %v3233 = vpop.permute.xlu0 %3232
  %3234 = vset.pattern.permute.xlu0 0
  %3235 = vperm.xlu0 %3234, %v3202
  %v3236 = vpop.permute.xlu0 %3235
  %3237 = vset.pattern.permute.xlu0 0
  %3238 = vperm.xlu0 %3237, %v3203
  %v3239 = vpop.permute.xlu0 %3238
  %3240 = vset.pattern.permute.xlu0 0
  %3241 = vperm.xlu0 %3240, %v3204
  %v3242 = vpop.permute.xlu0 %3241
  %3243 = vset.pattern.permute.xlu0 0
  %3244 = vperm.xlu0 %3243, %v3205
  %v3245 = vpop.permute.xlu0 %3244
  %3246 = vset.pattern.permute.xlu0 0
  %3247 = vperm.xlu0 %3246, %v3206
  %v3248 = vpop.permute.xlu0 %3247
  %3249 = vset.pattern.permute.xlu0 0
  %3250 = vperm.xlu0 %3249, %v3207
  %v3251 = vpop.permute.xlu0 %3250
  %3252 = vset.pattern.permute.xlu0 0
  %3253 = vperm.xlu0 %3252, %v3208
  %v3254 = vpop.permute.xlu0 %3253
  %3255 = vset.pattern.permute.xlu0 0
  %3256 = vperm.xlu0 %3255, %v3209
  %v3257 = vpop.permute.xlu0 %3256
  %vm3258 = vcmp.eq.s32.totalorder %v3212, 1
  %vm3259 = vcmp.eq.s32.totalorder %v3215, 1
  %vm3260 = vcmp.eq.s32.totalorder %v3218, 1
  %vm3261 = vcmp.eq.s32.totalorder %v3221, 1
  %vm3262 = vcmp.eq.s32.totalorder %v3224, 1
  %vm3263 = vcmp.eq.s32.totalorder %v3227, 1
  %vm3264 = vcmp.eq.s32.totalorder %v3230, 1
  %vm3265 = vcmp.eq.s32.totalorder %v3233, 1
  %vm3266 = vcmp.eq.s32.totalorder %v3236, 1
  %vm3267 = vcmp.eq.s32.totalorder %v3239, 1
  %vm3268 = vcmp.eq.s32.totalorder %v3242, 1
  %vm3269 = vcmp.eq.s32.totalorder %v3245, 1
  %vm3270 = vcmp.eq.s32.totalorder %v3248, 1
  %vm3271 = vcmp.eq.s32.totalorder %v3251, 1
  %vm3272 = vcmp.eq.s32.totalorder %v3254, 1
  %vm3273 = vcmp.eq.s32.totalorder %v3257, 1
  %v3274 = vsel %vm3258, %v3178, %v2808
  %v3275 = vsel %vm3259, %v3179, %v2809
  %v3276 = vsel %vm3260, %v3180, %v2810
  %v3277 = vsel %vm3261, %v3181, %v2811
  %v3278 = vsel %vm3262, %v3182, %v2812
  %v3279 = vsel %vm3263, %v3183, %v2813
  %v3280 = vsel %vm3264, %v3184, %v2814
  %v3281 = vsel %vm3265, %v3185, %v2815
  %v3282 = vsel %vm3266, %v3186, %v2816
  %v3283 = vsel %vm3267, %v3187, %v2817
  %v3284 = vsel %vm3268, %v3188, %v2818
  %v3285 = vsel %vm3269, %v3189, %v2819
  %v3286 = vsel %vm3270, %v3190, %v2820
  %v3287 = vsel %vm3271, %v3191, %v2821
  %v3288 = vsel %vm3272, %v3192, %v2822
  %v3289 = vsel %vm3273, %v3193, %v2823
  %vm3290 = vcmp.eq.s32.totalorder %v928, 32
  %vm3291 = vcmp.eq.s32.totalorder %v929, 32
  %vm3292 = vcmp.eq.s32.totalorder %v930, 32
  %vm3293 = vcmp.eq.s32.totalorder %v931, 32
  %vm3294 = vcmp.eq.s32.totalorder %v932, 32
  %vm3295 = vcmp.eq.s32.totalorder %v933, 32
  %vm3296 = vcmp.eq.s32.totalorder %v934, 32
  %vm3297 = vcmp.eq.s32.totalorder %v935, 32
  %vm3298 = vcmp.eq.s32.totalorder %v936, 32
  %vm3299 = vcmp.eq.s32.totalorder %v937, 32
  %vm3300 = vcmp.eq.s32.totalorder %v938, 32
  %vm3301 = vcmp.eq.s32.totalorder %v939, 32
  %vm3302 = vcmp.eq.s32.totalorder %v940, 32
  %vm3303 = vcmp.eq.s32.totalorder %v941, 32
  %vm3304 = vcmp.eq.s32.totalorder %v942, 32
  %vm3305 = vcmp.eq.s32.totalorder %v943, 32
  %v3306 = vsel %vm3290, 1, 0
  %v3307 = vsel %vm3291, 1, 0
  %v3308 = vsel %vm3292, 1, 0
  %v3309 = vsel %vm3293, 1, 0
  %v3310 = vsel %vm3294, 1, 0
  %v3311 = vsel %vm3295, 1, 0
  %v3312 = vsel %vm3296, 1, 0
  %v3313 = vsel %vm3297, 1, 0
  %v3314 = vsel %vm3298, 1, 0
  %v3315 = vsel %vm3299, 1, 0
  %v3316 = vsel %vm3300, 1, 0
  %v3317 = vsel %vm3301, 1, 0
  %v3318 = vsel %vm3302, 1, 0
  %v3319 = vsel %vm3303, 1, 0
  %v3320 = vsel %vm3304, 1, 0
  %v3321 = vsel %vm3305, 1, 0
  %v3322 = vcvt.s32.f32 %v3306
  %v3323 = vcvt.s32.f32 %v3307
  %v3324 = vcvt.s32.f32 %v3308
  %v3325 = vcvt.s32.f32 %v3309
  %v3326 = vcvt.s32.f32 %v3310
  %v3327 = vcvt.s32.f32 %v3311
  %v3328 = vcvt.s32.f32 %v3312
  %v3329 = vcvt.s32.f32 %v3313
  %v3330 = vcvt.s32.f32 %v3314
  %v3331 = vcvt.s32.f32 %v3315
  %v3332 = vcvt.s32.f32 %v3316
  %v3333 = vcvt.s32.f32 %v3317
  %v3334 = vcvt.s32.f32 %v3318
  %v3335 = vcvt.s32.f32 %v3319
  %v3336 = vcvt.s32.f32 %v3320
  %v3337 = vcvt.s32.f32 %v3321
  %3338 = vmatprep.subr.mxu0 0.0
  %3339 = vmatpush1.msra.mxu0 %v3274
  %3340 = vmatprep.subr.mxu0 0.0
  %3341 = vmatpush1.msra.mxu0 %v3275
  %3342 = vmatprep.subr.mxu0 0.0
  %3343 = vmatpush1.msra.mxu0 %v3276
  %3344 = vmatprep.subr.mxu0 0.0
  %3345 = vmatpush1.msra.mxu0 %v3277
  %3346 = vmatprep.subr.mxu0 0.0
  %3347 = vmatpush1.msra.mxu0 %v3278
  %3348 = vmatprep.subr.mxu0 0.0
  %3349 = vmatpush1.msra.mxu0 %v3279
  %3350 = vmatprep.subr.mxu0 0.0
  %3351 = vmatpush1.msra.mxu0 %v3280
  %3352 = vmatprep.subr.mxu0 0.0
  %3353 = vmatpush1.msra.mxu0 %v3281
  %3354 = vmatprep.subr.mxu0 0.0
  %3355 = vmatpush1.msra.mxu0 %v3282
  %3356 = vmatprep.subr.mxu0 0.0
  %3357 = vmatpush1.msra.mxu0 %v3283
  %3358 = vmatprep.subr.mxu0 0.0
  %3359 = vmatpush1.msra.mxu0 %v3284
  %3360 = vmatprep.subr.mxu0 0.0
  %3361 = vmatpush1.msra.mxu0 %v3285
  %3362 = vmatprep.subr.mxu0 0.0
  %3363 = vmatpush1.msra.mxu0 %v3286
  %3364 = vmatprep.subr.mxu0 0.0
  %3365 = vmatpush1.msra.mxu0 %v3287
  %3366 = vmatprep.subr.mxu0 0.0
  %3367 = vmatpush1.msra.mxu0 %v3288
  %3368 = vmatprep.subr.mxu0 0.0
  %3369 = vmatpush1.msra.mxu0 %v3289
  %3370 = vmatprep.subr.mxu0 0.0
  %3371 = vmatpush1.msra.mxu0 0.0
  %3372 = vmatprep.subr.mxu0 0.0
  %3373 = vmatpush1.msra.mxu0 0.0
  %3374 = vmatprep.subr.mxu0 0.0
  %3375 = vmatpush1.msra.mxu0 0.0
  %3376 = vmatprep.subr.mxu0 0.0
  %3377 = vmatpush1.msra.mxu0 0.0
  %3378 = vmatprep.subr.mxu0 0.0
  %3379 = vmatpush1.msra.mxu0 0.0
  %3380 = vmatprep.subr.mxu0 0.0
  %3381 = vmatpush1.msra.mxu0 0.0
  %3382 = vmatprep.subr.mxu0 0.0
  %3383 = vmatpush1.msra.mxu0 0.0
  %3384 = vmatprep.subr.mxu0 0.0
  %3385 = vmatpush1.msra.mxu0 0.0
  %3386 = vmatprep.subr.mxu0 0.0
  %3387 = vmatpush1.msra.mxu0 0.0
  %3388 = vmatprep.subr.mxu0 0.0
  %3389 = vmatpush1.msra.mxu0 0.0
  %3390 = vmatprep.subr.mxu0 0.0
  %3391 = vmatpush1.msra.mxu0 0.0
  %3392 = vmatprep.subr.mxu0 0.0
  %3393 = vmatpush1.msra.mxu0 0.0
  %3394 = vmatprep.subr.mxu0 0.0
  %3395 = vmatpush1.msra.mxu0 0.0
  %3396 = vmatprep.subr.mxu0 0.0
  %3397 = vmatpush1.msra.mxu0 0.0
  %3398 = vmatprep.subr.mxu0 0.0
  %3399 = vmatpush1.msra.mxu0 0.0
  %3400 = vmatprep.subr.mxu0 0.0
  %3401 = vmatpush1.msra.mxu0 0.0
  %3402 = vmatprep.mubr.f32.mxu0 0.0
  %3403 = vmatmul.mubr.f32.gmra.mrb[0].mxu0 %v3322
  %v3404 = vpop.f32.mrb[0].mxu0
  %v3405 = vadd.f32 0.0, %v3404
  %v3406 = vpop.f32.mrb[0].mxu0
  %3407 = vmatprep.mubr.f32.mxu0 0.0
  %3408 = vmatmul.mubr.f32.gmra.mrb[0].mxu0 %v3323
  %v3409 = vpop.f32.mrb[0].mxu0
  %v3410 = vadd.f32 0.0, %v3409
  %v3411 = vpop.f32.mrb[0].mxu0
  %3412 = vmatprep.mubr.f32.mxu0 0.0
  %3413 = vmatmul.mubr.f32.gmra.mrb[0].mxu0 %v3324
  %v3414 = vpop.f32.mrb[0].mxu0
  %v3415 = vadd.f32 0.0, %v3414
  %v3416 = vpop.f32.mrb[0].mxu0
  %3417 = vmatprep.mubr.f32.mxu0 0.0
  %3418 = vmatmul.mubr.f32.gmra.mrb[0].mxu0 %v3325
  %v3419 = vpop.f32.mrb[0].mxu0
  %v3420 = vadd.f32 0.0, %v3419
  %v3421 = vpop.f32.mrb[0].mxu0
  %3422 = vmatprep.mubr.f32.mxu0 0.0
  %3423 = vmatmul.mubr.f32.gmra.mrb[0].mxu0 %v3326
  %v3424 = vpop.f32.mrb[0].mxu0
  %v3425 = vadd.f32 0.0, %v3424
  %v3426 = vpop.f32.mrb[0].mxu0
  %3427 = vmatprep.mubr.f32.mxu0 0.0
  %3428 = vmatmul.mubr.f32.gmra.mrb[0].mxu0 %v3327
  %v3429 = vpop.f32.mrb[0].mxu0
  %v3430 = vadd.f32 0.0, %v3429
  %v3431 = vpop.f32.mrb[0].mxu0
  %3432 = vmatprep.mubr.f32.mxu0 0.0
  %3433 = vmatmul.mubr.f32.gmra.mrb[0].mxu0 %v3328
  %v3434 = vpop.f32.mrb[0].mxu0
  %v3435 = vadd.f32 0.0, %v3434
  %v3436 = vpop.f32.mrb[0].mxu0
  %3437 = vmatprep.mubr.f32.mxu0 0.0
  %3438 = vmatmul.mubr.f32.gmra.mrb[0].mxu0 %v3329
  %v3439 = vpop.f32.mrb[0].mxu0
  %v3440 = vadd.f32 0.0, %v3439
  %v3441 = vpop.f32.mrb[0].mxu0
  %3442 = vmatprep.mubr.f32.mxu0 0.0
  %3443 = vmatmul.mubr.f32.gmra.mrb[0].mxu0 %v3330
  %v3444 = vpop.f32.mrb[0].mxu0
  %v3445 = vadd.f32 0.0, %v3444
  %v3446 = vpop.f32.mrb[0].mxu0
  %3447 = vmatprep.mubr.f32.mxu0 0.0
  %3448 = vmatmul.mubr.f32.gmra.mrb[0].mxu0 %v3331
  %v3449 = vpop.f32.mrb[0].mxu0
  %v3450 = vadd.f32 0.0, %v3449
  %v3451 = vpop.f32.mrb[0].mxu0
  %3452 = vmatprep.mubr.f32.mxu0 0.0
  %3453 = vmatmul.mubr.f32.gmra.mrb[0].mxu0 %v3332
  %v3454 = vpop.f32.mrb[0].mxu0
  %v3455 = vadd.f32 0.0, %v3454
  %v3456 = vpop.f32.mrb[0].mxu0
  %3457 = vmatprep.mubr.f32.mxu0 0.0
  %3458 = vmatmul.mubr.f32.gmra.mrb[0].mxu0 %v3333
  %v3459 = vpop.f32.mrb[0].mxu0
  %v3460 = vadd.f32 0.0, %v3459
  %v3461 = vpop.f32.mrb[0].mxu0
  %3462 = vmatprep.mubr.f32.mxu0 0.0
  %3463 = vmatmul.mubr.f32.gmra.mrb[0].mxu0 %v3334
  %v3464 = vpop.f32.mrb[0].mxu0
  %v3465 = vadd.f32 0.0, %v3464
  %v3466 = vpop.f32.mrb[0].mxu0
  %3467 = vmatprep.mubr.f32.mxu0 0.0
  %3468 = vmatmul.mubr.f32.gmra.mrb[0].mxu0 %v3335
  %v3469 = vpop.f32.mrb[0].mxu0
  %v3470 = vadd.f32 0.0, %v3469
  %v3471 = vpop.f32.mrb[0].mxu0
  %3472 = vmatprep.mubr.f32.mxu0 0.0
  %3473 = vmatmul.mubr.f32.gmra.mrb[0].mxu0 %v3336
  %v3474 = vpop.f32.mrb[0].mxu0
  %v3475 = vadd.f32 0.0, %v3474
  %v3476 = vpop.f32.mrb[0].mxu0
  %3477 = vmatprep.mubr.f32.mxu0 0.0
  %3478 = vmatmul.mubr.f32.gmra.mrb[0].mxu0 %v3337
  %v3479 = vpop.f32.mrb[0].mxu0
  %v3480 = vadd.f32 0.0, %v3479
  %v3481 = vpop.f32.mrb[0].mxu0
  %3482 = vdwg.mxu0
  %3483 = vmatprep.subr.mxu0 0.0
  %3484 = vmatpush1.msra.mxu0 %v944
  %3485 = vmatprep.subr.mxu0 0.0
  %3486 = vmatpush1.msra.mxu0 %v945
  %3487 = vmatprep.subr.mxu0 0.0
  %3488 = vmatpush1.msra.mxu0 %v946
  %3489 = vmatprep.subr.mxu0 0.0
  %3490 = vmatpush1.msra.mxu0 %v947
  %3491 = vmatprep.subr.mxu0 0.0
  %3492 = vmatpush1.msra.mxu0 %v948
  %3493 = vmatprep.subr.mxu0 0.0
  %3494 = vmatpush1.msra.mxu0 %v949
  %3495 = vmatprep.subr.mxu0 0.0
  %3496 = vmatpush1.msra.mxu0 %v950
  %3497 = vmatprep.subr.mxu0 0.0
  %3498 = vmatpush1.msra.mxu0 %v951
  %3499 = vmatprep.subr.mxu0 0.0
  %3500 = vmatpush1.msra.mxu0 %v952
  %3501 = vmatprep.subr.mxu0 0.0
  %3502 = vmatpush1.msra.mxu0 %v953
  %3503 = vmatprep.subr.mxu0 0.0
  %3504 = vmatpush1.msra.mxu0 %v954
  %3505 = vmatprep.subr.mxu0 0.0
  %3506 = vmatpush1.msra.mxu0 %v955
  %3507 = vmatprep.subr.mxu0 0.0
  %3508 = vmatpush1.msra.mxu0 %v956
  %3509 = vmatprep.subr.mxu0 0.0
  %3510 = vmatpush1.msra.mxu0 %v957
  %3511 = vmatprep.subr.mxu0 0.0
  %3512 = vmatpush1.msra.mxu0 %v958
  %3513 = vmatprep.subr.mxu0 0.0
  %3514 = vmatpush1.msra.mxu0 %v959
  %3515 = vmatprep.subr.mxu0 0.0
  %3516 = vmatpush1.msra.mxu0 0.0
  %3517 = vmatprep.subr.mxu0 0.0
  %3518 = vmatpush1.msra.mxu0 0.0
  %3519 = vmatprep.subr.mxu0 0.0
  %3520 = vmatpush1.msra.mxu0 0.0
  %3521 = vmatprep.subr.mxu0 0.0
  %3522 = vmatpush1.msra.mxu0 0.0
  %3523 = vmatprep.subr.mxu0 0.0
  %3524 = vmatpush1.msra.mxu0 0.0
  %3525 = vmatprep.subr.mxu0 0.0
  %3526 = vmatpush1.msra.mxu0 0.0
  %3527 = vmatprep.subr.mxu0 0.0
  %3528 = vmatpush1.msra.mxu0 0.0
  %3529 = vmatprep.subr.mxu0 0.0
  %3530 = vmatpush1.msra.mxu0 0.0
  %3531 = vmatprep.subr.mxu0 0.0
  %3532 = vmatpush1.msra.mxu0 0.0
  %3533 = vmatprep.subr.mxu0 0.0
  %3534 = vmatpush1.msra.mxu0 0.0
  %3535 = vmatprep.subr.mxu0 0.0
  %3536 = vmatpush1.msra.mxu0 0.0
  %3537 = vmatprep.subr.mxu0 0.0
  %3538 = vmatpush1.msra.mxu0 0.0
  %3539 = vmatprep.subr.mxu0 0.0
  %3540 = vmatpush1.msra.mxu0 0.0
  %3541 = vmatprep.subr.mxu0 0.0
  %3542 = vmatpush1.msra.mxu0 0.0
  %3543 = vmatprep.subr.mxu0 0.0
  %3544 = vmatpush1.msra.mxu0 0.0
  %3545 = vmatprep.subr.mxu0 0.0
  %3546 = vmatpush1.msra.mxu0 0.0
  %3547 = vmatprep.mubr.f32.mxu0 0.0
  %3548 = vmatmul.mubr.f32.gmra.mrb[0].mxu0 %v3322
  %v3549 = vpop.f32.mrb[0].mxu0
  %v3550 = vadd.f32 0.0, %v3549
  %v3551 = vpop.f32.mrb[0].mxu0
  %3552 = vmatprep.mubr.f32.mxu0 0.0
  %3553 = vmatmul.mubr.f32.gmra.mrb[0].mxu0 %v3323
  %v3554 = vpop.f32.mrb[0].mxu0
  %v3555 = vadd.f32 0.0, %v3554
  %v3556 = vpop.f32.mrb[0].mxu0
  %3557 = vmatprep.mubr.f32.mxu0 0.0
  %3558 = vmatmul.mubr.f32.gmra.mrb[0].mxu0 %v3324
  %v3559 = vpop.f32.mrb[0].mxu0
  %v3560 = vadd.f32 0.0, %v3559
  %v3561 = vpop.f32.mrb[0].mxu0
  %3562 = vmatprep.mubr.f32.mxu0 0.0
  %3563 = vmatmul.mubr.f32.gmra.mrb[0].mxu0 %v3325
  %v3564 = vpop.f32.mrb[0].mxu0
  %v3565 = vadd.f32 0.0, %v3564
  %v3566 = vpop.f32.mrb[0].mxu0
  %3567 = vmatprep.mubr.f32.mxu0 0.0
  %3568 = vmatmul.mubr.f32.gmra.mrb[0].mxu0 %v3326
  %v3569 = vpop.f32.mrb[0].mxu0
  %v3570 = vadd.f32 0.0, %v3569
  %v3571 = vpop.f32.mrb[0].mxu0
  %3572 = vmatprep.mubr.f32.mxu0 0.0
  %3573 = vmatmul.mubr.f32.gmra.mrb[0].mxu0 %v3327
  %v3574 = vpop.f32.mrb[0].mxu0
  %v3575 = vadd.f32 0.0, %v3574
  %v3576 = vpop.f32.mrb[0].mxu0
  %3577 = vmatprep.mubr.f32.mxu0 0.0
  %3578 = vmatmul.mubr.f32.gmra.mrb[0].mxu0 %v3328
  %v3579 = vpop.f32.mrb[0].mxu0
  %v3580 = vadd.f32 0.0, %v3579
  %v3581 = vpop.f32.mrb[0].mxu0
  %3582 = vmatprep.mubr.f32.mxu0 0.0
  %3583 = vmatmul.mubr.f32.gmra.mrb[0].mxu0 %v3329
  %v3584 = vpop.f32.mrb[0].mxu0
  %v3585 = vadd.f32 0.0, %v3584
  %v3586 = vpop.f32.mrb[0].mxu0
  %3587 = vmatprep.mubr.f32.mxu0 0.0
  %3588 = vmatmul.mubr.f32.gmra.mrb[0].mxu0 %v3330
  %v3589 = vpop.f32.mrb[0].mxu0
  %v3590 = vadd.f32 0.0, %v3589
  %v3591 = vpop.f32.mrb[0].mxu0
  %3592 = vmatprep.mubr.f32.mxu0 0.0
  %3593 = vmatmul.mubr.f32.gmra.mrb[0].mxu0 %v3331
  %v3594 = vpop.f32.mrb[0].mxu0
  %v3595 = vadd.f32 0.0, %v3594
  %v3596 = vpop.f32.mrb[0].mxu0
  %3597 = vmatprep.mubr.f32.mxu0 0.0
  %3598 = vmatmul.mubr.f32.gmra.mrb[0].mxu0 %v3332
  %v3599 = vpop.f32.mrb[0].mxu0
  %v3600 = vadd.f32 0.0, %v3599
  %v3601 = vpop.f32.mrb[0].mxu0
  %3602 = vmatprep.mubr.f32.mxu0 0.0
  %3603 = vmatmul.mubr.f32.gmra.mrb[0].mxu0 %v3333
  %v3604 = vpop.f32.mrb[0].mxu0
  %v3605 = vadd.f32 0.0, %v3604
  %v3606 = vpop.f32.mrb[0].mxu0
  %3607 = vmatprep.mubr.f32.mxu0 0.0
  %3608 = vmatmul.mubr.f32.gmra.mrb[0].mxu0 %v3334
  %v3609 = vpop.f32.mrb[0].mxu0
  %v3610 = vadd.f32 0.0, %v3609
  %v3611 = vpop.f32.mrb[0].mxu0
  %3612 = vmatprep.mubr.f32.mxu0 0.0
  %3613 = vmatmul.mubr.f32.gmra.mrb[0].mxu0 %v3335
  %v3614 = vpop.f32.mrb[0].mxu0
  %v3615 = vadd.f32 0.0, %v3614
  %v3616 = vpop.f32.mrb[0].mxu0
  %3617 = vmatprep.mubr.f32.mxu0 0.0
  %3618 = vmatmul.mubr.f32.gmra.mrb[0].mxu0 %v3336
  %v3619 = vpop.f32.mrb[0].mxu0
  %v3620 = vadd.f32 0.0, %v3619
  %v3621 = vpop.f32.mrb[0].mxu0
  %3622 = vmatprep.mubr.f32.mxu0 0.0
  %3623 = vmatmul.mubr.f32.gmra.mrb[0].mxu0 %v3337
  %v3624 = vpop.f32.mrb[0].mxu0
  %v3625 = vadd.f32 0.0, %v3624
  %v3626 = vpop.f32.mrb[0].mxu0
  %3627 = vdwg.mxu0
  %vm3628 = vcmp.eq.f32.partialorder %v3550, %v944
  %vm3629 = vcmp.eq.f32.partialorder %v3555, %v945
  %vm3630 = vcmp.eq.f32.partialorder %v3560, %v946
  %vm3631 = vcmp.eq.f32.partialorder %v3565, %v947
  %vm3632 = vcmp.eq.f32.partialorder %v3570, %v948
  %vm3633 = vcmp.eq.f32.partialorder %v3575, %v949
  %vm3634 = vcmp.eq.f32.partialorder %v3580, %v950
  %vm3635 = vcmp.eq.f32.partialorder %v3585, %v951
  %vm3636 = vcmp.eq.f32.partialorder %v3590, %v952
  %vm3637 = vcmp.eq.f32.partialorder %v3595, %v953
  %vm3638 = vcmp.eq.f32.partialorder %v3600, %v954
  %vm3639 = vcmp.eq.f32.partialorder %v3605, %v955
  %vm3640 = vcmp.eq.f32.partialorder %v3610, %v956
  %vm3641 = vcmp.eq.f32.partialorder %v3615, %v957
  %vm3642 = vcmp.eq.f32.partialorder %v3620, %v958
  %vm3643 = vcmp.eq.f32.partialorder %v3625, %v959
  %v3644 = vmax.f32 %v3274, %v3405
  %v3645 = vmax.f32 %v3275, %v3410
  %v3646 = vmax.f32 %v3276, %v3415
  %v3647 = vmax.f32 %v3277, %v3420
  %v3648 = vmax.f32 %v3278, %v3425
  %v3649 = vmax.f32 %v3279, %v3430
  %v3650 = vmax.f32 %v3280, %v3435
  %v3651 = vmax.f32 %v3281, %v3440
  %v3652 = vmax.f32 %v3282, %v3445
  %v3653 = vmax.f32 %v3283, %v3450
  %v3654 = vmax.f32 %v3284, %v3455
  %v3655 = vmax.f32 %v3285, %v3460
  %v3656 = vmax.f32 %v3286, %v3465
  %v3657 = vmax.f32 %v3287, %v3470
  %v3658 = vmax.f32 %v3288, %v3475
  %v3659 = vmax.f32 %v3289, %v3480
  %v3660 = vsel %vm3628, 1, 0
  %v3661 = vsel %vm3629, 1, 0
  %v3662 = vsel %vm3630, 1, 0
  %v3663 = vsel %vm3631, 1, 0
  %v3664 = vsel %vm3632, 1, 0
  %v3665 = vsel %vm3633, 1, 0
  %v3666 = vsel %vm3634, 1, 0
  %v3667 = vsel %vm3635, 1, 0
  %v3668 = vsel %vm3636, 1, 0
  %v3669 = vsel %vm3637, 1, 0
  %v3670 = vsel %vm3638, 1, 0
  %v3671 = vsel %vm3639, 1, 0
  %v3672 = vsel %vm3640, 1, 0
  %v3673 = vsel %vm3641, 1, 0
  %v3674 = vsel %vm3642, 1, 0
  %v3675 = vsel %vm3643, 1, 0
  %3676 = vset.pattern.permute.xlu0 0
  %3677 = vperm.xlu0 %3676, %v3660
  %v3678 = vpop.permute.xlu0 %3677
  %3679 = vset.pattern.permute.xlu0 0
  %3680 = vperm.xlu0 %3679, %v3661
  %v3681 = vpop.permute.xlu0 %3680
  %3682 = vset.pattern.permute.xlu0 0
  %3683 = vperm.xlu0 %3682, %v3662
  %v3684 = vpop.permute.xlu0 %3683
  %3685 = vset.pattern.permute.xlu0 0
  %3686 = vperm.xlu0 %3685, %v3663
  %v3687 = vpop.permute.xlu0 %3686
  %3688 = vset.pattern.permute.xlu0 0
  %3689 = vperm.xlu0 %3688, %v3664
  %v3690 = vpop.permute.xlu0 %3689
  %3691 = vset.pattern.permute.xlu0 0
  %3692 = vperm.xlu0 %3691, %v3665
  %v3693 = vpop.permute.xlu0 %3692
  %3694 = vset.pattern.permute.xlu0 0
  %3695 = vperm.xlu0 %3694, %v3666
  %v3696 = vpop.permute.xlu0 %3695
  %3697 = vset.pattern.permute.xlu0 0
  %3698 = vperm.xlu0 %3697, %v3667
  %v3699 = vpop.permute.xlu0 %3698
  %3700 = vset.pattern.permute.xlu0 0
  %3701 = vperm.xlu0 %3700, %v3668
  %v3702 = vpop.permute.xlu0 %3701
  %3703 = vset.pattern.permute.xlu0 0
  %3704 = vperm.xlu0 %3703, %v3669
  %v3705 = vpop.permute.xlu0 %3704
  %3706 = vset.pattern.permute.xlu0 0
  %3707 = vperm.xlu0 %3706, %v3670
  %v3708 = vpop.permute.xlu0 %3707
  %3709 = vset.pattern.permute.xlu0 0
  %3710 = vperm.xlu0 %3709, %v3671
  %v3711 = vpop.permute.xlu0 %3710
  %3712 = vset.pattern.permute.xlu0 0
  %3713 = vperm.xlu0 %3712, %v3672
  %v3714 = vpop.permute.xlu0 %3713
  %3715 = vset.pattern.permute.xlu0 0
  %3716 = vperm.xlu0 %3715, %v3673
  %v3717 = vpop.permute.xlu0 %3716
  %3718 = vset.pattern.permute.xlu0 0
  %3719 = vperm.xlu0 %3718, %v3674
  %v3720 = vpop.permute.xlu0 %3719
  %3721 = vset.pattern.permute.xlu0 0
  %3722 = vperm.xlu0 %3721, %v3675
  %v3723 = vpop.permute.xlu0 %3722
  %vm3724 = vcmp.eq.s32.totalorder %v3678, 1
  %vm3725 = vcmp.eq.s32.totalorder %v3681, 1
  %vm3726 = vcmp.eq.s32.totalorder %v3684, 1
  %vm3727 = vcmp.eq.s32.totalorder %v3687, 1
  %vm3728 = vcmp.eq.s32.totalorder %v3690, 1
  %vm3729 = vcmp.eq.s32.totalorder %v3693, 1
  %vm3730 = vcmp.eq.s32.totalorder %v3696, 1
  %vm3731 = vcmp.eq.s32.totalorder %v3699, 1
  %vm3732 = vcmp.eq.s32.totalorder %v3702, 1
  %vm3733 = vcmp.eq.s32.totalorder %v3705, 1
  %vm3734 = vcmp.eq.s32.totalorder %v3708, 1
  %vm3735 = vcmp.eq.s32.totalorder %v3711, 1
  %vm3736 = vcmp.eq.s32.totalorder %v3714, 1
  %vm3737 = vcmp.eq.s32.totalorder %v3717, 1
  %vm3738 = vcmp.eq.s32.totalorder %v3720, 1
  %vm3739 = vcmp.eq.s32.totalorder %v3723, 1
  %v3740 = vsel %vm3724, %v3644, %v3274
  %v3741 = vsel %vm3725, %v3645, %v3275
  %v3742 = vsel %vm3726, %v3646, %v3276
  %v3743 = vsel %vm3727, %v3647, %v3277
  %v3744 = vsel %vm3728, %v3648, %v3278
  %v3745 = vsel %vm3729, %v3649, %v3279
  %v3746 = vsel %vm3730, %v3650, %v3280
  %v3747 = vsel %vm3731, %v3651, %v3281
  %v3748 = vsel %vm3732, %v3652, %v3282
  %v3749 = vsel %vm3733, %v3653, %v3283
  %v3750 = vsel %vm3734, %v3654, %v3284
  %v3751 = vsel %vm3735, %v3655, %v3285
  %v3752 = vsel %vm3736, %v3656, %v3286
  %v3753 = vsel %vm3737, %v3657, %v3287
  %v3754 = vsel %vm3738, %v3658, %v3288
  %v3755 = vsel %vm3739, %v3659, %v3289
  %vm3756 = vcmp.eq.s32.totalorder %v928, 64
  %vm3757 = vcmp.eq.s32.totalorder %v929, 64
  %vm3758 = vcmp.eq.s32.totalorder %v930, 64
  %vm3759 = vcmp.eq.s32.totalorder %v931, 64
  %vm3760 = vcmp.eq.s32.totalorder %v932, 64
  %vm3761 = vcmp.eq.s32.totalorder %v933, 64
  %vm3762 = vcmp.eq.s32.totalorder %v934, 64
  %vm3763 = vcmp.eq.s32.totalorder %v935, 64
  %vm3764 = vcmp.eq.s32.totalorder %v936, 64
  %vm3765 = vcmp.eq.s32.totalorder %v937, 64
  %vm3766 = vcmp.eq.s32.totalorder %v938, 64
  %vm3767 = vcmp.eq.s32.totalorder %v939, 64
  %vm3768 = vcmp.eq.s32.totalorder %v940, 64
  %vm3769 = vcmp.eq.s32.totalorder %v941, 64
  %vm3770 = vcmp.eq.s32.totalorder %v942, 64
  %vm3771 = vcmp.eq.s32.totalorder %v943, 64
  %v3772 = vsel %vm3756, 1, 0
  %v3773 = vsel %vm3757, 1, 0
  %v3774 = vsel %vm3758, 1, 0
  %v3775 = vsel %vm3759, 1, 0
  %v3776 = vsel %vm3760, 1, 0
  %v3777 = vsel %vm3761, 1, 0
  %v3778 = vsel %vm3762, 1, 0
  %v3779 = vsel %vm3763, 1, 0
  %v3780 = vsel %vm3764, 1, 0
  %v3781 = vsel %vm3765, 1, 0
  %v3782 = vsel %vm3766, 1, 0
  %v3783 = vsel %vm3767, 1, 0
  %v3784 = vsel %vm3768, 1, 0
  %v3785 = vsel %vm3769, 1, 0
  %v3786 = vsel %vm3770, 1, 0
  %v3787 = vsel %vm3771, 1, 0
  %v3788 = vcvt.s32.f32 %v3772
  %v3789 = vcvt.s32.f32 %v3773
  %v3790 = vcvt.s32.f32 %v3774
  %v3791 = vcvt.s32.f32 %v3775
  %v3792 = vcvt.s32.f32 %v3776
  %v3793 = vcvt.s32.f32 %v3777
  %v3794 = vcvt.s32.f32 %v3778
  %v3795 = vcvt.s32.f32 %v3779
  %v3796 = vcvt.s32.f32 %v3780
  %v3797 = vcvt.s32.f32 %v3781
  %v3798 = vcvt.s32.f32 %v3782
  %v3799 = vcvt.s32.f32 %v3783
  %v3800 = vcvt.s32.f32 %v3784
  %v3801 = vcvt.s32.f32 %v3785
  %v3802 = vcvt.s32.f32 %v3786
  %v3803 = vcvt.s32.f32 %v3787
  %3804 = vmatprep.subr.mxu0 0.0
  %3805 = vmatpush1.msra.mxu0 %v3740
  %3806 = vmatprep.subr.mxu0 0.0
  %3807 = vmatpush1.msra.mxu0 %v3741
  %3808 = vmatprep.subr.mxu0 0.0
  %3809 = vmatpush1.msra.mxu0 %v3742
  %3810 = vmatprep.subr.mxu0 0.0
  %3811 = vmatpush1.msra.mxu0 %v3743
  %3812 = vmatprep.subr.mxu0 0.0
  %3813 = vmatpush1.msra.mxu0 %v3744
  %3814 = vmatprep.subr.mxu0 0.0
  %3815 = vmatpush1.msra.mxu0 %v3745
  %3816 = vmatprep.subr.mxu0 0.0
  %3817 = vmatpush1.msra.mxu0 %v3746
  %3818 = vmatprep.subr.mxu0 0.0
  %3819 = vmatpush1.msra.mxu0 %v3747
  %3820 = vmatprep.subr.mxu0 0.0
  %3821 = vmatpush1.msra.mxu0 %v3748
  %3822 = vmatprep.subr.mxu0 0.0
  %3823 = vmatpush1.msra.mxu0 %v3749
  %3824 = vmatprep.subr.mxu0 0.0
  %3825 = vmatpush1.msra.mxu0 %v3750
  %3826 = vmatprep.subr.mxu0 0.0
  %3827 = vmatpush1.msra.mxu0 %v3751
  %3828 = vmatprep.subr.mxu0 0.0
  %3829 = vmatpush1.msra.mxu0 %v3752
  %3830 = vmatprep.subr.mxu0 0.0
  %3831 = vmatpush1.msra.mxu0 %v3753
  %3832 = vmatprep.subr.mxu0 0.0
  %3833 = vmatpush1.msra.mxu0 %v3754
  %3834 = vmatprep.subr.mxu0 0.0
  %3835 = vmatpush1.msra.mxu0 %v3755
  %3836 = vmatprep.subr.mxu0 0.0
  %3837 = vmatpush1.msra.mxu0 0.0
  %3838 = vmatprep.subr.mxu0 0.0
  %3839 = vmatpush1.msra.mxu0 0.0
  %3840 = vmatprep.subr.mxu0 0.0
  %3841 = vmatpush1.msra.mxu0 0.0
  %3842 = vmatprep.subr.mxu0 0.0
  %3843 = vmatpush1.msra.mxu0 0.0
  %3844 = vmatprep.subr.mxu0 0.0
  %3845 = vmatpush1.msra.mxu0 0.0
  %3846 = vmatprep.subr.mxu0 0.0
  %3847 = vmatpush1.msra.mxu0 0.0
  %3848 = vmatprep.subr.mxu0 0.0
  %3849 = vmatpush1.msra.mxu0 0.0
  %3850 = vmatprep.subr.mxu0 0.0
  %3851 = vmatpush1.msra.mxu0 0.0
  %3852 = vmatprep.subr.mxu0 0.0
  %3853 = vmatpush1.msra.mxu0 0.0
  %3854 = vmatprep.subr.mxu0 0.0
  %3855 = vmatpush1.msra.mxu0 0.0
  %3856 = vmatprep.subr.mxu0 0.0
  %3857 = vmatpush1.msra.mxu0 0.0
  %3858 = vmatprep.subr.mxu0 0.0
  %3859 = vmatpush1.msra.mxu0 0.0
  %3860 = vmatprep.subr.mxu0 0.0
  %3861 = vmatpush1.msra.mxu0 0.0
  %3862 = vmatprep.subr.mxu0 0.0
  %3863 = vmatpush1.msra.mxu0 0.0
  %3864 = vmatprep.subr.mxu0 0.0
  %3865 = vmatpush1.msra.mxu0 0.0
  %3866 = vmatprep.subr.mxu0 0.0
  %3867 = vmatpush1.msra.mxu0 0.0
  %3868 = vmatprep.mubr.f32.mxu0 0.0
  %3869 = vmatmul.mubr.f32.gmra.mrb[0].mxu0 %v3788
  %v3870 = vpop.f32.mrb[0].mxu0
  %v3871 = vadd.f32 0.0, %v3870
  %v3872 = vpop.f32.mrb[0].mxu0
  %3873 = vmatprep.mubr.f32.mxu0 0.0
  %3874 = vmatmul.mubr.f32.gmra.mrb[0].mxu0 %v3789
  %v3875 = vpop.f32.mrb[0].mxu0
  %v3876 = vadd.f32 0.0, %v3875
  %v3877 = vpop.f32.mrb[0].mxu0
  %3878 = vmatprep.mubr.f32.mxu0 0.0
  %3879 = vmatmul.mubr.f32.gmra.mrb[0].mxu0 %v3790
  %v3880 = vpop.f32.mrb[0].mxu0
  %v3881 = vadd.f32 0.0, %v3880
  %v3882 = vpop.f32.mrb[0].mxu0
  %3883 = vmatprep.mubr.f32.mxu0 0.0
  %3884 = vmatmul.mubr.f32.gmra.mrb[0].mxu0 %v3791
  %v3885 = vpop.f32.mrb[0].mxu0
  %v3886 = vadd.f32 0.0, %v3885
  %v3887 = vpop.f32.mrb[0].mxu0
  %3888 = vmatprep.mubr.f32.mxu0 0.0
  %3889 = vmatmul.mubr.f32.gmra.mrb[0].mxu0 %v3792
  %v3890 = vpop.f32.mrb[0].mxu0
  %v3891 = vadd.f32 0.0, %v3890
  %v3892 = vpop.f32.mrb[0].mxu0
  %3893 = vmatprep.mubr.f32.mxu0 0.0
  %3894 = vmatmul.mubr.f32.gmra.mrb[0].mxu0 %v3793
  %v3895 = vpop.f32.mrb[0].mxu0
  %v3896 = vadd.f32 0.0, %v3895
  %v3897 = vpop.f32.mrb[0].mxu0
  %3898 = vmatprep.mubr.f32.mxu0 0.0
  %3899 = vmatmul.mubr.f32.gmra.mrb[0].mxu0 %v3794
  %v3900 = vpop.f32.mrb[0].mxu0
  %v3901 = vadd.f32 0.0, %v3900
  %v3902 = vpop.f32.mrb[0].mxu0
  %3903 = vmatprep.mubr.f32.mxu0 0.0
  %3904 = vmatmul.mubr.f32.gmra.mrb[0].mxu0 %v3795
  %v3905 = vpop.f32.mrb[0].mxu0
  %v3906 = vadd.f32 0.0, %v3905
  %v3907 = vpop.f32.mrb[0].mxu0
  %3908 = vmatprep.mubr.f32.mxu0 0.0
  %3909 = vmatmul.mubr.f32.gmra.mrb[0].mxu0 %v3796
  %v3910 = vpop.f32.mrb[0].mxu0
  %v3911 = vadd.f32 0.0, %v3910
  %v3912 = vpop.f32.mrb[0].mxu0
  %3913 = vmatprep.mubr.f32.mxu0 0.0
  %3914 = vmatmul.mubr.f32.gmra.mrb[0].mxu0 %v3797
  %v3915 = vpop.f32.mrb[0].mxu0
  %v3916 = vadd.f32 0.0, %v3915
  %v3917 = vpop.f32.mrb[0].mxu0
  %3918 = vmatprep.mubr.f32.mxu0 0.0
  %3919 = vmatmul.mubr.f32.gmra.mrb[0].mxu0 %v3798
  %v3920 = vpop.f32.mrb[0].mxu0
  %v3921 = vadd.f32 0.0, %v3920
  %v3922 = vpop.f32.mrb[0].mxu0
  %3923 = vmatprep.mubr.f32.mxu0 0.0
  %3924 = vmatmul.mubr.f32.gmra.mrb[0].mxu0 %v3799
  %v3925 = vpop.f32.mrb[0].mxu0
  %v3926 = vadd.f32 0.0, %v3925
  %v3927 = vpop.f32.mrb[0].mxu0
  %3928 = vmatprep.mubr.f32.mxu0 0.0
  %3929 = vmatmul.mubr.f32.gmra.mrb[0].mxu0 %v3800
  %v3930 = vpop.f32.mrb[0].mxu0
  %v3931 = vadd.f32 0.0, %v3930
  %v3932 = vpop.f32.mrb[0].mxu0
  %3933 = vmatprep.mubr.f32.mxu0 0.0
  %3934 = vmatmul.mubr.f32.gmra.mrb[0].mxu0 %v3801
  %v3935 = vpop.f32.mrb[0].mxu0
  %v3936 = vadd.f32 0.0, %v3935
  %v3937 = vpop.f32.mrb[0].mxu0
  %3938 = vmatprep.mubr.f32.mxu0 0.0
  %3939 = vmatmul.mubr.f32.gmra.mrb[0].mxu0 %v3802
  %v3940 = vpop.f32.mrb[0].mxu0
  %v3941 = vadd.f32 0.0, %v3940
  %v3942 = vpop.f32.mrb[0].mxu0
  %3943 = vmatprep.mubr.f32.mxu0 0.0
  %3944 = vmatmul.mubr.f32.gmra.mrb[0].mxu0 %v3803
  %v3945 = vpop.f32.mrb[0].mxu0
  %v3946 = vadd.f32 0.0, %v3945
  %v3947 = vpop.f32.mrb[0].mxu0
  %3948 = vdwg.mxu0
  %3949 = vmatprep.subr.mxu0 0.0
  %3950 = vmatpush1.msra.mxu0 %v944
  %3951 = vmatprep.subr.mxu0 0.0
  %3952 = vmatpush1.msra.mxu0 %v945
  %3953 = vmatprep.subr.mxu0 0.0
  %3954 = vmatpush1.msra.mxu0 %v946
  %3955 = vmatprep.subr.mxu0 0.0
  %3956 = vmatpush1.msra.mxu0 %v947
  %3957 = vmatprep.subr.mxu0 0.0
  %3958 = vmatpush1.msra.mxu0 %v948
  %3959 = vmatprep.subr.mxu0 0.0
  %3960 = vmatpush1.msra.mxu0 %v949
  %3961 = vmatprep.subr.mxu0 0.0
  %3962 = vmatpush1.msra.mxu0 %v950
  %3963 = vmatprep.subr.mxu0 0.0
  %3964 = vmatpush1.msra.mxu0 %v951
  %3965 = vmatprep.subr.mxu0 0.0
  %3966 = vmatpush1.msra.mxu0 %v952
  %3967 = vmatprep.subr.mxu0 0.0
  %3968 = vmatpush1.msra.mxu0 %v953
  %3969 = vmatprep.subr.mxu0 0.0
  %3970 = vmatpush1.msra.mxu0 %v954
  %3971 = vmatprep.subr.mxu0 0.0
  %3972 = vmatpush1.msra.mxu0 %v955
  %3973 = vmatprep.subr.mxu0 0.0
  %3974 = vmatpush1.msra.mxu0 %v956
  %3975 = vmatprep.subr.mxu0 0.0
  %3976 = vmatpush1.msra.mxu0 %v957
  %3977 = vmatprep.subr.mxu0 0.0
  %3978 = vmatpush1.msra.mxu0 %v958
  %3979 = vmatprep.subr.mxu0 0.0
  %3980 = vmatpush1.msra.mxu0 %v959
  %3981 = vmatprep.subr.mxu0 0.0
  %3982 = vmatpush1.msra.mxu0 0.0
  %3983 = vmatprep.subr.mxu0 0.0
  %3984 = vmatpush1.msra.mxu0 0.0
  %3985 = vmatprep.subr.mxu0 0.0
  %3986 = vmatpush1.msra.mxu0 0.0
  %3987 = vmatprep.subr.mxu0 0.0
  %3988 = vmatpush1.msra.mxu0 0.0
  %3989 = vmatprep.subr.mxu0 0.0
  %3990 = vmatpush1.msra.mxu0 0.0
  %3991 = vmatprep.subr.mxu0 0.0
  %3992 = vmatpush1.msra.mxu0 0.0
  %3993 = vmatprep.subr.mxu0 0.0
  %3994 = vmatpush1.msra.mxu0 0.0
  %3995 = vmatprep.subr.mxu0 0.0
  %3996 = vmatpush1.msra.mxu0 0.0
  %3997 = vmatprep.subr.mxu0 0.0
  %3998 = vmatpush1.msra.mxu0 0.0
  %3999 = vmatprep.subr.mxu0 0.0
  %4000 = vmatpush1.msra.mxu0 0.0
  %4001 = vmatprep.subr.mxu0 0.0
  %4002 = vmatpush1.msra.mxu0 0.0
  %4003 = vmatprep.subr.mxu0 0.0
  %4004 = vmatpush1.msra.mxu0 0.0
  %4005 = vmatprep.subr.mxu0 0.0
  %4006 = vmatpush1.msra.mxu0 0.0
  %4007 = vmatprep.subr.mxu0 0.0
  %4008 = vmatpush1.msra.mxu0 0.0
  %4009 = vmatprep.subr.mxu0 0.0
  %4010 = vmatpush1.msra.mxu0 0.0
  %4011 = vmatprep.subr.mxu0 0.0
  %4012 = vmatpush1.msra.mxu0 0.0
  %4013 = vmatprep.mubr.f32.mxu0 0.0
  %4014 = vmatmul.mubr.f32.gmra.mrb[0].mxu0 %v3788
  %v4015 = vpop.f32.mrb[0].mxu0
  %v4016 = vadd.f32 0.0, %v4015
  %v4017 = vpop.f32.mrb[0].mxu0
  %4018 = vmatprep.mubr.f32.mxu0 0.0
  %4019 = vmatmul.mubr.f32.gmra.mrb[0].mxu0 %v3789
  %v4020 = vpop.f32.mrb[0].mxu0
  %v4021 = vadd.f32 0.0, %v4020
  %v4022 = vpop.f32.mrb[0].mxu0
  %4023 = vmatprep.mubr.f32.mxu0 0.0
  %4024 = vmatmul.mubr.f32.gmra.mrb[0].mxu0 %v3790
  %v4025 = vpop.f32.mrb[0].mxu0
  %v4026 = vadd.f32 0.0, %v4025
  %v4027 = vpop.f32.mrb[0].mxu0
  %4028 = vmatprep.mubr.f32.mxu0 0.0
  %4029 = vmatmul.mubr.f32.gmra.mrb[0].mxu0 %v3791
  %v4030 = vpop.f32.mrb[0].mxu0
  %v4031 = vadd.f32 0.0, %v4030
  %v4032 = vpop.f32.mrb[0].mxu0
  %4033 = vmatprep.mubr.f32.mxu0 0.0
  %4034 = vmatmul.mubr.f32.gmra.mrb[0].mxu0 %v3792
  %v4035 = vpop.f32.mrb[0].mxu0
  %v4036 = vadd.f32 0.0, %v4035
  %v4037 = vpop.f32.mrb[0].mxu0
  %4038 = vmatprep.mubr.f32.mxu0 0.0
  %4039 = vmatmul.mubr.f32.gmra.mrb[0].mxu0 %v3793
  %v4040 = vpop.f32.mrb[0].mxu0
  %v4041 = vadd.f32 0.0, %v4040
  %v4042 = vpop.f32.mrb[0].mxu0
  %4043 = vmatprep.mubr.f32.mxu0 0.0
  %4044 = vmatmul.mubr.f32.gmra.mrb[0].mxu0 %v3794
  %v4045 = vpop.f32.mrb[0].mxu0
  %v4046 = vadd.f32 0.0, %v4045
  %v4047 = vpop.f32.mrb[0].mxu0
  %4048 = vmatprep.mubr.f32.mxu0 0.0
  %4049 = vmatmul.mubr.f32.gmra.mrb[0].mxu0 %v3795
  %v4050 = vpop.f32.mrb[0].mxu0
  %v4051 = vadd.f32 0.0, %v4050
  %v4052 = vpop.f32.mrb[0].mxu0
  %4053 = vmatprep.mubr.f32.mxu0 0.0
  %4054 = vmatmul.mubr.f32.gmra.mrb[0].mxu0 %v3796
  %v4055 = vpop.f32.mrb[0].mxu0
  %v4056 = vadd.f32 0.0, %v4055
  %v4057 = vpop.f32.mrb[0].mxu0
  %4058 = vmatprep.mubr.f32.mxu0 0.0
  %4059 = vmatmul.mubr.f32.gmra.mrb[0].mxu0 %v3797
  %v4060 = vpop.f32.mrb[0].mxu0
  %v4061 = vadd.f32 0.0, %v4060
  %v4062 = vpop.f32.mrb[0].mxu0
  %4063 = vmatprep.mubr.f32.mxu0 0.0
  %4064 = vmatmul.mubr.f32.gmra.mrb[0].mxu0 %v3798
  %v4065 = vpop.f32.mrb[0].mxu0
  %v4066 = vadd.f32 0.0, %v4065
  %v4067 = vpop.f32.mrb[0].mxu0
  %4068 = vmatprep.mubr.f32.mxu0 0.0
  %4069 = vmatmul.mubr.f32.gmra.mrb[0].mxu0 %v3799
  %v4070 = vpop.f32.mrb[0].mxu0
  %v4071 = vadd.f32 0.0, %v4070
  %v4072 = vpop.f32.mrb[0].mxu0
  %4073 = vmatprep.mubr.f32.mxu0 0.0
  %4074 = vmatmul.mubr.f32.gmra.mrb[0].mxu0 %v3800
  %v4075 = vpop.f32.mrb[0].mxu0
  %v4076 = vadd.f32 0.0, %v4075
  %v4077 = vpop.f32.mrb[0].mxu0
  %4078 = vmatprep.mubr.f32.mxu0 0.0
  %4079 = vmatmul.mubr.f32.gmra.mrb[0].mxu0 %v3801
  %v4080 = vpop.f32.mrb[0].mxu0
  %v4081 = vadd.f32 0.0, %v4080
  %v4082 = vpop.f32.mrb[0].mxu0
  %4083 = vmatprep.mubr.f32.mxu0 0.0
  %4084 = vmatmul.mubr.f32.gmra.mrb[0].mxu0 %v3802
  %v4085 = vpop.f32.mrb[0].mxu0
  %v4086 = vadd.f32 0.0, %v4085
  %v4087 = vpop.f32.mrb[0].mxu0
  %4088 = vmatprep.mubr.f32.mxu0 0.0
  %4089 = vmatmul.mubr.f32.gmra.mrb[0].mxu0 %v3803
  %v4090 = vpop.f32.mrb[0].mxu0
  %v4091 = vadd.f32 0.0, %v4090
  %v4092 = vpop.f32.mrb[0].mxu0
  %4093 = vdwg.mxu0
  %vm4094 = vcmp.eq.f32.partialorder %v4016, %v944
  %vm4095 = vcmp.eq.f32.partialorder %v4021, %v945
  %vm4096 = vcmp.eq.f32.partialorder %v4026, %v946
  %vm4097 = vcmp.eq.f32.partialorder %v4031, %v947
  %vm4098 = vcmp.eq.f32.partialorder %v4036, %v948
  %vm4099 = vcmp.eq.f32.partialorder %v4041, %v949
  %vm4100 = vcmp.eq.f32.partialorder %v4046, %v950
  %vm4101 = vcmp.eq.f32.partialorder %v4051, %v951
  %vm4102 = vcmp.eq.f32.partialorder %v4056, %v952
  %vm4103 = vcmp.eq.f32.partialorder %v4061, %v953
  %vm4104 = vcmp.eq.f32.partialorder %v4066, %v954
  %vm4105 = vcmp.eq.f32.partialorder %v4071, %v955
  %vm4106 = vcmp.eq.f32.partialorder %v4076, %v956
  %vm4107 = vcmp.eq.f32.partialorder %v4081, %v957
  %vm4108 = vcmp.eq.f32.partialorder %v4086, %v958
  %vm4109 = vcmp.eq.f32.partialorder %v4091, %v959
  %v4110 = vmax.f32 %v3740, %v3871
  %v4111 = vmax.f32 %v3741, %v3876
  %v4112 = vmax.f32 %v3742, %v3881
  %v4113 = vmax.f32 %v3743, %v3886
  %v4114 = vmax.f32 %v3744, %v3891
  %v4115 = vmax.f32 %v3745, %v3896
  %v4116 = vmax.f32 %v3746, %v3901
  %v4117 = vmax.f32 %v3747, %v3906
  %v4118 = vmax.f32 %v3748, %v3911
  %v4119 = vmax.f32 %v3749, %v3916
  %v4120 = vmax.f32 %v3750, %v3921
  %v4121 = vmax.f32 %v3751, %v3926
  %v4122 = vmax.f32 %v3752, %v3931
  %v4123 = vmax.f32 %v3753, %v3936
  %v4124 = vmax.f32 %v3754, %v3941
  %v4125 = vmax.f32 %v3755, %v3946
  %v4126 = vsel %vm4094, 1, 0
  %v4127 = vsel %vm4095, 1, 0
  %v4128 = vsel %vm4096, 1, 0
  %v4129 = vsel %vm4097, 1, 0
  %v4130 = vsel %vm4098, 1, 0
  %v4131 = vsel %vm4099, 1, 0
  %v4132 = vsel %vm4100, 1, 0
  %v4133 = vsel %vm4101, 1, 0
  %v4134 = vsel %vm4102, 1, 0
  %v4135 = vsel %vm4103, 1, 0
  %v4136 = vsel %vm4104, 1, 0
  %v4137 = vsel %vm4105, 1, 0
  %v4138 = vsel %vm4106, 1, 0
  %v4139 = vsel %vm4107, 1, 0
  %v4140 = vsel %vm4108, 1, 0
  %v4141 = vsel %vm4109, 1, 0
  %4142 = vset.pattern.permute.xlu0 0
  %4143 = vperm.xlu0 %4142, %v4126
  %v4144 = vpop.permute.xlu0 %4143
  %4145 = vset.pattern.permute.xlu0 0
  %4146 = vperm.xlu0 %4145, %v4127
  %v4147 = vpop.permute.xlu0 %4146
  %4148 = vset.pattern.permute.xlu0 0
  %4149 = vperm.xlu0 %4148, %v4128
  %v4150 = vpop.permute.xlu0 %4149
  %4151 = vset.pattern.permute.xlu0 0
  %4152 = vperm.xlu0 %4151, %v4129
  %v4153 = vpop.permute.xlu0 %4152
  %4154 = vset.pattern.permute.xlu0 0
  %4155 = vperm.xlu0 %4154, %v4130
  %v4156 = vpop.permute.xlu0 %4155
  %4157 = vset.pattern.permute.xlu0 0
  %4158 = vperm.xlu0 %4157, %v4131
  %v4159 = vpop.permute.xlu0 %4158
  %4160 = vset.pattern.permute.xlu0 0
  %4161 = vperm.xlu0 %4160, %v4132
  %v4162 = vpop.permute.xlu0 %4161
  %4163 = vset.pattern.permute.xlu0 0
  %4164 = vperm.xlu0 %4163, %v4133
  %v4165 = vpop.permute.xlu0 %4164
  %4166 = vset.pattern.permute.xlu0 0
  %4167 = vperm.xlu0 %4166, %v4134
  %v4168 = vpop.permute.xlu0 %4167
  %4169 = vset.pattern.permute.xlu0 0
  %4170 = vperm.xlu0 %4169, %v4135
  %v4171 = vpop.permute.xlu0 %4170
  %4172 = vset.pattern.permute.xlu0 0
  %4173 = vperm.xlu0 %4172, %v4136
  %v4174 = vpop.permute.xlu0 %4173
  %4175 = vset.pattern.permute.xlu0 0
  %4176 = vperm.xlu0 %4175, %v4137
  %v4177 = vpop.permute.xlu0 %4176
  %4178 = vset.pattern.permute.xlu0 0
  %4179 = vperm.xlu0 %4178, %v4138
  %v4180 = vpop.permute.xlu0 %4179
  %4181 = vset.pattern.permute.xlu0 0
  %4182 = vperm.xlu0 %4181, %v4139
  %v4183 = vpop.permute.xlu0 %4182
  %4184 = vset.pattern.permute.xlu0 0
  %4185 = vperm.xlu0 %4184, %v4140
  %v4186 = vpop.permute.xlu0 %4185
  %4187 = vset.pattern.permute.xlu0 0
  %4188 = vperm.xlu0 %4187, %v4141
  %v4189 = vpop.permute.xlu0 %4188
  %vm4190 = vcmp.eq.s32.totalorder %v4144, 1
  %vm4191 = vcmp.eq.s32.totalorder %v4147, 1
  %vm4192 = vcmp.eq.s32.totalorder %v4150, 1
  %vm4193 = vcmp.eq.s32.totalorder %v4153, 1
  %vm4194 = vcmp.eq.s32.totalorder %v4156, 1
  %vm4195 = vcmp.eq.s32.totalorder %v4159, 1
  %vm4196 = vcmp.eq.s32.totalorder %v4162, 1
  %vm4197 = vcmp.eq.s32.totalorder %v4165, 1
  %vm4198 = vcmp.eq.s32.totalorder %v4168, 1
  %vm4199 = vcmp.eq.s32.totalorder %v4171, 1
  %vm4200 = vcmp.eq.s32.totalorder %v4174, 1
  %vm4201 = vcmp.eq.s32.totalorder %v4177, 1
  %vm4202 = vcmp.eq.s32.totalorder %v4180, 1
  %vm4203 = vcmp.eq.s32.totalorder %v4183, 1
  %vm4204 = vcmp.eq.s32.totalorder %v4186, 1
  %vm4205 = vcmp.eq.s32.totalorder %v4189, 1
  %v4206 = vsel %vm4190, %v4110, %v3740
  %v4207 = vsel %vm4191, %v4111, %v3741
  %v4208 = vsel %vm4192, %v4112, %v3742
  %v4209 = vsel %vm4193, %v4113, %v3743
  %v4210 = vsel %vm4194, %v4114, %v3744
  %v4211 = vsel %vm4195, %v4115, %v3745
  %v4212 = vsel %vm4196, %v4116, %v3746
  %v4213 = vsel %vm4197, %v4117, %v3747
  %v4214 = vsel %vm4198, %v4118, %v3748
  %v4215 = vsel %vm4199, %v4119, %v3749
  %v4216 = vsel %vm4200, %v4120, %v3750
  %v4217 = vsel %vm4201, %v4121, %v3751
  %v4218 = vsel %vm4202, %v4122, %v3752
  %v4219 = vsel %vm4203, %v4123, %v3753
  %v4220 = vsel %vm4204, %v4124, %v3754
  %v4221 = vsel %vm4205, %v4125, %v3755
  %vm4222 = vcmp.eq.s32.totalorder %v928, 4294967295
  %vm4223 = vcmp.eq.s32.totalorder %v929, 4294967295
  %vm4224 = vcmp.eq.s32.totalorder %v930, 4294967295
  %vm4225 = vcmp.eq.s32.totalorder %v931, 4294967295
  %vm4226 = vcmp.eq.s32.totalorder %v932, 4294967295
  %vm4227 = vcmp.eq.s32.totalorder %v933, 4294967295
  %vm4228 = vcmp.eq.s32.totalorder %v934, 4294967295
  %vm4229 = vcmp.eq.s32.totalorder %v935, 4294967295
  %vm4230 = vcmp.eq.s32.totalorder %v936, 4294967295
  %vm4231 = vcmp.eq.s32.totalorder %v937, 4294967295
  %vm4232 = vcmp.eq.s32.totalorder %v938, 4294967295
  %vm4233 = vcmp.eq.s32.totalorder %v939, 4294967295
  %vm4234 = vcmp.eq.s32.totalorder %v940, 4294967295
  %vm4235 = vcmp.eq.s32.totalorder %v941, 4294967295
  %vm4236 = vcmp.eq.s32.totalorder %v942, 4294967295
  %vm4237 = vcmp.eq.s32.totalorder %v943, 4294967295
  %v4238 = vsel %vm4222, 1, 0
  %v4239 = vsel %vm4223, 1, 0
  %v4240 = vsel %vm4224, 1, 0
  %v4241 = vsel %vm4225, 1, 0
  %v4242 = vsel %vm4226, 1, 0
  %v4243 = vsel %vm4227, 1, 0
  %v4244 = vsel %vm4228, 1, 0
  %v4245 = vsel %vm4229, 1, 0
  %v4246 = vsel %vm4230, 1, 0
  %v4247 = vsel %vm4231, 1, 0
  %v4248 = vsel %vm4232, 1, 0
  %v4249 = vsel %vm4233, 1, 0
  %v4250 = vsel %vm4234, 1, 0
  %v4251 = vsel %vm4235, 1, 0
  %v4252 = vsel %vm4236, 1, 0
  %v4253 = vsel %vm4237, 1, 0
  %v4254 = vcvt.s32.f32 %v4238
  %v4255 = vcvt.s32.f32 %v4239
  %v4256 = vcvt.s32.f32 %v4240
  %v4257 = vcvt.s32.f32 %v4241
  %v4258 = vcvt.s32.f32 %v4242
  %v4259 = vcvt.s32.f32 %v4243
  %v4260 = vcvt.s32.f32 %v4244
  %v4261 = vcvt.s32.f32 %v4245
  %v4262 = vcvt.s32.f32 %v4246
  %v4263 = vcvt.s32.f32 %v4247
  %v4264 = vcvt.s32.f32 %v4248
  %v4265 = vcvt.s32.f32 %v4249
  %v4266 = vcvt.s32.f32 %v4250
  %v4267 = vcvt.s32.f32 %v4251
  %v4268 = vcvt.s32.f32 %v4252
  %v4269 = vcvt.s32.f32 %v4253
  %4270 = vmatprep.subr.mxu0 0.0
  %4271 = vmatpush1.msra.mxu0 %v944
  %4272 = vmatprep.subr.mxu0 0.0
  %4273 = vmatpush1.msra.mxu0 %v945
  %4274 = vmatprep.subr.mxu0 0.0
  %4275 = vmatpush1.msra.mxu0 %v946
  %4276 = vmatprep.subr.mxu0 0.0
  %4277 = vmatpush1.msra.mxu0 %v947
  %4278 = vmatprep.subr.mxu0 0.0
  %4279 = vmatpush1.msra.mxu0 %v948
  %4280 = vmatprep.subr.mxu0 0.0
  %4281 = vmatpush1.msra.mxu0 %v949
  %4282 = vmatprep.subr.mxu0 0.0
  %4283 = vmatpush1.msra.mxu0 %v950
  %4284 = vmatprep.subr.mxu0 0.0
  %4285 = vmatpush1.msra.mxu0 %v951
  %4286 = vmatprep.subr.mxu0 0.0
  %4287 = vmatpush1.msra.mxu0 %v952
  %4288 = vmatprep.subr.mxu0 0.0
  %4289 = vmatpush1.msra.mxu0 %v953
  %4290 = vmatprep.subr.mxu0 0.0
  %4291 = vmatpush1.msra.mxu0 %v954
  %4292 = vmatprep.subr.mxu0 0.0
  %4293 = vmatpush1.msra.mxu0 %v955
  %4294 = vmatprep.subr.mxu0 0.0
  %4295 = vmatpush1.msra.mxu0 %v956
  %4296 = vmatprep.subr.mxu0 0.0
  %4297 = vmatpush1.msra.mxu0 %v957
  %4298 = vmatprep.subr.mxu0 0.0
  %4299 = vmatpush1.msra.mxu0 %v958
  %4300 = vmatprep.subr.mxu0 0.0
  %4301 = vmatpush1.msra.mxu0 %v959
  %4302 = vmatprep.subr.mxu0 0.0
  %4303 = vmatpush1.msra.mxu0 0.0
  %4304 = vmatprep.subr.mxu0 0.0
  %4305 = vmatpush1.msra.mxu0 0.0
  %4306 = vmatprep.subr.mxu0 0.0
  %4307 = vmatpush1.msra.mxu0 0.0
  %4308 = vmatprep.subr.mxu0 0.0
  %4309 = vmatpush1.msra.mxu0 0.0
  %4310 = vmatprep.subr.mxu0 0.0
  %4311 = vmatpush1.msra.mxu0 0.0
  %4312 = vmatprep.subr.mxu0 0.0
  %4313 = vmatpush1.msra.mxu0 0.0
  %4314 = vmatprep.subr.mxu0 0.0
  %4315 = vmatpush1.msra.mxu0 0.0
  %4316 = vmatprep.subr.mxu0 0.0
  %4317 = vmatpush1.msra.mxu0 0.0
  %4318 = vmatprep.subr.mxu0 0.0
  %4319 = vmatpush1.msra.mxu0 0.0
  %4320 = vmatprep.subr.mxu0 0.0
  %4321 = vmatpush1.msra.mxu0 0.0
  %4322 = vmatprep.subr.mxu0 0.0
  %4323 = vmatpush1.msra.mxu0 0.0
  %4324 = vmatprep.subr.mxu0 0.0
  %4325 = vmatpush1.msra.mxu0 0.0
  %4326 = vmatprep.subr.mxu0 0.0
  %4327 = vmatpush1.msra.mxu0 0.0
  %4328 = vmatprep.subr.mxu0 0.0
  %4329 = vmatpush1.msra.mxu0 0.0
  %4330 = vmatprep.subr.mxu0 0.0
  %4331 = vmatpush1.msra.mxu0 0.0
  %4332 = vmatprep.subr.mxu0 0.0
  %4333 = vmatpush1.msra.mxu0 0.0
  %4334 = vmatprep.mubr.f32.mxu0 0.0
  %4335 = vmatmul.mubr.f32.gmra.mrb[0].mxu0 %v4254
  %v4336 = vpop.f32.mrb[0].mxu0
  %v4337 = vadd.f32 0.0, %v4336
  %v4338 = vpop.f32.mrb[0].mxu0
  %4339 = vmatprep.mubr.f32.mxu0 0.0
  %4340 = vmatmul.mubr.f32.gmra.mrb[0].mxu0 %v4255
  %v4341 = vpop.f32.mrb[0].mxu0
  %v4342 = vadd.f32 0.0, %v4341
  %v4343 = vpop.f32.mrb[0].mxu0
  %4344 = vmatprep.mubr.f32.mxu0 0.0
  %4345 = vmatmul.mubr.f32.gmra.mrb[0].mxu0 %v4256
  %v4346 = vpop.f32.mrb[0].mxu0
  %v4347 = vadd.f32 0.0, %v4346
  %v4348 = vpop.f32.mrb[0].mxu0
  %4349 = vmatprep.mubr.f32.mxu0 0.0
  %4350 = vmatmul.mubr.f32.gmra.mrb[0].mxu0 %v4257
  %v4351 = vpop.f32.mrb[0].mxu0
  %v4352 = vadd.f32 0.0, %v4351
  %v4353 = vpop.f32.mrb[0].mxu0
  %4354 = vmatprep.mubr.f32.mxu0 0.0
  %4355 = vmatmul.mubr.f32.gmra.mrb[0].mxu0 %v4258
  %v4356 = vpop.f32.mrb[0].mxu0
  %v4357 = vadd.f32 0.0, %v4356
  %v4358 = vpop.f32.mrb[0].mxu0
  %4359 = vmatprep.mubr.f32.mxu0 0.0
  %4360 = vmatmul.mubr.f32.gmra.mrb[0].mxu0 %v4259
  %v4361 = vpop.f32.mrb[0].mxu0
  %v4362 = vadd.f32 0.0, %v4361
  %v4363 = vpop.f32.mrb[0].mxu0
  %4364 = vmatprep.mubr.f32.mxu0 0.0
  %4365 = vmatmul.mubr.f32.gmra.mrb[0].mxu0 %v4260
  %v4366 = vpop.f32.mrb[0].mxu0
  %v4367 = vadd.f32 0.0, %v4366
  %v4368 = vpop.f32.mrb[0].mxu0
  %4369 = vmatprep.mubr.f32.mxu0 0.0
  %4370 = vmatmul.mubr.f32.gmra.mrb[0].mxu0 %v4261
  %v4371 = vpop.f32.mrb[0].mxu0
  %v4372 = vadd.f32 0.0, %v4371
  %v4373 = vpop.f32.mrb[0].mxu0
  %4374 = vmatprep.mubr.f32.mxu0 0.0
  %4375 = vmatmul.mubr.f32.gmra.mrb[0].mxu0 %v4262
  %v4376 = vpop.f32.mrb[0].mxu0
  %v4377 = vadd.f32 0.0, %v4376
  %v4378 = vpop.f32.mrb[0].mxu0
  %4379 = vmatprep.mubr.f32.mxu0 0.0
  %4380 = vmatmul.mubr.f32.gmra.mrb[0].mxu0 %v4263
  %v4381 = vpop.f32.mrb[0].mxu0
  %v4382 = vadd.f32 0.0, %v4381
  %v4383 = vpop.f32.mrb[0].mxu0
  %4384 = vmatprep.mubr.f32.mxu0 0.0
  %4385 = vmatmul.mubr.f32.gmra.mrb[0].mxu0 %v4264
  %v4386 = vpop.f32.mrb[0].mxu0
  %v4387 = vadd.f32 0.0, %v4386
  %v4388 = vpop.f32.mrb[0].mxu0
  %4389 = vmatprep.mubr.f32.mxu0 0.0
  %4390 = vmatmul.mubr.f32.gmra.mrb[0].mxu0 %v4265
  %v4391 = vpop.f32.mrb[0].mxu0
  %v4392 = vadd.f32 0.0, %v4391
  %v4393 = vpop.f32.mrb[0].mxu0
  %4394 = vmatprep.mubr.f32.mxu0 0.0
  %4395 = vmatmul.mubr.f32.gmra.mrb[0].mxu0 %v4266
  %v4396 = vpop.f32.mrb[0].mxu0
  %v4397 = vadd.f32 0.0, %v4396
  %v4398 = vpop.f32.mrb[0].mxu0
  %4399 = vmatprep.mubr.f32.mxu0 0.0
  %4400 = vmatmul.mubr.f32.gmra.mrb[0].mxu0 %v4267
  %v4401 = vpop.f32.mrb[0].mxu0
  %v4402 = vadd.f32 0.0, %v4401
  %v4403 = vpop.f32.mrb[0].mxu0
  %4404 = vmatprep.mubr.f32.mxu0 0.0
  %4405 = vmatmul.mubr.f32.gmra.mrb[0].mxu0 %v4268
  %v4406 = vpop.f32.mrb[0].mxu0
  %v4407 = vadd.f32 0.0, %v4406
  %v4408 = vpop.f32.mrb[0].mxu0
  %4409 = vmatprep.mubr.f32.mxu0 0.0
  %4410 = vmatmul.mubr.f32.gmra.mrb[0].mxu0 %v4269
  %v4411 = vpop.f32.mrb[0].mxu0
  %v4412 = vadd.f32 0.0, %v4411
  %v4413 = vpop.f32.mrb[0].mxu0
  %4414 = vdwg.mxu0
  %vm4415 = vcmp.ne.f32.partialorder %v4337, %v944
  %vm4416 = vcmp.ne.f32.partialorder %v4342, %v945
  %vm4417 = vcmp.ne.f32.partialorder %v4347, %v946
  %vm4418 = vcmp.ne.f32.partialorder %v4352, %v947
  %vm4419 = vcmp.ne.f32.partialorder %v4357, %v948
  %vm4420 = vcmp.ne.f32.partialorder %v4362, %v949
  %vm4421 = vcmp.ne.f32.partialorder %v4367, %v950
  %vm4422 = vcmp.ne.f32.partialorder %v4372, %v951
  %vm4423 = vcmp.ne.f32.partialorder %v4377, %v952
  %vm4424 = vcmp.ne.f32.partialorder %v4382, %v953
  %vm4425 = vcmp.ne.f32.partialorder %v4387, %v954
  %vm4426 = vcmp.ne.f32.partialorder %v4392, %v955
  %vm4427 = vcmp.ne.f32.partialorder %v4397, %v956
  %vm4428 = vcmp.ne.f32.partialorder %v4402, %v957
  %vm4429 = vcmp.ne.f32.partialorder %v4407, %v958
  %vm4430 = vcmp.ne.f32.partialorder %v4412, %v959
  %vm4431 = vcmp.eq.s32.totalorder %v912, 127
  %vm4432 = vcmp.eq.s32.totalorder %v913, 127
  %vm4433 = vcmp.eq.s32.totalorder %v914, 127
  %vm4434 = vcmp.eq.s32.totalorder %v915, 127
  %vm4435 = vcmp.eq.s32.totalorder %v916, 127
  %vm4436 = vcmp.eq.s32.totalorder %v917, 127
  %vm4437 = vcmp.eq.s32.totalorder %v918, 127
  %vm4438 = vcmp.eq.s32.totalorder %v919, 127
  %vm4439 = vcmp.eq.s32.totalorder %v920, 127
  %vm4440 = vcmp.eq.s32.totalorder %v921, 127
  %vm4441 = vcmp.eq.s32.totalorder %v922, 127
  %vm4442 = vcmp.eq.s32.totalorder %v923, 127
  %vm4443 = vcmp.eq.s32.totalorder %v924, 127
  %vm4444 = vcmp.eq.s32.totalorder %v925, 127
  %vm4445 = vcmp.eq.s32.totalorder %v926, 127
  %vm4446 = vcmp.eq.s32.totalorder %v927, 127
  %vm4447 = vmor %vm4415, %vm4431
  %vm4448 = vmor %vm4416, %vm4432
  %vm4449 = vmor %vm4417, %vm4433
  %vm4450 = vmor %vm4418, %vm4434
  %vm4451 = vmor %vm4419, %vm4435
  %vm4452 = vmor %vm4420, %vm4436
  %vm4453 = vmor %vm4421, %vm4437
  %vm4454 = vmor %vm4422, %vm4438
  %vm4455 = vmor %vm4423, %vm4439
  %vm4456 = vmor %vm4424, %vm4440
  %vm4457 = vmor %vm4425, %vm4441
  %vm4458 = vmor %vm4426, %vm4442
  %vm4459 = vmor %vm4427, %vm4443
  %vm4460 = vmor %vm4428, %vm4444
  %vm4461 = vmor %vm4429, %vm4445
  %vm4462 = vmor %vm4430, %vm4446
  %v4463 = vsel %vm4447, 1, 0
  %v4464 = vsel %vm4448, 1, 0
  %v4465 = vsel %vm4449, 1, 0
  %v4466 = vsel %vm4450, 1, 0
  %v4467 = vsel %vm4451, 1, 0
  %v4468 = vsel %vm4452, 1, 0
  %v4469 = vsel %vm4453, 1, 0
  %v4470 = vsel %vm4454, 1, 0
  %v4471 = vsel %vm4455, 1, 0
  %v4472 = vsel %vm4456, 1, 0
  %v4473 = vsel %vm4457, 1, 0
  %v4474 = vsel %vm4458, 1, 0
  %v4475 = vsel %vm4459, 1, 0
  %v4476 = vsel %vm4460, 1, 0
  %v4477 = vsel %vm4461, 1, 0
  %v4478 = vsel %vm4462, 1, 0
  %4479 = vset.pattern.permute.xlu0 0
  %4480 = vperm.xlu0 %4479, %v4463
  %v4481 = vpop.permute.xlu0 %4480
  %4482 = vset.pattern.permute.xlu0 0
  %4483 = vperm.xlu0 %4482, %v4464
  %v4484 = vpop.permute.xlu0 %4483
  %4485 = vset.pattern.permute.xlu0 0
  %4486 = vperm.xlu0 %4485, %v4465
  %v4487 = vpop.permute.xlu0 %4486
  %4488 = vset.pattern.permute.xlu0 0
  %4489 = vperm.xlu0 %4488, %v4466
  %v4490 = vpop.permute.xlu0 %4489
  %4491 = vset.pattern.permute.xlu0 0
  %4492 = vperm.xlu0 %4491, %v4467
  %v4493 = vpop.permute.xlu0 %4492
  %4494 = vset.pattern.permute.xlu0 0
  %4495 = vperm.xlu0 %4494, %v4468
  %v4496 = vpop.permute.xlu0 %4495
  %4497 = vset.pattern.permute.xlu0 0
  %4498 = vperm.xlu0 %4497, %v4469
  %v4499 = vpop.permute.xlu0 %4498
  %4500 = vset.pattern.permute.xlu0 0
  %4501 = vperm.xlu0 %4500, %v4470
  %v4502 = vpop.permute.xlu0 %4501
  %4503 = vset.pattern.permute.xlu0 0
  %4504 = vperm.xlu0 %4503, %v4471
  %v4505 = vpop.permute.xlu0 %4504
  %4506 = vset.pattern.permute.xlu0 0
  %4507 = vperm.xlu0 %4506, %v4472
  %v4508 = vpop.permute.xlu0 %4507
  %4509 = vset.pattern.permute.xlu0 0
  %4510 = vperm.xlu0 %4509, %v4473
  %v4511 = vpop.permute.xlu0 %4510
  %4512 = vset.pattern.permute.xlu0 0
  %4513 = vperm.xlu0 %4512, %v4474
  %v4514 = vpop.permute.xlu0 %4513
  %4515 = vset.pattern.permute.xlu0 0
  %4516 = vperm.xlu0 %4515, %v4475
  %v4517 = vpop.permute.xlu0 %4516
  %4518 = vset.pattern.permute.xlu0 0
  %4519 = vperm.xlu0 %4518, %v4476
  %v4520 = vpop.permute.xlu0 %4519
  %4521 = vset.pattern.permute.xlu0 0
  %4522 = vperm.xlu0 %4521, %v4477
  %v4523 = vpop.permute.xlu0 %4522
  %4524 = vset.pattern.permute.xlu0 0
  %4525 = vperm.xlu0 %4524, %v4478
  %v4526 = vpop.permute.xlu0 %4525
  %vm4527 = vcmp.eq.s32.totalorder %v4481, 1
  %vm4528 = vcmp.eq.s32.totalorder %v4484, 1
  %vm4529 = vcmp.eq.s32.totalorder %v4487, 1
  %vm4530 = vcmp.eq.s32.totalorder %v4490, 1
  %vm4531 = vcmp.eq.s32.totalorder %v4493, 1
  %vm4532 = vcmp.eq.s32.totalorder %v4496, 1
  %vm4533 = vcmp.eq.s32.totalorder %v4499, 1
  %vm4534 = vcmp.eq.s32.totalorder %v4502, 1
  %vm4535 = vcmp.eq.s32.totalorder %v4505, 1
  %vm4536 = vcmp.eq.s32.totalorder %v4508, 1
  %vm4537 = vcmp.eq.s32.totalorder %v4511, 1
  %vm4538 = vcmp.eq.s32.totalorder %v4514, 1
  %vm4539 = vcmp.eq.s32.totalorder %v4517, 1
  %vm4540 = vcmp.eq.s32.totalorder %v4520, 1
  %vm4541 = vcmp.eq.s32.totalorder %v4523, 1
  %vm4542 = vcmp.eq.s32.totalorder %v4526, 1
  %vm4543 = vmand %vm153, %vm4527
  %vm4544 = vmand %vm154, %vm4527
  %vm4545 = vmand %vm155, %vm4528
  %vm4546 = vmand %vm156, %vm4528
  %vm4547 = vmand %vm157, %vm4529
  %vm4548 = vmand %vm158, %vm4529
  %vm4549 = vmand %vm159, %vm4530
  %vm4550 = vmand %vm160, %vm4530
  %vm4551 = vmand %vm161, %vm4531
  %vm4552 = vmand %vm162, %vm4531
  %vm4553 = vmand %vm163, %vm4532
  %vm4554 = vmand %vm164, %vm4532
  %vm4555 = vmand %vm165, %vm4533
  %vm4556 = vmand %vm166, %vm4533
  %vm4557 = vmand %vm167, %vm4534
  %vm4558 = vmand %vm168, %vm4534
  %vm4559 = vmand %vm169, %vm4535
  %vm4560 = vmand %vm170, %vm4535
  %vm4561 = vmand %vm171, %vm4536
  %vm4562 = vmand %vm172, %vm4536
  %vm4563 = vmand %vm173, %vm4537
  %vm4564 = vmand %vm174, %vm4537
  %vm4565 = vmand %vm175, %vm4538
  %vm4566 = vmand %vm176, %vm4538
  %vm4567 = vmand %vm177, %vm4539
  %vm4568 = vmand %vm178, %vm4539
  %vm4569 = vmand %vm179, %vm4540
  %vm4570 = vmand %vm180, %vm4540
  %vm4571 = vmand %vm181, %vm4541
  %vm4572 = vmand %vm182, %vm4541
  %vm4573 = vmand %vm183, %vm4542
  %vm4574 = vmand %vm184, %vm4542
  %v4575 = vsel %vm4543, 1, 0
  %v4576 = vsel %vm4544, 1, 0
  %v4577 = vsel %vm4545, 1, 0
  %v4578 = vsel %vm4546, 1, 0
  %v4579 = vsel %vm4547, 1, 0
  %v4580 = vsel %vm4548, 1, 0
  %v4581 = vsel %vm4549, 1, 0
  %v4582 = vsel %vm4550, 1, 0
  %v4583 = vsel %vm4551, 1, 0
  %v4584 = vsel %vm4552, 1, 0
  %v4585 = vsel %vm4553, 1, 0
  %v4586 = vsel %vm4554, 1, 0
  %v4587 = vsel %vm4555, 1, 0
  %v4588 = vsel %vm4556, 1, 0
  %v4589 = vsel %vm4557, 1, 0
  %v4590 = vsel %vm4558, 1, 0
  %v4591 = vsel %vm4559, 1, 0
  %v4592 = vsel %vm4560, 1, 0
  %v4593 = vsel %vm4561, 1, 0
  %v4594 = vsel %vm4562, 1, 0
  %v4595 = vsel %vm4563, 1, 0
  %v4596 = vsel %vm4564, 1, 0
  %v4597 = vsel %vm4565, 1, 0
  %v4598 = vsel %vm4566, 1, 0
  %v4599 = vsel %vm4567, 1, 0
  %v4600 = vsel %vm4568, 1, 0
  %v4601 = vsel %vm4569, 1, 0
  %v4602 = vsel %vm4570, 1, 0
  %v4603 = vsel %vm4571, 1, 0
  %v4604 = vsel %vm4572, 1, 0
  %v4605 = vsel %vm4573, 1, 0
  %v4606 = vsel %vm4574, 1, 0
  %v4607 = vcvt.s32.f32 %v4575
  %v4608 = vcvt.s32.f32 %v4576
  %v4609 = vcvt.s32.f32 %v4577
  %v4610 = vcvt.s32.f32 %v4578
  %v4611 = vcvt.s32.f32 %v4579
  %v4612 = vcvt.s32.f32 %v4580
  %v4613 = vcvt.s32.f32 %v4581
  %v4614 = vcvt.s32.f32 %v4582
  %v4615 = vcvt.s32.f32 %v4583
  %v4616 = vcvt.s32.f32 %v4584
  %v4617 = vcvt.s32.f32 %v4585
  %v4618 = vcvt.s32.f32 %v4586
  %v4619 = vcvt.s32.f32 %v4587
  %v4620 = vcvt.s32.f32 %v4588
  %v4621 = vcvt.s32.f32 %v4589
  %v4622 = vcvt.s32.f32 %v4590
  %v4623 = vcvt.s32.f32 %v4591
  %v4624 = vcvt.s32.f32 %v4592
  %v4625 = vcvt.s32.f32 %v4593
  %v4626 = vcvt.s32.f32 %v4594
  %v4627 = vcvt.s32.f32 %v4595
  %v4628 = vcvt.s32.f32 %v4596
  %v4629 = vcvt.s32.f32 %v4597
  %v4630 = vcvt.s32.f32 %v4598
  %v4631 = vcvt.s32.f32 %v4599
  %v4632 = vcvt.s32.f32 %v4600
  %v4633 = vcvt.s32.f32 %v4601
  %v4634 = vcvt.s32.f32 %v4602
  %v4635 = vcvt.s32.f32 %v4603
  %v4636 = vcvt.s32.f32 %v4604
  %v4637 = vcvt.s32.f32 %v4605
  %v4638 = vcvt.s32.f32 %v4606
  %4639 = vxpose.xlu0.b32.start [1/16] %v4607, 128
  %4640 = vxpose.xlu0.b32.cont [2/16] %v4609, 128
  %4641 = vxpose.xlu0.b32.cont [3/16] %v4611, 128
  %4642 = vxpose.xlu0.b32.cont [4/16] %v4613, 128
  %4643 = vxpose.xlu0.b32.cont [5/16] %v4615, 128
  %4644 = vxpose.xlu0.b32.cont [6/16] %v4617, 128
  %4645 = vxpose.xlu0.b32.cont [7/16] %v4619, 128
  %4646 = vxpose.xlu0.b32.cont [8/16] %v4621, 128
  %4647 = vxpose.xlu0.b32.cont [9/16] %v4623, 128
  %4648 = vxpose.xlu0.b32.cont [10/16] %v4625, 128
  %4649 = vxpose.xlu0.b32.cont [11/16] %v4627, 128
  %4650 = vxpose.xlu0.b32.cont [12/16] %v4629, 128
  %4651 = vxpose.xlu0.b32.cont [13/16] %v4631, 128
  %4652 = vxpose.xlu0.b32.cont [14/16] %v4633, 128
  %4653 = vxpose.xlu0.b32.cont [15/16] %v4635, 128
  %4654 = vxpose.xlu0.b32.end [16/16] %v4637, 128
  %v4655 = vpop.trf.xlu0
  %v4656 = vpop.trf.xlu0
  %v4657 = vpop.trf.xlu0
  %v4658 = vpop.trf.xlu0
  %v4659 = vpop.trf.xlu0
  %v4660 = vpop.trf.xlu0
  %v4661 = vpop.trf.xlu0
  %v4662 = vpop.trf.xlu0
  %v4663 = vpop.trf.xlu0
  %v4664 = vpop.trf.xlu0
  %v4665 = vpop.trf.xlu0
  %v4666 = vpop.trf.xlu0
  %v4667 = vpop.trf.xlu0
  %v4668 = vpop.trf.xlu0
  %v4669 = vpop.trf.xlu0
  %v4670 = vpop.trf.xlu0
  %4671 = vxpose.xlu0.b32.start [1/16] %v4608, 128
  %4672 = vxpose.xlu0.b32.cont [2/16] %v4610, 128
  %4673 = vxpose.xlu0.b32.cont [3/16] %v4612, 128
  %4674 = vxpose.xlu0.b32.cont [4/16] %v4614, 128
  %4675 = vxpose.xlu0.b32.cont [5/16] %v4616, 128
  %4676 = vxpose.xlu0.b32.cont [6/16] %v4618, 128
  %4677 = vxpose.xlu0.b32.cont [7/16] %v4620, 128
  %4678 = vxpose.xlu0.b32.cont [8/16] %v4622, 128
  %4679 = vxpose.xlu0.b32.cont [9/16] %v4624, 128
  %4680 = vxpose.xlu0.b32.cont [10/16] %v4626, 128
  %4681 = vxpose.xlu0.b32.cont [11/16] %v4628, 128
  %4682 = vxpose.xlu0.b32.cont [12/16] %v4630, 128
  %4683 = vxpose.xlu0.b32.cont [13/16] %v4632, 128
  %4684 = vxpose.xlu0.b32.cont [14/16] %v4634, 128
  %4685 = vxpose.xlu0.b32.cont [15/16] %v4636, 128
  %4686 = vxpose.xlu0.b32.end [16/16] %v4638, 128
  %v4687 = vpop.trf.xlu0
  %v4688 = vpop.trf.xlu0
  %v4689 = vpop.trf.xlu0
  %v4690 = vpop.trf.xlu0
  %v4691 = vpop.trf.xlu0
  %v4692 = vpop.trf.xlu0
  %v4693 = vpop.trf.xlu0
  %v4694 = vpop.trf.xlu0
  %v4695 = vpop.trf.xlu0
  %v4696 = vpop.trf.xlu0
  %v4697 = vpop.trf.xlu0
  %v4698 = vpop.trf.xlu0
  %v4699 = vpop.trf.xlu0
  %v4700 = vpop.trf.xlu0
  %v4701 = vpop.trf.xlu0
  %v4702 = vpop.trf.xlu0
  %4703 = vmatprep.subr.mxu0 0.0
  %4704 = vmatpush1.msra.mxu0 %v4206
  %4705 = vmatprep.subr.mxu0 0.0
  %4706 = vmatpush1.msra.mxu0 %v4207
  %4707 = vmatprep.subr.mxu0 0.0
  %4708 = vmatpush1.msra.mxu0 %v4208
  %4709 = vmatprep.subr.mxu0 0.0
  %4710 = vmatpush1.msra.mxu0 %v4209
  %4711 = vmatprep.subr.mxu0 0.0
  %4712 = vmatpush1.msra.mxu0 %v4210
  %4713 = vmatprep.subr.mxu0 0.0
  %4714 = vmatpush1.msra.mxu0 %v4211
  %4715 = vmatprep.subr.mxu0 0.0
  %4716 = vmatpush1.msra.mxu0 %v4212
  %4717 = vmatprep.subr.mxu0 0.0
  %4718 = vmatpush1.msra.mxu0 %v4213
  %4719 = vmatprep.subr.mxu0 0.0
  %4720 = vmatpush1.msra.mxu0 %v4214
  %4721 = vmatprep.subr.mxu0 0.0
  %4722 = vmatpush1.msra.mxu0 %v4215
  %4723 = vmatprep.subr.mxu0 0.0
  %4724 = vmatpush1.msra.mxu0 %v4216
  %4725 = vmatprep.subr.mxu0 0.0
  %4726 = vmatpush1.msra.mxu0 %v4217
  %4727 = vmatprep.subr.mxu0 0.0
  %4728 = vmatpush1.msra.mxu0 %v4218
  %4729 = vmatprep.subr.mxu0 0.0
  %4730 = vmatpush1.msra.mxu0 %v4219
  %4731 = vmatprep.subr.mxu0 0.0
  %4732 = vmatpush1.msra.mxu0 %v4220
  %4733 = vmatprep.subr.mxu0 0.0
  %4734 = vmatpush1.msra.mxu0 %v4221
  %4735 = vmatprep.subr.mxu0 0.0
  %4736 = vmatpush1.msra.mxu0 0.0
  %4737 = vmatprep.subr.mxu0 0.0
  %4738 = vmatpush1.msra.mxu0 0.0
  %4739 = vmatprep.subr.mxu0 0.0
  %4740 = vmatpush1.msra.mxu0 0.0
  %4741 = vmatprep.subr.mxu0 0.0
  %4742 = vmatpush1.msra.mxu0 0.0
  %4743 = vmatprep.subr.mxu0 0.0
  %4744 = vmatpush1.msra.mxu0 0.0
  %4745 = vmatprep.subr.mxu0 0.0
  %4746 = vmatpush1.msra.mxu0 0.0
  %4747 = vmatprep.subr.mxu0 0.0
  %4748 = vmatpush1.msra.mxu0 0.0
  %4749 = vmatprep.subr.mxu0 0.0
  %4750 = vmatpush1.msra.mxu0 0.0
  %4751 = vmatprep.subr.mxu0 0.0
  %4752 = vmatpush1.msra.mxu0 0.0
  %4753 = vmatprep.subr.mxu0 0.0
  %4754 = vmatpush1.msra.mxu0 0.0
  %4755 = vmatprep.subr.mxu0 0.0
  %4756 = vmatpush1.msra.mxu0 0.0
  %4757 = vmatprep.subr.mxu0 0.0
  %4758 = vmatpush1.msra.mxu0 0.0
  %4759 = vmatprep.subr.mxu0 0.0
  %4760 = vmatpush1.msra.mxu0 0.0
  %4761 = vmatprep.subr.mxu0 0.0
  %4762 = vmatpush1.msra.mxu0 0.0
  %4763 = vmatprep.subr.mxu0 0.0
  %4764 = vmatpush1.msra.mxu0 0.0
  %4765 = vmatprep.subr.mxu0 0.0
  %4766 = vmatpush1.msra.mxu0 0.0
  %4767 = vmatprep.mubr.f32.mxu0 0.0
  %4768 = vmatmul.mubr.f32.gmra.mrb[0].mxu0 %v4655
  %v4769 = vpop.f32.mrb[0].mxu0
  %v4770 = vadd.f32 0.0, %v4769
  %v4771 = vpop.f32.mrb[0].mxu0
  %4772 = vmatprep.mubr.f32.mxu0 0.0
  %4773 = vmatmul.mubr.f32.gmra.mrb[0].mxu0 %v4656
  %v4774 = vpop.f32.mrb[0].mxu0
  %v4775 = vadd.f32 0.0, %v4774
  %v4776 = vpop.f32.mrb[0].mxu0
  %4777 = vmatprep.mubr.f32.mxu0 0.0
  %4778 = vmatmul.mubr.f32.gmra.mrb[0].mxu0 %v4657
  %v4779 = vpop.f32.mrb[0].mxu0
  %v4780 = vadd.f32 0.0, %v4779
  %v4781 = vpop.f32.mrb[0].mxu0
  %4782 = vmatprep.mubr.f32.mxu0 0.0
  %4783 = vmatmul.mubr.f32.gmra.mrb[0].mxu0 %v4658
  %v4784 = vpop.f32.mrb[0].mxu0
  %v4785 = vadd.f32 0.0, %v4784
  %v4786 = vpop.f32.mrb[0].mxu0
  %4787 = vmatprep.mubr.f32.mxu0 0.0
  %4788 = vmatmul.mubr.f32.gmra.mrb[0].mxu0 %v4659
  %v4789 = vpop.f32.mrb[0].mxu0
  %v4790 = vadd.f32 0.0, %v4789
  %v4791 = vpop.f32.mrb[0].mxu0
  %4792 = vmatprep.mubr.f32.mxu0 0.0
  %4793 = vmatmul.mubr.f32.gmra.mrb[0].mxu0 %v4660
  %v4794 = vpop.f32.mrb[0].mxu0
  %v4795 = vadd.f32 0.0, %v4794
  %v4796 = vpop.f32.mrb[0].mxu0
  %4797 = vmatprep.mubr.f32.mxu0 0.0
  %4798 = vmatmul.mubr.f32.gmra.mrb[0].mxu0 %v4661
  %v4799 = vpop.f32.mrb[0].mxu0
  %v4800 = vadd.f32 0.0, %v4799
  %v4801 = vpop.f32.mrb[0].mxu0
  %4802 = vmatprep.mubr.f32.mxu0 0.0
  %4803 = vmatmul.mubr.f32.gmra.mrb[0].mxu0 %v4662
  %v4804 = vpop.f32.mrb[0].mxu0
  %v4805 = vadd.f32 0.0, %v4804
  %v4806 = vpop.f32.mrb[0].mxu0
  %4807 = vmatprep.mubr.f32.mxu0 0.0
  %4808 = vmatmul.mubr.f32.gmra.mrb[0].mxu0 %v4663
  %v4809 = vpop.f32.mrb[0].mxu0
  %v4810 = vadd.f32 0.0, %v4809
  %v4811 = vpop.f32.mrb[0].mxu0
  %4812 = vmatprep.mubr.f32.mxu0 0.0
  %4813 = vmatmul.mubr.f32.gmra.mrb[0].mxu0 %v4664
  %v4814 = vpop.f32.mrb[0].mxu0
  %v4815 = vadd.f32 0.0, %v4814
  %v4816 = vpop.f32.mrb[0].mxu0
  %4817 = vmatprep.mubr.f32.mxu0 0.0
  %4818 = vmatmul.mubr.f32.gmra.mrb[0].mxu0 %v4665
  %v4819 = vpop.f32.mrb[0].mxu0
  %v4820 = vadd.f32 0.0, %v4819
  %v4821 = vpop.f32.mrb[0].mxu0
  %4822 = vmatprep.mubr.f32.mxu0 0.0
  %4823 = vmatmul.mubr.f32.gmra.mrb[0].mxu0 %v4666
  %v4824 = vpop.f32.mrb[0].mxu0
  %v4825 = vadd.f32 0.0, %v4824
  %v4826 = vpop.f32.mrb[0].mxu0
  %4827 = vmatprep.mubr.f32.mxu0 0.0
  %4828 = vmatmul.mubr.f32.gmra.mrb[0].mxu0 %v4667
  %v4829 = vpop.f32.mrb[0].mxu0
  %v4830 = vadd.f32 0.0, %v4829
  %v4831 = vpop.f32.mrb[0].mxu0
  %4832 = vmatprep.mubr.f32.mxu0 0.0
  %4833 = vmatmul.mubr.f32.gmra.mrb[0].mxu0 %v4668
  %v4834 = vpop.f32.mrb[0].mxu0
  %v4835 = vadd.f32 0.0, %v4834
  %v4836 = vpop.f32.mrb[0].mxu0
  %4837 = vmatprep.mubr.f32.mxu0 0.0
  %4838 = vmatmul.mubr.f32.gmra.mrb[0].mxu0 %v4669
  %v4839 = vpop.f32.mrb[0].mxu0
  %v4840 = vadd.f32 0.0, %v4839
  %v4841 = vpop.f32.mrb[0].mxu0
  %4842 = vmatprep.mubr.f32.mxu0 0.0
  %4843 = vmatmul.mubr.f32.gmra.mrb[0].mxu0 %v4670
  %v4844 = vpop.f32.mrb[0].mxu0
  %v4845 = vadd.f32 0.0, %v4844
  %v4846 = vpop.f32.mrb[0].mxu0
  %4847 = vmatprep.mubr.f32.mxu0 0.0
  %4848 = vmatmul.mubr.f32.gmra.mrb[0].mxu0 %v4687
  %v4849 = vpop.f32.mrb[0].mxu0
  %v4850 = vadd.f32 0.0, %v4849
  %v4851 = vpop.f32.mrb[0].mxu0
  %4852 = vmatprep.mubr.f32.mxu0 0.0
  %4853 = vmatmul.mubr.f32.gmra.mrb[0].mxu0 %v4688
  %v4854 = vpop.f32.mrb[0].mxu0
  %v4855 = vadd.f32 0.0, %v4854
  %v4856 = vpop.f32.mrb[0].mxu0
  %4857 = vmatprep.mubr.f32.mxu0 0.0
  %4858 = vmatmul.mubr.f32.gmra.mrb[0].mxu0 %v4689
  %v4859 = vpop.f32.mrb[0].mxu0
  %v4860 = vadd.f32 0.0, %v4859
  %v4861 = vpop.f32.mrb[0].mxu0
  %4862 = vmatprep.mubr.f32.mxu0 0.0
  %4863 = vmatmul.mubr.f32.gmra.mrb[0].mxu0 %v4690
  %v4864 = vpop.f32.mrb[0].mxu0
  %v4865 = vadd.f32 0.0, %v4864
  %v4866 = vpop.f32.mrb[0].mxu0
  %4867 = vmatprep.mubr.f32.mxu0 0.0
  %4868 = vmatmul.mubr.f32.gmra.mrb[0].mxu0 %v4691
  %v4869 = vpop.f32.mrb[0].mxu0
  %v4870 = vadd.f32 0.0, %v4869
  %v4871 = vpop.f32.mrb[0].mxu0
  %4872 = vmatprep.mubr.f32.mxu0 0.0
  %4873 = vmatmul.mubr.f32.gmra.mrb[0].mxu0 %v4692
  %v4874 = vpop.f32.mrb[0].mxu0
  %v4875 = vadd.f32 0.0, %v4874
  %v4876 = vpop.f32.mrb[0].mxu0
  %4877 = vmatprep.mubr.f32.mxu0 0.0
  %4878 = vmatmul.mubr.f32.gmra.mrb[0].mxu0 %v4693
  %v4879 = vpop.f32.mrb[0].mxu0
  %v4880 = vadd.f32 0.0, %v4879
  %v4881 = vpop.f32.mrb[0].mxu0
  %4882 = vmatprep.mubr.f32.mxu0 0.0
  %4883 = vmatmul.mubr.f32.gmra.mrb[0].mxu0 %v4694
  %v4884 = vpop.f32.mrb[0].mxu0
  %v4885 = vadd.f32 0.0, %v4884
  %v4886 = vpop.f32.mrb[0].mxu0
  %4887 = vmatprep.mubr.f32.mxu0 0.0
  %4888 = vmatmul.mubr.f32.gmra.mrb[0].mxu0 %v4695
  %v4889 = vpop.f32.mrb[0].mxu0
  %v4890 = vadd.f32 0.0, %v4889
  %v4891 = vpop.f32.mrb[0].mxu0
  %4892 = vmatprep.mubr.f32.mxu0 0.0
  %4893 = vmatmul.mubr.f32.gmra.mrb[0].mxu0 %v4696
  %v4894 = vpop.f32.mrb[0].mxu0
  %v4895 = vadd.f32 0.0, %v4894
  %v4896 = vpop.f32.mrb[0].mxu0
  %4897 = vmatprep.mubr.f32.mxu0 0.0
  %4898 = vmatmul.mubr.f32.gmra.mrb[0].mxu0 %v4697
  %v4899 = vpop.f32.mrb[0].mxu0
  %v4900 = vadd.f32 0.0, %v4899
  %v4901 = vpop.f32.mrb[0].mxu0
  %4902 = vmatprep.mubr.f32.mxu0 0.0
  %4903 = vmatmul.mubr.f32.gmra.mrb[0].mxu0 %v4698
  %v4904 = vpop.f32.mrb[0].mxu0
  %v4905 = vadd.f32 0.0, %v4904
  %v4906 = vpop.f32.mrb[0].mxu0
  %4907 = vmatprep.mubr.f32.mxu0 0.0
  %4908 = vmatmul.mubr.f32.gmra.mrb[0].mxu0 %v4699
  %v4909 = vpop.f32.mrb[0].mxu0
  %v4910 = vadd.f32 0.0, %v4909
  %v4911 = vpop.f32.mrb[0].mxu0
  %4912 = vmatprep.mubr.f32.mxu0 0.0
  %4913 = vmatmul.mubr.f32.gmra.mrb[0].mxu0 %v4700
  %v4914 = vpop.f32.mrb[0].mxu0
  %v4915 = vadd.f32 0.0, %v4914
  %v4916 = vpop.f32.mrb[0].mxu0
  %4917 = vmatprep.mubr.f32.mxu0 0.0
  %4918 = vmatmul.mubr.f32.gmra.mrb[0].mxu0 %v4701
  %v4919 = vpop.f32.mrb[0].mxu0
  %v4920 = vadd.f32 0.0, %v4919
  %v4921 = vpop.f32.mrb[0].mxu0
  %4922 = vmatprep.mubr.f32.mxu0 0.0
  %4923 = vmatmul.mubr.f32.gmra.mrb[0].mxu0 %v4702
  %v4924 = vpop.f32.mrb[0].mxu0
  %v4925 = vadd.f32 0.0, %v4924
  %v4926 = vpop.f32.mrb[0].mxu0
  %4927 = vdwg.mxu0
  %s4928 = scalar_lea.vmem %s9, %s31
  %v4929 = vld [vmem:[%s4928] sm:$0xff]
  %v4930 = vld [vmem:[%s4928 + $0x8] sm:$0xff]
  %v4931 = vld [vmem:[%s4928 + $0x10] sm:$0xff]
  %v4932 = vld [vmem:[%s4928 + $0x18] sm:$0xff]
  %v4933 = vld [vmem:[%s4928 + $0x20] sm:$0xff]
  %v4934 = vld [vmem:[%s4928 + $0x28] sm:$0xff]
  %v4935 = vld [vmem:[%s4928 + $0x30] sm:$0xff]
  %v4936 = vld [vmem:[%s4928 + $0x38] sm:$0xff]
  %v4937 = vld [vmem:[%s4928 + $0x40] sm:$0xff]
  %v4938 = vld [vmem:[%s4928 + $0x48] sm:$0xff]
  %v4939 = vld [vmem:[%s4928 + $0x50] sm:$0xff]
  %v4940 = vld [vmem:[%s4928 + $0x58] sm:$0xff]
  %v4941 = vld [vmem:[%s4928 + $0x60] sm:$0xff]
  %v4942 = vld [vmem:[%s4928 + $0x68] sm:$0xff]
  %v4943 = vld [vmem:[%s4928 + $0x70] sm:$0xff]
  %v4944 = vld [vmem:[%s4928 + $0x78] sm:$0xff]
  %v4945 = vld [vmem:[%s4928 + $0x80] sm:$0xff]
  %v4946 = vld [vmem:[%s4928 + $0x88] sm:$0xff]
  %v4947 = vld [vmem:[%s4928 + $0x90] sm:$0xff]
  %v4948 = vld [vmem:[%s4928 + $0x98] sm:$0xff]
  %v4949 = vld [vmem:[%s4928 + $0xa0] sm:$0xff]
  %v4950 = vld [vmem:[%s4928 + $0xa8] sm:$0xff]
  %v4951 = vld [vmem:[%s4928 + $0xb0] sm:$0xff]
  %v4952 = vld [vmem:[%s4928 + $0xb8] sm:$0xff]
  %v4953 = vld [vmem:[%s4928 + $0xc0] sm:$0xff]
  %v4954 = vld [vmem:[%s4928 + $0xc8] sm:$0xff]
  %v4955 = vld [vmem:[%s4928 + $0xd0] sm:$0xff]
  %v4956 = vld [vmem:[%s4928 + $0xd8] sm:$0xff]
  %v4957 = vld [vmem:[%s4928 + $0xe0] sm:$0xff]
  %v4958 = vld [vmem:[%s4928 + $0xe8] sm:$0xff]
  %v4959 = vld [vmem:[%s4928 + $0xf0] sm:$0xff]
  %v4960 = vld [vmem:[%s4928 + $0xf8] sm:$0xff]
  %v4961 = vmax.f32 %v4929, %v4770
  %v4962 = vmax.f32 %v4930, %v4775
  %v4963 = vmax.f32 %v4931, %v4780
  %v4964 = vmax.f32 %v4932, %v4785
  %v4965 = vmax.f32 %v4933, %v4790
  %v4966 = vmax.f32 %v4934, %v4795
  %v4967 = vmax.f32 %v4935, %v4800
  %v4968 = vmax.f32 %v4936, %v4805
  %v4969 = vmax.f32 %v4937, %v4810
  %v4970 = vmax.f32 %v4938, %v4815
  %v4971 = vmax.f32 %v4939, %v4820
  %v4972 = vmax.f32 %v4940, %v4825
  %v4973 = vmax.f32 %v4941, %v4830
  %v4974 = vmax.f32 %v4942, %v4835
  %v4975 = vmax.f32 %v4943, %v4840
  %v4976 = vmax.f32 %v4944, %v4845
  %v4977 = vmax.f32 %v4945, %v4850
  %v4978 = vmax.f32 %v4946, %v4855
  %v4979 = vmax.f32 %v4947, %v4860
  %v4980 = vmax.f32 %v4948, %v4865
  %v4981 = vmax.f32 %v4949, %v4870
  %v4982 = vmax.f32 %v4950, %v4875
  %v4983 = vmax.f32 %v4951, %v4880
  %v4984 = vmax.f32 %v4952, %v4885
  %v4985 = vmax.f32 %v4953, %v4890
  %v4986 = vmax.f32 %v4954, %v4895
  %v4987 = vmax.f32 %v4955, %v4900
  %v4988 = vmax.f32 %v4956, %v4905
  %v4989 = vmax.f32 %v4957, %v4910
  %v4990 = vmax.f32 %v4958, %v4915
  %v4991 = vmax.f32 %v4959, %v4920
  %v4992 = vmax.f32 %v4960, %v4925
  %4993 = vst.msk [vmem:[%s4928] sm:$0xff] %vm894, %v4961
  %4994 = vst.msk [vmem:[%s4928 + $0x8] sm:$0xff] %vm894, %v4962
  %4995 = vst.msk [vmem:[%s4928 + $0x10] sm:$0xff] %vm894, %v4963
  %4996 = vst.msk [vmem:[%s4928 + $0x18] sm:$0xff] %vm894, %v4964
  %4997 = vst.msk [vmem:[%s4928 + $0x20] sm:$0xff] %vm894, %v4965
  %4998 = vst.msk [vmem:[%s4928 + $0x28] sm:$0xff] %vm894, %v4966
  %4999 = vst.msk [vmem:[%s4928 + $0x30] sm:$0xff] %vm894, %v4967
  %5000 = vst.msk [vmem:[%s4928 + $0x38] sm:$0xff] %vm894, %v4968
  %5001 = vst.msk [vmem:[%s4928 + $0x40] sm:$0xff] %vm894, %v4969
  %5002 = vst.msk [vmem:[%s4928 + $0x48] sm:$0xff] %vm894, %v4970
  %5003 = vst.msk [vmem:[%s4928 + $0x50] sm:$0xff] %vm894, %v4971
  %5004 = vst.msk [vmem:[%s4928 + $0x58] sm:$0xff] %vm894, %v4972
  %5005 = vst.msk [vmem:[%s4928 + $0x60] sm:$0xff] %vm894, %v4973
  %5006 = vst.msk [vmem:[%s4928 + $0x68] sm:$0xff] %vm894, %v4974
  %5007 = vst.msk [vmem:[%s4928 + $0x70] sm:$0xff] %vm894, %v4975
  %5008 = vst.msk [vmem:[%s4928 + $0x78] sm:$0xff] %vm894, %v4976
  %5009 = vst.msk [vmem:[%s4928 + $0x80] sm:$0xff] %vm894, %v4977
  %5010 = vst.msk [vmem:[%s4928 + $0x88] sm:$0xff] %vm894, %v4978
  %5011 = vst.msk [vmem:[%s4928 + $0x90] sm:$0xff] %vm894, %v4979
  %5012 = vst.msk [vmem:[%s4928 + $0x98] sm:$0xff] %vm894, %v4980
  %5013 = vst.msk [vmem:[%s4928 + $0xa0] sm:$0xff] %vm894, %v4981
  %5014 = vst.msk [vmem:[%s4928 + $0xa8] sm:$0xff] %vm894, %v4982
  %5015 = vst.msk [vmem:[%s4928 + $0xb0] sm:$0xff] %vm894, %v4983
  %5016 = vst.msk [vmem:[%s4928 + $0xb8] sm:$0xff] %vm894, %v4984
  %5017 = vst.msk [vmem:[%s4928 + $0xc0] sm:$0xff] %vm894, %v4985
  %5018 = vst.msk [vmem:[%s4928 + $0xc8] sm:$0xff] %vm894, %v4986
  %5019 = vst.msk [vmem:[%s4928 + $0xd0] sm:$0xff] %vm894, %v4987
  %5020 = vst.msk [vmem:[%s4928 + $0xd8] sm:$0xff] %vm894, %v4988
  %5021 = vst.msk [vmem:[%s4928 + $0xe0] sm:$0xff] %vm894, %v4989
  %5022 = vst.msk [vmem:[%s4928 + $0xe8] sm:$0xff] %vm894, %v4990
  %5023 = vst.msk [vmem:[%s4928 + $0xf0] sm:$0xff] %vm894, %v4991
  %5024 = vst.msk [vmem:[%s4928 + $0xf8] sm:$0xff] %vm894, %v4992
  // Predicated region
  $region34: #{_forward.4} parent=0 // pred_check
    _
  $region35: #{_forward.4} parent=0 // pred_check_branch
    %5026 = sbr.rel (0) target = $region37
  $region36: #{_forward.4} parent=0 // pred_region
    _
  $region37: #{_forward.4} parent=0 // pred_fallthru
    _
  // Predicated region
  $region38: #{_forward.4} parent=0 // pred_check
    _
  $region39: #{_forward.4} parent=0 // pred_check_branch
    %5028 = sbr.rel (0) target = $region41
  $region40: #{_forward.4} parent=0 // pred_region
    _
  $region41: #{_forward.4} parent=0 // pred_fallthru
    _
  // Predicated region
  $region42: #{_forward.4} parent=0 // pred_check
    _
  $region43: #{_forward.4} parent=0 // pred_check_branch
    %5030 = sbr.rel (0) target = $region45
  $region44: #{_forward.4} parent=0 // pred_region
    _
  $region45: #{_forward.4} parent=0 // pred_fallthru
    _
  // Predicated region
  $region46: #{_forward.4} parent=0 // pred_check
    _
  $region47: #{_forward.4} parent=0 // pred_check_branch
    %5032 = sbr.rel (0) target = $region49
  $region48: #{_forward.4} parent=0 // pred_region
    _
  $region49: #{_forward.4} parent=0 // pred_fallthru
    _

</llo_original>
